<compile_context>
chip_gen: v6e
topology: v6e:2x2x1
jax: 0.10.0
libtpu: 0.0.40
codegen_flags: <defaults>
</compile_context>

<pallas_src>
import numpy as np
import jax
import jax.numpy as jnp
from jax import lax
from jax.experimental import pallas as pl
from jax.experimental.pallas import tpu as pltpu

LEAKY_SLOPE = 0.2
BN_EPS = 0.8                      # nn.BatchNorm2d(out_filters, 0.8) -> eps=0.8
CHANNEL_PLAN = (16, 32, 64, 128)  # discriminator_block output channels


# ---------------------------------------------------------------------------
# Fused Pallas kernel: one image per grid step, entire forward pass.
# ---------------------------------------------------------------------------
def _disc_kernel(p1_ref, w1_ref, b1_ref,
                 w2_ref, b2_ref, sh2_ref, g2_ref,
                 w3_ref, b3_ref, sh3_ref, g3_ref,
                 w4_ref, b4_ref, sh4_ref, g4_ref,
                 wfc_ref, bfc_ref, o_ref):
    # ---- block 1: Conv(Cin->16) + bias + LeakyReLU(0.2)   (bn=False) -------
    # Layer-1 patches are precomputed in glue (Cin=1); one tiny MXU dot with
    # full lane utilisation on N = OH*OW output pixels.
    patches = p1_ref[0]                                        # (9*Cin, S1)
    act = jnp.dot(w1_ref[...], patches,
                  preferred_element_type=jnp.float32)          # (16, S1)
    act = act + b1_ref[...]
    act = jnp.maximum(act, LEAKY_SLOPE * act)                  # 1 VPU op

    # ---- blocks 2..4: in-kernel im2col via constant gather matmuls ---------
    def conv_block(a_in, w_ref, b_ref, sh_ref, g_ref):
        c_out = w_ref.shape[1]
        s_out = g_ref.shape[2]
        acc = jnp.zeros((c_out, s_out), jnp.float32)
        for t in range(9):                                     # static unroll
            tap = jnp.dot(a_in, g_ref[t],                      # (Cin, S_out)
                          preferred_element_type=jnp.float32)
            acc = acc + jnp.dot(w_ref[t], tap,                 # (Cout, S_out)
                                preferred_element_type=jnp.float32)
        acc = acc + b_ref[...]                  # bias (BN scale folded in)
        acc = jnp.maximum(acc, LEAKY_SLOPE * acc)
        return acc + sh_ref[...]                # BN shift (after the ReLU)

    act = conv_block(act, w2_ref, b2_ref, sh2_ref, g2_ref)     # (32, 64)
    act = conv_block(act, w3_ref, b3_ref, sh3_ref, g3_ref)     # (64, 16)
    act = conv_block(act, w4_ref, b4_ref, sh4_ref, g4_ref)     # (128, 4)

    # ---- adv head: Linear(512 -> 1) + Sigmoid -------------------------------
    # (C, H*W) layout == PyTorch NCHW .view(B, -1) order, so wfc needs no
    # runtime permutation.  N=1 head stays off the MXU: VPU mul + reduces.
    z = jnp.sum(act * wfc_ref[...], axis=1, keepdims=True)     # lane reduce
    z = jnp.sum(z, axis=0, keepdims=True) + bfc_ref[...]       # sublane reduce
    o_ref[0] = 1.0 / (1.0 + jnp.exp(-z))                       # exp -> EUP


# ---------------------------------------------------------------------------
# Constant 0/1 gather matrices: in-kernel im2col for 3x3 / stride-2 / pad-1.
# ---------------------------------------------------------------------------
def _gather_mats(h_in, w_in):
    """Returns (9, h_in*w_in, (h_in//2)*(w_in//2)); tap t selects, for each
    output pixel, its input pixel (zero row where the tap lands on padding)."""
    h_out, w_out = h_in // 2, w_in // 2
    g = np.zeros((9, h_in * w_in, h_out * w_out), np.float32)
    for di in range(3):
        for dj in range(3):
            t = di * 3 + dj
            for io in range(h_out):
                r = 2 * io + di - 1
                if not 0 <= r < h_in:
                    continue
                for jo in range(w_out):
                    c = 2 * jo + dj - 1
                    if not 0 <= c < w_in:
                        continue
                    g[t, r * w_in + c, io * w_out + jo] = 1.0
    return jnp.asarray(g)


# ---------------------------------------------------------------------------
# Parameters (deterministic, synthetic), pre-packed into kernel layout.
# ---------------------------------------------------------------------------
def init_params(key, channels=1, img_size=32):
    assert img_size % 16 == 0
    chans = (channels,) + CHANNEL_PLAN
    raw_conv, kernel_conv = [], []
    for i in range(4):
        cin, cout = chans[i], chans[i + 1]
        key, kw, kb = jax.random.split(key, 3)
        w = jax.random.normal(kw, (3, 3, cin, cout), jnp.float32) * 0.05
        b = jax.random.normal(kb, (cout,), jnp.float32) * 0.05
        if i > 0:  # bn=True blocks: eval-mode running stats
            gamma = jnp.ones((cout,), jnp.float32)
            beta = jnp.zeros((cout,), jnp.float32)
            mean = jnp.zeros((cout,), jnp.float32)
            var = jnp.ones((cout,), jnp.float32)
            scale = gamma / jnp.sqrt(var + BN_EPS)   # > 0 => folding is valid
            shift = beta - mean * scale
        else:      # bn=False -> identity
            scale = jnp.ones((cout,), jnp.float32)
            shift = jnp.zeros((cout,), jnp.float32)
        raw_conv.append((w, b, scale, shift))
        # Fold BN scale into conv weight/bias (LeakyReLU is +-homogeneous).
        w_f, b_f = w * scale, b * scale
        if i == 0:
            kernel_conv.append(dict(
                w=w_f.reshape(9 * cin, cout).T,                 # (16, 9*Cin)
                b=b_f.reshape(cout, 1)))
        else:
            h_in = img_size // (2 ** i)
            kernel_conv.append(dict(
                w=jnp.transpose(w_f.reshape(9, cin, cout), (0, 2, 1)),  # (9,Co,Ci)
                b=b_f.reshape(cout, 1),
                shift=shift.reshape(cout, 1),
                g=_gather_mats(h_in, h_in)))
    ds = img_size // 2 ** 4
    key, kw, kb = jax.random.split(key, 3)
    w_fc = jax.random.normal(kw, (128 * ds * ds,), jnp.float32) * 0.05
    b_fc = jax.random.normal(kb, (1,), jnp.float32) * 0.05
    fc = (w_fc.reshape(128, ds * ds),   # rows already in NCHW-flatten order
          b_fc.reshape(1, 1))
    return dict(conv=kernel_conv, fc=fc, raw_conv=raw_conv)


# ---------------------------------------------------------------------------
# JAX glue
# ---------------------------------------------------------------------------
def _layer1_patches(x_nchw):
    """(B,C,H,W) -> (B, 9*C, (H//2)*(W//2)) patches for the FIRST conv only."""
    b, c, h, w = x_nchw.shape
    oh, ow = h // 2, w // 2
    xp = jnp.pad(x_nchw, ((0, 0), (0, 0), (1, 1), (1, 1)))
    taps = []
    for di in range(3):
        for dj in range(3):
            sl = xp[:, :, di:di + 2 * oh:2, dj:dj + 2 * ow:2]   # (B,C,OH,OW)
            taps.append(sl.reshape(b, c, oh * ow))
    return jnp.stack(taps, axis=1).reshape(b, 9 * c, oh * ow)   # tap-major, cin


def _const_spec(arr):
    """Whole-array block whose index never changes -> stays resident in VMEM."""
    if arr.ndim == 2:
        return pl.BlockSpec(arr.shape, lambda b: (0, 0))
    return pl.BlockSpec(arr.shape, lambda b: (0, 0, 0))


def discriminator_forward(img_nchw, params):
    p1 = _layer1_patches(img_nchw.astype(jnp.float32))
    batch = p1.shape[0]
    l1, l2, l3, l4 = params["conv"]
    wfc, bfc = params["fc"]

    operands = (p1, l1["w"], l1["b"],
                l2["w"], l2["b"], l2["shift"], l2["g"],
                l3["w"], l3["b"], l3["shift"], l3["g"],
                l4["w"], l4["b"], l4["shift"], l4["g"],
                wfc, bfc)
    in_specs = [pl.BlockSpec((1,) + p1.shape[1:], lambda b: (b, 0, 0))]
    in_specs += [_const_spec(a) for a in operands[1:]]

    out = pl.pallas_call(
        _disc_kernel,
        out_shape=jax.ShapeDtypeStruct((batch, 1, 1), jnp.float32),
        grid=(batch,),
        in_specs=in_specs,
        out_specs=pl.BlockSpec((1, 1, 1), lambda b: (b, 0, 0)),
        compiler_params=pltpu.CompilerParams(
            dimension_semantics=("parallel",)),   # v7x: 2 TCs split the batch
    )(*operands)
    return out.reshape(batch, 1)


# ---------------------------------------------------------------------------
# Pure-JAX reference (unfolded params) for in-script validation.
# ---------------------------------------------------------------------------
def discriminator_reference(img_nchw, params):
    x = img_nchw.astype(jnp.float32)
    for w, b, scale, shift in params["raw_conv"]:
        y = lax.conv_general_dilated(
            x, w, window_strides=(2, 2), padding=((1, 1), (1, 1)),
            dimension_numbers=("NCHW", "HWIO", "NCHW"),
            precision=lax.Precision.HIGHEST)
        y = y + b[None, :, None, None]
        y = jnp.maximum(y, LEAKY_SLOPE * y)              # LeakyReLU(0.2)
        x = y * scale[None, :, None, None] + shift[None, :, None, None]
    flat = x.reshape(x.shape[0], -1)                     # NCHW .view(B, -1)
    wfc, bfc = params["fc"]
    z = flat @ wfc.reshape(-1, 1) + bfc.reshape(1, 1)
    return 1.0 / (1.0 + jnp.exp(-z))


if __name__ == "__main__":
    key = jax.random.PRNGKey(0)
    key, k_img, k_param = jax.random.split(key, 3)

    batch, channels, img_size = 2, 1, 32           # MNIST-style DCGAN config
    img = jax.random.normal(k_img, (batch, channels, img_size, img_size),
                            jnp.float32)
    params = init_params(k_param, channels, img_size)

    fwd = jax.jit(lambda im: discriminator_forward(im, params))
    validity = fwd(img)
    jax.block_until_ready(validity)

    assert validity.shape == (batch, 1)
    assert bool(jnp.all(jnp.isfinite(validity)))
    ref = discriminator_reference(img, params)
    assert bool(jnp.allclose(validity, ref, atol=2e-3, rtol=2e-3))
    print("KERNEL_OK")
</pallas_src>

<mosaic_0001>
module attributes {stable_mosaic.version = 11 : i64} {
  func.func @_disc_kernel(%arg0: i32, %arg1: memref<1x9x256xf32, #tpu.memory_space<vmem>>, %arg2: memref<16x9xf32, #tpu.memory_space<vmem>>, %arg3: memref<16x1xf32, #tpu.memory_space<vmem>>, %arg4: memref<9x32x16xf32, #tpu.memory_space<vmem>>, %arg5: memref<32x1xf32, #tpu.memory_space<vmem>>, %arg6: memref<32x1xf32, #tpu.memory_space<vmem>>, %arg7: memref<9x256x64xf32, #tpu.memory_space<vmem>>, %arg8: memref<9x64x32xf32, #tpu.memory_space<vmem>>, %arg9: memref<64x1xf32, #tpu.memory_space<vmem>>, %arg10: memref<64x1xf32, #tpu.memory_space<vmem>>, %arg11: memref<9x64x16xf32, #tpu.memory_space<vmem>>, %arg12: memref<9x128x64xf32, #tpu.memory_space<vmem>>, %arg13: memref<128x1xf32, #tpu.memory_space<vmem>>, %arg14: memref<128x1xf32, #tpu.memory_space<vmem>>, %arg15: memref<9x16x4xf32, #tpu.memory_space<vmem>>, %arg16: memref<128x4xf32, #tpu.memory_space<vmem>>, %arg17: memref<1x1xf32, #tpu.memory_space<vmem>>, %arg18: memref<1x1x1xf32, #tpu.memory_space<vmem>>) attributes {dimension_semantics = [#tpu.dimension_semantics<parallel>], iteration_bounds = array<i64: 2>, scalar_prefetch = 0 : i64, scratch_operands = 0 : i64, tpu.core_type = #tpu.core_type<tc>, window_params = [{transform_indices = @transform_0, window_bounds = array<i64: 1, 9, 256>}, {pipeline_mode = #tpu.pipeline_mode<synchronous>, transform_indices = @transform_1, window_bounds = array<i64: 16, 9>}, {pipeline_mode = #tpu.pipeline_mode<synchronous>, transform_indices = @transform_2, window_bounds = array<i64: 16, 1>}, {pipeline_mode = #tpu.pipeline_mode<synchronous>, transform_indices = @transform_3, window_bounds = array<i64: 9, 32, 16>}, {pipeline_mode = #tpu.pipeline_mode<synchronous>, transform_indices = @transform_4, window_bounds = array<i64: 32, 1>}, {pipeline_mode = #tpu.pipeline_mode<synchronous>, transform_indices = @transform_5, window_bounds = array<i64: 32, 1>}, {pipeline_mode = #tpu.pipeline_mode<synchronous>, transform_indices = @transform_6, window_bounds = array<i64: 9, 256, 64>}, {pipeline_mode = #tpu.pipeline_mode<synchronous>, transform_indices = @transform_7, window_bounds = array<i64: 9, 64, 32>}, {pipeline_mode = #tpu.pipeline_mode<synchronous>, transform_indices = @transform_8, window_bounds = array<i64: 64, 1>}, {pipeline_mode = #tpu.pipeline_mode<synchronous>, transform_indices = @transform_9, window_bounds = array<i64: 64, 1>}, {pipeline_mode = #tpu.pipeline_mode<synchronous>, transform_indices = @transform_10, window_bounds = array<i64: 9, 64, 16>}, {pipeline_mode = #tpu.pipeline_mode<synchronous>, transform_indices = @transform_11, window_bounds = array<i64: 9, 128, 64>}, {pipeline_mode = #tpu.pipeline_mode<synchronous>, transform_indices = @transform_12, window_bounds = array<i64: 128, 1>}, {pipeline_mode = #tpu.pipeline_mode<synchronous>, transform_indices = @transform_13, window_bounds = array<i64: 128, 1>}, {pipeline_mode = #tpu.pipeline_mode<synchronous>, transform_indices = @transform_14, window_bounds = array<i64: 9, 16, 4>}, {pipeline_mode = #tpu.pipeline_mode<synchronous>, transform_indices = @transform_15, window_bounds = array<i64: 128, 4>}, {pipeline_mode = #tpu.pipeline_mode<synchronous>, transform_indices = @transform_16, window_bounds = array<i64: 1, 1>}, {transform_indices = @transform_17, window_bounds = array<i64: 1, 1, 1>}]} {
    %c0 = arith.constant 0 : index
    %c0_0 = arith.constant 0 : index
    %c0_1 = arith.constant 0 : index
    %0 = vector.load %arg1[%c0, %c0_0, %c0_1] : memref<1x9x256xf32, #tpu.memory_space<vmem>>, vector<1x9x256xf32>
    %1 = vector.shape_cast %0 : vector<1x9x256xf32> to vector<9x256xf32>
    %c0_2 = arith.constant 0 : index
    %c0_3 = arith.constant 0 : index
    %2 = vector.load %arg2[%c0_2, %c0_3] : memref<16x9xf32, #tpu.memory_space<vmem>>, vector<16x9xf32>
    %cst = arith.constant dense<0.000000e+00> : vector<16x256xf32>
    %3 = tpu.matmul %2, %1, %cst {dimension_numbers = #tpu.dot_dimension_numbers<[1], [0], [0], [1], [0, 0, 1, 1], [], []>} : vector<16x9xf32>, vector<9x256xf32>, vector<16x256xf32> -> vector<16x256xf32>
    %c0_4 = arith.constant 0 : index
    %c0_5 = arith.constant 0 : index
    %4 = vector.load %arg3[%c0_4, %c0_5] : memref<16x1xf32, #tpu.memory_space<vmem>>, vector<16x1xf32>
    %5 = vector.broadcast %4 : vector<16x1xf32> to vector<16x256xf32>
    %6 = arith.addf %3, %5 : vector<16x256xf32>
    %cst_6 = arith.constant 2.000000e-01 : f32
    %7 = vector.broadcast %cst_6 : f32 to vector<16x256xf32>
    %8 = arith.mulf %7, %6 : vector<16x256xf32>
    %9 = arith.maximumf %6, %8 : vector<16x256xf32>
    %cst_7 = arith.constant 0.000000e+00 : f32
    %10 = vector.broadcast %cst_7 : f32 to vector<32x64xf32>
    %c0_8 = arith.constant 0 : index
    %c0_9 = arith.constant 0 : index
    %c0_10 = arith.constant 0 : index
    %11 = vector.load %arg7[%c0_8, %c0_9, %c0_10] : memref<9x256x64xf32, #tpu.memory_space<vmem>>, vector<1x256x64xf32>
    %12 = vector.shape_cast %11 : vector<1x256x64xf32> to vector<256x64xf32>
    %cst_11 = arith.constant dense<0.000000e+00> : vector<16x64xf32>
    %13 = tpu.matmul %9, %12, %cst_11 {dimension_numbers = #tpu.dot_dimension_numbers<[1], [0], [0], [1], [0, 0, 1, 1], [], []>} : vector<16x256xf32>, vector<256x64xf32>, vector<16x64xf32> -> vector<16x64xf32>
    %c0_12 = arith.constant 0 : index
    %c0_13 = arith.constant 0 : index
    %c0_14 = arith.constant 0 : index
    %14 = vector.load %arg4[%c0_12, %c0_13, %c0_14] : memref<9x32x16xf32, #tpu.memory_space<vmem>>, vector<1x32x16xf32>
    %15 = vector.shape_cast %14 : vector<1x32x16xf32> to vector<32x16xf32>
    %cst_15 = arith.constant dense<0.000000e+00> : vector<32x64xf32>
    %16 = tpu.matmul %15, %13, %cst_15 {dimension_numbers = #tpu.dot_dimension_numbers<[1], [0], [0], [1], [0, 0, 1, 1], [], []>} : vector<32x16xf32>, vector<16x64xf32>, vector<32x64xf32> -> vector<32x64xf32>
    %17 = arith.addf %10, %16 : vector<32x64xf32>
    %c1 = arith.constant 1 : index
    %c0_16 = arith.constant 0 : index
    %c0_17 = arith.constant 0 : index
    %18 = vector.load %arg7[%c1, %c0_16, %c0_17] : memref<9x256x64xf32, #tpu.memory_space<vmem>>, vector<1x256x64xf32>
    %19 = vector.shape_cast %18 : vector<1x256x64xf32> to vector<256x64xf32>
    %cst_18 = arith.constant dense<0.000000e+00> : vector<16x64xf32>
    %20 = tpu.matmul %9, %19, %cst_18 {dimension_numbers = #tpu.dot_dimension_numbers<[1], [0], [0], [1], [0, 0, 1, 1], [], []>} : vector<16x256xf32>, vector<256x64xf32>, vector<16x64xf32> -> vector<16x64xf32>
    %c1_19 = arith.constant 1 : index
    %c0_20 = arith.constant 0 : index
    %c0_21 = arith.constant 0 : index
    %21 = vector.load %arg4[%c1_19, %c0_20, %c0_21] : memref<9x32x16xf32, #tpu.memory_space<vmem>>, vector<1x32x16xf32>
    %22 = vector.shape_cast %21 : vector<1x32x16xf32> to vector<32x16xf32>
    %cst_22 = arith.constant dense<0.000000e+00> : vector<32x64xf32>
    %23 = tpu.matmul %22, %20, %cst_22 {dimension_numbers = #tpu.dot_dimension_numbers<[1], [0], [0], [1], [0, 0, 1, 1], [], []>} : vector<32x16xf32>, vector<16x64xf32>, vector<32x64xf32> -> vector<32x64xf32>
    %24 = arith.addf %17, %23 : vector<32x64xf32>
    %c2 = arith.constant 2 : index
    %c0_23 = arith.constant 0 : index
    %c0_24 = arith.constant 0 : index
    %25 = vector.load %arg7[%c2, %c0_23, %c0_24] : memref<9x256x64xf32, #tpu.memory_space<vmem>>, vector<1x256x64xf32>
    %26 = vector.shape_cast %25 : vector<1x256x64xf32> to vector<256x64xf32>
    %cst_25 = arith.constant dense<0.000000e+00> : vector<16x64xf32>
    %27 = tpu.matmul %9, %26, %cst_25 {dimension_numbers = #tpu.dot_dimension_numbers<[1], [0], [0], [1], [0, 0, 1, 1], [], []>} : vector<16x256xf32>, vector<256x64xf32>, vector<16x64xf32> -> vector<16x64xf32>
    %c2_26 = arith.constant 2 : index
    %c0_27 = arith.constant 0 : index
    %c0_28 = arith.constant 0 : index
    %28 = vector.load %arg4[%c2_26, %c0_27, %c0_28] : memref<9x32x16xf32, #tpu.memory_space<vmem>>, vector<1x32x16xf32>
    %29 = vector.shape_cast %28 : vector<1x32x16xf32> to vector<32x16xf32>
    %cst_29 = arith.constant dense<0.000000e+00> : vector<32x64xf32>
    %30 = tpu.matmul %29, %27, %cst_29 {dimension_numbers = #tpu.dot_dimension_numbers<[1], [0], [0], [1], [0, 0, 1, 1], [], []>} : vector<32x16xf32>, vector<16x64xf32>, vector<32x64xf32> -> vector<32x64xf32>
    %31 = arith.addf %24, %30 : vector<32x64xf32>
    %c3 = arith.constant 3 : index
    %c0_30 = arith.constant 0 : index
    %c0_31 = arith.constant 0 : index
    %32 = vector.load %arg7[%c3, %c0_30, %c0_31] : memref<9x256x64xf32, #tpu.memory_space<vmem>>, vector<1x256x64xf32>
    %33 = vector.shape_cast %32 : vector<1x256x64xf32> to vector<256x64xf32>
    %cst_32 = arith.constant dense<0.000000e+00> : vector<16x64xf32>
    %34 = tpu.matmul %9, %33, %cst_32 {dimension_numbers = #tpu.dot_dimension_numbers<[1], [0], [0], [1], [0, 0, 1, 1], [], []>} : vector<16x256xf32>, vector<256x64xf32>, vector<16x64xf32> -> vector<16x64xf32>
    %c3_33 = arith.constant 3 : index
    %c0_34 = arith.constant 0 : index
    %c0_35 = arith.constant 0 : index
    %35 = vector.load %arg4[%c3_33, %c0_34, %c0_35] : memref<9x32x16xf32, #tpu.memory_space<vmem>>, vector<1x32x16xf32>
    %36 = vector.shape_cast %35 : vector<1x32x16xf32> to vector<32x16xf32>
    %cst_36 = arith.constant dense<0.000000e+00> : vector<32x64xf32>
    %37 = tpu.matmul %36, %34, %cst_36 {dimension_numbers = #tpu.dot_dimension_numbers<[1], [0], [0], [1], [0, 0, 1, 1], [], []>} : vector<32x16xf32>, vector<16x64xf32>, vector<32x64xf32> -> vector<32x64xf32>
    %38 = arith.addf %31, %37 : vector<32x64xf32>
    %c4 = arith.constant 4 : index
    %c0_37 = arith.constant 0 : index
    %c0_38 = arith.constant 0 : index
    %39 = vector.load %arg7[%c4, %c0_37, %c0_38] : memref<9x256x64xf32, #tpu.memory_space<vmem>>, vector<1x256x64xf32>
    %40 = vector.shape_cast %39 : vector<1x256x64xf32> to vector<256x64xf32>
    %cst_39 = arith.constant dense<0.000000e+00> : vector<16x64xf32>
    %41 = tpu.matmul %9, %40, %cst_39 {dimension_numbers = #tpu.dot_dimension_numbers<[1], [0], [0], [1], [0, 0, 1, 1], [], []>} : vector<16x256xf32>, vector<256x64xf32>, vector<16x64xf32> -> vector<16x64xf32>
    %c4_40 = arith.constant 4 : index
    %c0_41 = arith.constant 0 : index
    %c0_42 = arith.constant 0 : index
    %42 = vector.load %arg4[%c4_40, %c0_41, %c0_42] : memref<9x32x16xf32, #tpu.memory_space<vmem>>, vector<1x32x16xf32>
    %43 = vector.shape_cast %42 : vector<1x32x16xf32> to vector<32x16xf32>
    %cst_43 = arith.constant dense<0.000000e+00> : vector<32x64xf32>
    %44 = tpu.matmul %43, %41, %cst_43 {dimension_numbers = #tpu.dot_dimension_numbers<[1], [0], [0], [1], [0, 0, 1, 1], [], []>} : vector<32x16xf32>, vector<16x64xf32>, vector<32x64xf32> -> vector<32x64xf32>
    %45 = arith.addf %38, %44 : vector<32x64xf32>
    %c5 = arith.constant 5 : index
    %c0_44 = arith.constant 0 : index
    %c0_45 = arith.constant 0 : index
    %46 = vector.load %arg7[%c5, %c0_44, %c0_45] : memref<9x256x64xf32, #tpu.memory_space<vmem>>, vector<1x256x64xf32>
    %47 = vector.shape_cast %46 : vector<1x256x64xf32> to vector<256x64xf32>
    %cst_46 = arith.constant dense<0.000000e+00> : vector<16x64xf32>
    %48 = tpu.matmul %9, %47, %cst_46 {dimension_numbers = #tpu.dot_dimension_numbers<[1], [0], [0], [1], [0, 0, 1, 1], [], []>} : vector<16x256xf32>, vector<256x64xf32>, vector<16x64xf32> -> vector<16x64xf32>
    %c5_47 = arith.constant 5 : index
    %c0_48 = arith.constant 0 : index
    %c0_49 = arith.constant 0 : index
    %49 = vector.load %arg4[%c5_47, %c0_48, %c0_49] : memref<9x32x16xf32, #tpu.memory_space<vmem>>, vector<1x32x16xf32>
    %50 = vector.shape_cast %49 : vector<1x32x16xf32> to vector<32x16xf32>
    %cst_50 = arith.constant dense<0.000000e+00> : vector<32x64xf32>
    %51 = tpu.matmul %50, %48, %cst_50 {dimension_numbers = #tpu.dot_dimension_numbers<[1], [0], [0], [1], [0, 0, 1, 1], [], []>} : vector<32x16xf32>, vector<16x64xf32>, vector<32x64xf32> -> vector<32x64xf32>
    %52 = arith.addf %45, %51 : vector<32x64xf32>
    %c6 = arith.constant 6 : index
    %c0_51 = arith.constant 0 : index
    %c0_52 = arith.constant 0 : index
    %53 = vector.load %arg7[%c6, %c0_51, %c0_52] : memref<9x256x64xf32, #tpu.memory_space<vmem>>, vector<1x256x64xf32>
    %54 = vector.shape_cast %53 : vector<1x256x64xf32> to vector<256x64xf32>
    %cst_53 = arith.constant dense<0.000000e+00> : vector<16x64xf32>
    %55 = tpu.matmul %9, %54, %cst_53 {dimension_numbers = #tpu.dot_dimension_numbers<[1], [0], [0], [1], [0, 0, 1, 1], [], []>} : vector<16x256xf32>, vector<256x64xf32>, vector<16x64xf32> -> vector<16x64xf32>
    %c6_54 = arith.constant 6 : index
    %c0_55 = arith.constant 0 : index
    %c0_56 = arith.constant 0 : index
    %56 = vector.load %arg4[%c6_54, %c0_55, %c0_56] : memref<9x32x16xf32, #tpu.memory_space<vmem>>, vector<1x32x16xf32>
    %57 = vector.shape_cast %56 : vector<1x32x16xf32> to vector<32x16xf32>
    %cst_57 = arith.constant dense<0.000000e+00> : vector<32x64xf32>
    %58 = tpu.matmul %57, %55, %cst_57 {dimension_numbers = #tpu.dot_dimension_numbers<[1], [0], [0], [1], [0, 0, 1, 1], [], []>} : vector<32x16xf32>, vector<16x64xf32>, vector<32x64xf32> -> vector<32x64xf32>
    %59 = arith.addf %52, %58 : vector<32x64xf32>
    %c7 = arith.constant 7 : index
    %c0_58 = arith.constant 0 : index
    %c0_59 = arith.constant 0 : index
    %60 = vector.load %arg7[%c7, %c0_58, %c0_59] : memref<9x256x64xf32, #tpu.memory_space<vmem>>, vector<1x256x64xf32>
    %61 = vector.shape_cast %60 : vector<1x256x64xf32> to vector<256x64xf32>
    %cst_60 = arith.constant dense<0.000000e+00> : vector<16x64xf32>
    %62 = tpu.matmul %9, %61, %cst_60 {dimension_numbers = #tpu.dot_dimension_numbers<[1], [0], [0], [1], [0, 0, 1, 1], [], []>} : vector<16x256xf32>, vector<256x64xf32>, vector<16x64xf32> -> vector<16x64xf32>
    %c7_61 = arith.constant 7 : index
    %c0_62 = arith.constant 0 : index
    %c0_63 = arith.constant 0 : index
    %63 = vector.load %arg4[%c7_61, %c0_62, %c0_63] : memref<9x32x16xf32, #tpu.memory_space<vmem>>, vector<1x32x16xf32>
    %64 = vector.shape_cast %63 : vector<1x32x16xf32> to vector<32x16xf32>
    %cst_64 = arith.constant dense<0.000000e+00> : vector<32x64xf32>
    %65 = tpu.matmul %64, %62, %cst_64 {dimension_numbers = #tpu.dot_dimension_numbers<[1], [0], [0], [1], [0, 0, 1, 1], [], []>} : vector<32x16xf32>, vector<16x64xf32>, vector<32x64xf32> -> vector<32x64xf32>
    %66 = arith.addf %59, %65 : vector<32x64xf32>
    %c8 = arith.constant 8 : index
    %c0_65 = arith.constant 0 : index
    %c0_66 = arith.constant 0 : index
    %67 = vector.load %arg7[%c8, %c0_65, %c0_66] : memref<9x256x64xf32, #tpu.memory_space<vmem>>, vector<1x256x64xf32>
    %68 = vector.shape_cast %67 : vector<1x256x64xf32> to vector<256x64xf32>
    %cst_67 = arith.constant dense<0.000000e+00> : vector<16x64xf32>
    %69 = tpu.matmul %9, %68, %cst_67 {dimension_numbers = #tpu.dot_dimension_numbers<[1], [0], [0], [1], [0, 0, 1, 1], [], []>} : vector<16x256xf32>, vector<256x64xf32>, vector<16x64xf32> -> vector<16x64xf32>
    %c8_68 = arith.constant 8 : index
    %c0_69 = arith.constant 0 : index
    %c0_70 = arith.constant 0 : index
    %70 = vector.load %arg4[%c8_68, %c0_69, %c0_70] : memref<9x32x16xf32, #tpu.memory_space<vmem>>, vector<1x32x16xf32>
    %71 = vector.shape_cast %70 : vector<1x32x16xf32> to vector<32x16xf32>
    %cst_71 = arith.constant dense<0.000000e+00> : vector<32x64xf32>
    %72 = tpu.matmul %71, %69, %cst_71 {dimension_numbers = #tpu.dot_dimension_numbers<[1], [0], [0], [1], [0, 0, 1, 1], [], []>} : vector<32x16xf32>, vector<16x64xf32>, vector<32x64xf32> -> vector<32x64xf32>
    %73 = arith.addf %66, %72 : vector<32x64xf32>
    %c0_72 = arith.constant 0 : index
    %c0_73 = arith.constant 0 : index
    %74 = vector.load %arg5[%c0_72, %c0_73] : memref<32x1xf32, #tpu.memory_space<vmem>>, vector<32x1xf32>
    %75 = vector.broadcast %74 : vector<32x1xf32> to vector<32x64xf32>
    %76 = arith.addf %73, %75 : vector<32x64xf32>
    %cst_74 = arith.constant 2.000000e-01 : f32
    %77 = vector.broadcast %cst_74 : f32 to vector<32x64xf32>
    %78 = arith.mulf %77, %76 : vector<32x64xf32>
    %79 = arith.maximumf %76, %78 : vector<32x64xf32>
    %c0_75 = arith.constant 0 : index
    %c0_76 = arith.constant 0 : index
    %80 = vector.load %arg6[%c0_75, %c0_76] : memref<32x1xf32, #tpu.memory_space<vmem>>, vector<32x1xf32>
    %81 = vector.broadcast %80 : vector<32x1xf32> to vector<32x64xf32>
    %82 = arith.addf %79, %81 : vector<32x64xf32>
    %cst_77 = arith.constant 0.000000e+00 : f32
    %83 = vector.broadcast %cst_77 : f32 to vector<64x16xf32>
    %c0_78 = arith.constant 0 : index
    %c0_79 = arith.constant 0 : index
    %c0_80 = arith.constant 0 : index
    %84 = vector.load %arg11[%c0_78, %c0_79, %c0_80] : memref<9x64x16xf32, #tpu.memory_space<vmem>>, vector<1x64x16xf32>
    %85 = vector.shape_cast %84 : vector<1x64x16xf32> to vector<64x16xf32>
    %cst_81 = arith.constant dense<0.000000e+00> : vector<32x16xf32>
    %86 = tpu.matmul %82, %85, %cst_81 {dimension_numbers = #tpu.dot_dimension_numbers<[1], [0], [0], [1], [0, 0, 1, 1], [], []>} : vector<32x64xf32>, vector<64x16xf32>, vector<32x16xf32> -> vector<32x16xf32>
    %c0_82 = arith.constant 0 : index
    %c0_83 = arith.constant 0 : index
    %c0_84 = arith.constant 0 : index
    %87 = vector.load %arg8[%c0_82, %c0_83, %c0_84] : memref<9x64x32xf32, #tpu.memory_space<vmem>>, vector<1x64x32xf32>
    %88 = vector.shape_cast %87 : vector<1x64x32xf32> to vector<64x32xf32>
    %cst_85 = arith.constant dense<0.000000e+00> : vector<64x16xf32>
    %89 = tpu.matmul %88, %86, %cst_85 {dimension_numbers = #tpu.dot_dimension_numbers<[1], [0], [0], [1], [0, 0, 1, 1], [], []>} : vector<64x32xf32>, vector<32x16xf32>, vector<64x16xf32> -> vector<64x16xf32>
    %90 = arith.addf %83, %89 : vector<64x16xf32>
    %c1_86 = arith.constant 1 : index
    %c0_87 = arith.constant 0 : index
    %c0_88 = arith.constant 0 : index
    %91 = vector.load %arg11[%c1_86, %c0_87, %c0_88] : memref<9x64x16xf32, #tpu.memory_space<vmem>>, vector<1x64x16xf32>
    %92 = vector.shape_cast %91 : vector<1x64x16xf32> to vector<64x16xf32>
    %cst_89 = arith.constant dense<0.000000e+00> : vector<32x16xf32>
    %93 = tpu.matmul %82, %92, %cst_89 {dimension_numbers = #tpu.dot_dimension_numbers<[1], [0], [0], [1], [0, 0, 1, 1], [], []>} : vector<32x64xf32>, vector<64x16xf32>, vector<32x16xf32> -> vector<32x16xf32>
    %c1_90 = arith.constant 1 : index
    %c0_91 = arith.constant 0 : index
    %c0_92 = arith.constant 0 : index
    %94 = vector.load %arg8[%c1_90, %c0_91, %c0_92] : memref<9x64x32xf32, #tpu.memory_space<vmem>>, vector<1x64x32xf32>
    %95 = vector.shape_cast %94 : vector<1x64x32xf32> to vector<64x32xf32>
    %cst_93 = arith.constant dense<0.000000e+00> : vector<64x16xf32>
    %96 = tpu.matmul %95, %93, %cst_93 {dimension_numbers = #tpu.dot_dimension_numbers<[1], [0], [0], [1], [0, 0, 1, 1], [], []>} : vector<64x32xf32>, vector<32x16xf32>, vector<64x16xf32> -> vector<64x16xf32>
    %97 = arith.addf %90, %96 : vector<64x16xf32>
    %c2_94 = arith.constant 2 : index
    %c0_95 = arith.constant 0 : index
    %c0_96 = arith.constant 0 : index
    %98 = vector.load %arg11[%c2_94, %c0_95, %c0_96] : memref<9x64x16xf32, #tpu.memory_space<vmem>>, vector<1x64x16xf32>
    %99 = vector.shape_cast %98 : vector<1x64x16xf32> to vector<64x16xf32>
    %cst_97 = arith.constant dense<0.000000e+00> : vector<32x16xf32>
    %100 = tpu.matmul %82, %99, %cst_97 {dimension_numbers = #tpu.dot_dimension_numbers<[1], [0], [0], [1], [0, 0, 1, 1], [], []>} : vector<32x64xf32>, vector<64x16xf32>, vector<32x16xf32> -> vector<32x16xf32>
    %c2_98 = arith.constant 2 : index
    %c0_99 = arith.constant 0 : index
    %c0_100 = arith.constant 0 : index
    %101 = vector.load %arg8[%c2_98, %c0_99, %c0_100] : memref<9x64x32xf32, #tpu.memory_space<vmem>>, vector<1x64x32xf32>
    %102 = vector.shape_cast %101 : vector<1x64x32xf32> to vector<64x32xf32>
    %cst_101 = arith.constant dense<0.000000e+00> : vector<64x16xf32>
    %103 = tpu.matmul %102, %100, %cst_101 {dimension_numbers = #tpu.dot_dimension_numbers<[1], [0], [0], [1], [0, 0, 1, 1], [], []>} : vector<64x32xf32>, vector<32x16xf32>, vector<64x16xf32> -> vector<64x16xf32>
    %104 = arith.addf %97, %103 : vector<64x16xf32>
    %c3_102 = arith.constant 3 : index
    %c0_103 = arith.constant 0 : index
    %c0_104 = arith.constant 0 : index
    %105 = vector.load %arg11[%c3_102, %c0_103, %c0_104] : memref<9x64x16xf32, #tpu.memory_space<vmem>>, vector<1x64x16xf32>
    %106 = vector.shape_cast %105 : vector<1x64x16xf32> to vector<64x16xf32>
    %cst_105 = arith.constant dense<0.000000e+00> : vector<32x16xf32>
    %107 = tpu.matmul %82, %106, %cst_105 {dimension_numbers = #tpu.dot_dimension_numbers<[1], [0], [0], [1], [0, 0, 1, 1], [], []>} : vector<32x64xf32>, vector<64x16xf32>, vector<32x16xf32> -> vector<32x16xf32>
    %c3_106 = arith.constant 3 : index
    %c0_107 = arith.constant 0 : index
    %c0_108 = arith.constant 0 : index
    %108 = vector.load %arg8[%c3_106, %c0_107, %c0_108] : memref<9x64x32xf32, #tpu.memory_space<vmem>>, vector<1x64x32xf32>
    %109 = vector.shape_cast %108 : vector<1x64x32xf32> to vector<64x32xf32>
    %cst_109 = arith.constant dense<0.000000e+00> : vector<64x16xf32>
    %110 = tpu.matmul %109, %107, %cst_109 {dimension_numbers = #tpu.dot_dimension_numbers<[1], [0], [0], [1], [0, 0, 1, 1], [], []>} : vector<64x32xf32>, vector<32x16xf32>, vector<64x16xf32> -> vector<64x16xf32>
    %111 = arith.addf %104, %110 : vector<64x16xf32>
    %c4_110 = arith.constant 4 : index
    %c0_111 = arith.constant 0 : index
    %c0_112 = arith.constant 0 : index
    %112 = vector.load %arg11[%c4_110, %c0_111, %c0_112] : memref<9x64x16xf32, #tpu.memory_space<vmem>>, vector<1x64x16xf32>
    %113 = vector.shape_cast %112 : vector<1x64x16xf32> to vector<64x16xf32>
    %cst_113 = arith.constant dense<0.000000e+00> : vector<32x16xf32>
    %114 = tpu.matmul %82, %113, %cst_113 {dimension_numbers = #tpu.dot_dimension_numbers<[1], [0], [0], [1], [0, 0, 1, 1], [], []>} : vector<32x64xf32>, vector<64x16xf32>, vector<32x16xf32> -> vector<32x16xf32>
    %c4_114 = arith.constant 4 : index
    %c0_115 = arith.constant 0 : index
    %c0_116 = arith.constant 0 : index
    %115 = vector.load %arg8[%c4_114, %c0_115, %c0_116] : memref<9x64x32xf32, #tpu.memory_space<vmem>>, vector<1x64x32xf32>
    %116 = vector.shape_cast %115 : vector<1x64x32xf32> to vector<64x32xf32>
    %cst_117 = arith.constant dense<0.000000e+00> : vector<64x16xf32>
    %117 = tpu.matmul %116, %114, %cst_117 {dimension_numbers = #tpu.dot_dimension_numbers<[1], [0], [0], [1], [0, 0, 1, 1], [], []>} : vector<64x32xf32>, vector<32x16xf32>, vector<64x16xf32> -> vector<64x16xf32>
    %118 = arith.addf %111, %117 : vector<64x16xf32>
    %c5_118 = arith.constant 5 : index
    %c0_119 = arith.constant 0 : index
    %c0_120 = arith.constant 0 : index
    %119 = vector.load %arg11[%c5_118, %c0_119, %c0_120] : memref<9x64x16xf32, #tpu.memory_space<vmem>>, vector<1x64x16xf32>
    %120 = vector.shape_cast %119 : vector<1x64x16xf32> to vector<64x16xf32>
    %cst_121 = arith.constant dense<0.000000e+00> : vector<32x16xf32>
    %121 = tpu.matmul %82, %120, %cst_121 {dimension_numbers = #tpu.dot_dimension_numbers<[1], [0], [0], [1], [0, 0, 1, 1], [], []>} : vector<32x64xf32>, vector<64x16xf32>, vector<32x16xf32> -> vector<32x16xf32>
    %c5_122 = arith.constant 5 : index
    %c0_123 = arith.constant 0 : index
    %c0_124 = arith.constant 0 : index
    %122 = vector.load %arg8[%c5_122, %c0_123, %c0_124] : memref<9x64x32xf32, #tpu.memory_space<vmem>>, vector<1x64x32xf32>
    %123 = vector.shape_cast %122 : vector<1x64x32xf32> to vector<64x32xf32>
    %cst_125 = arith.constant dense<0.000000e+00> : vector<64x16xf32>
    %124 = tpu.matmul %123, %121, %cst_125 {dimension_numbers = #tpu.dot_dimension_numbers<[1], [0], [0], [1], [0, 0, 1, 1], [], []>} : vector<64x32xf32>, vector<32x16xf32>, vector<64x16xf32> -> vector<64x16xf32>
    %125 = arith.addf %118, %124 : vector<64x16xf32>
    %c6_126 = arith.constant 6 : index
    %c0_127 = arith.constant 0 : index
    %c0_128 = arith.constant 0 : index
    %126 = vector.load %arg11[%c6_126, %c0_127, %c0_128] : memref<9x64x16xf32, #tpu.memory_space<vmem>>, vector<1x64x16xf32>
    %127 = vector.shape_cast %126 : vector<1x64x16xf32> to vector<64x16xf32>
    %cst_129 = arith.constant dense<0.000000e+00> : vector<32x16xf32>
    %128 = tpu.matmul %82, %127, %cst_129 {dimension_numbers = #tpu.dot_dimension_numbers<[1], [0], [0], [1], [0, 0, 1, 1], [], []>} : vector<32x64xf32>, vector<64x16xf32>, vector<32x16xf32> -> vector<32x16xf32>
    %c6_130 = arith.constant 6 : index
    %c0_131 = arith.constant 0 : index
    %c0_132 = arith.constant 0 : index
    %129 = vector.load %arg8[%c6_130, %c0_131, %c0_132] : memref<9x64x32xf32, #tpu.memory_space<vmem>>, vector<1x64x32xf32>
    %130 = vector.shape_cast %129 : vector<1x64x32xf32> to vector<64x32xf32>
    %cst_133 = arith.constant dense<0.000000e+00> : vector<64x16xf32>
    %131 = tpu.matmul %130, %128, %cst_133 {dimension_numbers = #tpu.dot_dimension_numbers<[1], [0], [0], [1], [0, 0, 1, 1], [], []>} : vector<64x32xf32>, vector<32x16xf32>, vector<64x16xf32> -> vector<64x16xf32>
    %132 = arith.addf %125, %131 : vector<64x16xf32>
    %c7_134 = arith.constant 7 : index
    %c0_135 = arith.constant 0 : index
    %c0_136 = arith.constant 0 : index
    %133 = vector.load %arg11[%c7_134, %c0_135, %c0_136] : memref<9x64x16xf32, #tpu.memory_space<vmem>>, vector<1x64x16xf32>
    %134 = vector.shape_cast %133 : vector<1x64x16xf32> to vector<64x16xf32>
    %cst_137 = arith.constant dense<0.000000e+00> : vector<32x16xf32>
    %135 = tpu.matmul %82, %134, %cst_137 {dimension_numbers = #tpu.dot_dimension_numbers<[1], [0], [0], [1], [0, 0, 1, 1], [], []>} : vector<32x64xf32>, vector<64x16xf32>, vector<32x16xf32> -> vector<32x16xf32>
    %c7_138 = arith.constant 7 : index
    %c0_139 = arith.constant 0 : index
    %c0_140 = arith.constant 0 : index
    %136 = vector.load %arg8[%c7_138, %c0_139, %c0_140] : memref<9x64x32xf32, #tpu.memory_space<vmem>>, vector<1x64x32xf32>
    %137 = vector.shape_cast %136 : vector<1x64x32xf32> to vector<64x32xf32>
    %cst_141 = arith.constant dense<0.000000e+00> : vector<64x16xf32>
    %138 = tpu.matmul %137, %135, %cst_141 {dimension_numbers = #tpu.dot_dimension_numbers<[1], [0], [0], [1], [0, 0, 1, 1], [], []>} : vector<64x32xf32>, vector<32x16xf32>, vector<64x16xf32> -> vector<64x16xf32>
    %139 = arith.addf %132, %138 : vector<64x16xf32>
    %c8_142 = arith.constant 8 : index
    %c0_143 = arith.constant 0 : index
    %c0_144 = arith.constant 0 : index
    %140 = vector.load %arg11[%c8_142, %c0_143, %c0_144] : memref<9x64x16xf32, #tpu.memory_space<vmem>>, vector<1x64x16xf32>
    %141 = vector.shape_cast %140 : vector<1x64x16xf32> to vector<64x16xf32>
    %cst_145 = arith.constant dense<0.000000e+00> : vector<32x16xf32>
    %142 = tpu.matmul %82, %141, %cst_145 {dimension_numbers = #tpu.dot_dimension_numbers<[1], [0], [0], [1], [0, 0, 1, 1], [], []>} : vector<32x64xf32>, vector<64x16xf32>, vector<32x16xf32> -> vector<32x16xf32>
    %c8_146 = arith.constant 8 : index
    %c0_147 = arith.constant 0 : index
    %c0_148 = arith.constant 0 : index
    %143 = vector.load %arg8[%c8_146, %c0_147, %c0_148] : memref<9x64x32xf32, #tpu.memory_space<vmem>>, vector<1x64x32xf32>
    %144 = vector.shape_cast %143 : vector<1x64x32xf32> to vector<64x32xf32>
    %cst_149 = arith.constant dense<0.000000e+00> : vector<64x16xf32>
    %145 = tpu.matmul %144, %142, %cst_149 {dimension_numbers = #tpu.dot_dimension_numbers<[1], [0], [0], [1], [0, 0, 1, 1], [], []>} : vector<64x32xf32>, vector<32x16xf32>, vector<64x16xf32> -> vector<64x16xf32>
    %146 = arith.addf %139, %145 : vector<64x16xf32>
    %c0_150 = arith.constant 0 : index
    %c0_151 = arith.constant 0 : index
    %147 = vector.load %arg9[%c0_150, %c0_151] : memref<64x1xf32, #tpu.memory_space<vmem>>, vector<64x1xf32>
    %148 = vector.broadcast %147 : vector<64x1xf32> to vector<64x16xf32>
    %149 = arith.addf %146, %148 : vector<64x16xf32>
    %cst_152 = arith.constant 2.000000e-01 : f32
    %150 = vector.broadcast %cst_152 : f32 to vector<64x16xf32>
    %151 = arith.mulf %150, %149 : vector<64x16xf32>
    %152 = arith.maximumf %149, %151 : vector<64x16xf32>
    %c0_153 = arith.constant 0 : index
    %c0_154 = arith.constant 0 : index
    %153 = vector.load %arg10[%c0_153, %c0_154] : memref<64x1xf32, #tpu.memory_space<vmem>>, vector<64x1xf32>
    %154 = vector.broadcast %153 : vector<64x1xf32> to vector<64x16xf32>
    %155 = arith.addf %152, %154 : vector<64x16xf32>
    %cst_155 = arith.constant 0.000000e+00 : f32
    %156 = vector.broadcast %cst_155 : f32 to vector<128x4xf32>
    %c0_156 = arith.constant 0 : index
    %c0_157 = arith.constant 0 : index
    %c0_158 = arith.constant 0 : index
    %157 = vector.load %arg15[%c0_156, %c0_157, %c0_158] : memref<9x16x4xf32, #tpu.memory_space<vmem>>, vector<1x16x4xf32>
    %158 = vector.shape_cast %157 : vector<1x16x4xf32> to vector<16x4xf32>
    %cst_159 = arith.constant dense<0.000000e+00> : vector<64x4xf32>
    %159 = tpu.matmul %155, %158, %cst_159 {dimension_numbers = #tpu.dot_dimension_numbers<[1], [0], [0], [1], [0, 0, 1, 1], [], []>} : vector<64x16xf32>, vector<16x4xf32>, vector<64x4xf32> -> vector<64x4xf32>
    %c0_160 = arith.constant 0 : index
    %c0_161 = arith.constant 0 : index
    %c0_162 = arith.constant 0 : index
    %160 = vector.load %arg12[%c0_160, %c0_161, %c0_162] : memref<9x128x64xf32, #tpu.memory_space<vmem>>, vector<1x128x64xf32>
    %161 = vector.shape_cast %160 : vector<1x128x64xf32> to vector<128x64xf32>
    %cst_163 = arith.constant dense<0.000000e+00> : vector<128x4xf32>
    %162 = tpu.matmul %161, %159, %cst_163 {dimension_numbers = #tpu.dot_dimension_numbers<[1], [0], [0], [1], [0, 0, 1, 1], [], []>} : vector<128x64xf32>, vector<64x4xf32>, vector<128x4xf32> -> vector<128x4xf32>
    %163 = arith.addf %156, %162 : vector<128x4xf32>
    %c1_164 = arith.constant 1 : index
    %c0_165 = arith.constant 0 : index
    %c0_166 = arith.constant 0 : index
    %164 = vector.load %arg15[%c1_164, %c0_165, %c0_166] : memref<9x16x4xf32, #tpu.memory_space<vmem>>, vector<1x16x4xf32>
    %165 = vector.shape_cast %164 : vector<1x16x4xf32> to vector<16x4xf32>
    %cst_167 = arith.constant dense<0.000000e+00> : vector<64x4xf32>
    %166 = tpu.matmul %155, %165, %cst_167 {dimension_numbers = #tpu.dot_dimension_numbers<[1], [0], [0], [1], [0, 0, 1, 1], [], []>} : vector<64x16xf32>, vector<16x4xf32>, vector<64x4xf32> -> vector<64x4xf32>
    %c1_168 = arith.constant 1 : index
    %c0_169 = arith.constant 0 : index
    %c0_170 = arith.constant 0 : index
    %167 = vector.load %arg12[%c1_168, %c0_169, %c0_170] : memref<9x128x64xf32, #tpu.memory_space<vmem>>, vector<1x128x64xf32>
    %168 = vector.shape_cast %167 : vector<1x128x64xf32> to vector<128x64xf32>
    %cst_171 = arith.constant dense<0.000000e+00> : vector<128x4xf32>
    %169 = tpu.matmul %168, %166, %cst_171 {dimension_numbers = #tpu.dot_dimension_numbers<[1], [0], [0], [1], [0, 0, 1, 1], [], []>} : vector<128x64xf32>, vector<64x4xf32>, vector<128x4xf32> -> vector<128x4xf32>
    %170 = arith.addf %163, %169 : vector<128x4xf32>
    %c2_172 = arith.constant 2 : index
    %c0_173 = arith.constant 0 : index
    %c0_174 = arith.constant 0 : index
    %171 = vector.load %arg15[%c2_172, %c0_173, %c0_174] : memref<9x16x4xf32, #tpu.memory_space<vmem>>, vector<1x16x4xf32>
    %172 = vector.shape_cast %171 : vector<1x16x4xf32> to vector<16x4xf32>
    %cst_175 = arith.constant dense<0.000000e+00> : vector<64x4xf32>
    %173 = tpu.matmul %155, %172, %cst_175 {dimension_numbers = #tpu.dot_dimension_numbers<[1], [0], [0], [1], [0, 0, 1, 1], [], []>} : vector<64x16xf32>, vector<16x4xf32>, vector<64x4xf32> -> vector<64x4xf32>
    %c2_176 = arith.constant 2 : index
    %c0_177 = arith.constant 0 : index
    %c0_178 = arith.constant 0 : index
    %174 = vector.load %arg12[%c2_176, %c0_177, %c0_178] : memref<9x128x64xf32, #tpu.memory_space<vmem>>, vector<1x128x64xf32>
    %175 = vector.shape_cast %174 : vector<1x128x64xf32> to vector<128x64xf32>
    %cst_179 = arith.constant dense<0.000000e+00> : vector<128x4xf32>
    %176 = tpu.matmul %175, %173, %cst_179 {dimension_numbers = #tpu.dot_dimension_numbers<[1], [0], [0], [1], [0, 0, 1, 1], [], []>} : vector<128x64xf32>, vector<64x4xf32>, vector<128x4xf32> -> vector<128x4xf32>
    %177 = arith.addf %170, %176 : vector<128x4xf32>
    %c3_180 = arith.constant 3 : index
    %c0_181 = arith.constant 0 : index
    %c0_182 = arith.constant 0 : index
    %178 = vector.load %arg15[%c3_180, %c0_181, %c0_182] : memref<9x16x4xf32, #tpu.memory_space<vmem>>, vector<1x16x4xf32>
    %179 = vector.shape_cast %178 : vector<1x16x4xf32> to vector<16x4xf32>
    %cst_183 = arith.constant dense<0.000000e+00> : vector<64x4xf32>
    %180 = tpu.matmul %155, %179, %cst_183 {dimension_numbers = #tpu.dot_dimension_numbers<[1], [0], [0], [1], [0, 0, 1, 1], [], []>} : vector<64x16xf32>, vector<16x4xf32>, vector<64x4xf32> -> vector<64x4xf32>
    %c3_184 = arith.constant 3 : index
    %c0_185 = arith.constant 0 : index
    %c0_186 = arith.constant 0 : index
    %181 = vector.load %arg12[%c3_184, %c0_185, %c0_186] : memref<9x128x64xf32, #tpu.memory_space<vmem>>, vector<1x128x64xf32>
    %182 = vector.shape_cast %181 : vector<1x128x64xf32> to vector<128x64xf32>
    %cst_187 = arith.constant dense<0.000000e+00> : vector<128x4xf32>
    %183 = tpu.matmul %182, %180, %cst_187 {dimension_numbers = #tpu.dot_dimension_numbers<[1], [0], [0], [1], [0, 0, 1, 1], [], []>} : vector<128x64xf32>, vector<64x4xf32>, vector<128x4xf32> -> vector<128x4xf32>
    %184 = arith.addf %177, %183 : vector<128x4xf32>
    %c4_188 = arith.constant 4 : index
    %c0_189 = arith.constant 0 : index
    %c0_190 = arith.constant 0 : index
    %185 = vector.load %arg15[%c4_188, %c0_189, %c0_190] : memref<9x16x4xf32, #tpu.memory_space<vmem>>, vector<1x16x4xf32>
    %186 = vector.shape_cast %185 : vector<1x16x4xf32> to vector<16x4xf32>
    %cst_191 = arith.constant dense<0.000000e+00> : vector<64x4xf32>
    %187 = tpu.matmul %155, %186, %cst_191 {dimension_numbers = #tpu.dot_dimension_numbers<[1], [0], [0], [1], [0, 0, 1, 1], [], []>} : vector<64x16xf32>, vector<16x4xf32>, vector<64x4xf32> -> vector<64x4xf32>
    %c4_192 = arith.constant 4 : index
    %c0_193 = arith.constant 0 : index
    %c0_194 = arith.constant 0 : index
    %188 = vector.load %arg12[%c4_192, %c0_193, %c0_194] : memref<9x128x64xf32, #tpu.memory_space<vmem>>, vector<1x128x64xf32>
    %189 = vector.shape_cast %188 : vector<1x128x64xf32> to vector<128x64xf32>
    %cst_195 = arith.constant dense<0.000000e+00> : vector<128x4xf32>
    %190 = tpu.matmul %189, %187, %cst_195 {dimension_numbers = #tpu.dot_dimension_numbers<[1], [0], [0], [1], [0, 0, 1, 1], [], []>} : vector<128x64xf32>, vector<64x4xf32>, vector<128x4xf32> -> vector<128x4xf32>
    %191 = arith.addf %184, %190 : vector<128x4xf32>
    %c5_196 = arith.constant 5 : index
    %c0_197 = arith.constant 0 : index
    %c0_198 = arith.constant 0 : index
    %192 = vector.load %arg15[%c5_196, %c0_197, %c0_198] : memref<9x16x4xf32, #tpu.memory_space<vmem>>, vector<1x16x4xf32>
    %193 = vector.shape_cast %192 : vector<1x16x4xf32> to vector<16x4xf32>
    %cst_199 = arith.constant dense<0.000000e+00> : vector<64x4xf32>
    %194 = tpu.matmul %155, %193, %cst_199 {dimension_numbers = #tpu.dot_dimension_numbers<[1], [0], [0], [1], [0, 0, 1, 1], [], []>} : vector<64x16xf32>, vector<16x4xf32>, vector<64x4xf32> -> vector<64x4xf32>
    %c5_200 = arith.constant 5 : index
    %c0_201 = arith.constant 0 : index
    %c0_202 = arith.constant 0 : index
    %195 = vector.load %arg12[%c5_200, %c0_201, %c0_202] : memref<9x128x64xf32, #tpu.memory_space<vmem>>, vector<1x128x64xf32>
    %196 = vector.shape_cast %195 : vector<1x128x64xf32> to vector<128x64xf32>
    %cst_203 = arith.constant dense<0.000000e+00> : vector<128x4xf32>
    %197 = tpu.matmul %196, %194, %cst_203 {dimension_numbers = #tpu.dot_dimension_numbers<[1], [0], [0], [1], [0, 0, 1, 1], [], []>} : vector<128x64xf32>, vector<64x4xf32>, vector<128x4xf32> -> vector<128x4xf32>
    %198 = arith.addf %191, %197 : vector<128x4xf32>
    %c6_204 = arith.constant 6 : index
    %c0_205 = arith.constant 0 : index
    %c0_206 = arith.constant 0 : index
    %199 = vector.load %arg15[%c6_204, %c0_205, %c0_206] : memref<9x16x4xf32, #tpu.memory_space<vmem>>, vector<1x16x4xf32>
    %200 = vector.shape_cast %199 : vector<1x16x4xf32> to vector<16x4xf32>
    %cst_207 = arith.constant dense<0.000000e+00> : vector<64x4xf32>
    %201 = tpu.matmul %155, %200, %cst_207 {dimension_numbers = #tpu.dot_dimension_numbers<[1], [0], [0], [1], [0, 0, 1, 1], [], []>} : vector<64x16xf32>, vector<16x4xf32>, vector<64x4xf32> -> vector<64x4xf32>
    %c6_208 = arith.constant 6 : index
    %c0_209 = arith.constant 0 : index
    %c0_210 = arith.constant 0 : index
    %202 = vector.load %arg12[%c6_208, %c0_209, %c0_210] : memref<9x128x64xf32, #tpu.memory_space<vmem>>, vector<1x128x64xf32>
    %203 = vector.shape_cast %202 : vector<1x128x64xf32> to vector<128x64xf32>
    %cst_211 = arith.constant dense<0.000000e+00> : vector<128x4xf32>
    %204 = tpu.matmul %203, %201, %cst_211 {dimension_numbers = #tpu.dot_dimension_numbers<[1], [0], [0], [1], [0, 0, 1, 1], [], []>} : vector<128x64xf32>, vector<64x4xf32>, vector<128x4xf32> -> vector<128x4xf32>
    %205 = arith.addf %198, %204 : vector<128x4xf32>
    %c7_212 = arith.constant 7 : index
    %c0_213 = arith.constant 0 : index
    %c0_214 = arith.constant 0 : index
    %206 = vector.load %arg15[%c7_212, %c0_213, %c0_214] : memref<9x16x4xf32, #tpu.memory_space<vmem>>, vector<1x16x4xf32>
    %207 = vector.shape_cast %206 : vector<1x16x4xf32> to vector<16x4xf32>
    %cst_215 = arith.constant dense<0.000000e+00> : vector<64x4xf32>
    %208 = tpu.matmul %155, %207, %cst_215 {dimension_numbers = #tpu.dot_dimension_numbers<[1], [0], [0], [1], [0, 0, 1, 1], [], []>} : vector<64x16xf32>, vector<16x4xf32>, vector<64x4xf32> -> vector<64x4xf32>
    %c7_216 = arith.constant 7 : index
    %c0_217 = arith.constant 0 : index
    %c0_218 = arith.constant 0 : index
    %209 = vector.load %arg12[%c7_216, %c0_217, %c0_218] : memref<9x128x64xf32, #tpu.memory_space<vmem>>, vector<1x128x64xf32>
    %210 = vector.shape_cast %209 : vector<1x128x64xf32> to vector<128x64xf32>
    %cst_219 = arith.constant dense<0.000000e+00> : vector<128x4xf32>
    %211 = tpu.matmul %210, %208, %cst_219 {dimension_numbers = #tpu.dot_dimension_numbers<[1], [0], [0], [1], [0, 0, 1, 1], [], []>} : vector<128x64xf32>, vector<64x4xf32>, vector<128x4xf32> -> vector<128x4xf32>
    %212 = arith.addf %205, %211 : vector<128x4xf32>
    %c8_220 = arith.constant 8 : index
    %c0_221 = arith.constant 0 : index
    %c0_222 = arith.constant 0 : index
    %213 = vector.load %arg15[%c8_220, %c0_221, %c0_222] : memref<9x16x4xf32, #tpu.memory_space<vmem>>, vector<1x16x4xf32>
    %214 = vector.shape_cast %213 : vector<1x16x4xf32> to vector<16x4xf32>
    %cst_223 = arith.constant dense<0.000000e+00> : vector<64x4xf32>
    %215 = tpu.matmul %155, %214, %cst_223 {dimension_numbers = #tpu.dot_dimension_numbers<[1], [0], [0], [1], [0, 0, 1, 1], [], []>} : vector<64x16xf32>, vector<16x4xf32>, vector<64x4xf32> -> vector<64x4xf32>
    %c8_224 = arith.constant 8 : index
    %c0_225 = arith.constant 0 : index
    %c0_226 = arith.constant 0 : index
    %216 = vector.load %arg12[%c8_224, %c0_225, %c0_226] : memref<9x128x64xf32, #tpu.memory_space<vmem>>, vector<1x128x64xf32>
    %217 = vector.shape_cast %216 : vector<1x128x64xf32> to vector<128x64xf32>
    %cst_227 = arith.constant dense<0.000000e+00> : vector<128x4xf32>
    %218 = tpu.matmul %217, %215, %cst_227 {dimension_numbers = #tpu.dot_dimension_numbers<[1], [0], [0], [1], [0, 0, 1, 1], [], []>} : vector<128x64xf32>, vector<64x4xf32>, vector<128x4xf32> -> vector<128x4xf32>
    %219 = arith.addf %212, %218 : vector<128x4xf32>
    %c0_228 = arith.constant 0 : index
    %c0_229 = arith.constant 0 : index
    %220 = vector.load %arg13[%c0_228, %c0_229] : memref<128x1xf32, #tpu.memory_space<vmem>>, vector<128x1xf32>
    %221 = vector.broadcast %220 : vector<128x1xf32> to vector<128x4xf32>
    %222 = arith.addf %219, %221 : vector<128x4xf32>
    %cst_230 = arith.constant 2.000000e-01 : f32
    %223 = vector.broadcast %cst_230 : f32 to vector<128x4xf32>
    %224 = arith.mulf %223, %222 : vector<128x4xf32>
    %225 = arith.maximumf %222, %224 : vector<128x4xf32>
    %c0_231 = arith.constant 0 : index
    %c0_232 = arith.constant 0 : index
    %226 = vector.load %arg14[%c0_231, %c0_232] : memref<128x1xf32, #tpu.memory_space<vmem>>, vector<128x1xf32>
    %227 = vector.broadcast %226 : vector<128x1xf32> to vector<128x4xf32>
    %228 = arith.addf %225, %227 : vector<128x4xf32>
    %c0_233 = arith.constant 0 : index
    %c0_234 = arith.constant 0 : index
    %229 = vector.load %arg16[%c0_233, %c0_234] : memref<128x4xf32, #tpu.memory_space<vmem>>, vector<128x4xf32>
    %230 = arith.mulf %228, %229 : vector<128x4xf32>
    %cst_235 = arith.constant dense<0.000000e+00> : vector<128xf32>
    %231 = vector.multi_reduction <add>, %230, %cst_235 [1] : vector<128x4xf32> to vector<128xf32>
    %232 = vector.shape_cast %231 : vector<128xf32> to vector<128x1xf32>
    %cst_236 = arith.constant dense<0.000000e+00> : vector<1xf32>
    %233 = vector.multi_reduction <add>, %232, %cst_236 [0] : vector<128x1xf32> to vector<1xf32>
    %234 = vector.shape_cast %233 : vector<1xf32> to vector<1x1xf32>
    %c0_237 = arith.constant 0 : index
    %c0_238 = arith.constant 0 : index
    %235 = vector.load %arg17[%c0_237, %c0_238] : memref<1x1xf32, #tpu.memory_space<vmem>>, vector<1x1xf32>
    %236 = arith.addf %234, %235 : vector<1x1xf32>
    %cst_239 = arith.constant 0.000000e+00 : f32
    %237 = vector.broadcast %cst_239 : f32 to vector<1x1xf32>
    %238 = arith.subf %237, %236 : vector<1x1xf32>
    %239 = math.exp %238 : vector<1x1xf32>
    %cst_240 = arith.constant 1.000000e+00 : f32
    %240 = vector.broadcast %cst_240 : f32 to vector<1x1xf32>
    %241 = arith.addf %240, %239 : vector<1x1xf32>
    %cst_241 = arith.constant 1.000000e+00 : f32
    %242 = vector.broadcast %cst_241 : f32 to vector<1x1xf32>
    %243 = arith.divf %242, %241 : vector<1x1xf32>
    %c0_242 = arith.constant 0 : index
    %c0_243 = arith.constant 0 : index
    %c0_244 = arith.constant 0 : index
    %244 = vector.load %arg18[%c0_242, %c0_243, %c0_244] : memref<1x1x1xf32, #tpu.memory_space<vmem>>, vector<1x1x1xf32>
    %245 = vector.shape_cast %244 : vector<1x1x1xf32> to vector<1x1xf32>
    %246 = vector.shape_cast %243 : vector<1x1xf32> to vector<1x1x1xf32>
    tpu.vector_store %arg18[%c0_242, %c0_243, %c0_244], %246 {strides = array<i32>} : memref<1x1x1xf32, #tpu.memory_space<vmem>>, vector<1x1x1xf32>,
    return
  }
  func.func @transform_0(%arg0: i32) -> (i32, i32, i32) {
    %c0_i32 = arith.constant 0 : i32
    %c0_i32_0 = arith.constant 0 : i32
    %c0_i32_1 = arith.constant 0 : i32
    return %arg0, %c0_i32, %c0_i32_0 : i32, i32, i32
  }
  func.func @transform_1(%arg0: i32) -> (i32, i32) {
    %c0_i32 = arith.constant 0 : i32
    %c0_i32_0 = arith.constant 0 : i32
    %c0_i32_1 = arith.constant 0 : i32
    return %c0_i32, %c0_i32_0 : i32, i32
  }
  func.func @transform_2(%arg0: i32) -> (i32, i32) {
    %c0_i32 = arith.constant 0 : i32
    %c0_i32_0 = arith.constant 0 : i32
    %c0_i32_1 = arith.constant 0 : i32
    return %c0_i32, %c0_i32_0 : i32, i32
  }
  func.func @transform_3(%arg0: i32) -> (i32, i32, i32) {
    %c0_i32 = arith.constant 0 : i32
    %c0_i32_0 = arith.constant 0 : i32
    %c0_i32_1 = arith.constant 0 : i32
    %c0_i32_2 = arith.constant 0 : i32
    return %c0_i32, %c0_i32_0, %c0_i32_1 : i32, i32, i32
  }
  func.func @transform_4(%arg0: i32) -> (i32, i32) {
    %c0_i32 = arith.constant 0 : i32
    %c0_i32_0 = arith.constant 0 : i32
    %c0_i32_1 = arith.constant 0 : i32
    return %c0_i32, %c0_i32_0 : i32, i32
  }
  func.func @transform_5(%arg0: i32) -> (i32, i32) {
    %c0_i32 = arith.constant 0 : i32
    %c0_i32_0 = arith.constant 0 : i32
    %c0_i32_1 = arith.constant 0 : i32
    return %c0_i32, %c0_i32_0 : i32, i32
  }
  func.func @transform_6(%arg0: i32) -> (i32, i32, i32) {
    %c0_i32 = arith.constant 0 : i32
    %c0_i32_0 = arith.constant 0 : i32
    %c0_i32_1 = arith.constant 0 : i32
    %c0_i32_2 = arith.constant 0 : i32
    return %c0_i32, %c0_i32_0, %c0_i32_1 : i32, i32, i32
  }
  func.func @transform_7(%arg0: i32) -> (i32, i32, i32) {
    %c0_i32 = arith.constant 0 : i32
    %c0_i32_0 = arith.constant 0 : i32
    %c0_i32_1 = arith.constant 0 : i32
    %c0_i32_2 = arith.constant 0 : i32
    return %c0_i32, %c0_i32_0, %c0_i32_1 : i32, i32, i32
  }
  func.func @transform_8(%arg0: i32) -> (i32, i32) {
    %c0_i32 = arith.constant 0 : i32
    %c0_i32_0 = arith.constant 0 : i32
    %c0_i32_1 = arith.constant 0 : i32
    return %c0_i32, %c0_i32_0 : i32, i32
  }
  func.func @transform_9(%arg0: i32) -> (i32, i32) {
    %c0_i32 = arith.constant 0 : i32
    %c0_i32_0 = arith.constant 0 : i32
    %c0_i32_1 = arith.constant 0 : i32
    return %c0_i32, %c0_i32_0 : i32, i32
  }
  func.func @transform_10(%arg0: i32) -> (i32, i32, i32) {
    %c0_i32 = arith.constant 0 : i32
    %c0_i32_0 = arith.constant 0 : i32
    %c0_i32_1 = arith.constant 0 : i32
    %c0_i32_2 = arith.constant 0 : i32
    return %c0_i32, %c0_i32_0, %c0_i32_1 : i32, i32, i32
  }
  func.func @transform_11(%arg0: i32) -> (i32, i32, i32) {
    %c0_i32 = arith.constant 0 : i32
    %c0_i32_0 = arith.constant 0 : i32
    %c0_i32_1 = arith.constant 0 : i32
    %c0_i32_2 = arith.constant 0 : i32
    return %c0_i32, %c0_i32_0, %c0_i32_1 : i32, i32, i32
  }
  func.func @transform_12(%arg0: i32) -> (i32, i32) {
    %c0_i32 = arith.constant 0 : i32
    %c0_i32_0 = arith.constant 0 : i32
    %c0_i32_1 = arith.constant 0 : i32
    return %c0_i32, %c0_i32_0 : i32, i32
  }
  func.func @transform_13(%arg0: i32) -> (i32, i32) {
    %c0_i32 = arith.constant 0 : i32
    %c0_i32_0 = arith.constant 0 : i32
    %c0_i32_1 = arith.constant 0 : i32
    return %c0_i32, %c0_i32_0 : i32, i32
  }
  func.func @transform_14(%arg0: i32) -> (i32, i32, i32) {
    %c0_i32 = arith.constant 0 : i32
    %c0_i32_0 = arith.constant 0 : i32
    %c0_i32_1 = arith.constant 0 : i32
    %c0_i32_2 = arith.constant 0 : i32
    return %c0_i32, %c0_i32_0, %c0_i32_1 : i32, i32, i32
  }
  func.func @transform_15(%arg0: i32) -> (i32, i32) {
    %c0_i32 = arith.constant 0 : i32
    %c0_i32_0 = arith.constant 0 : i32
    %c0_i32_1 = arith.constant 0 : i32
    return %c0_i32, %c0_i32_0 : i32, i32
  }
  func.func @transform_16(%arg0: i32) -> (i32, i32) {
    %c0_i32 = arith.constant 0 : i32
    %c0_i32_0 = arith.constant 0 : i32
    %c0_i32_1 = arith.constant 0 : i32
    return %c0_i32, %c0_i32_0 : i32, i32
  }
  func.func @transform_17(%arg0: i32) -> (i32, i32, i32) {
    %c0_i32 = arith.constant 0 : i32
    %c0_i32_0 = arith.constant 0 : i32
    %c0_i32_1 = arith.constant 0 : i32
    return %arg0, %c0_i32, %c0_i32_0 : i32, i32, i32
  }
}

</mosaic_0001>

<llo_original>
// kernel: _lambda_.1
$region0: #{_lambda_.1}
  #allocation0 [shape = 'u32[]', space=smem, size = 0x4, offset = 0x4, fixed_abs, tag = 'smem constant byte address 0x4 - core index']
  #allocation1 [shape = 'u32[144,128]{1,0:T(1,128)}', space=vmem, size = 0x12000, scoped, tag = 'internal scratch']
  #allocation2 [shape = 'f32[1,1]{1,0:T(1,128)S(1)}', space=vmem, size = 0x200, scoped, tag = 'scoped memory for _lambda_.1']
  %s0 = inlined_call_operand.vmem [shape: f32[2,9,256], index: 0, kind: input, shape index: {}]
  %s1 = inlined_call_operand.hbm [shape: f32[16,9], index: 1, kind: input, shape index: {}]
  %s2 = inlined_call_operand.hbm [shape: f32[16,1], index: 2, kind: input, shape index: {}]
  %s3 = inlined_call_operand.hbm [shape: f32[9,32,16], index: 3, kind: input, shape index: {}]
  %s4 = inlined_call_operand.hbm [shape: f32[32,1], index: 4, kind: input, shape index: {}]
  %s5 = inlined_call_operand.vmem [shape: f32[32,1], index: 5, kind: input, shape index: {}]
  %s6 = inlined_call_operand.hbm [shape: f32[9,256,64], index: 6, kind: input, shape index: {}]
  %s7 = inlined_call_operand.hbm [shape: f32[9,64,32], index: 7, kind: input, shape index: {}]
  %s8 = inlined_call_operand.hbm [shape: f32[64,1], index: 8, kind: input, shape index: {}]
  %s9 = inlined_call_operand.vmem [shape: f32[64,1], index: 9, kind: input, shape index: {}]
  %s10 = inlined_call_operand.hbm [shape: f32[9,64,16], index: 10, kind: input, shape index: {}]
  %s11 = inlined_call_operand.vmem [shape: f32[9,128,64], index: 11, kind: input, shape index: {}]
  %s12 = inlined_call_operand.hbm [shape: f32[128,1], index: 12, kind: input, shape index: {}]
  %s13 = inlined_call_operand.vmem [shape: f32[128,1], index: 13, kind: input, shape index: {}]
  %s14 = inlined_call_operand.hbm [shape: f32[9,16,4], index: 14, kind: input, shape index: {}]
  %s15 = inlined_call_operand.hbm [shape: f32[128,4], index: 15, kind: input, shape index: {}]
  %s16 = inlined_call_operand.<no memory space> [shape: f32[1,1], index: 16, kind: input, shape index: {}]
  %s17 = inlined_call_operand.vmem [shape: f32[2,1,1], index: 17, kind: output, shape index: {}]
  %s18 = sld [smem:[#allocation0]]
  $region145: #{_lambda_.1} parent=0
    _
  %s20 = ssub.s32 1, %s18
  %s21 = scalar_select 0, %s20, %s18
  %v22 = vstv %s16
  %23 = vst [vmem:[#allocation2] sm:$0x1] %v22
  $region1: #{_lambda_.1} parent=0
    #allocation3 [shape = 'u8[8192]{0}', space=vmem, size = 0x2000, scoped, tag = 'input window, operand 1, single buffered']
    #allocation4 [shape = 's32[2]{0}', space=sflag, size = 0x8, scoped, tag = 'scoped memory for _lambda_.1']
    #allocation5 [shape = 'u8[8192]{0}', space=vmem, size = 0x2000, scoped, tag = 'input window, operand 2, single buffered']
    #allocation6 [shape = 's32[1]{0}', space=sflag, size = 0x4, scoped, tag = 'scoped memory for _lambda_.1']
    #allocation7 [shape = 'u8[147456]{0}', space=vmem, size = 0x24000, scoped, tag = 'input window, operand 3, single buffered']
    #allocation8 [shape = 'u8[16384]{0}', space=vmem, size = 0x4000, scoped, tag = 'input window, operand 4, single buffered']
    #allocation9 [shape = 's32[1]{0}', space=sflag, size = 0x4, scoped, tag = 'scoped memory for _lambda_.1']
    #allocation10 [shape = 'u8[1179648]{0}', space=vmem, size = 0x120000, scoped, tag = 'input window, operand 6, single buffered']
    #allocation11 [shape = 'u8[294912]{0}', space=vmem, size = 0x48000, scoped, tag = 'input window, operand 7, single buffered']
    #allocation12 [shape = 's32[1]{0}', space=sflag, size = 0x4, scoped, tag = 'scoped memory for _lambda_.1']
    #allocation13 [shape = 'u8[32768]{0}', space=vmem, size = 0x8000, scoped, tag = 'input window, operand 8, single buffered']
    #allocation14 [shape = 'u8[294912]{0}', space=vmem, size = 0x48000, scoped, tag = 'input window, operand 10, single buffered']
    #allocation15 [shape = 's32[1]{0}', space=sflag, size = 0x4, scoped, tag = 'scoped memory for _lambda_.1']
    #allocation16 [shape = 'u8[65536]{0}', space=vmem, size = 0x10000, scoped, tag = 'input window, operand 12, single buffered']
    #allocation17 [shape = 'u8[73728]{0}', space=vmem, size = 0x12000, scoped, tag = 'input window, operand 14, single buffered']
    #allocation18 [shape = 's32[1]{0}', space=sflag, size = 0x4, scoped, tag = 'scoped memory for _lambda_.1']
    #allocation19 [shape = 'u8[65536]{0}', space=vmem, size = 0x10000, scoped, tag = 'input window, operand 15, single buffered']
    %24 = vsyncpa [#allocation4], 0
    %25 = vsyncpa [#allocation6], 0
    %26 = vsyncpa [#allocation9], 0
    %27 = vsyncpa [#allocation12], 0
    %28 = vsyncpa [#allocation15], 0
    %29 = vsyncpa [#allocation18], 0
    loop: start=0, step=1, limit=4
    $region2: #{_lambda_.1} parent=1 // loop_pre_header
      _
    $region3: #{_lambda_.1} parent=1 // loop_header
      %s31 = sphi 0, %s35
      %p32 = scmp.ge.s32.totalorder %s31, 4
      %s41 = sphi 0, %s43
      %s44 = sphi 0, %s41
      %s45 = sphi 0, %s44
      %s61 = sphi 0, %s45
      %s65 = sphi 0, %s65
      %s67 = sphi 0, %s65
      %s68 = sphi 0, %s67
      %s82 = sphi 0, %s68
      %s86 = sphi 0, %s86
      %s88 = sphi 0, %s86
      %s89 = sphi 0, %s88
      %s103 = sphi 0, %s89
      %s107 = sphi 0, %s107
      %s109 = sphi 0, %s107
      %s110 = sphi 0, %s109
      %s124 = sphi 0, %s110
      %s128 = sphi 0, %s128
      %s130 = sphi 0, %s128
      %s131 = sphi 0, %s130
      %s145 = sphi 0, %s131
      %s149 = sphi 0, %s149
      %s151 = sphi 0, %s149
      %s152 = sphi 0, %s151
      %s166 = sphi 0, %s152
      %s170 = sphi 0, %s170
      %s172 = sphi 0, %s170
      %s173 = sphi 0, %s172
      %s187 = sphi 0, %s173
      %s191 = sphi 0, %s191
      %s193 = sphi 0, %s191
      %s194 = sphi 0, %s193
      %s208 = sphi 0, %s194
      %s212 = sphi 0, %s212
      %s214 = sphi 0, %s212
      %s215 = sphi 0, %s214
      %s229 = sphi 0, %s215
      %s233 = sphi 0, %s233
      %s235 = sphi 0, %s233
      %s236 = sphi 0, %s235
      %s250 = sphi 0, %s236
      %s254 = sphi 0, %s254
      %s256 = sphi 0, %s254
      %s257 = sphi 0, %s256
      %s271 = sphi 0, %s257
      %s275 = sphi 0, %s275
      %s277 = sphi 0, %s275
      %s278 = sphi 0, %s277
      %s292 = sphi 0, %s278
      %s296 = sphi 0, %s296
      %s298 = sphi 0, %s296
      %s299 = sphi 0, %s298
      %s313 = sphi 0, %s299
      %s317 = sphi 0, %s317
      %s319 = sphi 0, %s317
      %s320 = sphi 0, %s319
      %s334 = sphi 0, %s320
      %s338 = sphi 0, %s338
      %s340 = sphi 0, %s338
      %s341 = sphi 0, %s340
      %s355 = sphi 0, %s341
      %s359 = sphi 0, %s359
      %s361 = sphi 0, %s359
      %s362 = sphi 0, %s361
      %s376 = sphi 0, %s362
      %s380 = sphi 0, %s380
      %s382 = sphi 0, %s380
      %s383 = sphi 0, %s382
      %s397 = sphi 0, %s383
      %s403 = sphi 0, %s405
      %s406 = sphi 0, %s403
      %s407 = sphi 0, %s406
      %s423 = sphi 0, %s407
    $region4: #{_lambda_.1} parent=1 // loop_header_branch
      %34 = sbr.rel (%p32) target = $region8
    $region5: #{_lambda_.1} parent=1 // loop_body
      %s36 = ssub.s32 %s31, 1
      %s37 = ssub.s32 %s31, 2
      %s38 = sadd.s32 %s31, 1
      %s39 = ssub.s32 %s31, %s38
      %p40 = scmp.eq.s32.totalorder %s39, 0
      %s42 = sadd.s32 %s41, 1
      %s43 = scalar_select %p40, %s41, %s42
      %p46 = pneg %p40
      %p47 = scmp.eq.s32.totalorder %s31, 1
      %p48 = por %p46, %p47
      %p49 = scmp.ne.s32.totalorder %s41, %s44
      %p50 = scmp.eq.s32.totalorder %s31, 0
      %p51 = por %p49, %p50
      %p52 = scmp.ne.s32.totalorder %s41, %s44
      %p53 = scmp.eq.s32.totalorder %s36, 1
      %p54 = por %p52, %p53
      %p55 = scmp.ne.s32.totalorder %s44, %s45
      %p56 = scmp.eq.s32.totalorder %s36, 0
      %p57 = por %p55, %p56
      %p58 = scmp.ne.s32.totalorder %s44, %s45
      %p59 = scmp.eq.s32.totalorder %s37, 1
      %p60 = por %p58, %p59
      %p62 = scmp.ne.s32.totalorder %s45, %s61
      %p63 = scmp.eq.s32.totalorder %s37, 0
      %p64 = por %p62, %p63
      %s66 = sadd.s32 %s65, 1
      %p69 = scmp.eq.s32.totalorder %s31, 1
      %p70 = scmp.ne.s32.totalorder %s65, %s67
      %p71 = scmp.eq.s32.totalorder %s31, 0
      %p72 = por %p70, %p71
      %p73 = scmp.ne.s32.totalorder %s65, %s67
      %p74 = scmp.eq.s32.totalorder %s36, 1
      %p75 = por %p73, %p74
      %p76 = scmp.ne.s32.totalorder %s67, %s68
      %p77 = scmp.eq.s32.totalorder %s36, 0
      %p78 = por %p76, %p77
      %p79 = scmp.ne.s32.totalorder %s67, %s68
      %p80 = scmp.eq.s32.totalorder %s37, 1
      %p81 = por %p79, %p80
      %p83 = scmp.ne.s32.totalorder %s68, %s82
      %p84 = scmp.eq.s32.totalorder %s37, 0
      %p85 = por %p83, %p84
      %s87 = sadd.s32 %s86, 1
      %p90 = scmp.eq.s32.totalorder %s31, 1
      %p91 = scmp.ne.s32.totalorder %s86, %s88
      %p92 = scmp.eq.s32.totalorder %s31, 0
      %p93 = por %p91, %p92
      %p94 = scmp.ne.s32.totalorder %s86, %s88
      %p95 = scmp.eq.s32.totalorder %s36, 1
      %p96 = por %p94, %p95
      %p97 = scmp.ne.s32.totalorder %s88, %s89
      %p98 = scmp.eq.s32.totalorder %s36, 0
      %p99 = por %p97, %p98
      %p100 = scmp.ne.s32.totalorder %s88, %s89
      %p101 = scmp.eq.s32.totalorder %s37, 1
      %p102 = por %p100, %p101
      %p104 = scmp.ne.s32.totalorder %s89, %s103
      %p105 = scmp.eq.s32.totalorder %s37, 0
      %p106 = por %p104, %p105
      %s108 = sadd.s32 %s107, 1
      %p111 = scmp.eq.s32.totalorder %s31, 1
      %p112 = scmp.ne.s32.totalorder %s107, %s109
      %p113 = scmp.eq.s32.totalorder %s31, 0
      %p114 = por %p112, %p113
      %p115 = scmp.ne.s32.totalorder %s107, %s109
      %p116 = scmp.eq.s32.totalorder %s36, 1
      %p117 = por %p115, %p116
      %p118 = scmp.ne.s32.totalorder %s109, %s110
      %p119 = scmp.eq.s32.totalorder %s36, 0
      %p120 = por %p118, %p119
      %p121 = scmp.ne.s32.totalorder %s109, %s110
      %p122 = scmp.eq.s32.totalorder %s37, 1
      %p123 = por %p121, %p122
      %p125 = scmp.ne.s32.totalorder %s110, %s124
      %p126 = scmp.eq.s32.totalorder %s37, 0
      %p127 = por %p125, %p126
      %s129 = sadd.s32 %s128, 1
      %p132 = scmp.eq.s32.totalorder %s31, 1
      %p133 = scmp.ne.s32.totalorder %s128, %s130
      %p134 = scmp.eq.s32.totalorder %s31, 0
      %p135 = por %p133, %p134
      %p136 = scmp.ne.s32.totalorder %s128, %s130
      %p137 = scmp.eq.s32.totalorder %s36, 1
      %p138 = por %p136, %p137
      %p139 = scmp.ne.s32.totalorder %s130, %s131
      %p140 = scmp.eq.s32.totalorder %s36, 0
      %p141 = por %p139, %p140
      %p142 = scmp.ne.s32.totalorder %s130, %s131
      %p143 = scmp.eq.s32.totalorder %s37, 1
      %p144 = por %p142, %p143
      %p146 = scmp.ne.s32.totalorder %s131, %s145
      %p147 = scmp.eq.s32.totalorder %s37, 0
      %p148 = por %p146, %p147
      %s150 = sadd.s32 %s149, 1
      %p153 = scmp.eq.s32.totalorder %s31, 1
      %p154 = scmp.ne.s32.totalorder %s149, %s151
      %p155 = scmp.eq.s32.totalorder %s31, 0
      %p156 = por %p154, %p155
      %p157 = scmp.ne.s32.totalorder %s149, %s151
      %p158 = scmp.eq.s32.totalorder %s36, 1
      %p159 = por %p157, %p158
      %p160 = scmp.ne.s32.totalorder %s151, %s152
      %p161 = scmp.eq.s32.totalorder %s36, 0
      %p162 = por %p160, %p161
      %p163 = scmp.ne.s32.totalorder %s151, %s152
      %p164 = scmp.eq.s32.totalorder %s37, 1
      %p165 = por %p163, %p164
      %p167 = scmp.ne.s32.totalorder %s152, %s166
      %p168 = scmp.eq.s32.totalorder %s37, 0
      %p169 = por %p167, %p168
      %s171 = sadd.s32 %s170, 1
      %p174 = scmp.eq.s32.totalorder %s31, 1
      %p175 = scmp.ne.s32.totalorder %s170, %s172
      %p176 = scmp.eq.s32.totalorder %s31, 0
      %p177 = por %p175, %p176
      %p178 = scmp.ne.s32.totalorder %s170, %s172
      %p179 = scmp.eq.s32.totalorder %s36, 1
      %p180 = por %p178, %p179
      %p181 = scmp.ne.s32.totalorder %s172, %s173
      %p182 = scmp.eq.s32.totalorder %s36, 0
      %p183 = por %p181, %p182
      %p184 = scmp.ne.s32.totalorder %s172, %s173
      %p185 = scmp.eq.s32.totalorder %s37, 1
      %p186 = por %p184, %p185
      %p188 = scmp.ne.s32.totalorder %s173, %s187
      %p189 = scmp.eq.s32.totalorder %s37, 0
      %p190 = por %p188, %p189
      %s192 = sadd.s32 %s191, 1
      %p195 = scmp.eq.s32.totalorder %s31, 1
      %p196 = scmp.ne.s32.totalorder %s191, %s193
      %p197 = scmp.eq.s32.totalorder %s31, 0
      %p198 = por %p196, %p197
      %p199 = scmp.ne.s32.totalorder %s191, %s193
      %p200 = scmp.eq.s32.totalorder %s36, 1
      %p201 = por %p199, %p200
      %p202 = scmp.ne.s32.totalorder %s193, %s194
      %p203 = scmp.eq.s32.totalorder %s36, 0
      %p204 = por %p202, %p203
      %p205 = scmp.ne.s32.totalorder %s193, %s194
      %p206 = scmp.eq.s32.totalorder %s37, 1
      %p207 = por %p205, %p206
      %p209 = scmp.ne.s32.totalorder %s194, %s208
      %p210 = scmp.eq.s32.totalorder %s37, 0
      %p211 = por %p209, %p210
      %s213 = sadd.s32 %s212, 1
      %p216 = scmp.eq.s32.totalorder %s31, 1
      %p217 = scmp.ne.s32.totalorder %s212, %s214
      %p218 = scmp.eq.s32.totalorder %s31, 0
      %p219 = por %p217, %p218
      %p220 = scmp.ne.s32.totalorder %s212, %s214
      %p221 = scmp.eq.s32.totalorder %s36, 1
      %p222 = por %p220, %p221
      %p223 = scmp.ne.s32.totalorder %s214, %s215
      %p224 = scmp.eq.s32.totalorder %s36, 0
      %p225 = por %p223, %p224
      %p226 = scmp.ne.s32.totalorder %s214, %s215
      %p227 = scmp.eq.s32.totalorder %s37, 1
      %p228 = por %p226, %p227
      %p230 = scmp.ne.s32.totalorder %s215, %s229
      %p231 = scmp.eq.s32.totalorder %s37, 0
      %p232 = por %p230, %p231
      %s234 = sadd.s32 %s233, 1
      %p237 = scmp.eq.s32.totalorder %s31, 1
      %p238 = scmp.ne.s32.totalorder %s233, %s235
      %p239 = scmp.eq.s32.totalorder %s31, 0
      %p240 = por %p238, %p239
      %p241 = scmp.ne.s32.totalorder %s233, %s235
      %p242 = scmp.eq.s32.totalorder %s36, 1
      %p243 = por %p241, %p242
      %p244 = scmp.ne.s32.totalorder %s235, %s236
      %p245 = scmp.eq.s32.totalorder %s36, 0
      %p246 = por %p244, %p245
      %p247 = scmp.ne.s32.totalorder %s235, %s236
      %p248 = scmp.eq.s32.totalorder %s37, 1
      %p249 = por %p247, %p248
      %p251 = scmp.ne.s32.totalorder %s236, %s250
      %p252 = scmp.eq.s32.totalorder %s37, 0
      %p253 = por %p251, %p252
      %s255 = sadd.s32 %s254, 1
      %p258 = scmp.eq.s32.totalorder %s31, 1
      %p259 = scmp.ne.s32.totalorder %s254, %s256
      %p260 = scmp.eq.s32.totalorder %s31, 0
      %p261 = por %p259, %p260
      %p262 = scmp.ne.s32.totalorder %s254, %s256
      %p263 = scmp.eq.s32.totalorder %s36, 1
      %p264 = por %p262, %p263
      %p265 = scmp.ne.s32.totalorder %s256, %s257
      %p266 = scmp.eq.s32.totalorder %s36, 0
      %p267 = por %p265, %p266
      %p268 = scmp.ne.s32.totalorder %s256, %s257
      %p269 = scmp.eq.s32.totalorder %s37, 1
      %p270 = por %p268, %p269
      %p272 = scmp.ne.s32.totalorder %s257, %s271
      %p273 = scmp.eq.s32.totalorder %s37, 0
      %p274 = por %p272, %p273
      %s276 = sadd.s32 %s275, 1
      %p279 = scmp.eq.s32.totalorder %s31, 1
      %p280 = scmp.ne.s32.totalorder %s275, %s277
      %p281 = scmp.eq.s32.totalorder %s31, 0
      %p282 = por %p280, %p281
      %p283 = scmp.ne.s32.totalorder %s275, %s277
      %p284 = scmp.eq.s32.totalorder %s36, 1
      %p285 = por %p283, %p284
      %p286 = scmp.ne.s32.totalorder %s277, %s278
      %p287 = scmp.eq.s32.totalorder %s36, 0
      %p288 = por %p286, %p287
      %p289 = scmp.ne.s32.totalorder %s277, %s278
      %p290 = scmp.eq.s32.totalorder %s37, 1
      %p291 = por %p289, %p290
      %p293 = scmp.ne.s32.totalorder %s278, %s292
      %p294 = scmp.eq.s32.totalorder %s37, 0
      %p295 = por %p293, %p294
      %s297 = sadd.s32 %s296, 1
      %p300 = scmp.eq.s32.totalorder %s31, 1
      %p301 = scmp.ne.s32.totalorder %s296, %s298
      %p302 = scmp.eq.s32.totalorder %s31, 0
      %p303 = por %p301, %p302
      %p304 = scmp.ne.s32.totalorder %s296, %s298
      %p305 = scmp.eq.s32.totalorder %s36, 1
      %p306 = por %p304, %p305
      %p307 = scmp.ne.s32.totalorder %s298, %s299
      %p308 = scmp.eq.s32.totalorder %s36, 0
      %p309 = por %p307, %p308
      %p310 = scmp.ne.s32.totalorder %s298, %s299
      %p311 = scmp.eq.s32.totalorder %s37, 1
      %p312 = por %p310, %p311
      %p314 = scmp.ne.s32.totalorder %s299, %s313
      %p315 = scmp.eq.s32.totalorder %s37, 0
      %p316 = por %p314, %p315
      %s318 = sadd.s32 %s317, 1
      %p321 = scmp.eq.s32.totalorder %s31, 1
      %p322 = scmp.ne.s32.totalorder %s317, %s319
      %p323 = scmp.eq.s32.totalorder %s31, 0
      %p324 = por %p322, %p323
      %p325 = scmp.ne.s32.totalorder %s317, %s319
      %p326 = scmp.eq.s32.totalorder %s36, 1
      %p327 = por %p325, %p326
      %p328 = scmp.ne.s32.totalorder %s319, %s320
      %p329 = scmp.eq.s32.totalorder %s36, 0
      %p330 = por %p328, %p329
      %p331 = scmp.ne.s32.totalorder %s319, %s320
      %p332 = scmp.eq.s32.totalorder %s37, 1
      %p333 = por %p331, %p332
      %p335 = scmp.ne.s32.totalorder %s320, %s334
      %p336 = scmp.eq.s32.totalorder %s37, 0
      %p337 = por %p335, %p336
      %s339 = sadd.s32 %s338, 1
      %p342 = scmp.eq.s32.totalorder %s31, 1
      %p343 = scmp.ne.s32.totalorder %s338, %s340
      %p344 = scmp.eq.s32.totalorder %s31, 0
      %p345 = por %p343, %p344
      %p346 = scmp.ne.s32.totalorder %s338, %s340
      %p347 = scmp.eq.s32.totalorder %s36, 1
      %p348 = por %p346, %p347
      %p349 = scmp.ne.s32.totalorder %s340, %s341
      %p350 = scmp.eq.s32.totalorder %s36, 0
      %p351 = por %p349, %p350
      %p352 = scmp.ne.s32.totalorder %s340, %s341
      %p353 = scmp.eq.s32.totalorder %s37, 1
      %p354 = por %p352, %p353
      %p356 = scmp.ne.s32.totalorder %s341, %s355
      %p357 = scmp.eq.s32.totalorder %s37, 0
      %p358 = por %p356, %p357
      %s360 = sadd.s32 %s359, 1
      %p363 = scmp.eq.s32.totalorder %s31, 1
      %p364 = scmp.ne.s32.totalorder %s359, %s361
      %p365 = scmp.eq.s32.totalorder %s31, 0
      %p366 = por %p364, %p365
      %p367 = scmp.ne.s32.totalorder %s359, %s361
      %p368 = scmp.eq.s32.totalorder %s36, 1
      %p369 = por %p367, %p368
      %p370 = scmp.ne.s32.totalorder %s361, %s362
      %p371 = scmp.eq.s32.totalorder %s36, 0
      %p372 = por %p370, %p371
      %p373 = scmp.ne.s32.totalorder %s361, %s362
      %p374 = scmp.eq.s32.totalorder %s37, 1
      %p375 = por %p373, %p374
      %p377 = scmp.ne.s32.totalorder %s362, %s376
      %p378 = scmp.eq.s32.totalorder %s37, 0
      %p379 = por %p377, %p378
      %s381 = sadd.s32 %s380, 1
      %p384 = scmp.eq.s32.totalorder %s31, 1
      %p385 = scmp.ne.s32.totalorder %s380, %s382
      %p386 = scmp.eq.s32.totalorder %s31, 0
      %p387 = por %p385, %p386
      %p388 = scmp.ne.s32.totalorder %s380, %s382
      %p389 = scmp.eq.s32.totalorder %s36, 1
      %p390 = por %p388, %p389
      %p391 = scmp.ne.s32.totalorder %s382, %s383
      %p392 = scmp.eq.s32.totalorder %s36, 0
      %p393 = por %p391, %p392
      %p394 = scmp.ne.s32.totalorder %s382, %s383
      %p395 = scmp.eq.s32.totalorder %s37, 1
      %p396 = por %p394, %p395
      %p398 = scmp.ne.s32.totalorder %s383, %s397
      %p399 = scmp.eq.s32.totalorder %s37, 0
      %p400 = por %p398, %p399
      %s401 = ssub.s32 %s31, %s38
      %p402 = scmp.eq.s32.totalorder %s401, 0
      %s404 = sadd.s32 %s403, 1
      %s405 = scalar_select %p402, %s403, %s404
      %p408 = pneg %p402
      %p409 = scmp.eq.s32.totalorder %s31, 1
      %p410 = por %p408, %p409
      %p411 = scmp.ne.s32.totalorder %s403, %s406
      %p412 = scmp.eq.s32.totalorder %s31, 0
      %p413 = por %p411, %p412
      %p414 = scmp.ne.s32.totalorder %s403, %s406
      %p415 = scmp.eq.s32.totalorder %s36, 1
      %p416 = por %p414, %p415
      %p417 = scmp.ne.s32.totalorder %s406, %s407
      %p418 = scmp.eq.s32.totalorder %s36, 0
      %p419 = por %p417, %p418
      %p420 = scmp.ne.s32.totalorder %s406, %s407
      %p421 = scmp.eq.s32.totalorder %s37, 1
      %p422 = por %p420, %p421
      %p424 = scmp.ne.s32.totalorder %s407, %s423
      %p425 = scmp.eq.s32.totalorder %s37, 0
      %p426 = por %p424, %p425
      %p427 = scmp.le.s32.totalorder 1, %s31
      %p428 = scmp.lt.s32.totalorder %s31, 3
      %p429 = pnand %p427, %p428
      %p430 = pneg %p429
      // Predicated region
      $region9: #{_lambda_.1} parent=5 // pred_check
        _
      $region10: #{_lambda_.1} parent=5 // pred_check_branch
        %432 = sbr.rel (%p429) target = $region12
      $region11: #{_lambda_.1} parent=5 // pred_region
        %s433 = ssub.s32 %s31, 1
        // Predicated region
        $region13: #{_lambda_.1} parent=11 // pred_check
          %p434 = pneg %p78
        $region14: #{_lambda_.1} parent=11 // pred_check_branch
          %436 = sbr.rel (%p434) target = $region16
        $region15: #{_lambda_.1} parent=11 // pred_region
          %s438 = ssub.s32 256, 256
          %439 = vsyncadd [#allocation4], %s438
          %s440 = sshll.u32 [#allocation3], 4
          %s441 = int_to_ptr.vmem [resolvable:$true] %s440
          %446 = dma.hbm_to_vmem [thread:$0]  %s1, 256, %s441, [#allocation4], 128, 128, 8
        $region16: #{_lambda_.1} parent=11 // pred_fallthru
          _
        // Predicated region
        $region17: #{_lambda_.1} parent=11 // pred_check
          %p447 = pneg %p99
        $region18: #{_lambda_.1} parent=11 // pred_check_branch
          %449 = sbr.rel (%p447) target = $region20
        $region19: #{_lambda_.1} parent=11 // pred_region
          %s451 = ssub.s32 256, 256
          %452 = vsyncadd [#allocation6], %s451
          %s453 = sshll.u32 [#allocation5], 4
          %s454 = int_to_ptr.vmem [resolvable:$true] %s453
          %459 = dma.hbm_to_vmem [thread:$0]  %s2, 256, %s454, [#allocation6], 128, 128, 8
        $region20: #{_lambda_.1} parent=11 // pred_fallthru
          _
        // Predicated region
        $region21: #{_lambda_.1} parent=11 // pred_check
          %p460 = pneg %p120
        $region22: #{_lambda_.1} parent=11 // pred_check_branch
          %462 = sbr.rel (%p460) target = $region24
        $region23: #{_lambda_.1} parent=11 // pred_region
          %s464 = ssub.s32 4608, 4608
          %465 = vsyncadd [#allocation6], %s464
          %s466 = sshll.u32 [#allocation7], 4
          %s467 = int_to_ptr.vmem [resolvable:$true] %s466
          %472 = dma.hbm_to_vmem [thread:$0]  %s3, 4608, %s467, [#allocation6], 128, 128, 8
        $region24: #{_lambda_.1} parent=11 // pred_fallthru
          _
        // Predicated region
        $region25: #{_lambda_.1} parent=11 // pred_check
          %p473 = pneg %p141
        $region26: #{_lambda_.1} parent=11 // pred_check_branch
          %475 = sbr.rel (%p473) target = $region28
        $region27: #{_lambda_.1} parent=11 // pred_region
          %s477 = ssub.s32 512, 512
          %478 = vsyncadd [#allocation9], %s477
          %s479 = sshll.u32 [#allocation8], 4
          %s480 = int_to_ptr.vmem [resolvable:$true] %s479
          %485 = dma.hbm_to_vmem [thread:$0]  %s4, 512, %s480, [#allocation9], 128, 128, 8
        $region28: #{_lambda_.1} parent=11 // pred_fallthru
          _
        // Predicated region
        $region29: #{_lambda_.1} parent=11 // pred_check
          %p486 = pneg %p162
        $region30: #{_lambda_.1} parent=11 // pred_check_branch
          %488 = sbr.rel (%p486) target = $region32
        $region31: #{_lambda_.1} parent=11 // pred_region
          _
        $region32: #{_lambda_.1} parent=11 // pred_fallthru
          _
        // Predicated region
        $region33: #{_lambda_.1} parent=11 // pred_check
          %p489 = pneg %p183
        $region34: #{_lambda_.1} parent=11 // pred_check_branch
          %491 = sbr.rel (%p489) target = $region36
        $region35: #{_lambda_.1} parent=11 // pred_region
          %s493 = ssub.s32 36864, 36864
          %494 = vsyncadd [#allocation9], %s493
          %s495 = sshll.u32 [#allocation10], 4
          %s496 = int_to_ptr.vmem [resolvable:$true] %s495
          %501 = dma.hbm_to_vmem [thread:$0]  %s6, 36864, %s496, [#allocation9], 128, 128, 8
        $region36: #{_lambda_.1} parent=11 // pred_fallthru
          _
        // Predicated region
        $region37: #{_lambda_.1} parent=11 // pred_check
          %p502 = pneg %p204
        $region38: #{_lambda_.1} parent=11 // pred_check_branch
          %504 = sbr.rel (%p502) target = $region40
        $region39: #{_lambda_.1} parent=11 // pred_region
          %s506 = ssub.s32 9216, 9216
          %507 = vsyncadd [#allocation12], %s506
          %s508 = sshll.u32 [#allocation11], 4
          %s509 = int_to_ptr.vmem [resolvable:$true] %s508
          %514 = dma.hbm_to_vmem [thread:$0]  %s7, 9216, %s509, [#allocation12], 128, 128, 8
        $region40: #{_lambda_.1} parent=11 // pred_fallthru
          _
        // Predicated region
        $region41: #{_lambda_.1} parent=11 // pred_check
          %p515 = pneg %p225
        $region42: #{_lambda_.1} parent=11 // pred_check_branch
          %517 = sbr.rel (%p515) target = $region44
        $region43: #{_lambda_.1} parent=11 // pred_region
          %s519 = ssub.s32 1024, 1024
          %520 = vsyncadd [#allocation12], %s519
          %s521 = sshll.u32 [#allocation13], 4
          %s522 = int_to_ptr.vmem [resolvable:$true] %s521
          %527 = dma.hbm_to_vmem [thread:$0]  %s8, 1024, %s522, [#allocation12], 128, 128, 8
        $region44: #{_lambda_.1} parent=11 // pred_fallthru
          _
        // Predicated region
        $region45: #{_lambda_.1} parent=11 // pred_check
          %p528 = pneg %p246
        $region46: #{_lambda_.1} parent=11 // pred_check_branch
          %530 = sbr.rel (%p528) target = $region48
        $region47: #{_lambda_.1} parent=11 // pred_region
          _
        $region48: #{_lambda_.1} parent=11 // pred_fallthru
          _
        // Predicated region
        $region49: #{_lambda_.1} parent=11 // pred_check
          %p531 = pneg %p267
        $region50: #{_lambda_.1} parent=11 // pred_check_branch
          %533 = sbr.rel (%p531) target = $region52
        $region51: #{_lambda_.1} parent=11 // pred_region
          %s535 = ssub.s32 9216, 9216
          %536 = vsyncadd [#allocation15], %s535
          %s537 = sshll.u32 [#allocation14], 4
          %s538 = int_to_ptr.vmem [resolvable:$true] %s537
          %543 = dma.hbm_to_vmem [thread:$0]  %s10, 9216, %s538, [#allocation15], 128, 128, 8
        $region52: #{_lambda_.1} parent=11 // pred_fallthru
          _
        // Predicated region
        $region53: #{_lambda_.1} parent=11 // pred_check
          %p544 = pneg %p288
        $region54: #{_lambda_.1} parent=11 // pred_check_branch
          %546 = sbr.rel (%p544) target = $region56
        $region55: #{_lambda_.1} parent=11 // pred_region
          _
        $region56: #{_lambda_.1} parent=11 // pred_fallthru
          _
        // Predicated region
        $region57: #{_lambda_.1} parent=11 // pred_check
          %p547 = pneg %p309
        $region58: #{_lambda_.1} parent=11 // pred_check_branch
          %549 = sbr.rel (%p547) target = $region60
        $region59: #{_lambda_.1} parent=11 // pred_region
          %s551 = ssub.s32 2048, 2048
          %552 = vsyncadd [#allocation15], %s551
          %s553 = sshll.u32 [#allocation16], 4
          %s554 = int_to_ptr.vmem [resolvable:$true] %s553
          %559 = dma.hbm_to_vmem [thread:$0]  %s12, 2048, %s554, [#allocation15], 128, 128, 8
        $region60: #{_lambda_.1} parent=11 // pred_fallthru
          _
        // Predicated region
        $region61: #{_lambda_.1} parent=11 // pred_check
          %p560 = pneg %p330
        $region62: #{_lambda_.1} parent=11 // pred_check_branch
          %562 = sbr.rel (%p560) target = $region64
        $region63: #{_lambda_.1} parent=11 // pred_region
          _
        $region64: #{_lambda_.1} parent=11 // pred_fallthru
          _
        // Predicated region
        $region65: #{_lambda_.1} parent=11 // pred_check
          %p563 = pneg %p351
        $region66: #{_lambda_.1} parent=11 // pred_check_branch
          %565 = sbr.rel (%p563) target = $region68
        $region67: #{_lambda_.1} parent=11 // pred_region
          %s567 = ssub.s32 2304, 2304
          %568 = vsyncadd [#allocation18], %s567
          %s569 = sshll.u32 [#allocation17], 4
          %s570 = int_to_ptr.vmem [resolvable:$true] %s569
          %575 = dma.hbm_to_vmem [thread:$0]  %s14, 2304, %s570, [#allocation18], 128, 128, 8
        $region68: #{_lambda_.1} parent=11 // pred_fallthru
          _
        // Predicated region
        $region69: #{_lambda_.1} parent=11 // pred_check
          %p576 = pneg %p372
        $region70: #{_lambda_.1} parent=11 // pred_check_branch
          %578 = sbr.rel (%p576) target = $region72
        $region71: #{_lambda_.1} parent=11 // pred_region
          %s580 = ssub.s32 2048, 2048
          %581 = vsyncadd [#allocation18], %s580
          %s582 = sshll.u32 [#allocation19], 4
          %s583 = int_to_ptr.vmem [resolvable:$true] %s582
          %588 = dma.hbm_to_vmem [thread:$0]  %s15, 2048, %s583, [#allocation18], 128, 128, 8
        $region72: #{_lambda_.1} parent=11 // pred_fallthru
          _
        // Predicated region
        $region73: #{_lambda_.1} parent=11 // pred_check
          %p589 = pneg %p393
        $region74: #{_lambda_.1} parent=11 // pred_check_branch
          %591 = sbr.rel (%p589) target = $region76
        $region75: #{_lambda_.1} parent=11 // pred_region
          _
        $region76: #{_lambda_.1} parent=11 // pred_fallthru
          _
      $region12: #{_lambda_.1} parent=5 // pred_fallthru
        _
      %p592 = scmp.lt.s32.totalorder %s31, 2
      // Predicated region
      $region77: #{_lambda_.1} parent=5 // pred_check
        %p593 = pneg %p592
      $region78: #{_lambda_.1} parent=5 // pred_check_branch
        %595 = sbr.rel (%p593) target = $region80
      $region79: #{_lambda_.1} parent=5 // pred_region
        // Predicated region
        $region81: #{_lambda_.1} parent=79 // pred_check
          %p596 = pneg %p51
        $region82: #{_lambda_.1} parent=79 // pred_check_branch
          %598 = sbr.rel (%p596) target = $region84
        $region83: #{_lambda_.1} parent=79 // pred_region
          %p599 = scmp.lt.s32.totalorder %s31, 1
          %s600 = scalar_select %p599, %s31, 1
          %s601 = smul.addr %s600, 4
          %s602 = smul.addr %s601, 8
          %s603 = scalar_lea.vmem %s0, %s602
        $region84: #{_lambda_.1} parent=79 // pred_fallthru
          _
      $region80: #{_lambda_.1} parent=5 // pred_fallthru
        _
      %p604 = scmp.le.s32.totalorder 1, %s31
      %p605 = scmp.lt.s32.totalorder %s31, 3
      %p606 = pnand %p604, %p605
      %p607 = pneg %p606
      // Predicated region
      $region85: #{_lambda_.1} parent=5 // pred_check
        _
      $region86: #{_lambda_.1} parent=5 // pred_check_branch
        %609 = sbr.rel (%p606) target = $region88
      $region87: #{_lambda_.1} parent=5 // pred_region
        %s610 = ssub.s32 %s31, 1
        // Predicated region
        $region89: #{_lambda_.1} parent=87 // pred_check
          %p611 = pneg %p78
        $region90: #{_lambda_.1} parent=87 // pred_check_branch
          %613 = sbr.rel (%p611) target = $region92
        $region91: #{_lambda_.1} parent=87 // pred_region
          %614 = dma.done [#allocation4], 256
        $region92: #{_lambda_.1} parent=87 // pred_fallthru
          _
        // Predicated region
        $region93: #{_lambda_.1} parent=87 // pred_check
          %p615 = pneg %p99
        $region94: #{_lambda_.1} parent=87 // pred_check_branch
          %617 = sbr.rel (%p615) target = $region96
        $region95: #{_lambda_.1} parent=87 // pred_region
          %618 = dma.done [#allocation6], 256
        $region96: #{_lambda_.1} parent=87 // pred_fallthru
          _
        // Predicated region
        $region97: #{_lambda_.1} parent=87 // pred_check
          %p619 = pneg %p120
        $region98: #{_lambda_.1} parent=87 // pred_check_branch
          %621 = sbr.rel (%p619) target = $region100
        $region99: #{_lambda_.1} parent=87 // pred_region
          %622 = dma.done [#allocation6], 4608
        $region100: #{_lambda_.1} parent=87 // pred_fallthru
          _
        // Predicated region
        $region101: #{_lambda_.1} parent=87 // pred_check
          %p623 = pneg %p141
        $region102: #{_lambda_.1} parent=87 // pred_check_branch
          %625 = sbr.rel (%p623) target = $region104
        $region103: #{_lambda_.1} parent=87 // pred_region
          %626 = dma.done [#allocation9], 512
        $region104: #{_lambda_.1} parent=87 // pred_fallthru
          _
        // Predicated region
        $region105: #{_lambda_.1} parent=87 // pred_check
          %p627 = pneg %p183
        $region106: #{_lambda_.1} parent=87 // pred_check_branch
          %629 = sbr.rel (%p627) target = $region108
        $region107: #{_lambda_.1} parent=87 // pred_region
          %630 = dma.done [#allocation9], 36864
        $region108: #{_lambda_.1} parent=87 // pred_fallthru
          _
        // Predicated region
        $region109: #{_lambda_.1} parent=87 // pred_check
          %p631 = pneg %p204
        $region110: #{_lambda_.1} parent=87 // pred_check_branch
          %633 = sbr.rel (%p631) target = $region112
        $region111: #{_lambda_.1} parent=87 // pred_region
          %634 = dma.done [#allocation12], 9216
        $region112: #{_lambda_.1} parent=87 // pred_fallthru
          _
        // Predicated region
        $region113: #{_lambda_.1} parent=87 // pred_check
          %p635 = pneg %p225
        $region114: #{_lambda_.1} parent=87 // pred_check_branch
          %637 = sbr.rel (%p635) target = $region116
        $region115: #{_lambda_.1} parent=87 // pred_region
          %638 = dma.done [#allocation12], 1024
        $region116: #{_lambda_.1} parent=87 // pred_fallthru
          _
        // Predicated region
        $region117: #{_lambda_.1} parent=87 // pred_check
          %p639 = pneg %p267
        $region118: #{_lambda_.1} parent=87 // pred_check_branch
          %641 = sbr.rel (%p639) target = $region120
        $region119: #{_lambda_.1} parent=87 // pred_region
          %642 = dma.done [#allocation15], 9216
        $region120: #{_lambda_.1} parent=87 // pred_fallthru
          _
        // Predicated region
        $region121: #{_lambda_.1} parent=87 // pred_check
          %p643 = pneg %p309
        $region122: #{_lambda_.1} parent=87 // pred_check_branch
          %645 = sbr.rel (%p643) target = $region124
        $region123: #{_lambda_.1} parent=87 // pred_region
          %646 = dma.done [#allocation15], 2048
        $region124: #{_lambda_.1} parent=87 // pred_fallthru
          _
        // Predicated region
        $region125: #{_lambda_.1} parent=87 // pred_check
          %p647 = pneg %p351
        $region126: #{_lambda_.1} parent=87 // pred_check_branch
          %649 = sbr.rel (%p647) target = $region128
        $region127: #{_lambda_.1} parent=87 // pred_region
          %650 = dma.done [#allocation18], 2304
        $region128: #{_lambda_.1} parent=87 // pred_fallthru
          _
        // Predicated region
        $region129: #{_lambda_.1} parent=87 // pred_check
          %p651 = pneg %p372
        $region130: #{_lambda_.1} parent=87 // pred_check_branch
          %653 = sbr.rel (%p651) target = $region132
        $region131: #{_lambda_.1} parent=87 // pred_region
          %654 = dma.done [#allocation18], 2048
        $region132: #{_lambda_.1} parent=87 // pred_fallthru
          _
        %p655 = scmp.lt.s32.totalorder %s36, 1
        %s656 = scalar_select %p655, %s36, 1
        %s657 = smul.addr %s656, 4
        %s658 = smul.addr %s657, 8
        %s659 = scalar_lea.vmem %s0, %s658
        %p660 = pneg %p57
        %p661 = pneg %p54
        %p662 = pneg %p78
        %p663 = pneg %p75
        %p664 = pneg %p99
        %p665 = pneg %p96
        %p666 = pneg %p120
        %p667 = pneg %p117
        %p668 = pneg %p141
        %p669 = pneg %p138
        %p670 = pneg %p162
        %p671 = pneg %p159
        %p672 = pneg %p183
        %p673 = pneg %p180
        %p674 = pneg %p204
        %p675 = pneg %p201
        %p676 = pneg %p225
        %p677 = pneg %p222
        %p678 = pneg %p246
        %p679 = pneg %p243
        %p680 = pneg %p267
        %p681 = pneg %p264
        %p682 = pneg %p288
        %p683 = pneg %p285
        %p684 = pneg %p309
        %p685 = pneg %p306
        %p686 = pneg %p330
        %p687 = pneg %p327
        %p688 = pneg %p351
        %p689 = pneg %p348
        %p690 = pneg %p372
        %p691 = pneg %p369
        %p692 = pneg %p393
        %p693 = pneg %p390
        %p694 = pneg %p419
        %p695 = pneg %p416
        %p696 = scmp.lt.s32.totalorder %s36, 1
        %s697 = scalar_select %p696, %s36, 1
        %s698 = scalar_lea.vmem %s17, %s697
        %p699 = scmp.lt.s32.totalorder %s36, 1
        %s700 = scalar_select %p699, %s36, 1
        %s701 = smul.addr %s700, 4
        %s702 = smul.addr %s701, 8
        %s703 = scalar_lea.vmem %s0, %s702
        %p704 = scmp.lt.s32.totalorder %s36, 1
        %s705 = scalar_select %p704, %s36, 1
        %s706 = scalar_lea.vmem %s17, %s705
        %v707 = vld [vmem:[%s703] sm:$0xff]
        %v708 = vld [vmem:[%s703 + $0x8] sm:$0xff]
        %v709 = vld [vmem:[%s703 + $0x10] sm:$0x1]
        %v710 = vld [vmem:[%s703 + $0x18] sm:$0x1]
        %v711 = vld [vmem:[#allocation3] sm:$0xff]
        %v712 = vld [vmem:[#allocation3 + $0x8] sm:$0xff]
        %v713 = vld [vmem:[#allocation5] sm:$0xff]
        %v714 = vld [vmem:[#allocation5 + $0x8] sm:$0xff]
        %716 = vset.pattern.permute.xlu0 0
        %717 = vperm.xlu0 %716, %v713
        %v718 = vpop.permute.xlu0 %717
        %721 = vset.pattern.permute.xlu0 0
        %722 = vperm.xlu0 %721, %v714
        %v723 = vpop.permute.xlu0 %722
        %vm725 = vcmask 72704
        %v727 = vsel %vm725, %v711, 0
        %v730 = vsel %vm725, %v712, 0
        %vm732 = vcmask 1040384
        %v734 = vsel %vm732, %v709, 0
        %v737 = vsel %vm732, %v710, 0
        %739 = vmatprep.subr.mxu0 0.0
        %740 = vmatpush1.msra.mxu0 0.0
        %741 = vmatprep.subr.mxu0 0.0
        %742 = vmatpush1.msra.mxu0 0.0
        %743 = vmatprep.subr.mxu0 0.0
        %744 = vmatpush1.msra.mxu0 0.0
        %745 = vmatprep.subr.mxu0 0.0
        %746 = vmatpush1.msra.mxu0 0.0
        %747 = vmatprep.subr.mxu0 0.0
        %748 = vmatpush1.msra.mxu0 0.0
        %749 = vmatprep.subr.mxu0 0.0
        %750 = vmatpush1.msra.mxu0 0.0
        %751 = vmatprep.subr.mxu0 0.0
        %752 = vmatpush1.msra.mxu0 0.0
        %753 = vmatprep.subr.mxu0 0.0
        %754 = vmatpush1.msra.mxu0 0.0
        %755 = vmatprep.subr.mxu0 0.0
        %756 = vmatpush1.msra.mxu0 0.0
        %757 = vmatprep.subr.mxu0 0.0
        %758 = vmatpush1.msra.mxu0 0.0
        %759 = vmatprep.subr.mxu0 0.0
        %760 = vmatpush1.msra.mxu0 0.0
        %761 = vmatprep.subr.mxu0 0.0
        %762 = vmatpush1.msra.mxu0 0.0
        %763 = vmatprep.subr.mxu0 0.0
        %764 = vmatpush1.msra.mxu0 0.0
        %765 = vmatprep.subr.mxu0 0.0
        %766 = vmatpush1.msra.mxu0 0.0
        %767 = vmatprep.subr.mxu0 %v737
        %768 = vmatpush1.msra.mxu0 %v734
        %769 = vmatprep.subr.mxu0 %v708
        %770 = vmatpush1.msra.mxu0 %v707
        %771 = vmatprep.subr.mxu0 0.0
        %772 = vmatpush2.msra.mxu0 0.0
        %773 = vmatprep.subr.mxu0 0.0
        %774 = vmatpush2.msra.mxu0 0.0
        %775 = vmatprep.subr.mxu0 0.0
        %776 = vmatpush2.msra.mxu0 0.0
        %777 = vmatprep.subr.mxu0 0.0
        %778 = vmatpush2.msra.mxu0 0.0
        %779 = vmatprep.subr.mxu0 0.0
        %780 = vmatpush2.msra.mxu0 0.0
        %781 = vmatprep.subr.mxu0 0.0
        %782 = vmatpush2.msra.mxu0 0.0
        %783 = vmatprep.subr.mxu0 0.0
        %784 = vmatpush2.msra.mxu0 0.0
        %785 = vmatprep.subr.mxu0 0.0
        %786 = vmatpush2.msra.mxu0 0.0
        %787 = vmatprep.subr.mxu0 0.0
        %788 = vmatpush2.msra.mxu0 0.0
        %789 = vmatprep.subr.mxu0 0.0
        %790 = vmatpush2.msra.mxu0 0.0
        %791 = vmatprep.subr.mxu0 0.0
        %792 = vmatpush2.msra.mxu0 0.0
        %793 = vmatprep.subr.mxu0 0.0
        %794 = vmatpush2.msra.mxu0 0.0
        %795 = vmatprep.subr.mxu0 0.0
        %796 = vmatpush2.msra.mxu0 0.0
        %797 = vmatprep.subr.mxu0 0.0
        %798 = vmatpush2.msra.mxu0 0.0
        %799 = vmatprep.subr.mxu0 0.0
        %800 = vmatpush2.msra.mxu0 0.0
        %801 = vmatprep.subr.mxu0 0.0
        %802 = vmatpush2.msra.mxu0 0.0
        %803 = vmatprep.mubr.f32.mxu0 0.0
        %804 = vmatmul.mubr.f32.gmra.mxu0 %v727
        %v805 = vpop.f32.mrf.mxu0
        %v806 = vadd.f32 %v718, %v805
        %v807 = vpop.f32.mrf.mxu0
        %v808 = vadd.f32 %v718, %v807
        %809 = vmatprep.mubr.f32.mxu0 0.0
        %810 = vmatmul.mubr.f32.gmra.mxu0 %v730
        %v811 = vpop.f32.mrf.mxu0
        %v812 = vadd.f32 %v723, %v811
        %v813 = vpop.f32.mrf.mxu0
        %v814 = vadd.f32 %v723, %v813
        %815 = vdwg.mxu0
        %v816 = vmul.f32 %v806, 0.2
        %v817 = vmul.f32 %v808, 0.2
        %v818 = vmul.f32 %v812, 0.2
        %v819 = vmul.f32 %v814, 0.2
        %v820 = vmax.f32 %v806, %v816
        %v821 = vmax.f32 %v808, %v817
        %v822 = vmax.f32 %v812, %v818
        %v823 = vmax.f32 %v814, %v819
        %v824 = vld [vmem:[#allocation10] sm:$0xff]
        %v825 = vld [vmem:[#allocation10 + $0x8] sm:$0xff]
        %v826 = vld [vmem:[#allocation10 + $0x10] sm:$0xff]
        %v827 = vld [vmem:[#allocation10 + $0x18] sm:$0xff]
        %v828 = vld [vmem:[#allocation10 + $0x20] sm:$0xff]
        %v829 = vld [vmem:[#allocation10 + $0x28] sm:$0xff]
        %v830 = vld [vmem:[#allocation10 + $0x30] sm:$0xff]
        %v831 = vld [vmem:[#allocation10 + $0x38] sm:$0xff]
        %v832 = vld [vmem:[#allocation10 + $0x40] sm:$0xff]
        %v833 = vld [vmem:[#allocation10 + $0x48] sm:$0xff]
        %v834 = vld [vmem:[#allocation10 + $0x50] sm:$0xff]
        %v835 = vld [vmem:[#allocation10 + $0x58] sm:$0xff]
        %v836 = vld [vmem:[#allocation10 + $0x60] sm:$0xff]
        %v837 = vld [vmem:[#allocation10 + $0x68] sm:$0xff]
        %v838 = vld [vmem:[#allocation10 + $0x70] sm:$0xff]
        %v839 = vld [vmem:[#allocation10 + $0x78] sm:$0xff]
        %v840 = vld [vmem:[#allocation10 + $0x80] sm:$0xff]
        %v841 = vld [vmem:[#allocation10 + $0x88] sm:$0xff]
        %v842 = vld [vmem:[#allocation10 + $0x90] sm:$0xff]
        %v843 = vld [vmem:[#allocation10 + $0x98] sm:$0xff]
        %v844 = vld [vmem:[#allocation10 + $0xa0] sm:$0xff]
        %v845 = vld [vmem:[#allocation10 + $0xa8] sm:$0xff]
        %v846 = vld [vmem:[#allocation10 + $0xb0] sm:$0xff]
        %v847 = vld [vmem:[#allocation10 + $0xb8] sm:$0xff]
        %v848 = vld [vmem:[#allocation10 + $0xc0] sm:$0xff]
        %v849 = vld [vmem:[#allocation10 + $0xc8] sm:$0xff]
        %v850 = vld [vmem:[#allocation10 + $0xd0] sm:$0xff]
        %v851 = vld [vmem:[#allocation10 + $0xd8] sm:$0xff]
        %v852 = vld [vmem:[#allocation10 + $0xe0] sm:$0xff]
        %v853 = vld [vmem:[#allocation10 + $0xe8] sm:$0xff]
        %v854 = vld [vmem:[#allocation10 + $0xf0] sm:$0xff]
        %v855 = vld [vmem:[#allocation10 + $0xf8] sm:$0xff]
        %856 = vmatprep.subr.mxu0 0.0
        %857 = vmatpush1.msra.mxu0 %v839
        %858 = vmatprep.subr.mxu0 0.0
        %859 = vmatpush1.msra.mxu0 %v838
        %860 = vmatprep.subr.mxu0 0.0
        %861 = vmatpush1.msra.mxu0 %v837
        %862 = vmatprep.subr.mxu0 0.0
        %863 = vmatpush1.msra.mxu0 %v836
        %864 = vmatprep.subr.mxu0 0.0
        %865 = vmatpush1.msra.mxu0 %v835
        %866 = vmatprep.subr.mxu0 0.0
        %867 = vmatpush1.msra.mxu0 %v834
        %868 = vmatprep.subr.mxu0 0.0
        %869 = vmatpush1.msra.mxu0 %v833
        %870 = vmatprep.subr.mxu0 0.0
        %871 = vmatpush1.msra.mxu0 %v832
        %872 = vmatprep.subr.mxu0 0.0
        %873 = vmatpush1.msra.mxu0 %v831
        %874 = vmatprep.subr.mxu0 0.0
        %875 = vmatpush1.msra.mxu0 %v830
        %876 = vmatprep.subr.mxu0 0.0
        %877 = vmatpush1.msra.mxu0 %v829
        %878 = vmatprep.subr.mxu0 0.0
        %879 = vmatpush1.msra.mxu0 %v828
        %880 = vmatprep.subr.mxu0 0.0
        %881 = vmatpush1.msra.mxu0 %v827
        %882 = vmatprep.subr.mxu0 0.0
        %883 = vmatpush1.msra.mxu0 %v826
        %884 = vmatprep.subr.mxu0 0.0
        %885 = vmatpush1.msra.mxu0 %v825
        %886 = vmatprep.subr.mxu0 0.0
        %887 = vmatpush1.msra.mxu0 %v824
        %888 = vmatprep.subr.mxu0 0.0
        %889 = vmatpush2.msra.mxu0 %v855
        %890 = vmatprep.subr.mxu0 0.0
        %891 = vmatpush2.msra.mxu0 %v854
        %892 = vmatprep.subr.mxu0 0.0
        %893 = vmatpush2.msra.mxu0 %v853
        %894 = vmatprep.subr.mxu0 0.0
        %895 = vmatpush2.msra.mxu0 %v852
        %896 = vmatprep.subr.mxu0 0.0
        %897 = vmatpush2.msra.mxu0 %v851
        %898 = vmatprep.subr.mxu0 0.0
        %899 = vmatpush2.msra.mxu0 %v850
        %900 = vmatprep.subr.mxu0 0.0
        %901 = vmatpush2.msra.mxu0 %v849
        %902 = vmatprep.subr.mxu0 0.0
        %903 = vmatpush2.msra.mxu0 %v848
        %904 = vmatprep.subr.mxu0 0.0
        %905 = vmatpush2.msra.mxu0 %v847
        %906 = vmatprep.subr.mxu0 0.0
        %907 = vmatpush2.msra.mxu0 %v846
        %908 = vmatprep.subr.mxu0 0.0
        %909 = vmatpush2.msra.mxu0 %v845
        %910 = vmatprep.subr.mxu0 0.0
        %911 = vmatpush2.msra.mxu0 %v844
        %912 = vmatprep.subr.mxu0 0.0
        %913 = vmatpush2.msra.mxu0 %v843
        %914 = vmatprep.subr.mxu0 0.0
        %915 = vmatpush2.msra.mxu0 %v842
        %916 = vmatprep.subr.mxu0 0.0
        %917 = vmatpush2.msra.mxu0 %v841
        %918 = vmatprep.subr.mxu0 0.0
        %919 = vmatpush2.msra.mxu0 %v840
        %920 = vmatprep.mubr.f32.mxu0 %v821
        %921 = vmatmul.mubr.f32.gmra.mxu0 %v820
        %v922 = vpop.f32.mrf.mxu0
        %v923 = vadd.f32 0.0, %v922
        %v924 = vpop.f32.mrf.mxu0
        %925 = vmatprep.mubr.f32.mxu0 %v823
        %926 = vmatmul.mubr.f32.gmra.mxu0 %v822
        %v927 = vpop.f32.mrf.mxu0
        %v928 = vadd.f32 0.0, %v927
        %v929 = vpop.f32.mrf.mxu0
        %930 = vdwg.mxu0
        %v931 = vld [vmem:[#allocation7] sm:$0xff]
        %v932 = vld [vmem:[#allocation7 + $0x8] sm:$0xff]
        %v933 = vld [vmem:[#allocation7 + $0x10] sm:$0xff]
        %v934 = vld [vmem:[#allocation7 + $0x18] sm:$0xff]
        %s935 = scalar_lea.vmem [#allocation10], 256
        %v936 = vld [vmem:[%s935] sm:$0xff]
        %v937 = vld [vmem:[%s935 + $0x8] sm:$0xff]
        %v938 = vld [vmem:[%s935 + $0x10] sm:$0xff]
        %v939 = vld [vmem:[%s935 + $0x18] sm:$0xff]
        %v940 = vld [vmem:[%s935 + $0x20] sm:$0xff]
        %v941 = vld [vmem:[%s935 + $0x28] sm:$0xff]
        %v942 = vld [vmem:[%s935 + $0x30] sm:$0xff]
        %v943 = vld [vmem:[%s935 + $0x38] sm:$0xff]
        %v944 = vld [vmem:[%s935 + $0x40] sm:$0xff]
        %v945 = vld [vmem:[%s935 + $0x48] sm:$0xff]
        %v946 = vld [vmem:[%s935 + $0x50] sm:$0xff]
        %v947 = vld [vmem:[%s935 + $0x58] sm:$0xff]
        %v948 = vld [vmem:[%s935 + $0x60] sm:$0xff]
        %v949 = vld [vmem:[%s935 + $0x68] sm:$0xff]
        %v950 = vld [vmem:[%s935 + $0x70] sm:$0xff]
        %v951 = vld [vmem:[%s935 + $0x78] sm:$0xff]
        %v952 = vld [vmem:[%s935 + $0x80] sm:$0xff]
        %v953 = vld [vmem:[%s935 + $0x88] sm:$0xff]
        %v954 = vld [vmem:[%s935 + $0x90] sm:$0xff]
        %v955 = vld [vmem:[%s935 + $0x98] sm:$0xff]
        %v956 = vld [vmem:[%s935 + $0xa0] sm:$0xff]
        %v957 = vld [vmem:[%s935 + $0xa8] sm:$0xff]
        %v958 = vld [vmem:[%s935 + $0xb0] sm:$0xff]
        %v959 = vld [vmem:[%s935 + $0xb8] sm:$0xff]
        %v960 = vld [vmem:[%s935 + $0xc0] sm:$0xff]
        %v961 = vld [vmem:[%s935 + $0xc8] sm:$0xff]
        %v962 = vld [vmem:[%s935 + $0xd0] sm:$0xff]
        %v963 = vld [vmem:[%s935 + $0xd8] sm:$0xff]
        %v964 = vld [vmem:[%s935 + $0xe0] sm:$0xff]
        %v965 = vld [vmem:[%s935 + $0xe8] sm:$0xff]
        %v966 = vld [vmem:[%s935 + $0xf0] sm:$0xff]
        %v967 = vld [vmem:[%s935 + $0xf8] sm:$0xff]
        %968 = vmatprep.subr.mxu0 0.0
        %969 = vmatpush1.msra.mxu0 %v951
        %970 = vmatprep.subr.mxu0 0.0
        %971 = vmatpush1.msra.mxu0 %v950
        %972 = vmatprep.subr.mxu0 0.0
        %973 = vmatpush1.msra.mxu0 %v949
        %974 = vmatprep.subr.mxu0 0.0
        %975 = vmatpush1.msra.mxu0 %v948
        %976 = vmatprep.subr.mxu0 0.0
        %977 = vmatpush1.msra.mxu0 %v947
        %978 = vmatprep.subr.mxu0 0.0
        %979 = vmatpush1.msra.mxu0 %v946
        %980 = vmatprep.subr.mxu0 0.0
        %981 = vmatpush1.msra.mxu0 %v945
        %982 = vmatprep.subr.mxu0 0.0
        %983 = vmatpush1.msra.mxu0 %v944
        %984 = vmatprep.subr.mxu0 0.0
        %985 = vmatpush1.msra.mxu0 %v943
        %986 = vmatprep.subr.mxu0 0.0
        %987 = vmatpush1.msra.mxu0 %v942
        %988 = vmatprep.subr.mxu0 0.0
        %989 = vmatpush1.msra.mxu0 %v941
        %990 = vmatprep.subr.mxu0 0.0
        %991 = vmatpush1.msra.mxu0 %v940
        %992 = vmatprep.subr.mxu0 0.0
        %993 = vmatpush1.msra.mxu0 %v939
        %994 = vmatprep.subr.mxu0 0.0
        %995 = vmatpush1.msra.mxu0 %v938
        %996 = vmatprep.subr.mxu0 0.0
        %997 = vmatpush1.msra.mxu0 %v937
        %998 = vmatprep.subr.mxu0 0.0
        %999 = vmatpush1.msra.mxu0 %v936
        %1000 = vmatprep.subr.mxu0 0.0
        %1001 = vmatpush2.msra.mxu0 %v967
        %1002 = vmatprep.subr.mxu0 0.0
        %1003 = vmatpush2.msra.mxu0 %v966
        %1004 = vmatprep.subr.mxu0 0.0
        %1005 = vmatpush2.msra.mxu0 %v965
        %1006 = vmatprep.subr.mxu0 0.0
        %1007 = vmatpush2.msra.mxu0 %v964
        %1008 = vmatprep.subr.mxu0 0.0
        %1009 = vmatpush2.msra.mxu0 %v963
        %1010 = vmatprep.subr.mxu0 0.0
        %1011 = vmatpush2.msra.mxu0 %v962
        %1012 = vmatprep.subr.mxu0 0.0
        %1013 = vmatpush2.msra.mxu0 %v961
        %1014 = vmatprep.subr.mxu0 0.0
        %1015 = vmatpush2.msra.mxu0 %v960
        %1016 = vmatprep.subr.mxu0 0.0
        %1017 = vmatpush2.msra.mxu0 %v959
        %1018 = vmatprep.subr.mxu0 0.0
        %1019 = vmatpush2.msra.mxu0 %v958
        %1020 = vmatprep.subr.mxu0 0.0
        %1021 = vmatpush2.msra.mxu0 %v957
        %1022 = vmatprep.subr.mxu0 0.0
        %1023 = vmatpush2.msra.mxu0 %v956
        %1024 = vmatprep.subr.mxu0 0.0
        %1025 = vmatpush2.msra.mxu0 %v955
        %1026 = vmatprep.subr.mxu0 0.0
        %1027 = vmatpush2.msra.mxu0 %v954
        %1028 = vmatprep.subr.mxu0 0.0
        %1029 = vmatpush2.msra.mxu0 %v953
        %1030 = vmatprep.subr.mxu0 0.0
        %1031 = vmatpush2.msra.mxu0 %v952
        %1032 = vmatprep.mubr.f32.mxu0 %v821
        %1033 = vmatmul.mubr.f32.gmra.mxu0 %v820
        %v1034 = vpop.f32.mrf.mxu0
        %v1035 = vadd.f32 0.0, %v1034
        %v1036 = vpop.f32.mrf.mxu0
        %1037 = vmatprep.mubr.f32.mxu0 %v823
        %1038 = vmatmul.mubr.f32.gmra.mxu0 %v822
        %v1039 = vpop.f32.mrf.mxu0
        %v1040 = vadd.f32 0.0, %v1039
        %v1041 = vpop.f32.mrf.mxu0
        %1042 = vdwg.mxu0
        %s1043 = scalar_lea.vmem [#allocation7], 32
        %v1044 = vld [vmem:[%s1043] sm:$0xff]
        %v1045 = vld [vmem:[%s1043 + $0x8] sm:$0xff]
        %v1046 = vld [vmem:[%s1043 + $0x10] sm:$0xff]
        %v1047 = vld [vmem:[%s1043 + $0x18] sm:$0xff]
        %vm1048 = vcmask 130048
        %v1050 = vsel %vm1048, %v1044, 0
        %v1053 = vsel %vm1048, %v1045, 0
        %v1056 = vsel %vm1048, %v1046, 0
        %v1059 = vsel %vm1048, %v1047, 0
        %1061 = vmatprep.subr.mxu0 0.0
        %1062 = vmatpush1.msra.mxu0 0.0
        %1063 = vmatprep.subr.mxu0 0.0
        %1064 = vmatpush1.msra.mxu0 0.0
        %1065 = vmatprep.subr.mxu0 0.0
        %1066 = vmatpush1.msra.mxu0 0.0
        %1067 = vmatprep.subr.mxu0 0.0
        %1068 = vmatpush1.msra.mxu0 0.0
        %1069 = vmatprep.subr.mxu0 0.0
        %1070 = vmatpush1.msra.mxu0 0.0
        %1071 = vmatprep.subr.mxu0 0.0
        %1072 = vmatpush1.msra.mxu0 0.0
        %1073 = vmatprep.subr.mxu0 0.0
        %1074 = vmatpush1.msra.mxu0 0.0
        %1075 = vmatprep.subr.mxu0 0.0
        %1076 = vmatpush1.msra.mxu0 0.0
        %1077 = vmatprep.subr.mxu0 0.0
        %1078 = vmatpush1.msra.mxu0 0.0
        %1079 = vmatprep.subr.mxu0 0.0
        %1080 = vmatpush1.msra.mxu0 0.0
        %1081 = vmatprep.subr.mxu0 0.0
        %1082 = vmatpush1.msra.mxu0 0.0
        %1083 = vmatprep.subr.mxu0 0.0
        %1084 = vmatpush1.msra.mxu0 0.0
        %1085 = vmatprep.subr.mxu0 0.0
        %1086 = vmatpush1.msra.mxu0 0.0
        %1087 = vmatprep.subr.mxu0 0.0
        %1088 = vmatpush1.msra.mxu0 0.0
        %1089 = vmatprep.subr.mxu0 0.0
        %1090 = vmatpush1.msra.mxu0 %v1040
        %1091 = vmatprep.subr.mxu0 0.0
        %1092 = vmatpush1.msra.mxu0 %v1035
        %1093 = vmatprep.subr.mxu0 0.0
        %1094 = vmatpush2.msra.mxu0 0.0
        %1095 = vmatprep.subr.mxu0 0.0
        %1096 = vmatpush2.msra.mxu0 0.0
        %1097 = vmatprep.subr.mxu0 0.0
        %1098 = vmatpush2.msra.mxu0 0.0
        %1099 = vmatprep.subr.mxu0 0.0
        %1100 = vmatpush2.msra.mxu0 0.0
        %1101 = vmatprep.subr.mxu0 0.0
        %1102 = vmatpush2.msra.mxu0 0.0
        %1103 = vmatprep.subr.mxu0 0.0
        %1104 = vmatpush2.msra.mxu0 0.0
        %1105 = vmatprep.subr.mxu0 0.0
        %1106 = vmatpush2.msra.mxu0 0.0
        %1107 = vmatprep.subr.mxu0 0.0
        %1108 = vmatpush2.msra.mxu0 0.0
        %1109 = vmatprep.subr.mxu0 0.0
        %1110 = vmatpush2.msra.mxu0 0.0
        %1111 = vmatprep.subr.mxu0 0.0
        %1112 = vmatpush2.msra.mxu0 0.0
        %1113 = vmatprep.subr.mxu0 0.0
        %1114 = vmatpush2.msra.mxu0 0.0
        %1115 = vmatprep.subr.mxu0 0.0
        %1116 = vmatpush2.msra.mxu0 0.0
        %1117 = vmatprep.subr.mxu0 0.0
        %1118 = vmatpush2.msra.mxu0 0.0
        %1119 = vmatprep.subr.mxu0 0.0
        %1120 = vmatpush2.msra.mxu0 0.0
        %1121 = vmatprep.subr.mxu0 0.0
        %1122 = vmatpush2.msra.mxu0 0.0
        %1123 = vmatprep.subr.mxu0 0.0
        %1124 = vmatpush2.msra.mxu0 0.0
        %1125 = vmatprep.mubr.f32.mxu0 0.0
        %1126 = vmatmul.mubr.f32.gmra.mxu0 %v1050
        %v1127 = vpop.f32.mrf.mxu0
        %v1128 = vadd.f32 0.0, %v1127
        %v1129 = vpop.f32.mrf.mxu0
        %1130 = vmatprep.mubr.f32.mxu0 0.0
        %1131 = vmatmul.mubr.f32.gmra.mxu0 %v1053
        %v1132 = vpop.f32.mrf.mxu0
        %v1133 = vadd.f32 0.0, %v1132
        %v1134 = vpop.f32.mrf.mxu0
        %1135 = vmatprep.mubr.f32.mxu0 0.0
        %1136 = vmatmul.mubr.f32.gmra.mxu0 %v1056
        %v1137 = vpop.f32.mrf.mxu0
        %v1138 = vadd.f32 0.0, %v1137
        %v1139 = vpop.f32.mrf.mxu0
        %1140 = vmatprep.mubr.f32.mxu0 0.0
        %1141 = vmatmul.mubr.f32.gmra.mxu0 %v1059
        %v1142 = vpop.f32.mrf.mxu0
        %v1143 = vadd.f32 0.0, %v1142
        %v1144 = vpop.f32.mrf.mxu0
        %1145 = vdwg.mxu0
        %v1147 = vsel %vm1048, %v931, 0
        %v1150 = vsel %vm1048, %v932, 0
        %v1153 = vsel %vm1048, %v933, 0
        %v1156 = vsel %vm1048, %v934, 0
        %1158 = vmatprep.subr.mxu0 0.0
        %1159 = vmatpush1.msra.mxu0 0.0
        %1160 = vmatprep.subr.mxu0 0.0
        %1161 = vmatpush1.msra.mxu0 0.0
        %1162 = vmatprep.subr.mxu0 0.0
        %1163 = vmatpush1.msra.mxu0 0.0
        %1164 = vmatprep.subr.mxu0 0.0
        %1165 = vmatpush1.msra.mxu0 0.0
        %1166 = vmatprep.subr.mxu0 0.0
        %1167 = vmatpush1.msra.mxu0 0.0
        %1168 = vmatprep.subr.mxu0 0.0
        %1169 = vmatpush1.msra.mxu0 0.0
        %1170 = vmatprep.subr.mxu0 0.0
        %1171 = vmatpush1.msra.mxu0 0.0
        %1172 = vmatprep.subr.mxu0 0.0
        %1173 = vmatpush1.msra.mxu0 0.0
        %1174 = vmatprep.subr.mxu0 0.0
        %1175 = vmatpush1.msra.mxu0 0.0
        %1176 = vmatprep.subr.mxu0 0.0
        %1177 = vmatpush1.msra.mxu0 0.0
        %1178 = vmatprep.subr.mxu0 0.0
        %1179 = vmatpush1.msra.mxu0 0.0
        %1180 = vmatprep.subr.mxu0 0.0
        %1181 = vmatpush1.msra.mxu0 0.0
        %1182 = vmatprep.subr.mxu0 0.0
        %1183 = vmatpush1.msra.mxu0 0.0
        %1184 = vmatprep.subr.mxu0 0.0
        %1185 = vmatpush1.msra.mxu0 0.0
        %1186 = vmatprep.subr.mxu0 0.0
        %1187 = vmatpush1.msra.mxu0 %v928
        %1188 = vmatprep.subr.mxu0 0.0
        %1189 = vmatpush1.msra.mxu0 %v923
        %1190 = vmatprep.subr.mxu0 0.0
        %1191 = vmatpush2.msra.mxu0 0.0
        %1192 = vmatprep.subr.mxu0 0.0
        %1193 = vmatpush2.msra.mxu0 0.0
        %1194 = vmatprep.subr.mxu0 0.0
        %1195 = vmatpush2.msra.mxu0 0.0
        %1196 = vmatprep.subr.mxu0 0.0
        %1197 = vmatpush2.msra.mxu0 0.0
        %1198 = vmatprep.subr.mxu0 0.0
        %1199 = vmatpush2.msra.mxu0 0.0
        %1200 = vmatprep.subr.mxu0 0.0
        %1201 = vmatpush2.msra.mxu0 0.0
        %1202 = vmatprep.subr.mxu0 0.0
        %1203 = vmatpush2.msra.mxu0 0.0
        %1204 = vmatprep.subr.mxu0 0.0
        %1205 = vmatpush2.msra.mxu0 0.0
        %1206 = vmatprep.subr.mxu0 0.0
        %1207 = vmatpush2.msra.mxu0 0.0
        %1208 = vmatprep.subr.mxu0 0.0
        %1209 = vmatpush2.msra.mxu0 0.0
        %1210 = vmatprep.subr.mxu0 0.0
        %1211 = vmatpush2.msra.mxu0 0.0
        %1212 = vmatprep.subr.mxu0 0.0
        %1213 = vmatpush2.msra.mxu0 0.0
        %1214 = vmatprep.subr.mxu0 0.0
        %1215 = vmatpush2.msra.mxu0 0.0
        %1216 = vmatprep.subr.mxu0 0.0
        %1217 = vmatpush2.msra.mxu0 0.0
        %1218 = vmatprep.subr.mxu0 0.0
        %1219 = vmatpush2.msra.mxu0 0.0
        %1220 = vmatprep.subr.mxu0 0.0
        %1221 = vmatpush2.msra.mxu0 0.0
        %1222 = vmatprep.mubr.f32.mxu0 0.0
        %1223 = vmatmul.mubr.f32.gmra.mxu0 %v1147
        %v1224 = vpop.f32.mrf.mxu0
        %v1225 = vadd.f32 %v1128, %v1224
        %v1226 = vpop.f32.mrf.mxu0
        %1227 = vmatprep.mubr.f32.mxu0 0.0
        %1228 = vmatmul.mubr.f32.gmra.mxu0 %v1150
        %v1229 = vpop.f32.mrf.mxu0
        %v1230 = vadd.f32 %v1133, %v1229
        %v1231 = vpop.f32.mrf.mxu0
        %1232 = vmatprep.mubr.f32.mxu0 0.0
        %1233 = vmatmul.mubr.f32.gmra.mxu0 %v1153
        %v1234 = vpop.f32.mrf.mxu0
        %v1235 = vadd.f32 %v1138, %v1234
        %v1236 = vpop.f32.mrf.mxu0
        %1237 = vmatprep.mubr.f32.mxu0 0.0
        %1238 = vmatmul.mubr.f32.gmra.mxu0 %v1156
        %v1239 = vpop.f32.mrf.mxu0
        %v1240 = vadd.f32 %v1143, %v1239
        %v1241 = vpop.f32.mrf.mxu0
        %1242 = vdwg.mxu0
        %s1243 = scalar_lea.vmem [#allocation10], 512
        %v1244 = vld [vmem:[%s1243] sm:$0xff]
        %v1245 = vld [vmem:[%s1243 + $0x8] sm:$0xff]
        %v1246 = vld [vmem:[%s1243 + $0x10] sm:$0xff]
        %v1247 = vld [vmem:[%s1243 + $0x18] sm:$0xff]
        %v1248 = vld [vmem:[%s1243 + $0x20] sm:$0xff]
        %v1249 = vld [vmem:[%s1243 + $0x28] sm:$0xff]
        %v1250 = vld [vmem:[%s1243 + $0x30] sm:$0xff]
        %v1251 = vld [vmem:[%s1243 + $0x38] sm:$0xff]
        %v1252 = vld [vmem:[%s1243 + $0x40] sm:$0xff]
        %v1253 = vld [vmem:[%s1243 + $0x48] sm:$0xff]
        %v1254 = vld [vmem:[%s1243 + $0x50] sm:$0xff]
        %v1255 = vld [vmem:[%s1243 + $0x58] sm:$0xff]
        %v1256 = vld [vmem:[%s1243 + $0x60] sm:$0xff]
        %v1257 = vld [vmem:[%s1243 + $0x68] sm:$0xff]
        %v1258 = vld [vmem:[%s1243 + $0x70] sm:$0xff]
        %v1259 = vld [vmem:[%s1243 + $0x78] sm:$0xff]
        %v1260 = vld [vmem:[%s1243 + $0x80] sm:$0xff]
        %v1261 = vld [vmem:[%s1243 + $0x88] sm:$0xff]
        %v1262 = vld [vmem:[%s1243 + $0x90] sm:$0xff]
        %v1263 = vld [vmem:[%s1243 + $0x98] sm:$0xff]
        %v1264 = vld [vmem:[%s1243 + $0xa0] sm:$0xff]
        %v1265 = vld [vmem:[%s1243 + $0xa8] sm:$0xff]
        %v1266 = vld [vmem:[%s1243 + $0xb0] sm:$0xff]
        %v1267 = vld [vmem:[%s1243 + $0xb8] sm:$0xff]
        %v1268 = vld [vmem:[%s1243 + $0xc0] sm:$0xff]
        %v1269 = vld [vmem:[%s1243 + $0xc8] sm:$0xff]
        %v1270 = vld [vmem:[%s1243 + $0xd0] sm:$0xff]
        %v1271 = vld [vmem:[%s1243 + $0xd8] sm:$0xff]
        %v1272 = vld [vmem:[%s1243 + $0xe0] sm:$0xff]
        %v1273 = vld [vmem:[%s1243 + $0xe8] sm:$0xff]
        %v1274 = vld [vmem:[%s1243 + $0xf0] sm:$0xff]
        %v1275 = vld [vmem:[%s1243 + $0xf8] sm:$0xff]
        %1276 = vmatprep.subr.mxu0 0.0
        %1277 = vmatpush1.msra.mxu0 %v1259
        %1278 = vmatprep.subr.mxu0 0.0
        %1279 = vmatpush1.msra.mxu0 %v1258
        %1280 = vmatprep.subr.mxu0 0.0
        %1281 = vmatpush1.msra.mxu0 %v1257
        %1282 = vmatprep.subr.mxu0 0.0
        %1283 = vmatpush1.msra.mxu0 %v1256
        %1284 = vmatprep.subr.mxu0 0.0
        %1285 = vmatpush1.msra.mxu0 %v1255
        %1286 = vmatprep.subr.mxu0 0.0
        %1287 = vmatpush1.msra.mxu0 %v1254
        %1288 = vmatprep.subr.mxu0 0.0
        %1289 = vmatpush1.msra.mxu0 %v1253
        %1290 = vmatprep.subr.mxu0 0.0
        %1291 = vmatpush1.msra.mxu0 %v1252
        %1292 = vmatprep.subr.mxu0 0.0
        %1293 = vmatpush1.msra.mxu0 %v1251
        %1294 = vmatprep.subr.mxu0 0.0
        %1295 = vmatpush1.msra.mxu0 %v1250
        %1296 = vmatprep.subr.mxu0 0.0
        %1297 = vmatpush1.msra.mxu0 %v1249
        %1298 = vmatprep.subr.mxu0 0.0
        %1299 = vmatpush1.msra.mxu0 %v1248
        %1300 = vmatprep.subr.mxu0 0.0
        %1301 = vmatpush1.msra.mxu0 %v1247
        %1302 = vmatprep.subr.mxu0 0.0
        %1303 = vmatpush1.msra.mxu0 %v1246
        %1304 = vmatprep.subr.mxu0 0.0
        %1305 = vmatpush1.msra.mxu0 %v1245
        %1306 = vmatprep.subr.mxu0 0.0
        %1307 = vmatpush1.msra.mxu0 %v1244
        %1308 = vmatprep.subr.mxu0 0.0
        %1309 = vmatpush2.msra.mxu0 %v1275
        %1310 = vmatprep.subr.mxu0 0.0
        %1311 = vmatpush2.msra.mxu0 %v1274
        %1312 = vmatprep.subr.mxu0 0.0
        %1313 = vmatpush2.msra.mxu0 %v1273
        %1314 = vmatprep.subr.mxu0 0.0
        %1315 = vmatpush2.msra.mxu0 %v1272
        %1316 = vmatprep.subr.mxu0 0.0
        %1317 = vmatpush2.msra.mxu0 %v1271
        %1318 = vmatprep.subr.mxu0 0.0
        %1319 = vmatpush2.msra.mxu0 %v1270
        %1320 = vmatprep.subr.mxu0 0.0
        %1321 = vmatpush2.msra.mxu0 %v1269
        %1322 = vmatprep.subr.mxu0 0.0
        %1323 = vmatpush2.msra.mxu0 %v1268
        %1324 = vmatprep.subr.mxu0 0.0
        %1325 = vmatpush2.msra.mxu0 %v1267
        %1326 = vmatprep.subr.mxu0 0.0
        %1327 = vmatpush2.msra.mxu0 %v1266
        %1328 = vmatprep.subr.mxu0 0.0
        %1329 = vmatpush2.msra.mxu0 %v1265
        %1330 = vmatprep.subr.mxu0 0.0
        %1331 = vmatpush2.msra.mxu0 %v1264
        %1332 = vmatprep.subr.mxu0 0.0
        %1333 = vmatpush2.msra.mxu0 %v1263
        %1334 = vmatprep.subr.mxu0 0.0
        %1335 = vmatpush2.msra.mxu0 %v1262
        %1336 = vmatprep.subr.mxu0 0.0
        %1337 = vmatpush2.msra.mxu0 %v1261
        %1338 = vmatprep.subr.mxu0 0.0
        %1339 = vmatpush2.msra.mxu0 %v1260
        %1340 = vmatprep.mubr.f32.mxu0 %v821
        %1341 = vmatmul.mubr.f32.gmra.mxu0 %v820
        %v1342 = vpop.f32.mrf.mxu0
        %v1343 = vadd.f32 0.0, %v1342
        %v1344 = vpop.f32.mrf.mxu0
        %1345 = vmatprep.mubr.f32.mxu0 %v823
        %1346 = vmatmul.mubr.f32.gmra.mxu0 %v822
        %v1347 = vpop.f32.mrf.mxu0
        %v1348 = vadd.f32 0.0, %v1347
        %v1349 = vpop.f32.mrf.mxu0
        %1350 = vdwg.mxu0
        %s1351 = scalar_lea.vmem [#allocation7], 64
        %v1352 = vld [vmem:[%s1351] sm:$0xff]
        %v1353 = vld [vmem:[%s1351 + $0x8] sm:$0xff]
        %v1354 = vld [vmem:[%s1351 + $0x10] sm:$0xff]
        %v1355 = vld [vmem:[%s1351 + $0x18] sm:$0xff]
        %v1357 = vsel %vm1048, %v1352, 0
        %v1360 = vsel %vm1048, %v1353, 0
        %v1363 = vsel %vm1048, %v1354, 0
        %v1366 = vsel %vm1048, %v1355, 0
        %1368 = vmatprep.subr.mxu0 0.0
        %1369 = vmatpush1.msra.mxu0 0.0
        %1370 = vmatprep.subr.mxu0 0.0
        %1371 = vmatpush1.msra.mxu0 0.0
        %1372 = vmatprep.subr.mxu0 0.0
        %1373 = vmatpush1.msra.mxu0 0.0
        %1374 = vmatprep.subr.mxu0 0.0
        %1375 = vmatpush1.msra.mxu0 0.0
        %1376 = vmatprep.subr.mxu0 0.0
        %1377 = vmatpush1.msra.mxu0 0.0
        %1378 = vmatprep.subr.mxu0 0.0
        %1379 = vmatpush1.msra.mxu0 0.0
        %1380 = vmatprep.subr.mxu0 0.0
        %1381 = vmatpush1.msra.mxu0 0.0
        %1382 = vmatprep.subr.mxu0 0.0
        %1383 = vmatpush1.msra.mxu0 0.0
        %1384 = vmatprep.subr.mxu0 0.0
        %1385 = vmatpush1.msra.mxu0 0.0
        %1386 = vmatprep.subr.mxu0 0.0
        %1387 = vmatpush1.msra.mxu0 0.0
        %1388 = vmatprep.subr.mxu0 0.0
        %1389 = vmatpush1.msra.mxu0 0.0
        %1390 = vmatprep.subr.mxu0 0.0
        %1391 = vmatpush1.msra.mxu0 0.0
        %1392 = vmatprep.subr.mxu0 0.0
        %1393 = vmatpush1.msra.mxu0 0.0
        %1394 = vmatprep.subr.mxu0 0.0
        %1395 = vmatpush1.msra.mxu0 0.0
        %1396 = vmatprep.subr.mxu0 0.0
        %1397 = vmatpush1.msra.mxu0 %v1348
        %1398 = vmatprep.subr.mxu0 0.0
        %1399 = vmatpush1.msra.mxu0 %v1343
        %1400 = vmatprep.subr.mxu0 0.0
        %1401 = vmatpush2.msra.mxu0 0.0
        %1402 = vmatprep.subr.mxu0 0.0
        %1403 = vmatpush2.msra.mxu0 0.0
        %1404 = vmatprep.subr.mxu0 0.0
        %1405 = vmatpush2.msra.mxu0 0.0
        %1406 = vmatprep.subr.mxu0 0.0
        %1407 = vmatpush2.msra.mxu0 0.0
        %1408 = vmatprep.subr.mxu0 0.0
        %1409 = vmatpush2.msra.mxu0 0.0
        %1410 = vmatprep.subr.mxu0 0.0
        %1411 = vmatpush2.msra.mxu0 0.0
        %1412 = vmatprep.subr.mxu0 0.0
        %1413 = vmatpush2.msra.mxu0 0.0
        %1414 = vmatprep.subr.mxu0 0.0
        %1415 = vmatpush2.msra.mxu0 0.0
        %1416 = vmatprep.subr.mxu0 0.0
        %1417 = vmatpush2.msra.mxu0 0.0
        %1418 = vmatprep.subr.mxu0 0.0
        %1419 = vmatpush2.msra.mxu0 0.0
        %1420 = vmatprep.subr.mxu0 0.0
        %1421 = vmatpush2.msra.mxu0 0.0
        %1422 = vmatprep.subr.mxu0 0.0
        %1423 = vmatpush2.msra.mxu0 0.0
        %1424 = vmatprep.subr.mxu0 0.0
        %1425 = vmatpush2.msra.mxu0 0.0
        %1426 = vmatprep.subr.mxu0 0.0
        %1427 = vmatpush2.msra.mxu0 0.0
        %1428 = vmatprep.subr.mxu0 0.0
        %1429 = vmatpush2.msra.mxu0 0.0
        %1430 = vmatprep.subr.mxu0 0.0
        %1431 = vmatpush2.msra.mxu0 0.0
        %1432 = vmatprep.mubr.f32.mxu0 0.0
        %1433 = vmatmul.mubr.f32.gmra.mxu0 %v1357
        %v1434 = vpop.f32.mrf.mxu0
        %v1435 = vadd.f32 0.0, %v1434
        %v1436 = vpop.f32.mrf.mxu0
        %1437 = vmatprep.mubr.f32.mxu0 0.0
        %1438 = vmatmul.mubr.f32.gmra.mxu0 %v1360
        %v1439 = vpop.f32.mrf.mxu0
        %v1440 = vadd.f32 0.0, %v1439
        %v1441 = vpop.f32.mrf.mxu0
        %1442 = vmatprep.mubr.f32.mxu0 0.0
        %1443 = vmatmul.mubr.f32.gmra.mxu0 %v1363
        %v1444 = vpop.f32.mrf.mxu0
        %v1445 = vadd.f32 0.0, %v1444
        %v1446 = vpop.f32.mrf.mxu0
        %1447 = vmatprep.mubr.f32.mxu0 0.0
        %1448 = vmatmul.mubr.f32.gmra.mxu0 %v1366
        %v1449 = vpop.f32.mrf.mxu0
        %v1450 = vadd.f32 0.0, %v1449
        %v1451 = vpop.f32.mrf.mxu0
        %1452 = vdwg.mxu0
        %v1453 = vadd.f32 %v1225, %v1435
        %v1454 = vadd.f32 %v1230, %v1440
        %v1455 = vadd.f32 %v1235, %v1445
        %v1456 = vadd.f32 %v1240, %v1450
        %s1457 = scalar_lea.vmem [#allocation10], 768
        %v1458 = vld [vmem:[%s1457] sm:$0xff]
        %v1459 = vld [vmem:[%s1457 + $0x8] sm:$0xff]
        %v1460 = vld [vmem:[%s1457 + $0x10] sm:$0xff]
        %v1461 = vld [vmem:[%s1457 + $0x18] sm:$0xff]
        %v1462 = vld [vmem:[%s1457 + $0x20] sm:$0xff]
        %v1463 = vld [vmem:[%s1457 + $0x28] sm:$0xff]
        %v1464 = vld [vmem:[%s1457 + $0x30] sm:$0xff]
        %v1465 = vld [vmem:[%s1457 + $0x38] sm:$0xff]
        %v1466 = vld [vmem:[%s1457 + $0x40] sm:$0xff]
        %v1467 = vld [vmem:[%s1457 + $0x48] sm:$0xff]
        %v1468 = vld [vmem:[%s1457 + $0x50] sm:$0xff]
        %v1469 = vld [vmem:[%s1457 + $0x58] sm:$0xff]
        %v1470 = vld [vmem:[%s1457 + $0x60] sm:$0xff]
        %v1471 = vld [vmem:[%s1457 + $0x68] sm:$0xff]
        %v1472 = vld [vmem:[%s1457 + $0x70] sm:$0xff]
        %v1473 = vld [vmem:[%s1457 + $0x78] sm:$0xff]
        %v1474 = vld [vmem:[%s1457 + $0x80] sm:$0xff]
        %v1475 = vld [vmem:[%s1457 + $0x88] sm:$0xff]
        %v1476 = vld [vmem:[%s1457 + $0x90] sm:$0xff]
        %v1477 = vld [vmem:[%s1457 + $0x98] sm:$0xff]
        %v1478 = vld [vmem:[%s1457 + $0xa0] sm:$0xff]
        %v1479 = vld [vmem:[%s1457 + $0xa8] sm:$0xff]
        %v1480 = vld [vmem:[%s1457 + $0xb0] sm:$0xff]
        %v1481 = vld [vmem:[%s1457 + $0xb8] sm:$0xff]
        %v1482 = vld [vmem:[%s1457 + $0xc0] sm:$0xff]
        %v1483 = vld [vmem:[%s1457 + $0xc8] sm:$0xff]
        %v1484 = vld [vmem:[%s1457 + $0xd0] sm:$0xff]
        %v1485 = vld [vmem:[%s1457 + $0xd8] sm:$0xff]
        %v1486 = vld [vmem:[%s1457 + $0xe0] sm:$0xff]
        %v1487 = vld [vmem:[%s1457 + $0xe8] sm:$0xff]
        %v1488 = vld [vmem:[%s1457 + $0xf0] sm:$0xff]
        %v1489 = vld [vmem:[%s1457 + $0xf8] sm:$0xff]
        %1490 = vmatprep.subr.mxu0 0.0
        %1491 = vmatpush1.msra.mxu0 %v1473
        %1492 = vmatprep.subr.mxu0 0.0
        %1493 = vmatpush1.msra.mxu0 %v1472
        %1494 = vmatprep.subr.mxu0 0.0
        %1495 = vmatpush1.msra.mxu0 %v1471
        %1496 = vmatprep.subr.mxu0 0.0
        %1497 = vmatpush1.msra.mxu0 %v1470
        %1498 = vmatprep.subr.mxu0 0.0
        %1499 = vmatpush1.msra.mxu0 %v1469
        %1500 = vmatprep.subr.mxu0 0.0
        %1501 = vmatpush1.msra.mxu0 %v1468
        %1502 = vmatprep.subr.mxu0 0.0
        %1503 = vmatpush1.msra.mxu0 %v1467
        %1504 = vmatprep.subr.mxu0 0.0
        %1505 = vmatpush1.msra.mxu0 %v1466
        %1506 = vmatprep.subr.mxu0 0.0
        %1507 = vmatpush1.msra.mxu0 %v1465
        %1508 = vmatprep.subr.mxu0 0.0
        %1509 = vmatpush1.msra.mxu0 %v1464
        %1510 = vmatprep.subr.mxu0 0.0
        %1511 = vmatpush1.msra.mxu0 %v1463
        %1512 = vmatprep.subr.mxu0 0.0
        %1513 = vmatpush1.msra.mxu0 %v1462
        %1514 = vmatprep.subr.mxu0 0.0
        %1515 = vmatpush1.msra.mxu0 %v1461
        %1516 = vmatprep.subr.mxu0 0.0
        %1517 = vmatpush1.msra.mxu0 %v1460
        %1518 = vmatprep.subr.mxu0 0.0
        %1519 = vmatpush1.msra.mxu0 %v1459
        %1520 = vmatprep.subr.mxu0 0.0
        %1521 = vmatpush1.msra.mxu0 %v1458
        %1522 = vmatprep.subr.mxu0 0.0
        %1523 = vmatpush2.msra.mxu0 %v1489
        %1524 = vmatprep.subr.mxu0 0.0
        %1525 = vmatpush2.msra.mxu0 %v1488
        %1526 = vmatprep.subr.mxu0 0.0
        %1527 = vmatpush2.msra.mxu0 %v1487
        %1528 = vmatprep.subr.mxu0 0.0
        %1529 = vmatpush2.msra.mxu0 %v1486
        %1530 = vmatprep.subr.mxu0 0.0
        %1531 = vmatpush2.msra.mxu0 %v1485
        %1532 = vmatprep.subr.mxu0 0.0
        %1533 = vmatpush2.msra.mxu0 %v1484
        %1534 = vmatprep.subr.mxu0 0.0
        %1535 = vmatpush2.msra.mxu0 %v1483
        %1536 = vmatprep.subr.mxu0 0.0
        %1537 = vmatpush2.msra.mxu0 %v1482
        %1538 = vmatprep.subr.mxu0 0.0
        %1539 = vmatpush2.msra.mxu0 %v1481
        %1540 = vmatprep.subr.mxu0 0.0
        %1541 = vmatpush2.msra.mxu0 %v1480
        %1542 = vmatprep.subr.mxu0 0.0
        %1543 = vmatpush2.msra.mxu0 %v1479
        %1544 = vmatprep.subr.mxu0 0.0
        %1545 = vmatpush2.msra.mxu0 %v1478
        %1546 = vmatprep.subr.mxu0 0.0
        %1547 = vmatpush2.msra.mxu0 %v1477
        %1548 = vmatprep.subr.mxu0 0.0
        %1549 = vmatpush2.msra.mxu0 %v1476
        %1550 = vmatprep.subr.mxu0 0.0
        %1551 = vmatpush2.msra.mxu0 %v1475
        %1552 = vmatprep.subr.mxu0 0.0
        %1553 = vmatpush2.msra.mxu0 %v1474
        %1554 = vmatprep.mubr.f32.mxu0 %v821
        %1555 = vmatmul.mubr.f32.gmra.mxu0 %v820
        %v1556 = vpop.f32.mrf.mxu0
        %v1557 = vadd.f32 0.0, %v1556
        %v1558 = vpop.f32.mrf.mxu0
        %1559 = vmatprep.mubr.f32.mxu0 %v823
        %1560 = vmatmul.mubr.f32.gmra.mxu0 %v822
        %v1561 = vpop.f32.mrf.mxu0
        %v1562 = vadd.f32 0.0, %v1561
        %v1563 = vpop.f32.mrf.mxu0
        %1564 = vdwg.mxu0
        %s1565 = scalar_lea.vmem [#allocation7], 96
        %v1566 = vld [vmem:[%s1565] sm:$0xff]
        %v1567 = vld [vmem:[%s1565 + $0x8] sm:$0xff]
        %v1568 = vld [vmem:[%s1565 + $0x10] sm:$0xff]
        %v1569 = vld [vmem:[%s1565 + $0x18] sm:$0xff]
        %v1571 = vsel %vm1048, %v1566, 0
        %v1574 = vsel %vm1048, %v1567, 0
        %v1577 = vsel %vm1048, %v1568, 0
        %v1580 = vsel %vm1048, %v1569, 0
        %1582 = vmatprep.subr.mxu0 0.0
        %1583 = vmatpush1.msra.mxu0 0.0
        %1584 = vmatprep.subr.mxu0 0.0
        %1585 = vmatpush1.msra.mxu0 0.0
        %1586 = vmatprep.subr.mxu0 0.0
        %1587 = vmatpush1.msra.mxu0 0.0
        %1588 = vmatprep.subr.mxu0 0.0
        %1589 = vmatpush1.msra.mxu0 0.0
        %1590 = vmatprep.subr.mxu0 0.0
        %1591 = vmatpush1.msra.mxu0 0.0
        %1592 = vmatprep.subr.mxu0 0.0
        %1593 = vmatpush1.msra.mxu0 0.0
        %1594 = vmatprep.subr.mxu0 0.0
        %1595 = vmatpush1.msra.mxu0 0.0
        %1596 = vmatprep.subr.mxu0 0.0
        %1597 = vmatpush1.msra.mxu0 0.0
        %1598 = vmatprep.subr.mxu0 0.0
        %1599 = vmatpush1.msra.mxu0 0.0
        %1600 = vmatprep.subr.mxu0 0.0
        %1601 = vmatpush1.msra.mxu0 0.0
        %1602 = vmatprep.subr.mxu0 0.0
        %1603 = vmatpush1.msra.mxu0 0.0
        %1604 = vmatprep.subr.mxu0 0.0
        %1605 = vmatpush1.msra.mxu0 0.0
        %1606 = vmatprep.subr.mxu0 0.0
        %1607 = vmatpush1.msra.mxu0 0.0
        %1608 = vmatprep.subr.mxu0 0.0
        %1609 = vmatpush1.msra.mxu0 0.0
        %1610 = vmatprep.subr.mxu0 0.0
        %1611 = vmatpush1.msra.mxu0 %v1562
        %1612 = vmatprep.subr.mxu0 0.0
        %1613 = vmatpush1.msra.mxu0 %v1557
        %1614 = vmatprep.subr.mxu0 0.0
        %1615 = vmatpush2.msra.mxu0 0.0
        %1616 = vmatprep.subr.mxu0 0.0
        %1617 = vmatpush2.msra.mxu0 0.0
        %1618 = vmatprep.subr.mxu0 0.0
        %1619 = vmatpush2.msra.mxu0 0.0
        %1620 = vmatprep.subr.mxu0 0.0
        %1621 = vmatpush2.msra.mxu0 0.0
        %1622 = vmatprep.subr.mxu0 0.0
        %1623 = vmatpush2.msra.mxu0 0.0
        %1624 = vmatprep.subr.mxu0 0.0
        %1625 = vmatpush2.msra.mxu0 0.0
        %1626 = vmatprep.subr.mxu0 0.0
        %1627 = vmatpush2.msra.mxu0 0.0
        %1628 = vmatprep.subr.mxu0 0.0
        %1629 = vmatpush2.msra.mxu0 0.0
        %1630 = vmatprep.subr.mxu0 0.0
        %1631 = vmatpush2.msra.mxu0 0.0
        %1632 = vmatprep.subr.mxu0 0.0
        %1633 = vmatpush2.msra.mxu0 0.0
        %1634 = vmatprep.subr.mxu0 0.0
        %1635 = vmatpush2.msra.mxu0 0.0
        %1636 = vmatprep.subr.mxu0 0.0
        %1637 = vmatpush2.msra.mxu0 0.0
        %1638 = vmatprep.subr.mxu0 0.0
        %1639 = vmatpush2.msra.mxu0 0.0
        %1640 = vmatprep.subr.mxu0 0.0
        %1641 = vmatpush2.msra.mxu0 0.0
        %1642 = vmatprep.subr.mxu0 0.0
        %1643 = vmatpush2.msra.mxu0 0.0
        %1644 = vmatprep.subr.mxu0 0.0
        %1645 = vmatpush2.msra.mxu0 0.0
        %1646 = vmatprep.mubr.f32.mxu0 0.0
        %1647 = vmatmul.mubr.f32.gmra.mxu0 %v1571
        %v1648 = vpop.f32.mrf.mxu0
        %v1649 = vadd.f32 0.0, %v1648
        %v1650 = vpop.f32.mrf.mxu0
        %1651 = vmatprep.mubr.f32.mxu0 0.0
        %1652 = vmatmul.mubr.f32.gmra.mxu0 %v1574
        %v1653 = vpop.f32.mrf.mxu0
        %v1654 = vadd.f32 0.0, %v1653
        %v1655 = vpop.f32.mrf.mxu0
        %1656 = vmatprep.mubr.f32.mxu0 0.0
        %1657 = vmatmul.mubr.f32.gmra.mxu0 %v1577
        %v1658 = vpop.f32.mrf.mxu0
        %v1659 = vadd.f32 0.0, %v1658
        %v1660 = vpop.f32.mrf.mxu0
        %1661 = vmatprep.mubr.f32.mxu0 0.0
        %1662 = vmatmul.mubr.f32.gmra.mxu0 %v1580
        %v1663 = vpop.f32.mrf.mxu0
        %v1664 = vadd.f32 0.0, %v1663
        %v1665 = vpop.f32.mrf.mxu0
        %1666 = vdwg.mxu0
        %v1667 = vadd.f32 %v1453, %v1649
        %v1668 = vadd.f32 %v1454, %v1654
        %v1669 = vadd.f32 %v1455, %v1659
        %v1670 = vadd.f32 %v1456, %v1664
        %s1671 = scalar_lea.vmem [#allocation10], 1024
        %v1672 = vld [vmem:[%s1671] sm:$0xff]
        %v1673 = vld [vmem:[%s1671 + $0x8] sm:$0xff]
        %v1674 = vld [vmem:[%s1671 + $0x10] sm:$0xff]
        %v1675 = vld [vmem:[%s1671 + $0x18] sm:$0xff]
        %v1676 = vld [vmem:[%s1671 + $0x20] sm:$0xff]
        %v1677 = vld [vmem:[%s1671 + $0x28] sm:$0xff]
        %v1678 = vld [vmem:[%s1671 + $0x30] sm:$0xff]
        %v1679 = vld [vmem:[%s1671 + $0x38] sm:$0xff]
        %v1680 = vld [vmem:[%s1671 + $0x40] sm:$0xff]
        %v1681 = vld [vmem:[%s1671 + $0x48] sm:$0xff]
        %v1682 = vld [vmem:[%s1671 + $0x50] sm:$0xff]
        %v1683 = vld [vmem:[%s1671 + $0x58] sm:$0xff]
        %v1684 = vld [vmem:[%s1671 + $0x60] sm:$0xff]
        %v1685 = vld [vmem:[%s1671 + $0x68] sm:$0xff]
        %v1686 = vld [vmem:[%s1671 + $0x70] sm:$0xff]
        %v1687 = vld [vmem:[%s1671 + $0x78] sm:$0xff]
        %v1688 = vld [vmem:[%s1671 + $0x80] sm:$0xff]
        %v1689 = vld [vmem:[%s1671 + $0x88] sm:$0xff]
        %v1690 = vld [vmem:[%s1671 + $0x90] sm:$0xff]
        %v1691 = vld [vmem:[%s1671 + $0x98] sm:$0xff]
        %v1692 = vld [vmem:[%s1671 + $0xa0] sm:$0xff]
        %v1693 = vld [vmem:[%s1671 + $0xa8] sm:$0xff]
        %v1694 = vld [vmem:[%s1671 + $0xb0] sm:$0xff]
        %v1695 = vld [vmem:[%s1671 + $0xb8] sm:$0xff]
        %v1696 = vld [vmem:[%s1671 + $0xc0] sm:$0xff]
        %v1697 = vld [vmem:[%s1671 + $0xc8] sm:$0xff]
        %v1698 = vld [vmem:[%s1671 + $0xd0] sm:$0xff]
        %v1699 = vld [vmem:[%s1671 + $0xd8] sm:$0xff]
        %v1700 = vld [vmem:[%s1671 + $0xe0] sm:$0xff]
        %v1701 = vld [vmem:[%s1671 + $0xe8] sm:$0xff]
        %v1702 = vld [vmem:[%s1671 + $0xf0] sm:$0xff]
        %v1703 = vld [vmem:[%s1671 + $0xf8] sm:$0xff]
        %1704 = vmatprep.subr.mxu0 0.0
        %1705 = vmatpush1.msra.mxu0 %v1687
        %1706 = vmatprep.subr.mxu0 0.0
        %1707 = vmatpush1.msra.mxu0 %v1686
        %1708 = vmatprep.subr.mxu0 0.0
        %1709 = vmatpush1.msra.mxu0 %v1685
        %1710 = vmatprep.subr.mxu0 0.0
        %1711 = vmatpush1.msra.mxu0 %v1684
        %1712 = vmatprep.subr.mxu0 0.0
        %1713 = vmatpush1.msra.mxu0 %v1683
        %1714 = vmatprep.subr.mxu0 0.0
        %1715 = vmatpush1.msra.mxu0 %v1682
        %1716 = vmatprep.subr.mxu0 0.0
        %1717 = vmatpush1.msra.mxu0 %v1681
        %1718 = vmatprep.subr.mxu0 0.0
        %1719 = vmatpush1.msra.mxu0 %v1680
        %1720 = vmatprep.subr.mxu0 0.0
        %1721 = vmatpush1.msra.mxu0 %v1679
        %1722 = vmatprep.subr.mxu0 0.0
        %1723 = vmatpush1.msra.mxu0 %v1678
        %1724 = vmatprep.subr.mxu0 0.0
        %1725 = vmatpush1.msra.mxu0 %v1677
        %1726 = vmatprep.subr.mxu0 0.0
        %1727 = vmatpush1.msra.mxu0 %v1676
        %1728 = vmatprep.subr.mxu0 0.0
        %1729 = vmatpush1.msra.mxu0 %v1675
        %1730 = vmatprep.subr.mxu0 0.0
        %1731 = vmatpush1.msra.mxu0 %v1674
        %1732 = vmatprep.subr.mxu0 0.0
        %1733 = vmatpush1.msra.mxu0 %v1673
        %1734 = vmatprep.subr.mxu0 0.0
        %1735 = vmatpush1.msra.mxu0 %v1672
        %1736 = vmatprep.subr.mxu0 0.0
        %1737 = vmatpush2.msra.mxu0 %v1703
        %1738 = vmatprep.subr.mxu0 0.0
        %1739 = vmatpush2.msra.mxu0 %v1702
        %1740 = vmatprep.subr.mxu0 0.0
        %1741 = vmatpush2.msra.mxu0 %v1701
        %1742 = vmatprep.subr.mxu0 0.0
        %1743 = vmatpush2.msra.mxu0 %v1700
        %1744 = vmatprep.subr.mxu0 0.0
        %1745 = vmatpush2.msra.mxu0 %v1699
        %1746 = vmatprep.subr.mxu0 0.0
        %1747 = vmatpush2.msra.mxu0 %v1698
        %1748 = vmatprep.subr.mxu0 0.0
        %1749 = vmatpush2.msra.mxu0 %v1697
        %1750 = vmatprep.subr.mxu0 0.0
        %1751 = vmatpush2.msra.mxu0 %v1696
        %1752 = vmatprep.subr.mxu0 0.0
        %1753 = vmatpush2.msra.mxu0 %v1695
        %1754 = vmatprep.subr.mxu0 0.0
        %1755 = vmatpush2.msra.mxu0 %v1694
        %1756 = vmatprep.subr.mxu0 0.0
        %1757 = vmatpush2.msra.mxu0 %v1693
        %1758 = vmatprep.subr.mxu0 0.0
        %1759 = vmatpush2.msra.mxu0 %v1692
        %1760 = vmatprep.subr.mxu0 0.0
        %1761 = vmatpush2.msra.mxu0 %v1691
        %1762 = vmatprep.subr.mxu0 0.0
        %1763 = vmatpush2.msra.mxu0 %v1690
        %1764 = vmatprep.subr.mxu0 0.0
        %1765 = vmatpush2.msra.mxu0 %v1689
        %1766 = vmatprep.subr.mxu0 0.0
        %1767 = vmatpush2.msra.mxu0 %v1688
        %1768 = vmatprep.mubr.f32.mxu0 %v821
        %1769 = vmatmul.mubr.f32.gmra.mxu0 %v820
        %v1770 = vpop.f32.mrf.mxu0
        %v1771 = vadd.f32 0.0, %v1770
        %v1772 = vpop.f32.mrf.mxu0
        %1773 = vmatprep.mubr.f32.mxu0 %v823
        %1774 = vmatmul.mubr.f32.gmra.mxu0 %v822
        %v1775 = vpop.f32.mrf.mxu0
        %v1776 = vadd.f32 0.0, %v1775
        %v1777 = vpop.f32.mrf.mxu0
        %1778 = vdwg.mxu0
        %s1779 = scalar_lea.vmem [#allocation7], 128
        %v1780 = vld [vmem:[%s1779] sm:$0xff]
        %v1781 = vld [vmem:[%s1779 + $0x8] sm:$0xff]
        %v1782 = vld [vmem:[%s1779 + $0x10] sm:$0xff]
        %v1783 = vld [vmem:[%s1779 + $0x18] sm:$0xff]
        %v1785 = vsel %vm1048, %v1780, 0
        %v1788 = vsel %vm1048, %v1781, 0
        %v1791 = vsel %vm1048, %v1782, 0
        %v1794 = vsel %vm1048, %v1783, 0
        %1796 = vmatprep.subr.mxu0 0.0
        %1797 = vmatpush1.msra.mxu0 0.0
        %1798 = vmatprep.subr.mxu0 0.0
        %1799 = vmatpush1.msra.mxu0 0.0
        %1800 = vmatprep.subr.mxu0 0.0
        %1801 = vmatpush1.msra.mxu0 0.0
        %1802 = vmatprep.subr.mxu0 0.0
        %1803 = vmatpush1.msra.mxu0 0.0
        %1804 = vmatprep.subr.mxu0 0.0
        %1805 = vmatpush1.msra.mxu0 0.0
        %1806 = vmatprep.subr.mxu0 0.0
        %1807 = vmatpush1.msra.mxu0 0.0
        %1808 = vmatprep.subr.mxu0 0.0
        %1809 = vmatpush1.msra.mxu0 0.0
        %1810 = vmatprep.subr.mxu0 0.0
        %1811 = vmatpush1.msra.mxu0 0.0
        %1812 = vmatprep.subr.mxu0 0.0
        %1813 = vmatpush1.msra.mxu0 0.0
        %1814 = vmatprep.subr.mxu0 0.0
        %1815 = vmatpush1.msra.mxu0 0.0
        %1816 = vmatprep.subr.mxu0 0.0
        %1817 = vmatpush1.msra.mxu0 0.0
        %1818 = vmatprep.subr.mxu0 0.0
        %1819 = vmatpush1.msra.mxu0 0.0
        %1820 = vmatprep.subr.mxu0 0.0
        %1821 = vmatpush1.msra.mxu0 0.0
        %1822 = vmatprep.subr.mxu0 0.0
        %1823 = vmatpush1.msra.mxu0 0.0
        %1824 = vmatprep.subr.mxu0 0.0
        %1825 = vmatpush1.msra.mxu0 %v1776
        %1826 = vmatprep.subr.mxu0 0.0
        %1827 = vmatpush1.msra.mxu0 %v1771
        %1828 = vmatprep.subr.mxu0 0.0
        %1829 = vmatpush2.msra.mxu0 0.0
        %1830 = vmatprep.subr.mxu0 0.0
        %1831 = vmatpush2.msra.mxu0 0.0
        %1832 = vmatprep.subr.mxu0 0.0
        %1833 = vmatpush2.msra.mxu0 0.0
        %1834 = vmatprep.subr.mxu0 0.0
        %1835 = vmatpush2.msra.mxu0 0.0
        %1836 = vmatprep.subr.mxu0 0.0
        %1837 = vmatpush2.msra.mxu0 0.0
        %1838 = vmatprep.subr.mxu0 0.0
        %1839 = vmatpush2.msra.mxu0 0.0
        %1840 = vmatprep.subr.mxu0 0.0
        %1841 = vmatpush2.msra.mxu0 0.0
        %1842 = vmatprep.subr.mxu0 0.0
        %1843 = vmatpush2.msra.mxu0 0.0
        %1844 = vmatprep.subr.mxu0 0.0
        %1845 = vmatpush2.msra.mxu0 0.0
        %1846 = vmatprep.subr.mxu0 0.0
        %1847 = vmatpush2.msra.mxu0 0.0
        %1848 = vmatprep.subr.mxu0 0.0
        %1849 = vmatpush2.msra.mxu0 0.0
        %1850 = vmatprep.subr.mxu0 0.0
        %1851 = vmatpush2.msra.mxu0 0.0
        %1852 = vmatprep.subr.mxu0 0.0
        %1853 = vmatpush2.msra.mxu0 0.0
        %1854 = vmatprep.subr.mxu0 0.0
        %1855 = vmatpush2.msra.mxu0 0.0
        %1856 = vmatprep.subr.mxu0 0.0
        %1857 = vmatpush2.msra.mxu0 0.0
        %1858 = vmatprep.subr.mxu0 0.0
        %1859 = vmatpush2.msra.mxu0 0.0
        %1860 = vmatprep.mubr.f32.mxu0 0.0
        %1861 = vmatmul.mubr.f32.gmra.mxu0 %v1785
        %v1862 = vpop.f32.mrf.mxu0
        %v1863 = vadd.f32 0.0, %v1862
        %v1864 = vpop.f32.mrf.mxu0
        %1865 = vmatprep.mubr.f32.mxu0 0.0
        %1866 = vmatmul.mubr.f32.gmra.mxu0 %v1788
        %v1867 = vpop.f32.mrf.mxu0
        %v1868 = vadd.f32 0.0, %v1867
        %v1869 = vpop.f32.mrf.mxu0
        %1870 = vmatprep.mubr.f32.mxu0 0.0
        %1871 = vmatmul.mubr.f32.gmra.mxu0 %v1791
        %v1872 = vpop.f32.mrf.mxu0
        %v1873 = vadd.f32 0.0, %v1872
        %v1874 = vpop.f32.mrf.mxu0
        %1875 = vmatprep.mubr.f32.mxu0 0.0
        %1876 = vmatmul.mubr.f32.gmra.mxu0 %v1794
        %v1877 = vpop.f32.mrf.mxu0
        %v1878 = vadd.f32 0.0, %v1877
        %v1879 = vpop.f32.mrf.mxu0
        %1880 = vdwg.mxu0
        %v1881 = vadd.f32 %v1667, %v1863
        %v1882 = vadd.f32 %v1668, %v1868
        %v1883 = vadd.f32 %v1669, %v1873
        %v1884 = vadd.f32 %v1670, %v1878
        %s1885 = scalar_lea.vmem [#allocation10], 1280
        %v1886 = vld [vmem:[%s1885] sm:$0xff]
        %v1887 = vld [vmem:[%s1885 + $0x8] sm:$0xff]
        %v1888 = vld [vmem:[%s1885 + $0x10] sm:$0xff]
        %v1889 = vld [vmem:[%s1885 + $0x18] sm:$0xff]
        %v1890 = vld [vmem:[%s1885 + $0x20] sm:$0xff]
        %v1891 = vld [vmem:[%s1885 + $0x28] sm:$0xff]
        %v1892 = vld [vmem:[%s1885 + $0x30] sm:$0xff]
        %v1893 = vld [vmem:[%s1885 + $0x38] sm:$0xff]
        %v1894 = vld [vmem:[%s1885 + $0x40] sm:$0xff]
        %v1895 = vld [vmem:[%s1885 + $0x48] sm:$0xff]
        %v1896 = vld [vmem:[%s1885 + $0x50] sm:$0xff]
        %v1897 = vld [vmem:[%s1885 + $0x58] sm:$0xff]
        %v1898 = vld [vmem:[%s1885 + $0x60] sm:$0xff]
        %v1899 = vld [vmem:[%s1885 + $0x68] sm:$0xff]
        %v1900 = vld [vmem:[%s1885 + $0x70] sm:$0xff]
        %v1901 = vld [vmem:[%s1885 + $0x78] sm:$0xff]
        %v1902 = vld [vmem:[%s1885 + $0x80] sm:$0xff]
        %v1903 = vld [vmem:[%s1885 + $0x88] sm:$0xff]
        %v1904 = vld [vmem:[%s1885 + $0x90] sm:$0xff]
        %v1905 = vld [vmem:[%s1885 + $0x98] sm:$0xff]
        %v1906 = vld [vmem:[%s1885 + $0xa0] sm:$0xff]
        %v1907 = vld [vmem:[%s1885 + $0xa8] sm:$0xff]
        %v1908 = vld [vmem:[%s1885 + $0xb0] sm:$0xff]
        %v1909 = vld [vmem:[%s1885 + $0xb8] sm:$0xff]
        %v1910 = vld [vmem:[%s1885 + $0xc0] sm:$0xff]
        %v1911 = vld [vmem:[%s1885 + $0xc8] sm:$0xff]
        %v1912 = vld [vmem:[%s1885 + $0xd0] sm:$0xff]
        %v1913 = vld [vmem:[%s1885 + $0xd8] sm:$0xff]
        %v1914 = vld [vmem:[%s1885 + $0xe0] sm:$0xff]
        %v1915 = vld [vmem:[%s1885 + $0xe8] sm:$0xff]
        %v1916 = vld [vmem:[%s1885 + $0xf0] sm:$0xff]
        %v1917 = vld [vmem:[%s1885 + $0xf8] sm:$0xff]
        %1918 = vmatprep.subr.mxu0 0.0
        %1919 = vmatpush1.msra.mxu0 %v1901
        %1920 = vmatprep.subr.mxu0 0.0
        %1921 = vmatpush1.msra.mxu0 %v1900
        %1922 = vmatprep.subr.mxu0 0.0
        %1923 = vmatpush1.msra.mxu0 %v1899
        %1924 = vmatprep.subr.mxu0 0.0
        %1925 = vmatpush1.msra.mxu0 %v1898
        %1926 = vmatprep.subr.mxu0 0.0
        %1927 = vmatpush1.msra.mxu0 %v1897
        %1928 = vmatprep.subr.mxu0 0.0
        %1929 = vmatpush1.msra.mxu0 %v1896
        %1930 = vmatprep.subr.mxu0 0.0
        %1931 = vmatpush1.msra.mxu0 %v1895
        %1932 = vmatprep.subr.mxu0 0.0
        %1933 = vmatpush1.msra.mxu0 %v1894
        %1934 = vmatprep.subr.mxu0 0.0
        %1935 = vmatpush1.msra.mxu0 %v1893
        %1936 = vmatprep.subr.mxu0 0.0
        %1937 = vmatpush1.msra.mxu0 %v1892
        %1938 = vmatprep.subr.mxu0 0.0
        %1939 = vmatpush1.msra.mxu0 %v1891
        %1940 = vmatprep.subr.mxu0 0.0
        %1941 = vmatpush1.msra.mxu0 %v1890
        %1942 = vmatprep.subr.mxu0 0.0
        %1943 = vmatpush1.msra.mxu0 %v1889
        %1944 = vmatprep.subr.mxu0 0.0
        %1945 = vmatpush1.msra.mxu0 %v1888
        %1946 = vmatprep.subr.mxu0 0.0
        %1947 = vmatpush1.msra.mxu0 %v1887
        %1948 = vmatprep.subr.mxu0 0.0
        %1949 = vmatpush1.msra.mxu0 %v1886
        %1950 = vmatprep.subr.mxu0 0.0
        %1951 = vmatpush2.msra.mxu0 %v1917
        %1952 = vmatprep.subr.mxu0 0.0
        %1953 = vmatpush2.msra.mxu0 %v1916
        %1954 = vmatprep.subr.mxu0 0.0
        %1955 = vmatpush2.msra.mxu0 %v1915
        %1956 = vmatprep.subr.mxu0 0.0
        %1957 = vmatpush2.msra.mxu0 %v1914
        %1958 = vmatprep.subr.mxu0 0.0
        %1959 = vmatpush2.msra.mxu0 %v1913
        %1960 = vmatprep.subr.mxu0 0.0
        %1961 = vmatpush2.msra.mxu0 %v1912
        %1962 = vmatprep.subr.mxu0 0.0
        %1963 = vmatpush2.msra.mxu0 %v1911
        %1964 = vmatprep.subr.mxu0 0.0
        %1965 = vmatpush2.msra.mxu0 %v1910
        %1966 = vmatprep.subr.mxu0 0.0
        %1967 = vmatpush2.msra.mxu0 %v1909
        %1968 = vmatprep.subr.mxu0 0.0
        %1969 = vmatpush2.msra.mxu0 %v1908
        %1970 = vmatprep.subr.mxu0 0.0
        %1971 = vmatpush2.msra.mxu0 %v1907
        %1972 = vmatprep.subr.mxu0 0.0
        %1973 = vmatpush2.msra.mxu0 %v1906
        %1974 = vmatprep.subr.mxu0 0.0
        %1975 = vmatpush2.msra.mxu0 %v1905
        %1976 = vmatprep.subr.mxu0 0.0
        %1977 = vmatpush2.msra.mxu0 %v1904
        %1978 = vmatprep.subr.mxu0 0.0
        %1979 = vmatpush2.msra.mxu0 %v1903
        %1980 = vmatprep.subr.mxu0 0.0
        %1981 = vmatpush2.msra.mxu0 %v1902
        %1982 = vmatprep.mubr.f32.mxu0 %v821
        %1983 = vmatmul.mubr.f32.gmra.mxu0 %v820
        %v1984 = vpop.f32.mrf.mxu0
        %v1985 = vadd.f32 0.0, %v1984
        %v1986 = vpop.f32.mrf.mxu0
        %1987 = vmatprep.mubr.f32.mxu0 %v823
        %1988 = vmatmul.mubr.f32.gmra.mxu0 %v822
        %v1989 = vpop.f32.mrf.mxu0
        %v1990 = vadd.f32 0.0, %v1989
        %v1991 = vpop.f32.mrf.mxu0
        %1992 = vdwg.mxu0
        %s1993 = scalar_lea.vmem [#allocation7], 160
        %v1994 = vld [vmem:[%s1993] sm:$0xff]
        %v1995 = vld [vmem:[%s1993 + $0x8] sm:$0xff]
        %v1996 = vld [vmem:[%s1993 + $0x10] sm:$0xff]
        %v1997 = vld [vmem:[%s1993 + $0x18] sm:$0xff]
        %v1999 = vsel %vm1048, %v1994, 0
        %v2002 = vsel %vm1048, %v1995, 0
        %v2005 = vsel %vm1048, %v1996, 0
        %v2008 = vsel %vm1048, %v1997, 0
        %2010 = vmatprep.subr.mxu0 0.0
        %2011 = vmatpush1.msra.mxu0 0.0
        %2012 = vmatprep.subr.mxu0 0.0
        %2013 = vmatpush1.msra.mxu0 0.0
        %2014 = vmatprep.subr.mxu0 0.0
        %2015 = vmatpush1.msra.mxu0 0.0
        %2016 = vmatprep.subr.mxu0 0.0
        %2017 = vmatpush1.msra.mxu0 0.0
        %2018 = vmatprep.subr.mxu0 0.0
        %2019 = vmatpush1.msra.mxu0 0.0
        %2020 = vmatprep.subr.mxu0 0.0
        %2021 = vmatpush1.msra.mxu0 0.0
        %2022 = vmatprep.subr.mxu0 0.0
        %2023 = vmatpush1.msra.mxu0 0.0
        %2024 = vmatprep.subr.mxu0 0.0
        %2025 = vmatpush1.msra.mxu0 0.0
        %2026 = vmatprep.subr.mxu0 0.0
        %2027 = vmatpush1.msra.mxu0 0.0
        %2028 = vmatprep.subr.mxu0 0.0
        %2029 = vmatpush1.msra.mxu0 0.0
        %2030 = vmatprep.subr.mxu0 0.0
        %2031 = vmatpush1.msra.mxu0 0.0
        %2032 = vmatprep.subr.mxu0 0.0
        %2033 = vmatpush1.msra.mxu0 0.0
        %2034 = vmatprep.subr.mxu0 0.0
        %2035 = vmatpush1.msra.mxu0 0.0
        %2036 = vmatprep.subr.mxu0 0.0
        %2037 = vmatpush1.msra.mxu0 0.0
        %2038 = vmatprep.subr.mxu0 0.0
        %2039 = vmatpush1.msra.mxu0 %v1990
        %2040 = vmatprep.subr.mxu0 0.0
        %2041 = vmatpush1.msra.mxu0 %v1985
        %2042 = vmatprep.subr.mxu0 0.0
        %2043 = vmatpush2.msra.mxu0 0.0
        %2044 = vmatprep.subr.mxu0 0.0
        %2045 = vmatpush2.msra.mxu0 0.0
        %2046 = vmatprep.subr.mxu0 0.0
        %2047 = vmatpush2.msra.mxu0 0.0
        %2048 = vmatprep.subr.mxu0 0.0
        %2049 = vmatpush2.msra.mxu0 0.0
        %2050 = vmatprep.subr.mxu0 0.0
        %2051 = vmatpush2.msra.mxu0 0.0
        %2052 = vmatprep.subr.mxu0 0.0
        %2053 = vmatpush2.msra.mxu0 0.0
        %2054 = vmatprep.subr.mxu0 0.0
        %2055 = vmatpush2.msra.mxu0 0.0
        %2056 = vmatprep.subr.mxu0 0.0
        %2057 = vmatpush2.msra.mxu0 0.0
        %2058 = vmatprep.subr.mxu0 0.0
        %2059 = vmatpush2.msra.mxu0 0.0
        %2060 = vmatprep.subr.mxu0 0.0
        %2061 = vmatpush2.msra.mxu0 0.0
        %2062 = vmatprep.subr.mxu0 0.0
        %2063 = vmatpush2.msra.mxu0 0.0
        %2064 = vmatprep.subr.mxu0 0.0
        %2065 = vmatpush2.msra.mxu0 0.0
        %2066 = vmatprep.subr.mxu0 0.0
        %2067 = vmatpush2.msra.mxu0 0.0
        %2068 = vmatprep.subr.mxu0 0.0
        %2069 = vmatpush2.msra.mxu0 0.0
        %2070 = vmatprep.subr.mxu0 0.0
        %2071 = vmatpush2.msra.mxu0 0.0
        %2072 = vmatprep.subr.mxu0 0.0
        %2073 = vmatpush2.msra.mxu0 0.0
        %2074 = vmatprep.mubr.f32.mxu0 0.0
        %2075 = vmatmul.mubr.f32.gmra.mxu0 %v1999
        %v2076 = vpop.f32.mrf.mxu0
        %v2077 = vadd.f32 0.0, %v2076
        %v2078 = vpop.f32.mrf.mxu0
        %2079 = vmatprep.mubr.f32.mxu0 0.0
        %2080 = vmatmul.mubr.f32.gmra.mxu0 %v2002
        %v2081 = vpop.f32.mrf.mxu0
        %v2082 = vadd.f32 0.0, %v2081
        %v2083 = vpop.f32.mrf.mxu0
        %2084 = vmatprep.mubr.f32.mxu0 0.0
        %2085 = vmatmul.mubr.f32.gmra.mxu0 %v2005
        %v2086 = vpop.f32.mrf.mxu0
        %v2087 = vadd.f32 0.0, %v2086
        %v2088 = vpop.f32.mrf.mxu0
        %2089 = vmatprep.mubr.f32.mxu0 0.0
        %2090 = vmatmul.mubr.f32.gmra.mxu0 %v2008
        %v2091 = vpop.f32.mrf.mxu0
        %v2092 = vadd.f32 0.0, %v2091
        %v2093 = vpop.f32.mrf.mxu0
        %2094 = vdwg.mxu0
        %v2095 = vadd.f32 %v1881, %v2077
        %v2096 = vadd.f32 %v1882, %v2082
        %v2097 = vadd.f32 %v1883, %v2087
        %v2098 = vadd.f32 %v1884, %v2092
        %s2099 = scalar_lea.vmem [#allocation10], 1536
        %v2100 = vld [vmem:[%s2099] sm:$0xff]
        %v2101 = vld [vmem:[%s2099 + $0x8] sm:$0xff]
        %v2102 = vld [vmem:[%s2099 + $0x10] sm:$0xff]
        %v2103 = vld [vmem:[%s2099 + $0x18] sm:$0xff]
        %v2104 = vld [vmem:[%s2099 + $0x20] sm:$0xff]
        %v2105 = vld [vmem:[%s2099 + $0x28] sm:$0xff]
        %v2106 = vld [vmem:[%s2099 + $0x30] sm:$0xff]
        %v2107 = vld [vmem:[%s2099 + $0x38] sm:$0xff]
        %v2108 = vld [vmem:[%s2099 + $0x40] sm:$0xff]
        %v2109 = vld [vmem:[%s2099 + $0x48] sm:$0xff]
        %v2110 = vld [vmem:[%s2099 + $0x50] sm:$0xff]
        %v2111 = vld [vmem:[%s2099 + $0x58] sm:$0xff]
        %v2112 = vld [vmem:[%s2099 + $0x60] sm:$0xff]
        %v2113 = vld [vmem:[%s2099 + $0x68] sm:$0xff]
        %v2114 = vld [vmem:[%s2099 + $0x70] sm:$0xff]
        %v2115 = vld [vmem:[%s2099 + $0x78] sm:$0xff]
        %v2116 = vld [vmem:[%s2099 + $0x80] sm:$0xff]
        %v2117 = vld [vmem:[%s2099 + $0x88] sm:$0xff]
        %v2118 = vld [vmem:[%s2099 + $0x90] sm:$0xff]
        %v2119 = vld [vmem:[%s2099 + $0x98] sm:$0xff]
        %v2120 = vld [vmem:[%s2099 + $0xa0] sm:$0xff]
        %v2121 = vld [vmem:[%s2099 + $0xa8] sm:$0xff]
        %v2122 = vld [vmem:[%s2099 + $0xb0] sm:$0xff]
        %v2123 = vld [vmem:[%s2099 + $0xb8] sm:$0xff]
        %v2124 = vld [vmem:[%s2099 + $0xc0] sm:$0xff]
        %v2125 = vld [vmem:[%s2099 + $0xc8] sm:$0xff]
        %v2126 = vld [vmem:[%s2099 + $0xd0] sm:$0xff]
        %v2127 = vld [vmem:[%s2099 + $0xd8] sm:$0xff]
        %v2128 = vld [vmem:[%s2099 + $0xe0] sm:$0xff]
        %v2129 = vld [vmem:[%s2099 + $0xe8] sm:$0xff]
        %v2130 = vld [vmem:[%s2099 + $0xf0] sm:$0xff]
        %v2131 = vld [vmem:[%s2099 + $0xf8] sm:$0xff]
        %2132 = vmatprep.subr.mxu0 0.0
        %2133 = vmatpush1.msra.mxu0 %v2115
        %2134 = vmatprep.subr.mxu0 0.0
        %2135 = vmatpush1.msra.mxu0 %v2114
        %2136 = vmatprep.subr.mxu0 0.0
        %2137 = vmatpush1.msra.mxu0 %v2113
        %2138 = vmatprep.subr.mxu0 0.0
        %2139 = vmatpush1.msra.mxu0 %v2112
        %2140 = vmatprep.subr.mxu0 0.0
        %2141 = vmatpush1.msra.mxu0 %v2111
        %2142 = vmatprep.subr.mxu0 0.0
        %2143 = vmatpush1.msra.mxu0 %v2110
        %2144 = vmatprep.subr.mxu0 0.0
        %2145 = vmatpush1.msra.mxu0 %v2109
        %2146 = vmatprep.subr.mxu0 0.0
        %2147 = vmatpush1.msra.mxu0 %v2108
        %2148 = vmatprep.subr.mxu0 0.0
        %2149 = vmatpush1.msra.mxu0 %v2107
        %2150 = vmatprep.subr.mxu0 0.0
        %2151 = vmatpush1.msra.mxu0 %v2106
        %2152 = vmatprep.subr.mxu0 0.0
        %2153 = vmatpush1.msra.mxu0 %v2105
        %2154 = vmatprep.subr.mxu0 0.0
        %2155 = vmatpush1.msra.mxu0 %v2104
        %2156 = vmatprep.subr.mxu0 0.0
        %2157 = vmatpush1.msra.mxu0 %v2103
        %2158 = vmatprep.subr.mxu0 0.0
        %2159 = vmatpush1.msra.mxu0 %v2102
        %2160 = vmatprep.subr.mxu0 0.0
        %2161 = vmatpush1.msra.mxu0 %v2101
        %2162 = vmatprep.subr.mxu0 0.0
        %2163 = vmatpush1.msra.mxu0 %v2100
        %2164 = vmatprep.subr.mxu0 0.0
        %2165 = vmatpush2.msra.mxu0 %v2131
        %2166 = vmatprep.subr.mxu0 0.0
        %2167 = vmatpush2.msra.mxu0 %v2130
        %2168 = vmatprep.subr.mxu0 0.0
        %2169 = vmatpush2.msra.mxu0 %v2129
        %2170 = vmatprep.subr.mxu0 0.0
        %2171 = vmatpush2.msra.mxu0 %v2128
        %2172 = vmatprep.subr.mxu0 0.0
        %2173 = vmatpush2.msra.mxu0 %v2127
        %2174 = vmatprep.subr.mxu0 0.0
        %2175 = vmatpush2.msra.mxu0 %v2126
        %2176 = vmatprep.subr.mxu0 0.0
        %2177 = vmatpush2.msra.mxu0 %v2125
        %2178 = vmatprep.subr.mxu0 0.0
        %2179 = vmatpush2.msra.mxu0 %v2124
        %2180 = vmatprep.subr.mxu0 0.0
        %2181 = vmatpush2.msra.mxu0 %v2123
        %2182 = vmatprep.subr.mxu0 0.0
        %2183 = vmatpush2.msra.mxu0 %v2122
        %2184 = vmatprep.subr.mxu0 0.0
        %2185 = vmatpush2.msra.mxu0 %v2121
        %2186 = vmatprep.subr.mxu0 0.0
        %2187 = vmatpush2.msra.mxu0 %v2120
        %2188 = vmatprep.subr.mxu0 0.0
        %2189 = vmatpush2.msra.mxu0 %v2119
        %2190 = vmatprep.subr.mxu0 0.0
        %2191 = vmatpush2.msra.mxu0 %v2118
        %2192 = vmatprep.subr.mxu0 0.0
        %2193 = vmatpush2.msra.mxu0 %v2117
        %2194 = vmatprep.subr.mxu0 0.0
        %2195 = vmatpush2.msra.mxu0 %v2116
        %2196 = vmatprep.mubr.f32.mxu0 %v821
        %2197 = vmatmul.mubr.f32.gmra.mxu0 %v820
        %v2198 = vpop.f32.mrf.mxu0
        %v2199 = vadd.f32 0.0, %v2198
        %v2200 = vpop.f32.mrf.mxu0
        %2201 = vmatprep.mubr.f32.mxu0 %v823
        %2202 = vmatmul.mubr.f32.gmra.mxu0 %v822
        %v2203 = vpop.f32.mrf.mxu0
        %v2204 = vadd.f32 0.0, %v2203
        %v2205 = vpop.f32.mrf.mxu0
        %2206 = vdwg.mxu0
        %s2207 = scalar_lea.vmem [#allocation7], 192
        %v2208 = vld [vmem:[%s2207] sm:$0xff]
        %v2209 = vld [vmem:[%s2207 + $0x8] sm:$0xff]
        %v2210 = vld [vmem:[%s2207 + $0x10] sm:$0xff]
        %v2211 = vld [vmem:[%s2207 + $0x18] sm:$0xff]
        %v2213 = vsel %vm1048, %v2208, 0
        %v2216 = vsel %vm1048, %v2209, 0
        %v2219 = vsel %vm1048, %v2210, 0
        %v2222 = vsel %vm1048, %v2211, 0
        %2224 = vmatprep.subr.mxu0 0.0
        %2225 = vmatpush1.msra.mxu0 0.0
        %2226 = vmatprep.subr.mxu0 0.0
        %2227 = vmatpush1.msra.mxu0 0.0
        %2228 = vmatprep.subr.mxu0 0.0
        %2229 = vmatpush1.msra.mxu0 0.0
        %2230 = vmatprep.subr.mxu0 0.0
        %2231 = vmatpush1.msra.mxu0 0.0
        %2232 = vmatprep.subr.mxu0 0.0
        %2233 = vmatpush1.msra.mxu0 0.0
        %2234 = vmatprep.subr.mxu0 0.0
        %2235 = vmatpush1.msra.mxu0 0.0
        %2236 = vmatprep.subr.mxu0 0.0
        %2237 = vmatpush1.msra.mxu0 0.0
        %2238 = vmatprep.subr.mxu0 0.0
        %2239 = vmatpush1.msra.mxu0 0.0
        %2240 = vmatprep.subr.mxu0 0.0
        %2241 = vmatpush1.msra.mxu0 0.0
        %2242 = vmatprep.subr.mxu0 0.0
        %2243 = vmatpush1.msra.mxu0 0.0
        %2244 = vmatprep.subr.mxu0 0.0
        %2245 = vmatpush1.msra.mxu0 0.0
        %2246 = vmatprep.subr.mxu0 0.0
        %2247 = vmatpush1.msra.mxu0 0.0
        %2248 = vmatprep.subr.mxu0 0.0
        %2249 = vmatpush1.msra.mxu0 0.0
        %2250 = vmatprep.subr.mxu0 0.0
        %2251 = vmatpush1.msra.mxu0 0.0
        %2252 = vmatprep.subr.mxu0 0.0
        %2253 = vmatpush1.msra.mxu0 %v2204
        %2254 = vmatprep.subr.mxu0 0.0
        %2255 = vmatpush1.msra.mxu0 %v2199
        %2256 = vmatprep.subr.mxu0 0.0
        %2257 = vmatpush2.msra.mxu0 0.0
        %2258 = vmatprep.subr.mxu0 0.0
        %2259 = vmatpush2.msra.mxu0 0.0
        %2260 = vmatprep.subr.mxu0 0.0
        %2261 = vmatpush2.msra.mxu0 0.0
        %2262 = vmatprep.subr.mxu0 0.0
        %2263 = vmatpush2.msra.mxu0 0.0
        %2264 = vmatprep.subr.mxu0 0.0
        %2265 = vmatpush2.msra.mxu0 0.0
        %2266 = vmatprep.subr.mxu0 0.0
        %2267 = vmatpush2.msra.mxu0 0.0
        %2268 = vmatprep.subr.mxu0 0.0
        %2269 = vmatpush2.msra.mxu0 0.0
        %2270 = vmatprep.subr.mxu0 0.0
        %2271 = vmatpush2.msra.mxu0 0.0
        %2272 = vmatprep.subr.mxu0 0.0
        %2273 = vmatpush2.msra.mxu0 0.0
        %2274 = vmatprep.subr.mxu0 0.0
        %2275 = vmatpush2.msra.mxu0 0.0
        %2276 = vmatprep.subr.mxu0 0.0
        %2277 = vmatpush2.msra.mxu0 0.0
        %2278 = vmatprep.subr.mxu0 0.0
        %2279 = vmatpush2.msra.mxu0 0.0
        %2280 = vmatprep.subr.mxu0 0.0
        %2281 = vmatpush2.msra.mxu0 0.0
        %2282 = vmatprep.subr.mxu0 0.0
        %2283 = vmatpush2.msra.mxu0 0.0
        %2284 = vmatprep.subr.mxu0 0.0
        %2285 = vmatpush2.msra.mxu0 0.0
        %2286 = vmatprep.subr.mxu0 0.0
        %2287 = vmatpush2.msra.mxu0 0.0
        %2288 = vmatprep.mubr.f32.mxu0 0.0
        %2289 = vmatmul.mubr.f32.gmra.mxu0 %v2213
        %v2290 = vpop.f32.mrf.mxu0
        %v2291 = vadd.f32 0.0, %v2290
        %v2292 = vpop.f32.mrf.mxu0
        %2293 = vmatprep.mubr.f32.mxu0 0.0
        %2294 = vmatmul.mubr.f32.gmra.mxu0 %v2216
        %v2295 = vpop.f32.mrf.mxu0
        %v2296 = vadd.f32 0.0, %v2295
        %v2297 = vpop.f32.mrf.mxu0
        %2298 = vmatprep.mubr.f32.mxu0 0.0
        %2299 = vmatmul.mubr.f32.gmra.mxu0 %v2219
        %v2300 = vpop.f32.mrf.mxu0
        %v2301 = vadd.f32 0.0, %v2300
        %v2302 = vpop.f32.mrf.mxu0
        %2303 = vmatprep.mubr.f32.mxu0 0.0
        %2304 = vmatmul.mubr.f32.gmra.mxu0 %v2222
        %v2305 = vpop.f32.mrf.mxu0
        %v2306 = vadd.f32 0.0, %v2305
        %v2307 = vpop.f32.mrf.mxu0
        %2308 = vdwg.mxu0
        %v2309 = vadd.f32 %v2095, %v2291
        %v2310 = vadd.f32 %v2096, %v2296
        %v2311 = vadd.f32 %v2097, %v2301
        %v2312 = vadd.f32 %v2098, %v2306
        %s2313 = scalar_lea.vmem [#allocation10], 1792
        %v2314 = vld [vmem:[%s2313] sm:$0xff]
        %v2315 = vld [vmem:[%s2313 + $0x8] sm:$0xff]
        %v2316 = vld [vmem:[%s2313 + $0x10] sm:$0xff]
        %v2317 = vld [vmem:[%s2313 + $0x18] sm:$0xff]
        %v2318 = vld [vmem:[%s2313 + $0x20] sm:$0xff]
        %v2319 = vld [vmem:[%s2313 + $0x28] sm:$0xff]
        %v2320 = vld [vmem:[%s2313 + $0x30] sm:$0xff]
        %v2321 = vld [vmem:[%s2313 + $0x38] sm:$0xff]
        %v2322 = vld [vmem:[%s2313 + $0x40] sm:$0xff]
        %v2323 = vld [vmem:[%s2313 + $0x48] sm:$0xff]
        %v2324 = vld [vmem:[%s2313 + $0x50] sm:$0xff]
        %v2325 = vld [vmem:[%s2313 + $0x58] sm:$0xff]
        %v2326 = vld [vmem:[%s2313 + $0x60] sm:$0xff]
        %v2327 = vld [vmem:[%s2313 + $0x68] sm:$0xff]
        %v2328 = vld [vmem:[%s2313 + $0x70] sm:$0xff]
        %v2329 = vld [vmem:[%s2313 + $0x78] sm:$0xff]
        %v2330 = vld [vmem:[%s2313 + $0x80] sm:$0xff]
        %v2331 = vld [vmem:[%s2313 + $0x88] sm:$0xff]
        %v2332 = vld [vmem:[%s2313 + $0x90] sm:$0xff]
        %v2333 = vld [vmem:[%s2313 + $0x98] sm:$0xff]
        %v2334 = vld [vmem:[%s2313 + $0xa0] sm:$0xff]
        %v2335 = vld [vmem:[%s2313 + $0xa8] sm:$0xff]
        %v2336 = vld [vmem:[%s2313 + $0xb0] sm:$0xff]
        %v2337 = vld [vmem:[%s2313 + $0xb8] sm:$0xff]
        %v2338 = vld [vmem:[%s2313 + $0xc0] sm:$0xff]
        %v2339 = vld [vmem:[%s2313 + $0xc8] sm:$0xff]
        %v2340 = vld [vmem:[%s2313 + $0xd0] sm:$0xff]
        %v2341 = vld [vmem:[%s2313 + $0xd8] sm:$0xff]
        %v2342 = vld [vmem:[%s2313 + $0xe0] sm:$0xff]
        %v2343 = vld [vmem:[%s2313 + $0xe8] sm:$0xff]
        %v2344 = vld [vmem:[%s2313 + $0xf0] sm:$0xff]
        %v2345 = vld [vmem:[%s2313 + $0xf8] sm:$0xff]
        %2346 = vmatprep.subr.mxu0 0.0
        %2347 = vmatpush1.msra.mxu0 %v2329
        %2348 = vmatprep.subr.mxu0 0.0
        %2349 = vmatpush1.msra.mxu0 %v2328
        %2350 = vmatprep.subr.mxu0 0.0
        %2351 = vmatpush1.msra.mxu0 %v2327
        %2352 = vmatprep.subr.mxu0 0.0
        %2353 = vmatpush1.msra.mxu0 %v2326
        %2354 = vmatprep.subr.mxu0 0.0
        %2355 = vmatpush1.msra.mxu0 %v2325
        %2356 = vmatprep.subr.mxu0 0.0
        %2357 = vmatpush1.msra.mxu0 %v2324
        %2358 = vmatprep.subr.mxu0 0.0
        %2359 = vmatpush1.msra.mxu0 %v2323
        %2360 = vmatprep.subr.mxu0 0.0
        %2361 = vmatpush1.msra.mxu0 %v2322
        %2362 = vmatprep.subr.mxu0 0.0
        %2363 = vmatpush1.msra.mxu0 %v2321
        %2364 = vmatprep.subr.mxu0 0.0
        %2365 = vmatpush1.msra.mxu0 %v2320
        %2366 = vmatprep.subr.mxu0 0.0
        %2367 = vmatpush1.msra.mxu0 %v2319
        %2368 = vmatprep.subr.mxu0 0.0
        %2369 = vmatpush1.msra.mxu0 %v2318
        %2370 = vmatprep.subr.mxu0 0.0
        %2371 = vmatpush1.msra.mxu0 %v2317
        %2372 = vmatprep.subr.mxu0 0.0
        %2373 = vmatpush1.msra.mxu0 %v2316
        %2374 = vmatprep.subr.mxu0 0.0
        %2375 = vmatpush1.msra.mxu0 %v2315
        %2376 = vmatprep.subr.mxu0 0.0
        %2377 = vmatpush1.msra.mxu0 %v2314
        %2378 = vmatprep.subr.mxu0 0.0
        %2379 = vmatpush2.msra.mxu0 %v2345
        %2380 = vmatprep.subr.mxu0 0.0
        %2381 = vmatpush2.msra.mxu0 %v2344
        %2382 = vmatprep.subr.mxu0 0.0
        %2383 = vmatpush2.msra.mxu0 %v2343
        %2384 = vmatprep.subr.mxu0 0.0
        %2385 = vmatpush2.msra.mxu0 %v2342
        %2386 = vmatprep.subr.mxu0 0.0
        %2387 = vmatpush2.msra.mxu0 %v2341
        %2388 = vmatprep.subr.mxu0 0.0
        %2389 = vmatpush2.msra.mxu0 %v2340
        %2390 = vmatprep.subr.mxu0 0.0
        %2391 = vmatpush2.msra.mxu0 %v2339
        %2392 = vmatprep.subr.mxu0 0.0
        %2393 = vmatpush2.msra.mxu0 %v2338
        %2394 = vmatprep.subr.mxu0 0.0
        %2395 = vmatpush2.msra.mxu0 %v2337
        %2396 = vmatprep.subr.mxu0 0.0
        %2397 = vmatpush2.msra.mxu0 %v2336
        %2398 = vmatprep.subr.mxu0 0.0
        %2399 = vmatpush2.msra.mxu0 %v2335
        %2400 = vmatprep.subr.mxu0 0.0
        %2401 = vmatpush2.msra.mxu0 %v2334
        %2402 = vmatprep.subr.mxu0 0.0
        %2403 = vmatpush2.msra.mxu0 %v2333
        %2404 = vmatprep.subr.mxu0 0.0
        %2405 = vmatpush2.msra.mxu0 %v2332
        %2406 = vmatprep.subr.mxu0 0.0
        %2407 = vmatpush2.msra.mxu0 %v2331
        %2408 = vmatprep.subr.mxu0 0.0
        %2409 = vmatpush2.msra.mxu0 %v2330
        %2410 = vmatprep.mubr.f32.mxu0 %v821
        %2411 = vmatmul.mubr.f32.gmra.mxu0 %v820
        %v2412 = vpop.f32.mrf.mxu0
        %v2413 = vadd.f32 0.0, %v2412
        %v2414 = vpop.f32.mrf.mxu0
        %2415 = vmatprep.mubr.f32.mxu0 %v823
        %2416 = vmatmul.mubr.f32.gmra.mxu0 %v822
        %v2417 = vpop.f32.mrf.mxu0
        %v2418 = vadd.f32 0.0, %v2417
        %v2419 = vpop.f32.mrf.mxu0
        %2420 = vdwg.mxu0
        %s2421 = scalar_lea.vmem [#allocation7], 224
        %v2422 = vld [vmem:[%s2421] sm:$0xff]
        %v2423 = vld [vmem:[%s2421 + $0x8] sm:$0xff]
        %v2424 = vld [vmem:[%s2421 + $0x10] sm:$0xff]
        %v2425 = vld [vmem:[%s2421 + $0x18] sm:$0xff]
        %v2427 = vsel %vm1048, %v2422, 0
        %v2430 = vsel %vm1048, %v2423, 0
        %v2433 = vsel %vm1048, %v2424, 0
        %v2436 = vsel %vm1048, %v2425, 0
        %2438 = vmatprep.subr.mxu0 0.0
        %2439 = vmatpush1.msra.mxu0 0.0
        %2440 = vmatprep.subr.mxu0 0.0
        %2441 = vmatpush1.msra.mxu0 0.0
        %2442 = vmatprep.subr.mxu0 0.0
        %2443 = vmatpush1.msra.mxu0 0.0
        %2444 = vmatprep.subr.mxu0 0.0
        %2445 = vmatpush1.msra.mxu0 0.0
        %2446 = vmatprep.subr.mxu0 0.0
        %2447 = vmatpush1.msra.mxu0 0.0
        %2448 = vmatprep.subr.mxu0 0.0
        %2449 = vmatpush1.msra.mxu0 0.0
        %2450 = vmatprep.subr.mxu0 0.0
        %2451 = vmatpush1.msra.mxu0 0.0
        %2452 = vmatprep.subr.mxu0 0.0
        %2453 = vmatpush1.msra.mxu0 0.0
        %2454 = vmatprep.subr.mxu0 0.0
        %2455 = vmatpush1.msra.mxu0 0.0
        %2456 = vmatprep.subr.mxu0 0.0
        %2457 = vmatpush1.msra.mxu0 0.0
        %2458 = vmatprep.subr.mxu0 0.0
        %2459 = vmatpush1.msra.mxu0 0.0
        %2460 = vmatprep.subr.mxu0 0.0
        %2461 = vmatpush1.msra.mxu0 0.0
        %2462 = vmatprep.subr.mxu0 0.0
        %2463 = vmatpush1.msra.mxu0 0.0
        %2464 = vmatprep.subr.mxu0 0.0
        %2465 = vmatpush1.msra.mxu0 0.0
        %2466 = vmatprep.subr.mxu0 0.0
        %2467 = vmatpush1.msra.mxu0 %v2418
        %2468 = vmatprep.subr.mxu0 0.0
        %2469 = vmatpush1.msra.mxu0 %v2413
        %2470 = vmatprep.subr.mxu0 0.0
        %2471 = vmatpush2.msra.mxu0 0.0
        %2472 = vmatprep.subr.mxu0 0.0
        %2473 = vmatpush2.msra.mxu0 0.0
        %2474 = vmatprep.subr.mxu0 0.0
        %2475 = vmatpush2.msra.mxu0 0.0
        %2476 = vmatprep.subr.mxu0 0.0
        %2477 = vmatpush2.msra.mxu0 0.0
        %2478 = vmatprep.subr.mxu0 0.0
        %2479 = vmatpush2.msra.mxu0 0.0
        %2480 = vmatprep.subr.mxu0 0.0
        %2481 = vmatpush2.msra.mxu0 0.0
        %2482 = vmatprep.subr.mxu0 0.0
        %2483 = vmatpush2.msra.mxu0 0.0
        %2484 = vmatprep.subr.mxu0 0.0
        %2485 = vmatpush2.msra.mxu0 0.0
        %2486 = vmatprep.subr.mxu0 0.0
        %2487 = vmatpush2.msra.mxu0 0.0
        %2488 = vmatprep.subr.mxu0 0.0
        %2489 = vmatpush2.msra.mxu0 0.0
        %2490 = vmatprep.subr.mxu0 0.0
        %2491 = vmatpush2.msra.mxu0 0.0
        %2492 = vmatprep.subr.mxu0 0.0
        %2493 = vmatpush2.msra.mxu0 0.0
        %2494 = vmatprep.subr.mxu0 0.0
        %2495 = vmatpush2.msra.mxu0 0.0
        %2496 = vmatprep.subr.mxu0 0.0
        %2497 = vmatpush2.msra.mxu0 0.0
        %2498 = vmatprep.subr.mxu0 0.0
        %2499 = vmatpush2.msra.mxu0 0.0
        %2500 = vmatprep.subr.mxu0 0.0
        %2501 = vmatpush2.msra.mxu0 0.0
        %2502 = vmatprep.mubr.f32.mxu0 0.0
        %2503 = vmatmul.mubr.f32.gmra.mxu0 %v2427
        %v2504 = vpop.f32.mrf.mxu0
        %v2505 = vadd.f32 0.0, %v2504
        %v2506 = vpop.f32.mrf.mxu0
        %2507 = vmatprep.mubr.f32.mxu0 0.0
        %2508 = vmatmul.mubr.f32.gmra.mxu0 %v2430
        %v2509 = vpop.f32.mrf.mxu0
        %v2510 = vadd.f32 0.0, %v2509
        %v2511 = vpop.f32.mrf.mxu0
        %2512 = vmatprep.mubr.f32.mxu0 0.0
        %2513 = vmatmul.mubr.f32.gmra.mxu0 %v2433
        %v2514 = vpop.f32.mrf.mxu0
        %v2515 = vadd.f32 0.0, %v2514
        %v2516 = vpop.f32.mrf.mxu0
        %2517 = vmatprep.mubr.f32.mxu0 0.0
        %2518 = vmatmul.mubr.f32.gmra.mxu0 %v2436
        %v2519 = vpop.f32.mrf.mxu0
        %v2520 = vadd.f32 0.0, %v2519
        %v2521 = vpop.f32.mrf.mxu0
        %2522 = vdwg.mxu0
        %v2523 = vadd.f32 %v2309, %v2505
        %v2524 = vadd.f32 %v2310, %v2510
        %v2525 = vadd.f32 %v2311, %v2515
        %v2526 = vadd.f32 %v2312, %v2520
        %s2527 = scalar_lea.vmem [#allocation10], 2048
        %v2528 = vld [vmem:[%s2527] sm:$0xff]
        %v2529 = vld [vmem:[%s2527 + $0x8] sm:$0xff]
        %v2530 = vld [vmem:[%s2527 + $0x10] sm:$0xff]
        %v2531 = vld [vmem:[%s2527 + $0x18] sm:$0xff]
        %v2532 = vld [vmem:[%s2527 + $0x20] sm:$0xff]
        %v2533 = vld [vmem:[%s2527 + $0x28] sm:$0xff]
        %v2534 = vld [vmem:[%s2527 + $0x30] sm:$0xff]
        %v2535 = vld [vmem:[%s2527 + $0x38] sm:$0xff]
        %v2536 = vld [vmem:[%s2527 + $0x40] sm:$0xff]
        %v2537 = vld [vmem:[%s2527 + $0x48] sm:$0xff]
        %v2538 = vld [vmem:[%s2527 + $0x50] sm:$0xff]
        %v2539 = vld [vmem:[%s2527 + $0x58] sm:$0xff]
        %v2540 = vld [vmem:[%s2527 + $0x60] sm:$0xff]
        %v2541 = vld [vmem:[%s2527 + $0x68] sm:$0xff]
        %v2542 = vld [vmem:[%s2527 + $0x70] sm:$0xff]
        %v2543 = vld [vmem:[%s2527 + $0x78] sm:$0xff]
        %v2544 = vld [vmem:[%s2527 + $0x80] sm:$0xff]
        %v2545 = vld [vmem:[%s2527 + $0x88] sm:$0xff]
        %v2546 = vld [vmem:[%s2527 + $0x90] sm:$0xff]
        %v2547 = vld [vmem:[%s2527 + $0x98] sm:$0xff]
        %v2548 = vld [vmem:[%s2527 + $0xa0] sm:$0xff]
        %v2549 = vld [vmem:[%s2527 + $0xa8] sm:$0xff]
        %v2550 = vld [vmem:[%s2527 + $0xb0] sm:$0xff]
        %v2551 = vld [vmem:[%s2527 + $0xb8] sm:$0xff]
        %v2552 = vld [vmem:[%s2527 + $0xc0] sm:$0xff]
        %v2553 = vld [vmem:[%s2527 + $0xc8] sm:$0xff]
        %v2554 = vld [vmem:[%s2527 + $0xd0] sm:$0xff]
        %v2555 = vld [vmem:[%s2527 + $0xd8] sm:$0xff]
        %v2556 = vld [vmem:[%s2527 + $0xe0] sm:$0xff]
        %v2557 = vld [vmem:[%s2527 + $0xe8] sm:$0xff]
        %v2558 = vld [vmem:[%s2527 + $0xf0] sm:$0xff]
        %v2559 = vld [vmem:[%s2527 + $0xf8] sm:$0xff]
        %2560 = vmatprep.subr.mxu0 0.0
        %2561 = vmatpush1.msra.mxu0 %v2543
        %2562 = vmatprep.subr.mxu0 0.0
        %2563 = vmatpush1.msra.mxu0 %v2542
        %2564 = vmatprep.subr.mxu0 0.0
        %2565 = vmatpush1.msra.mxu0 %v2541
        %2566 = vmatprep.subr.mxu0 0.0
        %2567 = vmatpush1.msra.mxu0 %v2540
        %2568 = vmatprep.subr.mxu0 0.0
        %2569 = vmatpush1.msra.mxu0 %v2539
        %2570 = vmatprep.subr.mxu0 0.0
        %2571 = vmatpush1.msra.mxu0 %v2538
        %2572 = vmatprep.subr.mxu0 0.0
        %2573 = vmatpush1.msra.mxu0 %v2537
        %2574 = vmatprep.subr.mxu0 0.0
        %2575 = vmatpush1.msra.mxu0 %v2536
        %2576 = vmatprep.subr.mxu0 0.0
        %2577 = vmatpush1.msra.mxu0 %v2535
        %2578 = vmatprep.subr.mxu0 0.0
        %2579 = vmatpush1.msra.mxu0 %v2534
        %2580 = vmatprep.subr.mxu0 0.0
        %2581 = vmatpush1.msra.mxu0 %v2533
        %2582 = vmatprep.subr.mxu0 0.0
        %2583 = vmatpush1.msra.mxu0 %v2532
        %2584 = vmatprep.subr.mxu0 0.0
        %2585 = vmatpush1.msra.mxu0 %v2531
        %2586 = vmatprep.subr.mxu0 0.0
        %2587 = vmatpush1.msra.mxu0 %v2530
        %2588 = vmatprep.subr.mxu0 0.0
        %2589 = vmatpush1.msra.mxu0 %v2529
        %2590 = vmatprep.subr.mxu0 0.0
        %2591 = vmatpush1.msra.mxu0 %v2528
        %2592 = vmatprep.subr.mxu0 0.0
        %2593 = vmatpush2.msra.mxu0 %v2559
        %2594 = vmatprep.subr.mxu0 0.0
        %2595 = vmatpush2.msra.mxu0 %v2558
        %2596 = vmatprep.subr.mxu0 0.0
        %2597 = vmatpush2.msra.mxu0 %v2557
        %2598 = vmatprep.subr.mxu0 0.0
        %2599 = vmatpush2.msra.mxu0 %v2556
        %2600 = vmatprep.subr.mxu0 0.0
        %2601 = vmatpush2.msra.mxu0 %v2555
        %2602 = vmatprep.subr.mxu0 0.0
        %2603 = vmatpush2.msra.mxu0 %v2554
        %2604 = vmatprep.subr.mxu0 0.0
        %2605 = vmatpush2.msra.mxu0 %v2553
        %2606 = vmatprep.subr.mxu0 0.0
        %2607 = vmatpush2.msra.mxu0 %v2552
        %2608 = vmatprep.subr.mxu0 0.0
        %2609 = vmatpush2.msra.mxu0 %v2551
        %2610 = vmatprep.subr.mxu0 0.0
        %2611 = vmatpush2.msra.mxu0 %v2550
        %2612 = vmatprep.subr.mxu0 0.0
        %2613 = vmatpush2.msra.mxu0 %v2549
        %2614 = vmatprep.subr.mxu0 0.0
        %2615 = vmatpush2.msra.mxu0 %v2548
        %2616 = vmatprep.subr.mxu0 0.0
        %2617 = vmatpush2.msra.mxu0 %v2547
        %2618 = vmatprep.subr.mxu0 0.0
        %2619 = vmatpush2.msra.mxu0 %v2546
        %2620 = vmatprep.subr.mxu0 0.0
        %2621 = vmatpush2.msra.mxu0 %v2545
        %2622 = vmatprep.subr.mxu0 0.0
        %2623 = vmatpush2.msra.mxu0 %v2544
        %2624 = vmatprep.mubr.f32.mxu0 %v821
        %2625 = vmatmul.mubr.f32.gmra.mxu0 %v820
        %v2626 = vpop.f32.mrf.mxu0
        %v2627 = vadd.f32 0.0, %v2626
        %v2628 = vpop.f32.mrf.mxu0
        %2629 = vmatprep.mubr.f32.mxu0 %v823
        %2630 = vmatmul.mubr.f32.gmra.mxu0 %v822
        %v2631 = vpop.f32.mrf.mxu0
        %v2632 = vadd.f32 0.0, %v2631
        %v2633 = vpop.f32.mrf.mxu0
        %2634 = vdwg.mxu0
        %s2635 = scalar_lea.vmem [#allocation7], 256
        %v2636 = vld [vmem:[%s2635] sm:$0xff]
        %v2637 = vld [vmem:[%s2635 + $0x8] sm:$0xff]
        %v2638 = vld [vmem:[%s2635 + $0x10] sm:$0xff]
        %v2639 = vld [vmem:[%s2635 + $0x18] sm:$0xff]
        %v2641 = vsel %vm1048, %v2636, 0
        %v2644 = vsel %vm1048, %v2637, 0
        %v2647 = vsel %vm1048, %v2638, 0
        %v2650 = vsel %vm1048, %v2639, 0
        %2652 = vmatprep.subr.mxu0 0.0
        %2653 = vmatpush1.msra.mxu0 0.0
        %2654 = vmatprep.subr.mxu0 0.0
        %2655 = vmatpush1.msra.mxu0 0.0
        %2656 = vmatprep.subr.mxu0 0.0
        %2657 = vmatpush1.msra.mxu0 0.0
        %2658 = vmatprep.subr.mxu0 0.0
        %2659 = vmatpush1.msra.mxu0 0.0
        %2660 = vmatprep.subr.mxu0 0.0
        %2661 = vmatpush1.msra.mxu0 0.0
        %2662 = vmatprep.subr.mxu0 0.0
        %2663 = vmatpush1.msra.mxu0 0.0
        %2664 = vmatprep.subr.mxu0 0.0
        %2665 = vmatpush1.msra.mxu0 0.0
        %2666 = vmatprep.subr.mxu0 0.0
        %2667 = vmatpush1.msra.mxu0 0.0
        %2668 = vmatprep.subr.mxu0 0.0
        %2669 = vmatpush1.msra.mxu0 0.0
        %2670 = vmatprep.subr.mxu0 0.0
        %2671 = vmatpush1.msra.mxu0 0.0
        %2672 = vmatprep.subr.mxu0 0.0
        %2673 = vmatpush1.msra.mxu0 0.0
        %2674 = vmatprep.subr.mxu0 0.0
        %2675 = vmatpush1.msra.mxu0 0.0
        %2676 = vmatprep.subr.mxu0 0.0
        %2677 = vmatpush1.msra.mxu0 0.0
        %2678 = vmatprep.subr.mxu0 0.0
        %2679 = vmatpush1.msra.mxu0 0.0
        %2680 = vmatprep.subr.mxu0 0.0
        %2681 = vmatpush1.msra.mxu0 %v2632
        %2682 = vmatprep.subr.mxu0 0.0
        %2683 = vmatpush1.msra.mxu0 %v2627
        %2684 = vmatprep.subr.mxu0 0.0
        %2685 = vmatpush2.msra.mxu0 0.0
        %2686 = vmatprep.subr.mxu0 0.0
        %2687 = vmatpush2.msra.mxu0 0.0
        %2688 = vmatprep.subr.mxu0 0.0
        %2689 = vmatpush2.msra.mxu0 0.0
        %2690 = vmatprep.subr.mxu0 0.0
        %2691 = vmatpush2.msra.mxu0 0.0
        %2692 = vmatprep.subr.mxu0 0.0
        %2693 = vmatpush2.msra.mxu0 0.0
        %2694 = vmatprep.subr.mxu0 0.0
        %2695 = vmatpush2.msra.mxu0 0.0
        %2696 = vmatprep.subr.mxu0 0.0
        %2697 = vmatpush2.msra.mxu0 0.0
        %2698 = vmatprep.subr.mxu0 0.0
        %2699 = vmatpush2.msra.mxu0 0.0
        %2700 = vmatprep.subr.mxu0 0.0
        %2701 = vmatpush2.msra.mxu0 0.0
        %2702 = vmatprep.subr.mxu0 0.0
        %2703 = vmatpush2.msra.mxu0 0.0
        %2704 = vmatprep.subr.mxu0 0.0
        %2705 = vmatpush2.msra.mxu0 0.0
        %2706 = vmatprep.subr.mxu0 0.0
        %2707 = vmatpush2.msra.mxu0 0.0
        %2708 = vmatprep.subr.mxu0 0.0
        %2709 = vmatpush2.msra.mxu0 0.0
        %2710 = vmatprep.subr.mxu0 0.0
        %2711 = vmatpush2.msra.mxu0 0.0
        %2712 = vmatprep.subr.mxu0 0.0
        %2713 = vmatpush2.msra.mxu0 0.0
        %2714 = vmatprep.subr.mxu0 0.0
        %2715 = vmatpush2.msra.mxu0 0.0
        %2716 = vmatprep.mubr.f32.mxu0 0.0
        %2717 = vmatmul.mubr.f32.gmra.mxu0 %v2641
        %v2718 = vpop.f32.mrf.mxu0
        %v2719 = vadd.f32 0.0, %v2718
        %v2720 = vpop.f32.mrf.mxu0
        %2721 = vmatprep.mubr.f32.mxu0 0.0
        %2722 = vmatmul.mubr.f32.gmra.mxu0 %v2644
        %v2723 = vpop.f32.mrf.mxu0
        %v2724 = vadd.f32 0.0, %v2723
        %v2725 = vpop.f32.mrf.mxu0
        %2726 = vmatprep.mubr.f32.mxu0 0.0
        %2727 = vmatmul.mubr.f32.gmra.mxu0 %v2647
        %v2728 = vpop.f32.mrf.mxu0
        %v2729 = vadd.f32 0.0, %v2728
        %v2730 = vpop.f32.mrf.mxu0
        %2731 = vmatprep.mubr.f32.mxu0 0.0
        %2732 = vmatmul.mubr.f32.gmra.mxu0 %v2650
        %v2733 = vpop.f32.mrf.mxu0
        %v2734 = vadd.f32 0.0, %v2733
        %v2735 = vpop.f32.mrf.mxu0
        %2736 = vdwg.mxu0
        %v2737 = vadd.f32 %v2523, %v2719
        %v2738 = vadd.f32 %v2524, %v2724
        %v2739 = vadd.f32 %v2525, %v2729
        %v2740 = vadd.f32 %v2526, %v2734
        %v2741 = vld [vmem:[#allocation8] sm:$0xff]
        %v2742 = vld [vmem:[#allocation8 + $0x8] sm:$0xff]
        %v2743 = vld [vmem:[#allocation8 + $0x10] sm:$0xff]
        %v2744 = vld [vmem:[#allocation8 + $0x18] sm:$0xff]
        %2746 = vset.pattern.permute.xlu0 0
        %2747 = vperm.xlu0 %2746, %v2741
        %v2748 = vpop.permute.xlu0 %2747
        %2751 = vset.pattern.permute.xlu0 0
        %2752 = vperm.xlu0 %2751, %v2742
        %v2753 = vpop.permute.xlu0 %2752
        %2756 = vset.pattern.permute.xlu0 0
        %2757 = vperm.xlu0 %2756, %v2743
        %v2758 = vpop.permute.xlu0 %2757
        %2761 = vset.pattern.permute.xlu0 0
        %2762 = vperm.xlu0 %2761, %v2744
        %v2763 = vpop.permute.xlu0 %2762
        %v2765 = vadd.f32 %v2737, %v2748
        %v2766 = vadd.f32 %v2738, %v2753
        %v2767 = vadd.f32 %v2739, %v2758
        %v2768 = vadd.f32 %v2740, %v2763
        %v2769 = vmul.f32 %v2765, 0.2
        %v2770 = vmul.f32 %v2766, 0.2
        %v2771 = vmul.f32 %v2767, 0.2
        %v2772 = vmul.f32 %v2768, 0.2
        %v2773 = vmax.f32 %v2765, %v2769
        %v2774 = vmax.f32 %v2766, %v2770
        %v2775 = vmax.f32 %v2767, %v2771
        %v2776 = vmax.f32 %v2768, %v2772
        %v2777 = vld [vmem:[%s5] sm:$0xff]
        %v2778 = vld [vmem:[%s5 + $0x8] sm:$0xff]
        %v2779 = vld [vmem:[%s5 + $0x10] sm:$0xff]
        %v2780 = vld [vmem:[%s5 + $0x18] sm:$0xff]
        %2782 = vset.pattern.permute.xlu0 0
        %2783 = vperm.xlu0 %2782, %v2777
        %v2784 = vpop.permute.xlu0 %2783
        %2787 = vset.pattern.permute.xlu0 0
        %2788 = vperm.xlu0 %2787, %v2778
        %v2789 = vpop.permute.xlu0 %2788
        %2792 = vset.pattern.permute.xlu0 0
        %2793 = vperm.xlu0 %2792, %v2779
        %v2794 = vpop.permute.xlu0 %2793
        %2797 = vset.pattern.permute.xlu0 0
        %2798 = vperm.xlu0 %2797, %v2780
        %v2799 = vpop.permute.xlu0 %2798
        %v2801 = vadd.f32 %v2773, %v2784
        %v2802 = vadd.f32 %v2774, %v2789
        %v2803 = vadd.f32 %v2775, %v2794
        %v2804 = vadd.f32 %v2776, %v2799
        %v2805 = vld [vmem:[#allocation14] sm:$0xff]
        %v2806 = vld [vmem:[#allocation14 + $0x8] sm:$0xff]
        %v2807 = vld [vmem:[#allocation14 + $0x10] sm:$0xff]
        %v2808 = vld [vmem:[#allocation14 + $0x18] sm:$0xff]
        %v2809 = vld [vmem:[#allocation14 + $0x20] sm:$0xff]
        %v2810 = vld [vmem:[#allocation14 + $0x28] sm:$0xff]
        %v2811 = vld [vmem:[#allocation14 + $0x30] sm:$0xff]
        %v2812 = vld [vmem:[#allocation14 + $0x38] sm:$0xff]
        %vm2813 = vcmask 523264
        %v2815 = vsel %vm2813, %v2801, 0
        %v2818 = vsel %vm2813, %v2802, 0
        %v2821 = vsel %vm2813, %v2803, 0
        %v2824 = vsel %vm2813, %v2804, 0
        %2826 = vmatprep.subr.mxu0 0.0
        %2827 = vmatpush1.msra.mxu0 0.0
        %2828 = vmatprep.subr.mxu0 0.0
        %2829 = vmatpush1.msra.mxu0 0.0
        %2830 = vmatprep.subr.mxu0 0.0
        %2831 = vmatpush1.msra.mxu0 0.0
        %2832 = vmatprep.subr.mxu0 0.0
        %2833 = vmatpush1.msra.mxu0 0.0
        %2834 = vmatprep.subr.mxu0 0.0
        %2835 = vmatpush1.msra.mxu0 0.0
        %2836 = vmatprep.subr.mxu0 0.0
        %2837 = vmatpush1.msra.mxu0 0.0
        %2838 = vmatprep.subr.mxu0 0.0
        %2839 = vmatpush1.msra.mxu0 0.0
        %2840 = vmatprep.subr.mxu0 0.0
        %2841 = vmatpush1.msra.mxu0 0.0
        %2842 = vmatprep.subr.mxu0 0.0
        %2843 = vmatpush1.msra.mxu0 %v2812
        %2844 = vmatprep.subr.mxu0 0.0
        %2845 = vmatpush1.msra.mxu0 %v2811
        %2846 = vmatprep.subr.mxu0 0.0
        %2847 = vmatpush1.msra.mxu0 %v2810
        %2848 = vmatprep.subr.mxu0 0.0
        %2849 = vmatpush1.msra.mxu0 %v2809
        %2850 = vmatprep.subr.mxu0 0.0
        %2851 = vmatpush1.msra.mxu0 %v2808
        %2852 = vmatprep.subr.mxu0 0.0
        %2853 = vmatpush1.msra.mxu0 %v2807
        %2854 = vmatprep.subr.mxu0 0.0
        %2855 = vmatpush1.msra.mxu0 %v2806
        %2856 = vmatprep.subr.mxu0 0.0
        %2857 = vmatpush1.msra.mxu0 %v2805
        %2858 = vmatprep.subr.mxu0 0.0
        %2859 = vmatpush2.msra.mxu0 0.0
        %2860 = vmatprep.subr.mxu0 0.0
        %2861 = vmatpush2.msra.mxu0 0.0
        %2862 = vmatprep.subr.mxu0 0.0
        %2863 = vmatpush2.msra.mxu0 0.0
        %2864 = vmatprep.subr.mxu0 0.0
        %2865 = vmatpush2.msra.mxu0 0.0
        %2866 = vmatprep.subr.mxu0 0.0
        %2867 = vmatpush2.msra.mxu0 0.0
        %2868 = vmatprep.subr.mxu0 0.0
        %2869 = vmatpush2.msra.mxu0 0.0
        %2870 = vmatprep.subr.mxu0 0.0
        %2871 = vmatpush2.msra.mxu0 0.0
        %2872 = vmatprep.subr.mxu0 0.0
        %2873 = vmatpush2.msra.mxu0 0.0
        %2874 = vmatprep.subr.mxu0 0.0
        %2875 = vmatpush2.msra.mxu0 0.0
        %2876 = vmatprep.subr.mxu0 0.0
        %2877 = vmatpush2.msra.mxu0 0.0
        %2878 = vmatprep.subr.mxu0 0.0
        %2879 = vmatpush2.msra.mxu0 0.0
        %2880 = vmatprep.subr.mxu0 0.0
        %2881 = vmatpush2.msra.mxu0 0.0
        %2882 = vmatprep.subr.mxu0 0.0
        %2883 = vmatpush2.msra.mxu0 0.0
        %2884 = vmatprep.subr.mxu0 0.0
        %2885 = vmatpush2.msra.mxu0 0.0
        %2886 = vmatprep.subr.mxu0 0.0
        %2887 = vmatpush2.msra.mxu0 0.0
        %2888 = vmatprep.subr.mxu0 0.0
        %2889 = vmatpush2.msra.mxu0 0.0
        %2890 = vmatprep.mubr.f32.mxu0 0.0
        %2891 = vmatmul.mubr.f32.gmra.mxu0 %v2815
        %v2892 = vpop.f32.mrf.mxu0
        %v2893 = vadd.f32 0.0, %v2892
        %v2894 = vpop.f32.mrf.mxu0
        %2895 = vmatprep.mubr.f32.mxu0 0.0
        %2896 = vmatmul.mubr.f32.gmra.mxu0 %v2818
        %v2897 = vpop.f32.mrf.mxu0
        %v2898 = vadd.f32 0.0, %v2897
        %v2899 = vpop.f32.mrf.mxu0
        %2900 = vmatprep.mubr.f32.mxu0 0.0
        %2901 = vmatmul.mubr.f32.gmra.mxu0 %v2821
        %v2902 = vpop.f32.mrf.mxu0
        %v2903 = vadd.f32 0.0, %v2902
        %v2904 = vpop.f32.mrf.mxu0
        %2905 = vmatprep.mubr.f32.mxu0 0.0
        %2906 = vmatmul.mubr.f32.gmra.mxu0 %v2824
        %v2907 = vpop.f32.mrf.mxu0
        %v2908 = vadd.f32 0.0, %v2907
        %v2909 = vpop.f32.mrf.mxu0
        %2910 = vdwg.mxu0
        %v2911 = vld [vmem:[#allocation11] sm:$0xff]
        %v2912 = vld [vmem:[#allocation11 + $0x8] sm:$0xff]
        %v2913 = vld [vmem:[#allocation11 + $0x10] sm:$0xff]
        %v2914 = vld [vmem:[#allocation11 + $0x18] sm:$0xff]
        %v2915 = vld [vmem:[#allocation11 + $0x20] sm:$0xff]
        %v2916 = vld [vmem:[#allocation11 + $0x28] sm:$0xff]
        %v2917 = vld [vmem:[#allocation11 + $0x30] sm:$0xff]
        %v2918 = vld [vmem:[#allocation11 + $0x38] sm:$0xff]
        %s2919 = scalar_lea.vmem [#allocation14], 64
        %v2920 = vld [vmem:[%s2919] sm:$0xff]
        %v2921 = vld [vmem:[%s2919 + $0x8] sm:$0xff]
        %v2922 = vld [vmem:[%s2919 + $0x10] sm:$0xff]
        %v2923 = vld [vmem:[%s2919 + $0x18] sm:$0xff]
        %v2924 = vld [vmem:[%s2919 + $0x20] sm:$0xff]
        %v2925 = vld [vmem:[%s2919 + $0x28] sm:$0xff]
        %v2926 = vld [vmem:[%s2919 + $0x30] sm:$0xff]
        %v2927 = vld [vmem:[%s2919 + $0x38] sm:$0xff]
        %2928 = vmatprep.subr.mxu0 0.0
        %2929 = vmatpush1.msra.mxu0 0.0
        %2930 = vmatprep.subr.mxu0 0.0
        %2931 = vmatpush1.msra.mxu0 0.0
        %2932 = vmatprep.subr.mxu0 0.0
        %2933 = vmatpush1.msra.mxu0 0.0
        %2934 = vmatprep.subr.mxu0 0.0
        %2935 = vmatpush1.msra.mxu0 0.0
        %2936 = vmatprep.subr.mxu0 0.0
        %2937 = vmatpush1.msra.mxu0 0.0
        %2938 = vmatprep.subr.mxu0 0.0
        %2939 = vmatpush1.msra.mxu0 0.0
        %2940 = vmatprep.subr.mxu0 0.0
        %2941 = vmatpush1.msra.mxu0 0.0
        %2942 = vmatprep.subr.mxu0 0.0
        %2943 = vmatpush1.msra.mxu0 0.0
        %2944 = vmatprep.subr.mxu0 0.0
        %2945 = vmatpush1.msra.mxu0 %v2927
        %2946 = vmatprep.subr.mxu0 0.0
        %2947 = vmatpush1.msra.mxu0 %v2926
        %2948 = vmatprep.subr.mxu0 0.0
        %2949 = vmatpush1.msra.mxu0 %v2925
        %2950 = vmatprep.subr.mxu0 0.0
        %2951 = vmatpush1.msra.mxu0 %v2924
        %2952 = vmatprep.subr.mxu0 0.0
        %2953 = vmatpush1.msra.mxu0 %v2923
        %2954 = vmatprep.subr.mxu0 0.0
        %2955 = vmatpush1.msra.mxu0 %v2922
        %2956 = vmatprep.subr.mxu0 0.0
        %2957 = vmatpush1.msra.mxu0 %v2921
        %2958 = vmatprep.subr.mxu0 0.0
        %2959 = vmatpush1.msra.mxu0 %v2920
        %2960 = vmatprep.subr.mxu0 0.0
        %2961 = vmatpush2.msra.mxu0 0.0
        %2962 = vmatprep.subr.mxu0 0.0
        %2963 = vmatpush2.msra.mxu0 0.0
        %2964 = vmatprep.subr.mxu0 0.0
        %2965 = vmatpush2.msra.mxu0 0.0
        %2966 = vmatprep.subr.mxu0 0.0
        %2967 = vmatpush2.msra.mxu0 0.0
        %2968 = vmatprep.subr.mxu0 0.0
        %2969 = vmatpush2.msra.mxu0 0.0
        %2970 = vmatprep.subr.mxu0 0.0
        %2971 = vmatpush2.msra.mxu0 0.0
        %2972 = vmatprep.subr.mxu0 0.0
        %2973 = vmatpush2.msra.mxu0 0.0
        %2974 = vmatprep.subr.mxu0 0.0
        %2975 = vmatpush2.msra.mxu0 0.0
        %2976 = vmatprep.subr.mxu0 0.0
        %2977 = vmatpush2.msra.mxu0 0.0
        %2978 = vmatprep.subr.mxu0 0.0
        %2979 = vmatpush2.msra.mxu0 0.0
        %2980 = vmatprep.subr.mxu0 0.0
        %2981 = vmatpush2.msra.mxu0 0.0
        %2982 = vmatprep.subr.mxu0 0.0
        %2983 = vmatpush2.msra.mxu0 0.0
        %2984 = vmatprep.subr.mxu0 0.0
        %2985 = vmatpush2.msra.mxu0 0.0
        %2986 = vmatprep.subr.mxu0 0.0
        %2987 = vmatpush2.msra.mxu0 0.0
        %2988 = vmatprep.subr.mxu0 0.0
        %2989 = vmatpush2.msra.mxu0 0.0
        %2990 = vmatprep.subr.mxu0 0.0
        %2991 = vmatpush2.msra.mxu0 0.0
        %2992 = vmatprep.mubr.f32.mxu0 0.0
        %2993 = vmatmul.mubr.f32.gmra.mxu0 %v2815
        %v2994 = vpop.f32.mrf.mxu0
        %v2995 = vadd.f32 0.0, %v2994
        %v2996 = vpop.f32.mrf.mxu0
        %2997 = vmatprep.mubr.f32.mxu0 0.0
        %2998 = vmatmul.mubr.f32.gmra.mxu0 %v2818
        %v2999 = vpop.f32.mrf.mxu0
        %v3000 = vadd.f32 0.0, %v2999
        %v3001 = vpop.f32.mrf.mxu0
        %3002 = vmatprep.mubr.f32.mxu0 0.0
        %3003 = vmatmul.mubr.f32.gmra.mxu0 %v2821
        %v3004 = vpop.f32.mrf.mxu0
        %v3005 = vadd.f32 0.0, %v3004
        %v3006 = vpop.f32.mrf.mxu0
        %3007 = vmatprep.mubr.f32.mxu0 0.0
        %3008 = vmatmul.mubr.f32.gmra.mxu0 %v2824
        %v3009 = vpop.f32.mrf.mxu0
        %v3010 = vadd.f32 0.0, %v3009
        %v3011 = vpop.f32.mrf.mxu0
        %3012 = vdwg.mxu0
        %s3013 = scalar_lea.vmem [#allocation11], 64
        %v3014 = vld [vmem:[%s3013] sm:$0xff]
        %v3015 = vld [vmem:[%s3013 + $0x8] sm:$0xff]
        %v3016 = vld [vmem:[%s3013 + $0x10] sm:$0xff]
        %v3017 = vld [vmem:[%s3013 + $0x18] sm:$0xff]
        %v3018 = vld [vmem:[%s3013 + $0x20] sm:$0xff]
        %v3019 = vld [vmem:[%s3013 + $0x28] sm:$0xff]
        %v3020 = vld [vmem:[%s3013 + $0x30] sm:$0xff]
        %v3021 = vld [vmem:[%s3013 + $0x38] sm:$0xff]
        %vm3022 = vcmask 261120
        %v3024 = vsel %vm3022, %v3014, 0
        %v3027 = vsel %vm3022, %v3015, 0
        %v3030 = vsel %vm3022, %v3016, 0
        %v3033 = vsel %vm3022, %v3017, 0
        %v3036 = vsel %vm3022, %v3018, 0
        %v3039 = vsel %vm3022, %v3019, 0
        %v3042 = vsel %vm3022, %v3020, 0
        %v3045 = vsel %vm3022, %v3021, 0
        %3047 = vmatprep.subr.mxu0 0.0
        %3048 = vmatpush1.msra.mxu0 0.0
        %3049 = vmatprep.subr.mxu0 0.0
        %3050 = vmatpush1.msra.mxu0 0.0
        %3051 = vmatprep.subr.mxu0 0.0
        %3052 = vmatpush1.msra.mxu0 0.0
        %3053 = vmatprep.subr.mxu0 0.0
        %3054 = vmatpush1.msra.mxu0 0.0
        %3055 = vmatprep.subr.mxu0 0.0
        %3056 = vmatpush1.msra.mxu0 0.0
        %3057 = vmatprep.subr.mxu0 0.0
        %3058 = vmatpush1.msra.mxu0 0.0
        %3059 = vmatprep.subr.mxu0 0.0
        %3060 = vmatpush1.msra.mxu0 0.0
        %3061 = vmatprep.subr.mxu0 0.0
        %3062 = vmatpush1.msra.mxu0 0.0
        %3063 = vmatprep.subr.mxu0 0.0
        %3064 = vmatpush1.msra.mxu0 0.0
        %3065 = vmatprep.subr.mxu0 0.0
        %3066 = vmatpush1.msra.mxu0 0.0
        %3067 = vmatprep.subr.mxu0 0.0
        %3068 = vmatpush1.msra.mxu0 0.0
        %3069 = vmatprep.subr.mxu0 0.0
        %3070 = vmatpush1.msra.mxu0 0.0
        %3071 = vmatprep.subr.mxu0 0.0
        %3072 = vmatpush1.msra.mxu0 %v3010
        %3073 = vmatprep.subr.mxu0 0.0
        %3074 = vmatpush1.msra.mxu0 %v3005
        %3075 = vmatprep.subr.mxu0 0.0
        %3076 = vmatpush1.msra.mxu0 %v3000
        %3077 = vmatprep.subr.mxu0 0.0
        %3078 = vmatpush1.msra.mxu0 %v2995
        %3079 = vmatprep.subr.mxu0 0.0
        %3080 = vmatpush2.msra.mxu0 0.0
        %3081 = vmatprep.subr.mxu0 0.0
        %3082 = vmatpush2.msra.mxu0 0.0
        %3083 = vmatprep.subr.mxu0 0.0
        %3084 = vmatpush2.msra.mxu0 0.0
        %3085 = vmatprep.subr.mxu0 0.0
        %3086 = vmatpush2.msra.mxu0 0.0
        %3087 = vmatprep.subr.mxu0 0.0
        %3088 = vmatpush2.msra.mxu0 0.0
        %3089 = vmatprep.subr.mxu0 0.0
        %3090 = vmatpush2.msra.mxu0 0.0
        %3091 = vmatprep.subr.mxu0 0.0
        %3092 = vmatpush2.msra.mxu0 0.0
        %3093 = vmatprep.subr.mxu0 0.0
        %3094 = vmatpush2.msra.mxu0 0.0
        %3095 = vmatprep.subr.mxu0 0.0
        %3096 = vmatpush2.msra.mxu0 0.0
        %3097 = vmatprep.subr.mxu0 0.0
        %3098 = vmatpush2.msra.mxu0 0.0
        %3099 = vmatprep.subr.mxu0 0.0
        %3100 = vmatpush2.msra.mxu0 0.0
        %3101 = vmatprep.subr.mxu0 0.0
        %3102 = vmatpush2.msra.mxu0 0.0
        %3103 = vmatprep.subr.mxu0 0.0
        %3104 = vmatpush2.msra.mxu0 0.0
        %3105 = vmatprep.subr.mxu0 0.0
        %3106 = vmatpush2.msra.mxu0 0.0
        %3107 = vmatprep.subr.mxu0 0.0
        %3108 = vmatpush2.msra.mxu0 0.0
        %3109 = vmatprep.subr.mxu0 0.0
        %3110 = vmatpush2.msra.mxu0 0.0
        %3111 = vmatprep.mubr.f32.mxu0 0.0
        %3112 = vmatmul.mubr.f32.gmra.mxu0 %v3024
        %v3113 = vpop.f32.mrf.mxu0
        %v3114 = vadd.f32 0.0, %v3113
        %v3115 = vpop.f32.mrf.mxu0
        %3116 = vmatprep.mubr.f32.mxu0 0.0
        %3117 = vmatmul.mubr.f32.gmra.mxu0 %v3027
        %v3118 = vpop.f32.mrf.mxu0
        %v3119 = vadd.f32 0.0, %v3118
        %v3120 = vpop.f32.mrf.mxu0
        %3121 = vmatprep.mubr.f32.mxu0 0.0
        %3122 = vmatmul.mubr.f32.gmra.mxu0 %v3030
        %v3123 = vpop.f32.mrf.mxu0
        %v3124 = vadd.f32 0.0, %v3123
        %v3125 = vpop.f32.mrf.mxu0
        %3126 = vmatprep.mubr.f32.mxu0 0.0
        %3127 = vmatmul.mubr.f32.gmra.mxu0 %v3033
        %v3128 = vpop.f32.mrf.mxu0
        %v3129 = vadd.f32 0.0, %v3128
        %v3130 = vpop.f32.mrf.mxu0
        %3131 = vmatprep.mubr.f32.mxu0 0.0
        %3132 = vmatmul.mubr.f32.gmra.mxu0 %v3036
        %v3133 = vpop.f32.mrf.mxu0
        %v3134 = vadd.f32 0.0, %v3133
        %v3135 = vpop.f32.mrf.mxu0
        %3136 = vmatprep.mubr.f32.mxu0 0.0
        %3137 = vmatmul.mubr.f32.gmra.mxu0 %v3039
        %v3138 = vpop.f32.mrf.mxu0
        %v3139 = vadd.f32 0.0, %v3138
        %v3140 = vpop.f32.mrf.mxu0
        %3141 = vmatprep.mubr.f32.mxu0 0.0
        %3142 = vmatmul.mubr.f32.gmra.mxu0 %v3042
        %v3143 = vpop.f32.mrf.mxu0
        %v3144 = vadd.f32 0.0, %v3143
        %v3145 = vpop.f32.mrf.mxu0
        %3146 = vmatprep.mubr.f32.mxu0 0.0
        %3147 = vmatmul.mubr.f32.gmra.mxu0 %v3045
        %v3148 = vpop.f32.mrf.mxu0
        %v3149 = vadd.f32 0.0, %v3148
        %v3150 = vpop.f32.mrf.mxu0
        %3151 = vdwg.mxu0
        %v3153 = vsel %vm3022, %v2911, 0
        %v3156 = vsel %vm3022, %v2912, 0
        %v3159 = vsel %vm3022, %v2913, 0
        %v3162 = vsel %vm3022, %v2914, 0
        %v3165 = vsel %vm3022, %v2915, 0
        %v3168 = vsel %vm3022, %v2916, 0
        %v3171 = vsel %vm3022, %v2917, 0
        %v3174 = vsel %vm3022, %v2918, 0
        %3176 = vmatprep.subr.mxu0 0.0
        %3177 = vmatpush1.msra.mxu0 0.0
        %3178 = vmatprep.subr.mxu0 0.0
        %3179 = vmatpush1.msra.mxu0 0.0
        %3180 = vmatprep.subr.mxu0 0.0
        %3181 = vmatpush1.msra.mxu0 0.0
        %3182 = vmatprep.subr.mxu0 0.0
        %3183 = vmatpush1.msra.mxu0 0.0
        %3184 = vmatprep.subr.mxu0 0.0
        %3185 = vmatpush1.msra.mxu0 0.0
        %3186 = vmatprep.subr.mxu0 0.0
        %3187 = vmatpush1.msra.mxu0 0.0
        %3188 = vmatprep.subr.mxu0 0.0
        %3189 = vmatpush1.msra.mxu0 0.0
        %3190 = vmatprep.subr.mxu0 0.0
        %3191 = vmatpush1.msra.mxu0 0.0
        %3192 = vmatprep.subr.mxu0 0.0
        %3193 = vmatpush1.msra.mxu0 0.0
        %3194 = vmatprep.subr.mxu0 0.0
        %3195 = vmatpush1.msra.mxu0 0.0
        %3196 = vmatprep.subr.mxu0 0.0
        %3197 = vmatpush1.msra.mxu0 0.0
        %3198 = vmatprep.subr.mxu0 0.0
        %3199 = vmatpush1.msra.mxu0 0.0
        %3200 = vmatprep.subr.mxu0 0.0
        %3201 = vmatpush1.msra.mxu0 %v2908
        %3202 = vmatprep.subr.mxu0 0.0
        %3203 = vmatpush1.msra.mxu0 %v2903
        %3204 = vmatprep.subr.mxu0 0.0
        %3205 = vmatpush1.msra.mxu0 %v2898
        %3206 = vmatprep.subr.mxu0 0.0
        %3207 = vmatpush1.msra.mxu0 %v2893
        %3208 = vmatprep.subr.mxu0 0.0
        %3209 = vmatpush2.msra.mxu0 0.0
        %3210 = vmatprep.subr.mxu0 0.0
        %3211 = vmatpush2.msra.mxu0 0.0
        %3212 = vmatprep.subr.mxu0 0.0
        %3213 = vmatpush2.msra.mxu0 0.0
        %3214 = vmatprep.subr.mxu0 0.0
        %3215 = vmatpush2.msra.mxu0 0.0
        %3216 = vmatprep.subr.mxu0 0.0
        %3217 = vmatpush2.msra.mxu0 0.0
        %3218 = vmatprep.subr.mxu0 0.0
        %3219 = vmatpush2.msra.mxu0 0.0
        %3220 = vmatprep.subr.mxu0 0.0
        %3221 = vmatpush2.msra.mxu0 0.0
        %3222 = vmatprep.subr.mxu0 0.0
        %3223 = vmatpush2.msra.mxu0 0.0
        %3224 = vmatprep.subr.mxu0 0.0
        %3225 = vmatpush2.msra.mxu0 0.0
        %3226 = vmatprep.subr.mxu0 0.0
        %3227 = vmatpush2.msra.mxu0 0.0
        %3228 = vmatprep.subr.mxu0 0.0
        %3229 = vmatpush2.msra.mxu0 0.0
        %3230 = vmatprep.subr.mxu0 0.0
        %3231 = vmatpush2.msra.mxu0 0.0
        %3232 = vmatprep.subr.mxu0 0.0
        %3233 = vmatpush2.msra.mxu0 0.0
        %3234 = vmatprep.subr.mxu0 0.0
        %3235 = vmatpush2.msra.mxu0 0.0
        %3236 = vmatprep.subr.mxu0 0.0
        %3237 = vmatpush2.msra.mxu0 0.0
        %3238 = vmatprep.subr.mxu0 0.0
        %3239 = vmatpush2.msra.mxu0 0.0
        %3240 = vmatprep.mubr.f32.mxu0 0.0
        %3241 = vmatmul.mubr.f32.gmra.mxu0 %v3153
        %v3242 = vpop.f32.mrf.mxu0
        %v3243 = vadd.f32 %v3114, %v3242
        %v3244 = vpop.f32.mrf.mxu0
        %3245 = vmatprep.mubr.f32.mxu0 0.0
        %3246 = vmatmul.mubr.f32.gmra.mxu0 %v3156
        %v3247 = vpop.f32.mrf.mxu0
        %v3248 = vadd.f32 %v3119, %v3247
        %v3249 = vpop.f32.mrf.mxu0
        %3250 = vmatprep.mubr.f32.mxu0 0.0
        %3251 = vmatmul.mubr.f32.gmra.mxu0 %v3159
        %v3252 = vpop.f32.mrf.mxu0
        %v3253 = vadd.f32 %v3124, %v3252
        %v3254 = vpop.f32.mrf.mxu0
        %3255 = vmatprep.mubr.f32.mxu0 0.0
        %3256 = vmatmul.mubr.f32.gmra.mxu0 %v3162
        %v3257 = vpop.f32.mrf.mxu0
        %v3258 = vadd.f32 %v3129, %v3257
        %v3259 = vpop.f32.mrf.mxu0
        %3260 = vmatprep.mubr.f32.mxu0 0.0
        %3261 = vmatmul.mubr.f32.gmra.mxu0 %v3165
        %v3262 = vpop.f32.mrf.mxu0
        %v3263 = vadd.f32 %v3134, %v3262
        %v3264 = vpop.f32.mrf.mxu0
        %3265 = vmatprep.mubr.f32.mxu0 0.0
        %3266 = vmatmul.mubr.f32.gmra.mxu0 %v3168
        %v3267 = vpop.f32.mrf.mxu0
        %v3268 = vadd.f32 %v3139, %v3267
        %v3269 = vpop.f32.mrf.mxu0
        %3270 = vmatprep.mubr.f32.mxu0 0.0
        %3271 = vmatmul.mubr.f32.gmra.mxu0 %v3171
        %v3272 = vpop.f32.mrf.mxu0
        %v3273 = vadd.f32 %v3144, %v3272
        %v3274 = vpop.f32.mrf.mxu0
        %3275 = vmatprep.mubr.f32.mxu0 0.0
        %3276 = vmatmul.mubr.f32.gmra.mxu0 %v3174
        %v3277 = vpop.f32.mrf.mxu0
        %v3278 = vadd.f32 %v3149, %v3277
        %v3279 = vpop.f32.mrf.mxu0
        %3280 = vdwg.mxu0
        %s3281 = scalar_lea.vmem [#allocation14], 128
        %v3282 = vld [vmem:[%s3281] sm:$0xff]
        %v3283 = vld [vmem:[%s3281 + $0x8] sm:$0xff]
        %v3284 = vld [vmem:[%s3281 + $0x10] sm:$0xff]
        %v3285 = vld [vmem:[%s3281 + $0x18] sm:$0xff]
        %v3286 = vld [vmem:[%s3281 + $0x20] sm:$0xff]
        %v3287 = vld [vmem:[%s3281 + $0x28] sm:$0xff]
        %v3288 = vld [vmem:[%s3281 + $0x30] sm:$0xff]
        %v3289 = vld [vmem:[%s3281 + $0x38] sm:$0xff]
        %3290 = vmatprep.subr.mxu0 0.0
        %3291 = vmatpush1.msra.mxu0 0.0
        %3292 = vmatprep.subr.mxu0 0.0
        %3293 = vmatpush1.msra.mxu0 0.0
        %3294 = vmatprep.subr.mxu0 0.0
        %3295 = vmatpush1.msra.mxu0 0.0
        %3296 = vmatprep.subr.mxu0 0.0
        %3297 = vmatpush1.msra.mxu0 0.0
        %3298 = vmatprep.subr.mxu0 0.0
        %3299 = vmatpush1.msra.mxu0 0.0
        %3300 = vmatprep.subr.mxu0 0.0
        %3301 = vmatpush1.msra.mxu0 0.0
        %3302 = vmatprep.subr.mxu0 0.0
        %3303 = vmatpush1.msra.mxu0 0.0
        %3304 = vmatprep.subr.mxu0 0.0
        %3305 = vmatpush1.msra.mxu0 0.0
        %3306 = vmatprep.subr.mxu0 0.0
        %3307 = vmatpush1.msra.mxu0 %v3289
        %3308 = vmatprep.subr.mxu0 0.0
        %3309 = vmatpush1.msra.mxu0 %v3288
        %3310 = vmatprep.subr.mxu0 0.0
        %3311 = vmatpush1.msra.mxu0 %v3287
        %3312 = vmatprep.subr.mxu0 0.0
        %3313 = vmatpush1.msra.mxu0 %v3286
        %3314 = vmatprep.subr.mxu0 0.0
        %3315 = vmatpush1.msra.mxu0 %v3285
        %3316 = vmatprep.subr.mxu0 0.0
        %3317 = vmatpush1.msra.mxu0 %v3284
        %3318 = vmatprep.subr.mxu0 0.0
        %3319 = vmatpush1.msra.mxu0 %v3283
        %3320 = vmatprep.subr.mxu0 0.0
        %3321 = vmatpush1.msra.mxu0 %v3282
        %3322 = vmatprep.subr.mxu0 0.0
        %3323 = vmatpush2.msra.mxu0 0.0
        %3324 = vmatprep.subr.mxu0 0.0
        %3325 = vmatpush2.msra.mxu0 0.0
        %3326 = vmatprep.subr.mxu0 0.0
        %3327 = vmatpush2.msra.mxu0 0.0
        %3328 = vmatprep.subr.mxu0 0.0
        %3329 = vmatpush2.msra.mxu0 0.0
        %3330 = vmatprep.subr.mxu0 0.0
        %3331 = vmatpush2.msra.mxu0 0.0
        %3332 = vmatprep.subr.mxu0 0.0
        %3333 = vmatpush2.msra.mxu0 0.0
        %3334 = vmatprep.subr.mxu0 0.0
        %3335 = vmatpush2.msra.mxu0 0.0
        %3336 = vmatprep.subr.mxu0 0.0
        %3337 = vmatpush2.msra.mxu0 0.0
        %3338 = vmatprep.subr.mxu0 0.0
        %3339 = vmatpush2.msra.mxu0 0.0
        %3340 = vmatprep.subr.mxu0 0.0
        %3341 = vmatpush2.msra.mxu0 0.0
        %3342 = vmatprep.subr.mxu0 0.0
        %3343 = vmatpush2.msra.mxu0 0.0
        %3344 = vmatprep.subr.mxu0 0.0
        %3345 = vmatpush2.msra.mxu0 0.0
        %3346 = vmatprep.subr.mxu0 0.0
        %3347 = vmatpush2.msra.mxu0 0.0
        %3348 = vmatprep.subr.mxu0 0.0
        %3349 = vmatpush2.msra.mxu0 0.0
        %3350 = vmatprep.subr.mxu0 0.0
        %3351 = vmatpush2.msra.mxu0 0.0
        %3352 = vmatprep.subr.mxu0 0.0
        %3353 = vmatpush2.msra.mxu0 0.0
        %3354 = vmatprep.mubr.f32.mxu0 0.0
        %3355 = vmatmul.mubr.f32.gmra.mxu0 %v2815
        %v3356 = vpop.f32.mrf.mxu0
        %v3357 = vadd.f32 0.0, %v3356
        %v3358 = vpop.f32.mrf.mxu0
        %3359 = vmatprep.mubr.f32.mxu0 0.0
        %3360 = vmatmul.mubr.f32.gmra.mxu0 %v2818
        %v3361 = vpop.f32.mrf.mxu0
        %v3362 = vadd.f32 0.0, %v3361
        %v3363 = vpop.f32.mrf.mxu0
        %3364 = vmatprep.mubr.f32.mxu0 0.0
        %3365 = vmatmul.mubr.f32.gmra.mxu0 %v2821
        %v3366 = vpop.f32.mrf.mxu0
        %v3367 = vadd.f32 0.0, %v3366
        %v3368 = vpop.f32.mrf.mxu0
        %3369 = vmatprep.mubr.f32.mxu0 0.0
        %3370 = vmatmul.mubr.f32.gmra.mxu0 %v2824
        %v3371 = vpop.f32.mrf.mxu0
        %v3372 = vadd.f32 0.0, %v3371
        %v3373 = vpop.f32.mrf.mxu0
        %3374 = vdwg.mxu0
        %s3375 = scalar_lea.vmem [#allocation11], 128
        %v3376 = vld [vmem:[%s3375] sm:$0xff]
        %v3377 = vld [vmem:[%s3375 + $0x8] sm:$0xff]
        %v3378 = vld [vmem:[%s3375 + $0x10] sm:$0xff]
        %v3379 = vld [vmem:[%s3375 + $0x18] sm:$0xff]
        %v3380 = vld [vmem:[%s3375 + $0x20] sm:$0xff]
        %v3381 = vld [vmem:[%s3375 + $0x28] sm:$0xff]
        %v3382 = vld [vmem:[%s3375 + $0x30] sm:$0xff]
        %v3383 = vld [vmem:[%s3375 + $0x38] sm:$0xff]
        %v3385 = vsel %vm3022, %v3376, 0
        %v3388 = vsel %vm3022, %v3377, 0
        %v3391 = vsel %vm3022, %v3378, 0
        %v3394 = vsel %vm3022, %v3379, 0
        %v3397 = vsel %vm3022, %v3380, 0
        %v3400 = vsel %vm3022, %v3381, 0
        %v3403 = vsel %vm3022, %v3382, 0
        %v3406 = vsel %vm3022, %v3383, 0
        %3408 = vmatprep.subr.mxu0 0.0
        %3409 = vmatpush1.msra.mxu0 0.0
        %3410 = vmatprep.subr.mxu0 0.0
        %3411 = vmatpush1.msra.mxu0 0.0
        %3412 = vmatprep.subr.mxu0 0.0
        %3413 = vmatpush1.msra.mxu0 0.0
        %3414 = vmatprep.subr.mxu0 0.0
        %3415 = vmatpush1.msra.mxu0 0.0
        %3416 = vmatprep.subr.mxu0 0.0
        %3417 = vmatpush1.msra.mxu0 0.0
        %3418 = vmatprep.subr.mxu0 0.0
        %3419 = vmatpush1.msra.mxu0 0.0
        %3420 = vmatprep.subr.mxu0 0.0
        %3421 = vmatpush1.msra.mxu0 0.0
        %3422 = vmatprep.subr.mxu0 0.0
        %3423 = vmatpush1.msra.mxu0 0.0
        %3424 = vmatprep.subr.mxu0 0.0
        %3425 = vmatpush1.msra.mxu0 0.0
        %3426 = vmatprep.subr.mxu0 0.0
        %3427 = vmatpush1.msra.mxu0 0.0
        %3428 = vmatprep.subr.mxu0 0.0
        %3429 = vmatpush1.msra.mxu0 0.0
        %3430 = vmatprep.subr.mxu0 0.0
        %3431 = vmatpush1.msra.mxu0 0.0
        %3432 = vmatprep.subr.mxu0 0.0
        %3433 = vmatpush1.msra.mxu0 %v3372
        %3434 = vmatprep.subr.mxu0 0.0
        %3435 = vmatpush1.msra.mxu0 %v3367
        %3436 = vmatprep.subr.mxu0 0.0
        %3437 = vmatpush1.msra.mxu0 %v3362
        %3438 = vmatprep.subr.mxu0 0.0
        %3439 = vmatpush1.msra.mxu0 %v3357
        %3440 = vmatprep.subr.mxu0 0.0
        %3441 = vmatpush2.msra.mxu0 0.0
        %3442 = vmatprep.subr.mxu0 0.0
        %3443 = vmatpush2.msra.mxu0 0.0
        %3444 = vmatprep.subr.mxu0 0.0
        %3445 = vmatpush2.msra.mxu0 0.0
        %3446 = vmatprep.subr.mxu0 0.0
        %3447 = vmatpush2.msra.mxu0 0.0
        %3448 = vmatprep.subr.mxu0 0.0
        %3449 = vmatpush2.msra.mxu0 0.0
        %3450 = vmatprep.subr.mxu0 0.0
        %3451 = vmatpush2.msra.mxu0 0.0
        %3452 = vmatprep.subr.mxu0 0.0
        %3453 = vmatpush2.msra.mxu0 0.0
        %3454 = vmatprep.subr.mxu0 0.0
        %3455 = vmatpush2.msra.mxu0 0.0
        %3456 = vmatprep.subr.mxu0 0.0
        %3457 = vmatpush2.msra.mxu0 0.0
        %3458 = vmatprep.subr.mxu0 0.0
        %3459 = vmatpush2.msra.mxu0 0.0
        %3460 = vmatprep.subr.mxu0 0.0
        %3461 = vmatpush2.msra.mxu0 0.0
        %3462 = vmatprep.subr.mxu0 0.0
        %3463 = vmatpush2.msra.mxu0 0.0
        %3464 = vmatprep.subr.mxu0 0.0
        %3465 = vmatpush2.msra.mxu0 0.0
        %3466 = vmatprep.subr.mxu0 0.0
        %3467 = vmatpush2.msra.mxu0 0.0
        %3468 = vmatprep.subr.mxu0 0.0
        %3469 = vmatpush2.msra.mxu0 0.0
        %3470 = vmatprep.subr.mxu0 0.0
        %3471 = vmatpush2.msra.mxu0 0.0
        %3472 = vmatprep.mubr.f32.mxu0 0.0
        %3473 = vmatmul.mubr.f32.gmra.mxu0 %v3385
        %v3474 = vpop.f32.mrf.mxu0
        %v3475 = vadd.f32 0.0, %v3474
        %v3476 = vpop.f32.mrf.mxu0
        %3477 = vmatprep.mubr.f32.mxu0 0.0
        %3478 = vmatmul.mubr.f32.gmra.mxu0 %v3388
        %v3479 = vpop.f32.mrf.mxu0
        %v3480 = vadd.f32 0.0, %v3479
        %v3481 = vpop.f32.mrf.mxu0
        %3482 = vmatprep.mubr.f32.mxu0 0.0
        %3483 = vmatmul.mubr.f32.gmra.mxu0 %v3391
        %v3484 = vpop.f32.mrf.mxu0
        %v3485 = vadd.f32 0.0, %v3484
        %v3486 = vpop.f32.mrf.mxu0
        %3487 = vmatprep.mubr.f32.mxu0 0.0
        %3488 = vmatmul.mubr.f32.gmra.mxu0 %v3394
        %v3489 = vpop.f32.mrf.mxu0
        %v3490 = vadd.f32 0.0, %v3489
        %v3491 = vpop.f32.mrf.mxu0
        %3492 = vmatprep.mubr.f32.mxu0 0.0
        %3493 = vmatmul.mubr.f32.gmra.mxu0 %v3397
        %v3494 = vpop.f32.mrf.mxu0
        %v3495 = vadd.f32 0.0, %v3494
        %v3496 = vpop.f32.mrf.mxu0
        %3497 = vmatprep.mubr.f32.mxu0 0.0
        %3498 = vmatmul.mubr.f32.gmra.mxu0 %v3400
        %v3499 = vpop.f32.mrf.mxu0
        %v3500 = vadd.f32 0.0, %v3499
        %v3501 = vpop.f32.mrf.mxu0
        %3502 = vmatprep.mubr.f32.mxu0 0.0
        %3503 = vmatmul.mubr.f32.gmra.mxu0 %v3403
        %v3504 = vpop.f32.mrf.mxu0
        %v3505 = vadd.f32 0.0, %v3504
        %v3506 = vpop.f32.mrf.mxu0
        %3507 = vmatprep.mubr.f32.mxu0 0.0
        %3508 = vmatmul.mubr.f32.gmra.mxu0 %v3406
        %v3509 = vpop.f32.mrf.mxu0
        %v3510 = vadd.f32 0.0, %v3509
        %v3511 = vpop.f32.mrf.mxu0
        %3512 = vdwg.mxu0
        %v3513 = vadd.f32 %v3243, %v3475
        %v3514 = vadd.f32 %v3248, %v3480
        %v3515 = vadd.f32 %v3253, %v3485
        %v3516 = vadd.f32 %v3258, %v3490
        %v3517 = vadd.f32 %v3263, %v3495
        %v3518 = vadd.f32 %v3268, %v3500
        %v3519 = vadd.f32 %v3273, %v3505
        %v3520 = vadd.f32 %v3278, %v3510
        %s3521 = scalar_lea.vmem [#allocation14], 192
        %v3522 = vld [vmem:[%s3521] sm:$0xff]
        %v3523 = vld [vmem:[%s3521 + $0x8] sm:$0xff]
        %v3524 = vld [vmem:[%s3521 + $0x10] sm:$0xff]
        %v3525 = vld [vmem:[%s3521 + $0x18] sm:$0xff]
        %v3526 = vld [vmem:[%s3521 + $0x20] sm:$0xff]
        %v3527 = vld [vmem:[%s3521 + $0x28] sm:$0xff]
        %v3528 = vld [vmem:[%s3521 + $0x30] sm:$0xff]
        %v3529 = vld [vmem:[%s3521 + $0x38] sm:$0xff]
        %3530 = vmatprep.subr.mxu0 0.0
        %3531 = vmatpush1.msra.mxu0 0.0
        %3532 = vmatprep.subr.mxu0 0.0
        %3533 = vmatpush1.msra.mxu0 0.0
        %3534 = vmatprep.subr.mxu0 0.0
        %3535 = vmatpush1.msra.mxu0 0.0
        %3536 = vmatprep.subr.mxu0 0.0
        %3537 = vmatpush1.msra.mxu0 0.0
        %3538 = vmatprep.subr.mxu0 0.0
        %3539 = vmatpush1.msra.mxu0 0.0
        %3540 = vmatprep.subr.mxu0 0.0
        %3541 = vmatpush1.msra.mxu0 0.0
        %3542 = vmatprep.subr.mxu0 0.0
        %3543 = vmatpush1.msra.mxu0 0.0
        %3544 = vmatprep.subr.mxu0 0.0
        %3545 = vmatpush1.msra.mxu0 0.0
        %3546 = vmatprep.subr.mxu0 0.0
        %3547 = vmatpush1.msra.mxu0 %v3529
        %3548 = vmatprep.subr.mxu0 0.0
        %3549 = vmatpush1.msra.mxu0 %v3528
        %3550 = vmatprep.subr.mxu0 0.0
        %3551 = vmatpush1.msra.mxu0 %v3527
        %3552 = vmatprep.subr.mxu0 0.0
        %3553 = vmatpush1.msra.mxu0 %v3526
        %3554 = vmatprep.subr.mxu0 0.0
        %3555 = vmatpush1.msra.mxu0 %v3525
        %3556 = vmatprep.subr.mxu0 0.0
        %3557 = vmatpush1.msra.mxu0 %v3524
        %3558 = vmatprep.subr.mxu0 0.0
        %3559 = vmatpush1.msra.mxu0 %v3523
        %3560 = vmatprep.subr.mxu0 0.0
        %3561 = vmatpush1.msra.mxu0 %v3522
        %3562 = vmatprep.subr.mxu0 0.0
        %3563 = vmatpush2.msra.mxu0 0.0
        %3564 = vmatprep.subr.mxu0 0.0
        %3565 = vmatpush2.msra.mxu0 0.0
        %3566 = vmatprep.subr.mxu0 0.0
        %3567 = vmatpush2.msra.mxu0 0.0
        %3568 = vmatprep.subr.mxu0 0.0
        %3569 = vmatpush2.msra.mxu0 0.0
        %3570 = vmatprep.subr.mxu0 0.0
        %3571 = vmatpush2.msra.mxu0 0.0
        %3572 = vmatprep.subr.mxu0 0.0
        %3573 = vmatpush2.msra.mxu0 0.0
        %3574 = vmatprep.subr.mxu0 0.0
        %3575 = vmatpush2.msra.mxu0 0.0
        %3576 = vmatprep.subr.mxu0 0.0
        %3577 = vmatpush2.msra.mxu0 0.0
        %3578 = vmatprep.subr.mxu0 0.0
        %3579 = vmatpush2.msra.mxu0 0.0
        %3580 = vmatprep.subr.mxu0 0.0
        %3581 = vmatpush2.msra.mxu0 0.0
        %3582 = vmatprep.subr.mxu0 0.0
        %3583 = vmatpush2.msra.mxu0 0.0
        %3584 = vmatprep.subr.mxu0 0.0
        %3585 = vmatpush2.msra.mxu0 0.0
        %3586 = vmatprep.subr.mxu0 0.0
        %3587 = vmatpush2.msra.mxu0 0.0
        %3588 = vmatprep.subr.mxu0 0.0
        %3589 = vmatpush2.msra.mxu0 0.0
        %3590 = vmatprep.subr.mxu0 0.0
        %3591 = vmatpush2.msra.mxu0 0.0
        %3592 = vmatprep.subr.mxu0 0.0
        %3593 = vmatpush2.msra.mxu0 0.0
        %3594 = vmatprep.mubr.f32.mxu0 0.0
        %3595 = vmatmul.mubr.f32.gmra.mxu0 %v2815
        %v3596 = vpop.f32.mrf.mxu0
        %v3597 = vadd.f32 0.0, %v3596
        %v3598 = vpop.f32.mrf.mxu0
        %3599 = vmatprep.mubr.f32.mxu0 0.0
        %3600 = vmatmul.mubr.f32.gmra.mxu0 %v2818
        %v3601 = vpop.f32.mrf.mxu0
        %v3602 = vadd.f32 0.0, %v3601
        %v3603 = vpop.f32.mrf.mxu0
        %3604 = vmatprep.mubr.f32.mxu0 0.0
        %3605 = vmatmul.mubr.f32.gmra.mxu0 %v2821
        %v3606 = vpop.f32.mrf.mxu0
        %v3607 = vadd.f32 0.0, %v3606
        %v3608 = vpop.f32.mrf.mxu0
        %3609 = vmatprep.mubr.f32.mxu0 0.0
        %3610 = vmatmul.mubr.f32.gmra.mxu0 %v2824
        %v3611 = vpop.f32.mrf.mxu0
        %v3612 = vadd.f32 0.0, %v3611
        %v3613 = vpop.f32.mrf.mxu0
        %3614 = vdwg.mxu0
        %s3615 = scalar_lea.vmem [#allocation11], 192
        %v3616 = vld [vmem:[%s3615] sm:$0xff]
        %v3617 = vld [vmem:[%s3615 + $0x8] sm:$0xff]
        %v3618 = vld [vmem:[%s3615 + $0x10] sm:$0xff]
        %v3619 = vld [vmem:[%s3615 + $0x18] sm:$0xff]
        %v3620 = vld [vmem:[%s3615 + $0x20] sm:$0xff]
        %v3621 = vld [vmem:[%s3615 + $0x28] sm:$0xff]
        %v3622 = vld [vmem:[%s3615 + $0x30] sm:$0xff]
        %v3623 = vld [vmem:[%s3615 + $0x38] sm:$0xff]
        %v3625 = vsel %vm3022, %v3616, 0
        %v3628 = vsel %vm3022, %v3617, 0
        %v3631 = vsel %vm3022, %v3618, 0
        %v3634 = vsel %vm3022, %v3619, 0
        %v3637 = vsel %vm3022, %v3620, 0
        %v3640 = vsel %vm3022, %v3621, 0
        %v3643 = vsel %vm3022, %v3622, 0
        %v3646 = vsel %vm3022, %v3623, 0
        %3648 = vmatprep.subr.mxu0 0.0
        %3649 = vmatpush1.msra.mxu0 0.0
        %3650 = vmatprep.subr.mxu0 0.0
        %3651 = vmatpush1.msra.mxu0 0.0
        %3652 = vmatprep.subr.mxu0 0.0
        %3653 = vmatpush1.msra.mxu0 0.0
        %3654 = vmatprep.subr.mxu0 0.0
        %3655 = vmatpush1.msra.mxu0 0.0
        %3656 = vmatprep.subr.mxu0 0.0
        %3657 = vmatpush1.msra.mxu0 0.0
        %3658 = vmatprep.subr.mxu0 0.0
        %3659 = vmatpush1.msra.mxu0 0.0
        %3660 = vmatprep.subr.mxu0 0.0
        %3661 = vmatpush1.msra.mxu0 0.0
        %3662 = vmatprep.subr.mxu0 0.0
        %3663 = vmatpush1.msra.mxu0 0.0
        %3664 = vmatprep.subr.mxu0 0.0
        %3665 = vmatpush1.msra.mxu0 0.0
        %3666 = vmatprep.subr.mxu0 0.0
        %3667 = vmatpush1.msra.mxu0 0.0
        %3668 = vmatprep.subr.mxu0 0.0
        %3669 = vmatpush1.msra.mxu0 0.0
        %3670 = vmatprep.subr.mxu0 0.0
        %3671 = vmatpush1.msra.mxu0 0.0
        %3672 = vmatprep.subr.mxu0 0.0
        %3673 = vmatpush1.msra.mxu0 %v3612
        %3674 = vmatprep.subr.mxu0 0.0
        %3675 = vmatpush1.msra.mxu0 %v3607
        %3676 = vmatprep.subr.mxu0 0.0
        %3677 = vmatpush1.msra.mxu0 %v3602
        %3678 = vmatprep.subr.mxu0 0.0
        %3679 = vmatpush1.msra.mxu0 %v3597
        %3680 = vmatprep.subr.mxu0 0.0
        %3681 = vmatpush2.msra.mxu0 0.0
        %3682 = vmatprep.subr.mxu0 0.0
        %3683 = vmatpush2.msra.mxu0 0.0
        %3684 = vmatprep.subr.mxu0 0.0
        %3685 = vmatpush2.msra.mxu0 0.0
        %3686 = vmatprep.subr.mxu0 0.0
        %3687 = vmatpush2.msra.mxu0 0.0
        %3688 = vmatprep.subr.mxu0 0.0
        %3689 = vmatpush2.msra.mxu0 0.0
        %3690 = vmatprep.subr.mxu0 0.0
        %3691 = vmatpush2.msra.mxu0 0.0
        %3692 = vmatprep.subr.mxu0 0.0
        %3693 = vmatpush2.msra.mxu0 0.0
        %3694 = vmatprep.subr.mxu0 0.0
        %3695 = vmatpush2.msra.mxu0 0.0
        %3696 = vmatprep.subr.mxu0 0.0
        %3697 = vmatpush2.msra.mxu0 0.0
        %3698 = vmatprep.subr.mxu0 0.0
        %3699 = vmatpush2.msra.mxu0 0.0
        %3700 = vmatprep.subr.mxu0 0.0
        %3701 = vmatpush2.msra.mxu0 0.0
        %3702 = vmatprep.subr.mxu0 0.0
        %3703 = vmatpush2.msra.mxu0 0.0
        %3704 = vmatprep.subr.mxu0 0.0
        %3705 = vmatpush2.msra.mxu0 0.0
        %3706 = vmatprep.subr.mxu0 0.0
        %3707 = vmatpush2.msra.mxu0 0.0
        %3708 = vmatprep.subr.mxu0 0.0
        %3709 = vmatpush2.msra.mxu0 0.0
        %3710 = vmatprep.subr.mxu0 0.0
        %3711 = vmatpush2.msra.mxu0 0.0
        %3712 = vmatprep.mubr.f32.mxu0 0.0
        %3713 = vmatmul.mubr.f32.gmra.mxu0 %v3625
        %v3714 = vpop.f32.mrf.mxu0
        %v3715 = vadd.f32 0.0, %v3714
        %v3716 = vpop.f32.mrf.mxu0
        %3717 = vmatprep.mubr.f32.mxu0 0.0
        %3718 = vmatmul.mubr.f32.gmra.mxu0 %v3628
        %v3719 = vpop.f32.mrf.mxu0
        %v3720 = vadd.f32 0.0, %v3719
        %v3721 = vpop.f32.mrf.mxu0
        %3722 = vmatprep.mubr.f32.mxu0 0.0
        %3723 = vmatmul.mubr.f32.gmra.mxu0 %v3631
        %v3724 = vpop.f32.mrf.mxu0
        %v3725 = vadd.f32 0.0, %v3724
        %v3726 = vpop.f32.mrf.mxu0
        %3727 = vmatprep.mubr.f32.mxu0 0.0
        %3728 = vmatmul.mubr.f32.gmra.mxu0 %v3634
        %v3729 = vpop.f32.mrf.mxu0
        %v3730 = vadd.f32 0.0, %v3729
        %v3731 = vpop.f32.mrf.mxu0
        %3732 = vmatprep.mubr.f32.mxu0 0.0
        %3733 = vmatmul.mubr.f32.gmra.mxu0 %v3637
        %v3734 = vpop.f32.mrf.mxu0
        %v3735 = vadd.f32 0.0, %v3734
        %v3736 = vpop.f32.mrf.mxu0
        %3737 = vmatprep.mubr.f32.mxu0 0.0
        %3738 = vmatmul.mubr.f32.gmra.mxu0 %v3640
        %v3739 = vpop.f32.mrf.mxu0
        %v3740 = vadd.f32 0.0, %v3739
        %v3741 = vpop.f32.mrf.mxu0
        %3742 = vmatprep.mubr.f32.mxu0 0.0
        %3743 = vmatmul.mubr.f32.gmra.mxu0 %v3643
        %v3744 = vpop.f32.mrf.mxu0
        %v3745 = vadd.f32 0.0, %v3744
        %v3746 = vpop.f32.mrf.mxu0
        %3747 = vmatprep.mubr.f32.mxu0 0.0
        %3748 = vmatmul.mubr.f32.gmra.mxu0 %v3646
        %v3749 = vpop.f32.mrf.mxu0
        %v3750 = vadd.f32 0.0, %v3749
        %v3751 = vpop.f32.mrf.mxu0
        %3752 = vdwg.mxu0
        %v3753 = vadd.f32 %v3513, %v3715
        %v3754 = vadd.f32 %v3514, %v3720
        %v3755 = vadd.f32 %v3515, %v3725
        %v3756 = vadd.f32 %v3516, %v3730
        %v3757 = vadd.f32 %v3517, %v3735
        %v3758 = vadd.f32 %v3518, %v3740
        %v3759 = vadd.f32 %v3519, %v3745
        %v3760 = vadd.f32 %v3520, %v3750
        %s3761 = scalar_lea.vmem [#allocation14], 256
        %v3762 = vld [vmem:[%s3761] sm:$0xff]
        %v3763 = vld [vmem:[%s3761 + $0x8] sm:$0xff]
        %v3764 = vld [vmem:[%s3761 + $0x10] sm:$0xff]
        %v3765 = vld [vmem:[%s3761 + $0x18] sm:$0xff]
        %v3766 = vld [vmem:[%s3761 + $0x20] sm:$0xff]
        %v3767 = vld [vmem:[%s3761 + $0x28] sm:$0xff]
        %v3768 = vld [vmem:[%s3761 + $0x30] sm:$0xff]
        %v3769 = vld [vmem:[%s3761 + $0x38] sm:$0xff]
        %3770 = vmatprep.subr.mxu0 0.0
        %3771 = vmatpush1.msra.mxu0 0.0
        %3772 = vmatprep.subr.mxu0 0.0
        %3773 = vmatpush1.msra.mxu0 0.0
        %3774 = vmatprep.subr.mxu0 0.0
        %3775 = vmatpush1.msra.mxu0 0.0
        %3776 = vmatprep.subr.mxu0 0.0
        %3777 = vmatpush1.msra.mxu0 0.0
        %3778 = vmatprep.subr.mxu0 0.0
        %3779 = vmatpush1.msra.mxu0 0.0
        %3780 = vmatprep.subr.mxu0 0.0
        %3781 = vmatpush1.msra.mxu0 0.0
        %3782 = vmatprep.subr.mxu0 0.0
        %3783 = vmatpush1.msra.mxu0 0.0
        %3784 = vmatprep.subr.mxu0 0.0
        %3785 = vmatpush1.msra.mxu0 0.0
        %3786 = vmatprep.subr.mxu0 0.0
        %3787 = vmatpush1.msra.mxu0 %v3769
        %3788 = vmatprep.subr.mxu0 0.0
        %3789 = vmatpush1.msra.mxu0 %v3768
        %3790 = vmatprep.subr.mxu0 0.0
        %3791 = vmatpush1.msra.mxu0 %v3767
        %3792 = vmatprep.subr.mxu0 0.0
        %3793 = vmatpush1.msra.mxu0 %v3766
        %3794 = vmatprep.subr.mxu0 0.0
        %3795 = vmatpush1.msra.mxu0 %v3765
        %3796 = vmatprep.subr.mxu0 0.0
        %3797 = vmatpush1.msra.mxu0 %v3764
        %3798 = vmatprep.subr.mxu0 0.0
        %3799 = vmatpush1.msra.mxu0 %v3763
        %3800 = vmatprep.subr.mxu0 0.0
        %3801 = vmatpush1.msra.mxu0 %v3762
        %3802 = vmatprep.subr.mxu0 0.0
        %3803 = vmatpush2.msra.mxu0 0.0
        %3804 = vmatprep.subr.mxu0 0.0
        %3805 = vmatpush2.msra.mxu0 0.0
        %3806 = vmatprep.subr.mxu0 0.0
        %3807 = vmatpush2.msra.mxu0 0.0
        %3808 = vmatprep.subr.mxu0 0.0
        %3809 = vmatpush2.msra.mxu0 0.0
        %3810 = vmatprep.subr.mxu0 0.0
        %3811 = vmatpush2.msra.mxu0 0.0
        %3812 = vmatprep.subr.mxu0 0.0
        %3813 = vmatpush2.msra.mxu0 0.0
        %3814 = vmatprep.subr.mxu0 0.0
        %3815 = vmatpush2.msra.mxu0 0.0
        %3816 = vmatprep.subr.mxu0 0.0
        %3817 = vmatpush2.msra.mxu0 0.0
        %3818 = vmatprep.subr.mxu0 0.0
        %3819 = vmatpush2.msra.mxu0 0.0
        %3820 = vmatprep.subr.mxu0 0.0
        %3821 = vmatpush2.msra.mxu0 0.0
        %3822 = vmatprep.subr.mxu0 0.0
        %3823 = vmatpush2.msra.mxu0 0.0
        %3824 = vmatprep.subr.mxu0 0.0
        %3825 = vmatpush2.msra.mxu0 0.0
        %3826 = vmatprep.subr.mxu0 0.0
        %3827 = vmatpush2.msra.mxu0 0.0
        %3828 = vmatprep.subr.mxu0 0.0
        %3829 = vmatpush2.msra.mxu0 0.0
        %3830 = vmatprep.subr.mxu0 0.0
        %3831 = vmatpush2.msra.mxu0 0.0
        %3832 = vmatprep.subr.mxu0 0.0
        %3833 = vmatpush2.msra.mxu0 0.0
        %3834 = vmatprep.mubr.f32.mxu0 0.0
        %3835 = vmatmul.mubr.f32.gmra.mxu0 %v2815
        %v3836 = vpop.f32.mrf.mxu0
        %v3837 = vadd.f32 0.0, %v3836
        %v3838 = vpop.f32.mrf.mxu0
        %3839 = vmatprep.mubr.f32.mxu0 0.0
        %3840 = vmatmul.mubr.f32.gmra.mxu0 %v2818
        %v3841 = vpop.f32.mrf.mxu0
        %v3842 = vadd.f32 0.0, %v3841
        %v3843 = vpop.f32.mrf.mxu0
        %3844 = vmatprep.mubr.f32.mxu0 0.0
        %3845 = vmatmul.mubr.f32.gmra.mxu0 %v2821
        %v3846 = vpop.f32.mrf.mxu0
        %v3847 = vadd.f32 0.0, %v3846
        %v3848 = vpop.f32.mrf.mxu0
        %3849 = vmatprep.mubr.f32.mxu0 0.0
        %3850 = vmatmul.mubr.f32.gmra.mxu0 %v2824
        %v3851 = vpop.f32.mrf.mxu0
        %v3852 = vadd.f32 0.0, %v3851
        %v3853 = vpop.f32.mrf.mxu0
        %3854 = vdwg.mxu0
        %s3855 = scalar_lea.vmem [#allocation11], 256
        %v3856 = vld [vmem:[%s3855] sm:$0xff]
        %v3857 = vld [vmem:[%s3855 + $0x8] sm:$0xff]
        %v3858 = vld [vmem:[%s3855 + $0x10] sm:$0xff]
        %v3859 = vld [vmem:[%s3855 + $0x18] sm:$0xff]
        %v3860 = vld [vmem:[%s3855 + $0x20] sm:$0xff]
        %v3861 = vld [vmem:[%s3855 + $0x28] sm:$0xff]
        %v3862 = vld [vmem:[%s3855 + $0x30] sm:$0xff]
        %v3863 = vld [vmem:[%s3855 + $0x38] sm:$0xff]
        %v3865 = vsel %vm3022, %v3856, 0
        %v3868 = vsel %vm3022, %v3857, 0
        %v3871 = vsel %vm3022, %v3858, 0
        %v3874 = vsel %vm3022, %v3859, 0
        %v3877 = vsel %vm3022, %v3860, 0
        %v3880 = vsel %vm3022, %v3861, 0
        %v3883 = vsel %vm3022, %v3862, 0
        %v3886 = vsel %vm3022, %v3863, 0
        %3888 = vmatprep.subr.mxu0 0.0
        %3889 = vmatpush1.msra.mxu0 0.0
        %3890 = vmatprep.subr.mxu0 0.0
        %3891 = vmatpush1.msra.mxu0 0.0
        %3892 = vmatprep.subr.mxu0 0.0
        %3893 = vmatpush1.msra.mxu0 0.0
        %3894 = vmatprep.subr.mxu0 0.0
        %3895 = vmatpush1.msra.mxu0 0.0
        %3896 = vmatprep.subr.mxu0 0.0
        %3897 = vmatpush1.msra.mxu0 0.0
        %3898 = vmatprep.subr.mxu0 0.0
        %3899 = vmatpush1.msra.mxu0 0.0
        %3900 = vmatprep.subr.mxu0 0.0
        %3901 = vmatpush1.msra.mxu0 0.0
        %3902 = vmatprep.subr.mxu0 0.0
        %3903 = vmatpush1.msra.mxu0 0.0
        %3904 = vmatprep.subr.mxu0 0.0
        %3905 = vmatpush1.msra.mxu0 0.0
        %3906 = vmatprep.subr.mxu0 0.0
        %3907 = vmatpush1.msra.mxu0 0.0
        %3908 = vmatprep.subr.mxu0 0.0
        %3909 = vmatpush1.msra.mxu0 0.0
        %3910 = vmatprep.subr.mxu0 0.0
        %3911 = vmatpush1.msra.mxu0 0.0
        %3912 = vmatprep.subr.mxu0 0.0
        %3913 = vmatpush1.msra.mxu0 %v3852
        %3914 = vmatprep.subr.mxu0 0.0
        %3915 = vmatpush1.msra.mxu0 %v3847
        %3916 = vmatprep.subr.mxu0 0.0
        %3917 = vmatpush1.msra.mxu0 %v3842
        %3918 = vmatprep.subr.mxu0 0.0
        %3919 = vmatpush1.msra.mxu0 %v3837
        %3920 = vmatprep.subr.mxu0 0.0
        %3921 = vmatpush2.msra.mxu0 0.0
        %3922 = vmatprep.subr.mxu0 0.0
        %3923 = vmatpush2.msra.mxu0 0.0
        %3924 = vmatprep.subr.mxu0 0.0
        %3925 = vmatpush2.msra.mxu0 0.0
        %3926 = vmatprep.subr.mxu0 0.0
        %3927 = vmatpush2.msra.mxu0 0.0
        %3928 = vmatprep.subr.mxu0 0.0
        %3929 = vmatpush2.msra.mxu0 0.0
        %3930 = vmatprep.subr.mxu0 0.0
        %3931 = vmatpush2.msra.mxu0 0.0
        %3932 = vmatprep.subr.mxu0 0.0
        %3933 = vmatpush2.msra.mxu0 0.0
        %3934 = vmatprep.subr.mxu0 0.0
        %3935 = vmatpush2.msra.mxu0 0.0
        %3936 = vmatprep.subr.mxu0 0.0
        %3937 = vmatpush2.msra.mxu0 0.0
        %3938 = vmatprep.subr.mxu0 0.0
        %3939 = vmatpush2.msra.mxu0 0.0
        %3940 = vmatprep.subr.mxu0 0.0
        %3941 = vmatpush2.msra.mxu0 0.0
        %3942 = vmatprep.subr.mxu0 0.0
        %3943 = vmatpush2.msra.mxu0 0.0
        %3944 = vmatprep.subr.mxu0 0.0
        %3945 = vmatpush2.msra.mxu0 0.0
        %3946 = vmatprep.subr.mxu0 0.0
        %3947 = vmatpush2.msra.mxu0 0.0
        %3948 = vmatprep.subr.mxu0 0.0
        %3949 = vmatpush2.msra.mxu0 0.0
        %3950 = vmatprep.subr.mxu0 0.0
        %3951 = vmatpush2.msra.mxu0 0.0
        %3952 = vmatprep.mubr.f32.mxu0 0.0
        %3953 = vmatmul.mubr.f32.gmra.mxu0 %v3865
        %v3954 = vpop.f32.mrf.mxu0
        %v3955 = vadd.f32 0.0, %v3954
        %v3956 = vpop.f32.mrf.mxu0
        %3957 = vmatprep.mubr.f32.mxu0 0.0
        %3958 = vmatmul.mubr.f32.gmra.mxu0 %v3868
        %v3959 = vpop.f32.mrf.mxu0
        %v3960 = vadd.f32 0.0, %v3959
        %v3961 = vpop.f32.mrf.mxu0
        %3962 = vmatprep.mubr.f32.mxu0 0.0
        %3963 = vmatmul.mubr.f32.gmra.mxu0 %v3871
        %v3964 = vpop.f32.mrf.mxu0
        %v3965 = vadd.f32 0.0, %v3964
        %v3966 = vpop.f32.mrf.mxu0
        %3967 = vmatprep.mubr.f32.mxu0 0.0
        %3968 = vmatmul.mubr.f32.gmra.mxu0 %v3874
        %v3969 = vpop.f32.mrf.mxu0
        %v3970 = vadd.f32 0.0, %v3969
        %v3971 = vpop.f32.mrf.mxu0
        %3972 = vmatprep.mubr.f32.mxu0 0.0
        %3973 = vmatmul.mubr.f32.gmra.mxu0 %v3877
        %v3974 = vpop.f32.mrf.mxu0
        %v3975 = vadd.f32 0.0, %v3974
        %v3976 = vpop.f32.mrf.mxu0
        %3977 = vmatprep.mubr.f32.mxu0 0.0
        %3978 = vmatmul.mubr.f32.gmra.mxu0 %v3880
        %v3979 = vpop.f32.mrf.mxu0
        %v3980 = vadd.f32 0.0, %v3979
        %v3981 = vpop.f32.mrf.mxu0
        %3982 = vmatprep.mubr.f32.mxu0 0.0
        %3983 = vmatmul.mubr.f32.gmra.mxu0 %v3883
        %v3984 = vpop.f32.mrf.mxu0
        %v3985 = vadd.f32 0.0, %v3984
        %v3986 = vpop.f32.mrf.mxu0
        %3987 = vmatprep.mubr.f32.mxu0 0.0
        %3988 = vmatmul.mubr.f32.gmra.mxu0 %v3886
        %v3989 = vpop.f32.mrf.mxu0
        %v3990 = vadd.f32 0.0, %v3989
        %v3991 = vpop.f32.mrf.mxu0
        %3992 = vdwg.mxu0
        %v3993 = vadd.f32 %v3753, %v3955
        %v3994 = vadd.f32 %v3754, %v3960
        %v3995 = vadd.f32 %v3755, %v3965
        %v3996 = vadd.f32 %v3756, %v3970
        %v3997 = vadd.f32 %v3757, %v3975
        %v3998 = vadd.f32 %v3758, %v3980
        %v3999 = vadd.f32 %v3759, %v3985
        %v4000 = vadd.f32 %v3760, %v3990
        %s4001 = scalar_lea.vmem [#allocation14], 320
        %v4002 = vld [vmem:[%s4001] sm:$0xff]
        %v4003 = vld [vmem:[%s4001 + $0x8] sm:$0xff]
        %v4004 = vld [vmem:[%s4001 + $0x10] sm:$0xff]
        %v4005 = vld [vmem:[%s4001 + $0x18] sm:$0xff]
        %v4006 = vld [vmem:[%s4001 + $0x20] sm:$0xff]
        %v4007 = vld [vmem:[%s4001 + $0x28] sm:$0xff]
        %v4008 = vld [vmem:[%s4001 + $0x30] sm:$0xff]
        %v4009 = vld [vmem:[%s4001 + $0x38] sm:$0xff]
        %4010 = vmatprep.subr.mxu0 0.0
        %4011 = vmatpush1.msra.mxu0 0.0
        %4012 = vmatprep.subr.mxu0 0.0
        %4013 = vmatpush1.msra.mxu0 0.0
        %4014 = vmatprep.subr.mxu0 0.0
        %4015 = vmatpush1.msra.mxu0 0.0
        %4016 = vmatprep.subr.mxu0 0.0
        %4017 = vmatpush1.msra.mxu0 0.0
        %4018 = vmatprep.subr.mxu0 0.0
        %4019 = vmatpush1.msra.mxu0 0.0
        %4020 = vmatprep.subr.mxu0 0.0
        %4021 = vmatpush1.msra.mxu0 0.0
        %4022 = vmatprep.subr.mxu0 0.0
        %4023 = vmatpush1.msra.mxu0 0.0
        %4024 = vmatprep.subr.mxu0 0.0
        %4025 = vmatpush1.msra.mxu0 0.0
        %4026 = vmatprep.subr.mxu0 0.0
        %4027 = vmatpush1.msra.mxu0 %v4009
        %4028 = vmatprep.subr.mxu0 0.0
        %4029 = vmatpush1.msra.mxu0 %v4008
        %4030 = vmatprep.subr.mxu0 0.0
        %4031 = vmatpush1.msra.mxu0 %v4007
        %4032 = vmatprep.subr.mxu0 0.0
        %4033 = vmatpush1.msra.mxu0 %v4006
        %4034 = vmatprep.subr.mxu0 0.0
        %4035 = vmatpush1.msra.mxu0 %v4005
        %4036 = vmatprep.subr.mxu0 0.0
        %4037 = vmatpush1.msra.mxu0 %v4004
        %4038 = vmatprep.subr.mxu0 0.0
        %4039 = vmatpush1.msra.mxu0 %v4003
        %4040 = vmatprep.subr.mxu0 0.0
        %4041 = vmatpush1.msra.mxu0 %v4002
        %4042 = vmatprep.subr.mxu0 0.0
        %4043 = vmatpush2.msra.mxu0 0.0
        %4044 = vmatprep.subr.mxu0 0.0
        %4045 = vmatpush2.msra.mxu0 0.0
        %4046 = vmatprep.subr.mxu0 0.0
        %4047 = vmatpush2.msra.mxu0 0.0
        %4048 = vmatprep.subr.mxu0 0.0
        %4049 = vmatpush2.msra.mxu0 0.0
        %4050 = vmatprep.subr.mxu0 0.0
        %4051 = vmatpush2.msra.mxu0 0.0
        %4052 = vmatprep.subr.mxu0 0.0
        %4053 = vmatpush2.msra.mxu0 0.0
        %4054 = vmatprep.subr.mxu0 0.0
        %4055 = vmatpush2.msra.mxu0 0.0
        %4056 = vmatprep.subr.mxu0 0.0
        %4057 = vmatpush2.msra.mxu0 0.0
        %4058 = vmatprep.subr.mxu0 0.0
        %4059 = vmatpush2.msra.mxu0 0.0
        %4060 = vmatprep.subr.mxu0 0.0
        %4061 = vmatpush2.msra.mxu0 0.0
        %4062 = vmatprep.subr.mxu0 0.0
        %4063 = vmatpush2.msra.mxu0 0.0
        %4064 = vmatprep.subr.mxu0 0.0
        %4065 = vmatpush2.msra.mxu0 0.0
        %4066 = vmatprep.subr.mxu0 0.0
        %4067 = vmatpush2.msra.mxu0 0.0
        %4068 = vmatprep.subr.mxu0 0.0
        %4069 = vmatpush2.msra.mxu0 0.0
        %4070 = vmatprep.subr.mxu0 0.0
        %4071 = vmatpush2.msra.mxu0 0.0
        %4072 = vmatprep.subr.mxu0 0.0
        %4073 = vmatpush2.msra.mxu0 0.0
        %4074 = vmatprep.mubr.f32.mxu0 0.0
        %4075 = vmatmul.mubr.f32.gmra.mxu0 %v2815
        %v4076 = vpop.f32.mrf.mxu0
        %v4077 = vadd.f32 0.0, %v4076
        %v4078 = vpop.f32.mrf.mxu0
        %4079 = vmatprep.mubr.f32.mxu0 0.0
        %4080 = vmatmul.mubr.f32.gmra.mxu0 %v2818
        %v4081 = vpop.f32.mrf.mxu0
        %v4082 = vadd.f32 0.0, %v4081
        %v4083 = vpop.f32.mrf.mxu0
        %4084 = vmatprep.mubr.f32.mxu0 0.0
        %4085 = vmatmul.mubr.f32.gmra.mxu0 %v2821
        %v4086 = vpop.f32.mrf.mxu0
        %v4087 = vadd.f32 0.0, %v4086
        %v4088 = vpop.f32.mrf.mxu0
        %4089 = vmatprep.mubr.f32.mxu0 0.0
        %4090 = vmatmul.mubr.f32.gmra.mxu0 %v2824
        %v4091 = vpop.f32.mrf.mxu0
        %v4092 = vadd.f32 0.0, %v4091
        %v4093 = vpop.f32.mrf.mxu0
        %4094 = vdwg.mxu0
        %s4095 = scalar_lea.vmem [#allocation11], 320
        %v4096 = vld [vmem:[%s4095] sm:$0xff]
        %v4097 = vld [vmem:[%s4095 + $0x8] sm:$0xff]
        %v4098 = vld [vmem:[%s4095 + $0x10] sm:$0xff]
        %v4099 = vld [vmem:[%s4095 + $0x18] sm:$0xff]
        %v4100 = vld [vmem:[%s4095 + $0x20] sm:$0xff]
        %v4101 = vld [vmem:[%s4095 + $0x28] sm:$0xff]
        %v4102 = vld [vmem:[%s4095 + $0x30] sm:$0xff]
        %v4103 = vld [vmem:[%s4095 + $0x38] sm:$0xff]
        %v4105 = vsel %vm3022, %v4096, 0
        %v4108 = vsel %vm3022, %v4097, 0
        %v4111 = vsel %vm3022, %v4098, 0
        %v4114 = vsel %vm3022, %v4099, 0
        %v4117 = vsel %vm3022, %v4100, 0
        %v4120 = vsel %vm3022, %v4101, 0
        %v4123 = vsel %vm3022, %v4102, 0
        %v4126 = vsel %vm3022, %v4103, 0
        %4128 = vmatprep.subr.mxu0 0.0
        %4129 = vmatpush1.msra.mxu0 0.0
        %4130 = vmatprep.subr.mxu0 0.0
        %4131 = vmatpush1.msra.mxu0 0.0
        %4132 = vmatprep.subr.mxu0 0.0
        %4133 = vmatpush1.msra.mxu0 0.0
        %4134 = vmatprep.subr.mxu0 0.0
        %4135 = vmatpush1.msra.mxu0 0.0
        %4136 = vmatprep.subr.mxu0 0.0
        %4137 = vmatpush1.msra.mxu0 0.0
        %4138 = vmatprep.subr.mxu0 0.0
        %4139 = vmatpush1.msra.mxu0 0.0
        %4140 = vmatprep.subr.mxu0 0.0
        %4141 = vmatpush1.msra.mxu0 0.0
        %4142 = vmatprep.subr.mxu0 0.0
        %4143 = vmatpush1.msra.mxu0 0.0
        %4144 = vmatprep.subr.mxu0 0.0
        %4145 = vmatpush1.msra.mxu0 0.0
        %4146 = vmatprep.subr.mxu0 0.0
        %4147 = vmatpush1.msra.mxu0 0.0
        %4148 = vmatprep.subr.mxu0 0.0
        %4149 = vmatpush1.msra.mxu0 0.0
        %4150 = vmatprep.subr.mxu0 0.0
        %4151 = vmatpush1.msra.mxu0 0.0
        %4152 = vmatprep.subr.mxu0 0.0
        %4153 = vmatpush1.msra.mxu0 %v4092
        %4154 = vmatprep.subr.mxu0 0.0
        %4155 = vmatpush1.msra.mxu0 %v4087
        %4156 = vmatprep.subr.mxu0 0.0
        %4157 = vmatpush1.msra.mxu0 %v4082
        %4158 = vmatprep.subr.mxu0 0.0
        %4159 = vmatpush1.msra.mxu0 %v4077
        %4160 = vmatprep.subr.mxu0 0.0
        %4161 = vmatpush2.msra.mxu0 0.0
        %4162 = vmatprep.subr.mxu0 0.0
        %4163 = vmatpush2.msra.mxu0 0.0
        %4164 = vmatprep.subr.mxu0 0.0
        %4165 = vmatpush2.msra.mxu0 0.0
        %4166 = vmatprep.subr.mxu0 0.0
        %4167 = vmatpush2.msra.mxu0 0.0
        %4168 = vmatprep.subr.mxu0 0.0
        %4169 = vmatpush2.msra.mxu0 0.0
        %4170 = vmatprep.subr.mxu0 0.0
        %4171 = vmatpush2.msra.mxu0 0.0
        %4172 = vmatprep.subr.mxu0 0.0
        %4173 = vmatpush2.msra.mxu0 0.0
        %4174 = vmatprep.subr.mxu0 0.0
        %4175 = vmatpush2.msra.mxu0 0.0
        %4176 = vmatprep.subr.mxu0 0.0
        %4177 = vmatpush2.msra.mxu0 0.0
        %4178 = vmatprep.subr.mxu0 0.0
        %4179 = vmatpush2.msra.mxu0 0.0
        %4180 = vmatprep.subr.mxu0 0.0
        %4181 = vmatpush2.msra.mxu0 0.0
        %4182 = vmatprep.subr.mxu0 0.0
        %4183 = vmatpush2.msra.mxu0 0.0
        %4184 = vmatprep.subr.mxu0 0.0
        %4185 = vmatpush2.msra.mxu0 0.0
        %4186 = vmatprep.subr.mxu0 0.0
        %4187 = vmatpush2.msra.mxu0 0.0
        %4188 = vmatprep.subr.mxu0 0.0
        %4189 = vmatpush2.msra.mxu0 0.0
        %4190 = vmatprep.subr.mxu0 0.0
        %4191 = vmatpush2.msra.mxu0 0.0
        %4192 = vmatprep.mubr.f32.mxu0 0.0
        %4193 = vmatmul.mubr.f32.gmra.mxu0 %v4105
        %v4194 = vpop.f32.mrf.mxu0
        %v4195 = vadd.f32 0.0, %v4194
        %v4196 = vpop.f32.mrf.mxu0
        %4197 = vmatprep.mubr.f32.mxu0 0.0
        %4198 = vmatmul.mubr.f32.gmra.mxu0 %v4108
        %v4199 = vpop.f32.mrf.mxu0
        %v4200 = vadd.f32 0.0, %v4199
        %v4201 = vpop.f32.mrf.mxu0
        %4202 = vmatprep.mubr.f32.mxu0 0.0
        %4203 = vmatmul.mubr.f32.gmra.mxu0 %v4111
        %v4204 = vpop.f32.mrf.mxu0
        %v4205 = vadd.f32 0.0, %v4204
        %v4206 = vpop.f32.mrf.mxu0
        %4207 = vmatprep.mubr.f32.mxu0 0.0
        %4208 = vmatmul.mubr.f32.gmra.mxu0 %v4114
        %v4209 = vpop.f32.mrf.mxu0
        %v4210 = vadd.f32 0.0, %v4209
        %v4211 = vpop.f32.mrf.mxu0
        %4212 = vmatprep.mubr.f32.mxu0 0.0
        %4213 = vmatmul.mubr.f32.gmra.mxu0 %v4117
        %v4214 = vpop.f32.mrf.mxu0
        %v4215 = vadd.f32 0.0, %v4214
        %v4216 = vpop.f32.mrf.mxu0
        %4217 = vmatprep.mubr.f32.mxu0 0.0
        %4218 = vmatmul.mubr.f32.gmra.mxu0 %v4120
        %v4219 = vpop.f32.mrf.mxu0
        %v4220 = vadd.f32 0.0, %v4219
        %v4221 = vpop.f32.mrf.mxu0
        %4222 = vmatprep.mubr.f32.mxu0 0.0
        %4223 = vmatmul.mubr.f32.gmra.mxu0 %v4123
        %v4224 = vpop.f32.mrf.mxu0
        %v4225 = vadd.f32 0.0, %v4224
        %v4226 = vpop.f32.mrf.mxu0
        %4227 = vmatprep.mubr.f32.mxu0 0.0
        %4228 = vmatmul.mubr.f32.gmra.mxu0 %v4126
        %v4229 = vpop.f32.mrf.mxu0
        %v4230 = vadd.f32 0.0, %v4229
        %v4231 = vpop.f32.mrf.mxu0
        %4232 = vdwg.mxu0
        %v4233 = vadd.f32 %v3993, %v4195
        %v4234 = vadd.f32 %v3994, %v4200
        %v4235 = vadd.f32 %v3995, %v4205
        %v4236 = vadd.f32 %v3996, %v4210
        %v4237 = vadd.f32 %v3997, %v4215
        %v4238 = vadd.f32 %v3998, %v4220
        %v4239 = vadd.f32 %v3999, %v4225
        %v4240 = vadd.f32 %v4000, %v4230
        %s4241 = scalar_lea.vmem [#allocation14], 384
        %v4242 = vld [vmem:[%s4241] sm:$0xff]
        %v4243 = vld [vmem:[%s4241 + $0x8] sm:$0xff]
        %v4244 = vld [vmem:[%s4241 + $0x10] sm:$0xff]
        %v4245 = vld [vmem:[%s4241 + $0x18] sm:$0xff]
        %v4246 = vld [vmem:[%s4241 + $0x20] sm:$0xff]
        %v4247 = vld [vmem:[%s4241 + $0x28] sm:$0xff]
        %v4248 = vld [vmem:[%s4241 + $0x30] sm:$0xff]
        %v4249 = vld [vmem:[%s4241 + $0x38] sm:$0xff]
        %4250 = vmatprep.subr.mxu0 0.0
        %4251 = vmatpush1.msra.mxu0 0.0
        %4252 = vmatprep.subr.mxu0 0.0
        %4253 = vmatpush1.msra.mxu0 0.0
        %4254 = vmatprep.subr.mxu0 0.0
        %4255 = vmatpush1.msra.mxu0 0.0
        %4256 = vmatprep.subr.mxu0 0.0
        %4257 = vmatpush1.msra.mxu0 0.0
        %4258 = vmatprep.subr.mxu0 0.0
        %4259 = vmatpush1.msra.mxu0 0.0
        %4260 = vmatprep.subr.mxu0 0.0
        %4261 = vmatpush1.msra.mxu0 0.0
        %4262 = vmatprep.subr.mxu0 0.0
        %4263 = vmatpush1.msra.mxu0 0.0
        %4264 = vmatprep.subr.mxu0 0.0
        %4265 = vmatpush1.msra.mxu0 0.0
        %4266 = vmatprep.subr.mxu0 0.0
        %4267 = vmatpush1.msra.mxu0 %v4249
        %4268 = vmatprep.subr.mxu0 0.0
        %4269 = vmatpush1.msra.mxu0 %v4248
        %4270 = vmatprep.subr.mxu0 0.0
        %4271 = vmatpush1.msra.mxu0 %v4247
        %4272 = vmatprep.subr.mxu0 0.0
        %4273 = vmatpush1.msra.mxu0 %v4246
        %4274 = vmatprep.subr.mxu0 0.0
        %4275 = vmatpush1.msra.mxu0 %v4245
        %4276 = vmatprep.subr.mxu0 0.0
        %4277 = vmatpush1.msra.mxu0 %v4244
        %4278 = vmatprep.subr.mxu0 0.0
        %4279 = vmatpush1.msra.mxu0 %v4243
        %4280 = vmatprep.subr.mxu0 0.0
        %4281 = vmatpush1.msra.mxu0 %v4242
        %4282 = vmatprep.subr.mxu0 0.0
        %4283 = vmatpush2.msra.mxu0 0.0
        %4284 = vmatprep.subr.mxu0 0.0
        %4285 = vmatpush2.msra.mxu0 0.0
        %4286 = vmatprep.subr.mxu0 0.0
        %4287 = vmatpush2.msra.mxu0 0.0
        %4288 = vmatprep.subr.mxu0 0.0
        %4289 = vmatpush2.msra.mxu0 0.0
        %4290 = vmatprep.subr.mxu0 0.0
        %4291 = vmatpush2.msra.mxu0 0.0
        %4292 = vmatprep.subr.mxu0 0.0
        %4293 = vmatpush2.msra.mxu0 0.0
        %4294 = vmatprep.subr.mxu0 0.0
        %4295 = vmatpush2.msra.mxu0 0.0
        %4296 = vmatprep.subr.mxu0 0.0
        %4297 = vmatpush2.msra.mxu0 0.0
        %4298 = vmatprep.subr.mxu0 0.0
        %4299 = vmatpush2.msra.mxu0 0.0
        %4300 = vmatprep.subr.mxu0 0.0
        %4301 = vmatpush2.msra.mxu0 0.0
        %4302 = vmatprep.subr.mxu0 0.0
        %4303 = vmatpush2.msra.mxu0 0.0
        %4304 = vmatprep.subr.mxu0 0.0
        %4305 = vmatpush2.msra.mxu0 0.0
        %4306 = vmatprep.subr.mxu0 0.0
        %4307 = vmatpush2.msra.mxu0 0.0
        %4308 = vmatprep.subr.mxu0 0.0
        %4309 = vmatpush2.msra.mxu0 0.0
        %4310 = vmatprep.subr.mxu0 0.0
        %4311 = vmatpush2.msra.mxu0 0.0
        %4312 = vmatprep.subr.mxu0 0.0
        %4313 = vmatpush2.msra.mxu0 0.0
        %4314 = vmatprep.mubr.f32.mxu0 0.0
        %4315 = vmatmul.mubr.f32.gmra.mxu0 %v2815
        %v4316 = vpop.f32.mrf.mxu0
        %v4317 = vadd.f32 0.0, %v4316
        %v4318 = vpop.f32.mrf.mxu0
        %4319 = vmatprep.mubr.f32.mxu0 0.0
        %4320 = vmatmul.mubr.f32.gmra.mxu0 %v2818
        %v4321 = vpop.f32.mrf.mxu0
        %v4322 = vadd.f32 0.0, %v4321
        %v4323 = vpop.f32.mrf.mxu0
        %4324 = vmatprep.mubr.f32.mxu0 0.0
        %4325 = vmatmul.mubr.f32.gmra.mxu0 %v2821
        %v4326 = vpop.f32.mrf.mxu0
        %v4327 = vadd.f32 0.0, %v4326
        %v4328 = vpop.f32.mrf.mxu0
        %4329 = vmatprep.mubr.f32.mxu0 0.0
        %4330 = vmatmul.mubr.f32.gmra.mxu0 %v2824
        %v4331 = vpop.f32.mrf.mxu0
        %v4332 = vadd.f32 0.0, %v4331
        %v4333 = vpop.f32.mrf.mxu0
        %4334 = vdwg.mxu0
        %s4335 = scalar_lea.vmem [#allocation11], 384
        %v4336 = vld [vmem:[%s4335] sm:$0xff]
        %v4337 = vld [vmem:[%s4335 + $0x8] sm:$0xff]
        %v4338 = vld [vmem:[%s4335 + $0x10] sm:$0xff]
        %v4339 = vld [vmem:[%s4335 + $0x18] sm:$0xff]
        %v4340 = vld [vmem:[%s4335 + $0x20] sm:$0xff]
        %v4341 = vld [vmem:[%s4335 + $0x28] sm:$0xff]
        %v4342 = vld [vmem:[%s4335 + $0x30] sm:$0xff]
        %v4343 = vld [vmem:[%s4335 + $0x38] sm:$0xff]
        %v4345 = vsel %vm3022, %v4336, 0
        %v4348 = vsel %vm3022, %v4337, 0
        %v4351 = vsel %vm3022, %v4338, 0
        %v4354 = vsel %vm3022, %v4339, 0
        %v4357 = vsel %vm3022, %v4340, 0
        %v4360 = vsel %vm3022, %v4341, 0
        %v4363 = vsel %vm3022, %v4342, 0
        %v4366 = vsel %vm3022, %v4343, 0
        %4368 = vmatprep.subr.mxu0 0.0
        %4369 = vmatpush1.msra.mxu0 0.0
        %4370 = vmatprep.subr.mxu0 0.0
        %4371 = vmatpush1.msra.mxu0 0.0
        %4372 = vmatprep.subr.mxu0 0.0
        %4373 = vmatpush1.msra.mxu0 0.0
        %4374 = vmatprep.subr.mxu0 0.0
        %4375 = vmatpush1.msra.mxu0 0.0
        %4376 = vmatprep.subr.mxu0 0.0
        %4377 = vmatpush1.msra.mxu0 0.0
        %4378 = vmatprep.subr.mxu0 0.0
        %4379 = vmatpush1.msra.mxu0 0.0
        %4380 = vmatprep.subr.mxu0 0.0
        %4381 = vmatpush1.msra.mxu0 0.0
        %4382 = vmatprep.subr.mxu0 0.0
        %4383 = vmatpush1.msra.mxu0 0.0
        %4384 = vmatprep.subr.mxu0 0.0
        %4385 = vmatpush1.msra.mxu0 0.0
        %4386 = vmatprep.subr.mxu0 0.0
        %4387 = vmatpush1.msra.mxu0 0.0
        %4388 = vmatprep.subr.mxu0 0.0
        %4389 = vmatpush1.msra.mxu0 0.0
        %4390 = vmatprep.subr.mxu0 0.0
        %4391 = vmatpush1.msra.mxu0 0.0
        %4392 = vmatprep.subr.mxu0 0.0
        %4393 = vmatpush1.msra.mxu0 %v4332
        %4394 = vmatprep.subr.mxu0 0.0
        %4395 = vmatpush1.msra.mxu0 %v4327
        %4396 = vmatprep.subr.mxu0 0.0
        %4397 = vmatpush1.msra.mxu0 %v4322
        %4398 = vmatprep.subr.mxu0 0.0
        %4399 = vmatpush1.msra.mxu0 %v4317
        %4400 = vmatprep.subr.mxu0 0.0
        %4401 = vmatpush2.msra.mxu0 0.0
        %4402 = vmatprep.subr.mxu0 0.0
        %4403 = vmatpush2.msra.mxu0 0.0
        %4404 = vmatprep.subr.mxu0 0.0
        %4405 = vmatpush2.msra.mxu0 0.0
        %4406 = vmatprep.subr.mxu0 0.0
        %4407 = vmatpush2.msra.mxu0 0.0
        %4408 = vmatprep.subr.mxu0 0.0
        %4409 = vmatpush2.msra.mxu0 0.0
        %4410 = vmatprep.subr.mxu0 0.0
        %4411 = vmatpush2.msra.mxu0 0.0
        %4412 = vmatprep.subr.mxu0 0.0
        %4413 = vmatpush2.msra.mxu0 0.0
        %4414 = vmatprep.subr.mxu0 0.0
        %4415 = vmatpush2.msra.mxu0 0.0
        %4416 = vmatprep.subr.mxu0 0.0
        %4417 = vmatpush2.msra.mxu0 0.0
        %4418 = vmatprep.subr.mxu0 0.0
        %4419 = vmatpush2.msra.mxu0 0.0
        %4420 = vmatprep.subr.mxu0 0.0
        %4421 = vmatpush2.msra.mxu0 0.0
        %4422 = vmatprep.subr.mxu0 0.0
        %4423 = vmatpush2.msra.mxu0 0.0
        %4424 = vmatprep.subr.mxu0 0.0
        %4425 = vmatpush2.msra.mxu0 0.0
        %4426 = vmatprep.subr.mxu0 0.0
        %4427 = vmatpush2.msra.mxu0 0.0
        %4428 = vmatprep.subr.mxu0 0.0
        %4429 = vmatpush2.msra.mxu0 0.0
        %4430 = vmatprep.subr.mxu0 0.0
        %4431 = vmatpush2.msra.mxu0 0.0
        %4432 = vmatprep.mubr.f32.mxu0 0.0
        %4433 = vmatmul.mubr.f32.gmra.mxu0 %v4345
        %v4434 = vpop.f32.mrf.mxu0
        %v4435 = vadd.f32 0.0, %v4434
        %v4436 = vpop.f32.mrf.mxu0
        %4437 = vmatprep.mubr.f32.mxu0 0.0
        %4438 = vmatmul.mubr.f32.gmra.mxu0 %v4348
        %v4439 = vpop.f32.mrf.mxu0
        %v4440 = vadd.f32 0.0, %v4439
        %v4441 = vpop.f32.mrf.mxu0
        %4442 = vmatprep.mubr.f32.mxu0 0.0
        %4443 = vmatmul.mubr.f32.gmra.mxu0 %v4351
        %v4444 = vpop.f32.mrf.mxu0
        %v4445 = vadd.f32 0.0, %v4444
        %v4446 = vpop.f32.mrf.mxu0
        %4447 = vmatprep.mubr.f32.mxu0 0.0
        %4448 = vmatmul.mubr.f32.gmra.mxu0 %v4354
        %v4449 = vpop.f32.mrf.mxu0
        %v4450 = vadd.f32 0.0, %v4449
        %v4451 = vpop.f32.mrf.mxu0
        %4452 = vmatprep.mubr.f32.mxu0 0.0
        %4453 = vmatmul.mubr.f32.gmra.mxu0 %v4357
        %v4454 = vpop.f32.mrf.mxu0
        %v4455 = vadd.f32 0.0, %v4454
        %v4456 = vpop.f32.mrf.mxu0
        %4457 = vmatprep.mubr.f32.mxu0 0.0
        %4458 = vmatmul.mubr.f32.gmra.mxu0 %v4360
        %v4459 = vpop.f32.mrf.mxu0
        %v4460 = vadd.f32 0.0, %v4459
        %v4461 = vpop.f32.mrf.mxu0
        %4462 = vmatprep.mubr.f32.mxu0 0.0
        %4463 = vmatmul.mubr.f32.gmra.mxu0 %v4363
        %v4464 = vpop.f32.mrf.mxu0
        %v4465 = vadd.f32 0.0, %v4464
        %v4466 = vpop.f32.mrf.mxu0
        %4467 = vmatprep.mubr.f32.mxu0 0.0
        %4468 = vmatmul.mubr.f32.gmra.mxu0 %v4366
        %v4469 = vpop.f32.mrf.mxu0
        %v4470 = vadd.f32 0.0, %v4469
        %v4471 = vpop.f32.mrf.mxu0
        %4472 = vdwg.mxu0
        %v4473 = vadd.f32 %v4233, %v4435
        %v4474 = vadd.f32 %v4234, %v4440
        %v4475 = vadd.f32 %v4235, %v4445
        %v4476 = vadd.f32 %v4236, %v4450
        %v4477 = vadd.f32 %v4237, %v4455
        %v4478 = vadd.f32 %v4238, %v4460
        %v4479 = vadd.f32 %v4239, %v4465
        %v4480 = vadd.f32 %v4240, %v4470
        %s4481 = scalar_lea.vmem [#allocation14], 448
        %v4482 = vld [vmem:[%s4481] sm:$0xff]
        %v4483 = vld [vmem:[%s4481 + $0x8] sm:$0xff]
        %v4484 = vld [vmem:[%s4481 + $0x10] sm:$0xff]
        %v4485 = vld [vmem:[%s4481 + $0x18] sm:$0xff]
        %v4486 = vld [vmem:[%s4481 + $0x20] sm:$0xff]
        %v4487 = vld [vmem:[%s4481 + $0x28] sm:$0xff]
        %v4488 = vld [vmem:[%s4481 + $0x30] sm:$0xff]
        %v4489 = vld [vmem:[%s4481 + $0x38] sm:$0xff]
        %4490 = vmatprep.subr.mxu0 0.0
        %4491 = vmatpush1.msra.mxu0 0.0
        %4492 = vmatprep.subr.mxu0 0.0
        %4493 = vmatpush1.msra.mxu0 0.0
        %4494 = vmatprep.subr.mxu0 0.0
        %4495 = vmatpush1.msra.mxu0 0.0
        %4496 = vmatprep.subr.mxu0 0.0
        %4497 = vmatpush1.msra.mxu0 0.0
        %4498 = vmatprep.subr.mxu0 0.0
        %4499 = vmatpush1.msra.mxu0 0.0
        %4500 = vmatprep.subr.mxu0 0.0
        %4501 = vmatpush1.msra.mxu0 0.0
        %4502 = vmatprep.subr.mxu0 0.0
        %4503 = vmatpush1.msra.mxu0 0.0
        %4504 = vmatprep.subr.mxu0 0.0
        %4505 = vmatpush1.msra.mxu0 0.0
        %4506 = vmatprep.subr.mxu0 0.0
        %4507 = vmatpush1.msra.mxu0 %v4489
        %4508 = vmatprep.subr.mxu0 0.0
        %4509 = vmatpush1.msra.mxu0 %v4488
        %4510 = vmatprep.subr.mxu0 0.0
        %4511 = vmatpush1.msra.mxu0 %v4487
        %4512 = vmatprep.subr.mxu0 0.0
        %4513 = vmatpush1.msra.mxu0 %v4486
        %4514 = vmatprep.subr.mxu0 0.0
        %4515 = vmatpush1.msra.mxu0 %v4485
        %4516 = vmatprep.subr.mxu0 0.0
        %4517 = vmatpush1.msra.mxu0 %v4484
        %4518 = vmatprep.subr.mxu0 0.0
        %4519 = vmatpush1.msra.mxu0 %v4483
        %4520 = vmatprep.subr.mxu0 0.0
        %4521 = vmatpush1.msra.mxu0 %v4482
        %4522 = vmatprep.subr.mxu0 0.0
        %4523 = vmatpush2.msra.mxu0 0.0
        %4524 = vmatprep.subr.mxu0 0.0
        %4525 = vmatpush2.msra.mxu0 0.0
        %4526 = vmatprep.subr.mxu0 0.0
        %4527 = vmatpush2.msra.mxu0 0.0
        %4528 = vmatprep.subr.mxu0 0.0
        %4529 = vmatpush2.msra.mxu0 0.0
        %4530 = vmatprep.subr.mxu0 0.0
        %4531 = vmatpush2.msra.mxu0 0.0
        %4532 = vmatprep.subr.mxu0 0.0
        %4533 = vmatpush2.msra.mxu0 0.0
        %4534 = vmatprep.subr.mxu0 0.0
        %4535 = vmatpush2.msra.mxu0 0.0
        %4536 = vmatprep.subr.mxu0 0.0
        %4537 = vmatpush2.msra.mxu0 0.0
        %4538 = vmatprep.subr.mxu0 0.0
        %4539 = vmatpush2.msra.mxu0 0.0
        %4540 = vmatprep.subr.mxu0 0.0
        %4541 = vmatpush2.msra.mxu0 0.0
        %4542 = vmatprep.subr.mxu0 0.0
        %4543 = vmatpush2.msra.mxu0 0.0
        %4544 = vmatprep.subr.mxu0 0.0
        %4545 = vmatpush2.msra.mxu0 0.0
        %4546 = vmatprep.subr.mxu0 0.0
        %4547 = vmatpush2.msra.mxu0 0.0
        %4548 = vmatprep.subr.mxu0 0.0
        %4549 = vmatpush2.msra.mxu0 0.0
        %4550 = vmatprep.subr.mxu0 0.0
        %4551 = vmatpush2.msra.mxu0 0.0
        %4552 = vmatprep.subr.mxu0 0.0
        %4553 = vmatpush2.msra.mxu0 0.0
        %4554 = vmatprep.mubr.f32.mxu0 0.0
        %4555 = vmatmul.mubr.f32.gmra.mxu0 %v2815
        %v4556 = vpop.f32.mrf.mxu0
        %v4557 = vadd.f32 0.0, %v4556
        %v4558 = vpop.f32.mrf.mxu0
        %4559 = vmatprep.mubr.f32.mxu0 0.0
        %4560 = vmatmul.mubr.f32.gmra.mxu0 %v2818
        %v4561 = vpop.f32.mrf.mxu0
        %v4562 = vadd.f32 0.0, %v4561
        %v4563 = vpop.f32.mrf.mxu0
        %4564 = vmatprep.mubr.f32.mxu0 0.0
        %4565 = vmatmul.mubr.f32.gmra.mxu0 %v2821
        %v4566 = vpop.f32.mrf.mxu0
        %v4567 = vadd.f32 0.0, %v4566
        %v4568 = vpop.f32.mrf.mxu0
        %4569 = vmatprep.mubr.f32.mxu0 0.0
        %4570 = vmatmul.mubr.f32.gmra.mxu0 %v2824
        %v4571 = vpop.f32.mrf.mxu0
        %v4572 = vadd.f32 0.0, %v4571
        %v4573 = vpop.f32.mrf.mxu0
        %4574 = vdwg.mxu0
        %s4575 = scalar_lea.vmem [#allocation11], 448
        %v4576 = vld [vmem:[%s4575] sm:$0xff]
        %v4577 = vld [vmem:[%s4575 + $0x8] sm:$0xff]
        %v4578 = vld [vmem:[%s4575 + $0x10] sm:$0xff]
        %v4579 = vld [vmem:[%s4575 + $0x18] sm:$0xff]
        %v4580 = vld [vmem:[%s4575 + $0x20] sm:$0xff]
        %v4581 = vld [vmem:[%s4575 + $0x28] sm:$0xff]
        %v4582 = vld [vmem:[%s4575 + $0x30] sm:$0xff]
        %v4583 = vld [vmem:[%s4575 + $0x38] sm:$0xff]
        %v4585 = vsel %vm3022, %v4576, 0
        %v4588 = vsel %vm3022, %v4577, 0
        %v4591 = vsel %vm3022, %v4578, 0
        %v4594 = vsel %vm3022, %v4579, 0
        %v4597 = vsel %vm3022, %v4580, 0
        %v4600 = vsel %vm3022, %v4581, 0
        %v4603 = vsel %vm3022, %v4582, 0
        %v4606 = vsel %vm3022, %v4583, 0
        %4608 = vmatprep.subr.mxu0 0.0
        %4609 = vmatpush1.msra.mxu0 0.0
        %4610 = vmatprep.subr.mxu0 0.0
        %4611 = vmatpush1.msra.mxu0 0.0
        %4612 = vmatprep.subr.mxu0 0.0
        %4613 = vmatpush1.msra.mxu0 0.0
        %4614 = vmatprep.subr.mxu0 0.0
        %4615 = vmatpush1.msra.mxu0 0.0
        %4616 = vmatprep.subr.mxu0 0.0
        %4617 = vmatpush1.msra.mxu0 0.0
        %4618 = vmatprep.subr.mxu0 0.0
        %4619 = vmatpush1.msra.mxu0 0.0
        %4620 = vmatprep.subr.mxu0 0.0
        %4621 = vmatpush1.msra.mxu0 0.0
        %4622 = vmatprep.subr.mxu0 0.0
        %4623 = vmatpush1.msra.mxu0 0.0
        %4624 = vmatprep.subr.mxu0 0.0
        %4625 = vmatpush1.msra.mxu0 0.0
        %4626 = vmatprep.subr.mxu0 0.0
        %4627 = vmatpush1.msra.mxu0 0.0
        %4628 = vmatprep.subr.mxu0 0.0
        %4629 = vmatpush1.msra.mxu0 0.0
        %4630 = vmatprep.subr.mxu0 0.0
        %4631 = vmatpush1.msra.mxu0 0.0
        %4632 = vmatprep.subr.mxu0 0.0
        %4633 = vmatpush1.msra.mxu0 %v4572
        %4634 = vmatprep.subr.mxu0 0.0
        %4635 = vmatpush1.msra.mxu0 %v4567
        %4636 = vmatprep.subr.mxu0 0.0
        %4637 = vmatpush1.msra.mxu0 %v4562
        %4638 = vmatprep.subr.mxu0 0.0
        %4639 = vmatpush1.msra.mxu0 %v4557
        %4640 = vmatprep.subr.mxu0 0.0
        %4641 = vmatpush2.msra.mxu0 0.0
        %4642 = vmatprep.subr.mxu0 0.0
        %4643 = vmatpush2.msra.mxu0 0.0
        %4644 = vmatprep.subr.mxu0 0.0
        %4645 = vmatpush2.msra.mxu0 0.0
        %4646 = vmatprep.subr.mxu0 0.0
        %4647 = vmatpush2.msra.mxu0 0.0
        %4648 = vmatprep.subr.mxu0 0.0
        %4649 = vmatpush2.msra.mxu0 0.0
        %4650 = vmatprep.subr.mxu0 0.0
        %4651 = vmatpush2.msra.mxu0 0.0
        %4652 = vmatprep.subr.mxu0 0.0
        %4653 = vmatpush2.msra.mxu0 0.0
        %4654 = vmatprep.subr.mxu0 0.0
        %4655 = vmatpush2.msra.mxu0 0.0
        %4656 = vmatprep.subr.mxu0 0.0
        %4657 = vmatpush2.msra.mxu0 0.0
        %4658 = vmatprep.subr.mxu0 0.0
        %4659 = vmatpush2.msra.mxu0 0.0
        %4660 = vmatprep.subr.mxu0 0.0
        %4661 = vmatpush2.msra.mxu0 0.0
        %4662 = vmatprep.subr.mxu0 0.0
        %4663 = vmatpush2.msra.mxu0 0.0
        %4664 = vmatprep.subr.mxu0 0.0
        %4665 = vmatpush2.msra.mxu0 0.0
        %4666 = vmatprep.subr.mxu0 0.0
        %4667 = vmatpush2.msra.mxu0 0.0
        %4668 = vmatprep.subr.mxu0 0.0
        %4669 = vmatpush2.msra.mxu0 0.0
        %4670 = vmatprep.subr.mxu0 0.0
        %4671 = vmatpush2.msra.mxu0 0.0
        %4672 = vmatprep.mubr.f32.mxu0 0.0
        %4673 = vmatmul.mubr.f32.gmra.mxu0 %v4585
        %v4674 = vpop.f32.mrf.mxu0
        %v4675 = vadd.f32 0.0, %v4674
        %v4676 = vpop.f32.mrf.mxu0
        %4677 = vmatprep.mubr.f32.mxu0 0.0
        %4678 = vmatmul.mubr.f32.gmra.mxu0 %v4588
        %v4679 = vpop.f32.mrf.mxu0
        %v4680 = vadd.f32 0.0, %v4679
        %v4681 = vpop.f32.mrf.mxu0
        %4682 = vmatprep.mubr.f32.mxu0 0.0
        %4683 = vmatmul.mubr.f32.gmra.mxu0 %v4591
        %v4684 = vpop.f32.mrf.mxu0
        %v4685 = vadd.f32 0.0, %v4684
        %v4686 = vpop.f32.mrf.mxu0
        %4687 = vmatprep.mubr.f32.mxu0 0.0
        %4688 = vmatmul.mubr.f32.gmra.mxu0 %v4594
        %v4689 = vpop.f32.mrf.mxu0
        %v4690 = vadd.f32 0.0, %v4689
        %v4691 = vpop.f32.mrf.mxu0
        %4692 = vmatprep.mubr.f32.mxu0 0.0
        %4693 = vmatmul.mubr.f32.gmra.mxu0 %v4597
        %v4694 = vpop.f32.mrf.mxu0
        %v4695 = vadd.f32 0.0, %v4694
        %v4696 = vpop.f32.mrf.mxu0
        %4697 = vmatprep.mubr.f32.mxu0 0.0
        %4698 = vmatmul.mubr.f32.gmra.mxu0 %v4600
        %v4699 = vpop.f32.mrf.mxu0
        %v4700 = vadd.f32 0.0, %v4699
        %v4701 = vpop.f32.mrf.mxu0
        %4702 = vmatprep.mubr.f32.mxu0 0.0
        %4703 = vmatmul.mubr.f32.gmra.mxu0 %v4603
        %v4704 = vpop.f32.mrf.mxu0
        %v4705 = vadd.f32 0.0, %v4704
        %v4706 = vpop.f32.mrf.mxu0
        %4707 = vmatprep.mubr.f32.mxu0 0.0
        %4708 = vmatmul.mubr.f32.gmra.mxu0 %v4606
        %v4709 = vpop.f32.mrf.mxu0
        %v4710 = vadd.f32 0.0, %v4709
        %v4711 = vpop.f32.mrf.mxu0
        %4712 = vdwg.mxu0
        %v4713 = vadd.f32 %v4473, %v4675
        %v4714 = vadd.f32 %v4474, %v4680
        %v4715 = vadd.f32 %v4475, %v4685
        %v4716 = vadd.f32 %v4476, %v4690
        %v4717 = vadd.f32 %v4477, %v4695
        %v4718 = vadd.f32 %v4478, %v4700
        %v4719 = vadd.f32 %v4479, %v4705
        %v4720 = vadd.f32 %v4480, %v4710
        %s4721 = scalar_lea.vmem [#allocation14], 512
        %v4722 = vld [vmem:[%s4721] sm:$0xff]
        %v4723 = vld [vmem:[%s4721 + $0x8] sm:$0xff]
        %v4724 = vld [vmem:[%s4721 + $0x10] sm:$0xff]
        %v4725 = vld [vmem:[%s4721 + $0x18] sm:$0xff]
        %v4726 = vld [vmem:[%s4721 + $0x20] sm:$0xff]
        %v4727 = vld [vmem:[%s4721 + $0x28] sm:$0xff]
        %v4728 = vld [vmem:[%s4721 + $0x30] sm:$0xff]
        %v4729 = vld [vmem:[%s4721 + $0x38] sm:$0xff]
        %4730 = vmatprep.subr.mxu0 0.0
        %4731 = vmatpush1.msra.mxu0 0.0
        %4732 = vmatprep.subr.mxu0 0.0
        %4733 = vmatpush1.msra.mxu0 0.0
        %4734 = vmatprep.subr.mxu0 0.0
        %4735 = vmatpush1.msra.mxu0 0.0
        %4736 = vmatprep.subr.mxu0 0.0
        %4737 = vmatpush1.msra.mxu0 0.0
        %4738 = vmatprep.subr.mxu0 0.0
        %4739 = vmatpush1.msra.mxu0 0.0
        %4740 = vmatprep.subr.mxu0 0.0
        %4741 = vmatpush1.msra.mxu0 0.0
        %4742 = vmatprep.subr.mxu0 0.0
        %4743 = vmatpush1.msra.mxu0 0.0
        %4744 = vmatprep.subr.mxu0 0.0
        %4745 = vmatpush1.msra.mxu0 0.0
        %4746 = vmatprep.subr.mxu0 0.0
        %4747 = vmatpush1.msra.mxu0 %v4729
        %4748 = vmatprep.subr.mxu0 0.0
        %4749 = vmatpush1.msra.mxu0 %v4728
        %4750 = vmatprep.subr.mxu0 0.0
        %4751 = vmatpush1.msra.mxu0 %v4727
        %4752 = vmatprep.subr.mxu0 0.0
        %4753 = vmatpush1.msra.mxu0 %v4726
        %4754 = vmatprep.subr.mxu0 0.0
        %4755 = vmatpush1.msra.mxu0 %v4725
        %4756 = vmatprep.subr.mxu0 0.0
        %4757 = vmatpush1.msra.mxu0 %v4724
        %4758 = vmatprep.subr.mxu0 0.0
        %4759 = vmatpush1.msra.mxu0 %v4723
        %4760 = vmatprep.subr.mxu0 0.0
        %4761 = vmatpush1.msra.mxu0 %v4722
        %4762 = vmatprep.subr.mxu0 0.0
        %4763 = vmatpush2.msra.mxu0 0.0
        %4764 = vmatprep.subr.mxu0 0.0
        %4765 = vmatpush2.msra.mxu0 0.0
        %4766 = vmatprep.subr.mxu0 0.0
        %4767 = vmatpush2.msra.mxu0 0.0
        %4768 = vmatprep.subr.mxu0 0.0
        %4769 = vmatpush2.msra.mxu0 0.0
        %4770 = vmatprep.subr.mxu0 0.0
        %4771 = vmatpush2.msra.mxu0 0.0
        %4772 = vmatprep.subr.mxu0 0.0
        %4773 = vmatpush2.msra.mxu0 0.0
        %4774 = vmatprep.subr.mxu0 0.0
        %4775 = vmatpush2.msra.mxu0 0.0
        %4776 = vmatprep.subr.mxu0 0.0
        %4777 = vmatpush2.msra.mxu0 0.0
        %4778 = vmatprep.subr.mxu0 0.0
        %4779 = vmatpush2.msra.mxu0 0.0
        %4780 = vmatprep.subr.mxu0 0.0
        %4781 = vmatpush2.msra.mxu0 0.0
        %4782 = vmatprep.subr.mxu0 0.0
        %4783 = vmatpush2.msra.mxu0 0.0
        %4784 = vmatprep.subr.mxu0 0.0
        %4785 = vmatpush2.msra.mxu0 0.0
        %4786 = vmatprep.subr.mxu0 0.0
        %4787 = vmatpush2.msra.mxu0 0.0
        %4788 = vmatprep.subr.mxu0 0.0
        %4789 = vmatpush2.msra.mxu0 0.0
        %4790 = vmatprep.subr.mxu0 0.0
        %4791 = vmatpush2.msra.mxu0 0.0
        %4792 = vmatprep.subr.mxu0 0.0
        %4793 = vmatpush2.msra.mxu0 0.0
        %4794 = vmatprep.mubr.f32.mxu0 0.0
        %4795 = vmatmul.mubr.f32.gmra.mxu0 %v2815
        %v4796 = vpop.f32.mrf.mxu0
        %v4797 = vadd.f32 0.0, %v4796
        %v4798 = vpop.f32.mrf.mxu0
        %4799 = vmatprep.mubr.f32.mxu0 0.0
        %4800 = vmatmul.mubr.f32.gmra.mxu0 %v2818
        %v4801 = vpop.f32.mrf.mxu0
        %v4802 = vadd.f32 0.0, %v4801
        %v4803 = vpop.f32.mrf.mxu0
        %4804 = vmatprep.mubr.f32.mxu0 0.0
        %4805 = vmatmul.mubr.f32.gmra.mxu0 %v2821
        %v4806 = vpop.f32.mrf.mxu0
        %v4807 = vadd.f32 0.0, %v4806
        %v4808 = vpop.f32.mrf.mxu0
        %4809 = vmatprep.mubr.f32.mxu0 0.0
        %4810 = vmatmul.mubr.f32.gmra.mxu0 %v2824
        %v4811 = vpop.f32.mrf.mxu0
        %v4812 = vadd.f32 0.0, %v4811
        %v4813 = vpop.f32.mrf.mxu0
        %4814 = vdwg.mxu0
        %s4815 = scalar_lea.vmem [#allocation11], 512
        %v4816 = vld [vmem:[%s4815] sm:$0xff]
        %v4817 = vld [vmem:[%s4815 + $0x8] sm:$0xff]
        %v4818 = vld [vmem:[%s4815 + $0x10] sm:$0xff]
        %v4819 = vld [vmem:[%s4815 + $0x18] sm:$0xff]
        %v4820 = vld [vmem:[%s4815 + $0x20] sm:$0xff]
        %v4821 = vld [vmem:[%s4815 + $0x28] sm:$0xff]
        %v4822 = vld [vmem:[%s4815 + $0x30] sm:$0xff]
        %v4823 = vld [vmem:[%s4815 + $0x38] sm:$0xff]
        %v4825 = vsel %vm3022, %v4816, 0
        %v4828 = vsel %vm3022, %v4817, 0
        %v4831 = vsel %vm3022, %v4818, 0
        %v4834 = vsel %vm3022, %v4819, 0
        %v4837 = vsel %vm3022, %v4820, 0
        %v4840 = vsel %vm3022, %v4821, 0
        %v4843 = vsel %vm3022, %v4822, 0
        %v4846 = vsel %vm3022, %v4823, 0
        %4848 = vmatprep.subr.mxu0 0.0
        %4849 = vmatpush1.msra.mxu0 0.0
        %4850 = vmatprep.subr.mxu0 0.0
        %4851 = vmatpush1.msra.mxu0 0.0
        %4852 = vmatprep.subr.mxu0 0.0
        %4853 = vmatpush1.msra.mxu0 0.0
        %4854 = vmatprep.subr.mxu0 0.0
        %4855 = vmatpush1.msra.mxu0 0.0
        %4856 = vmatprep.subr.mxu0 0.0
        %4857 = vmatpush1.msra.mxu0 0.0
        %4858 = vmatprep.subr.mxu0 0.0
        %4859 = vmatpush1.msra.mxu0 0.0
        %4860 = vmatprep.subr.mxu0 0.0
        %4861 = vmatpush1.msra.mxu0 0.0
        %4862 = vmatprep.subr.mxu0 0.0
        %4863 = vmatpush1.msra.mxu0 0.0
        %4864 = vmatprep.subr.mxu0 0.0
        %4865 = vmatpush1.msra.mxu0 0.0
        %4866 = vmatprep.subr.mxu0 0.0
        %4867 = vmatpush1.msra.mxu0 0.0
        %4868 = vmatprep.subr.mxu0 0.0
        %4869 = vmatpush1.msra.mxu0 0.0
        %4870 = vmatprep.subr.mxu0 0.0
        %4871 = vmatpush1.msra.mxu0 0.0
        %4872 = vmatprep.subr.mxu0 0.0
        %4873 = vmatpush1.msra.mxu0 %v4812
        %4874 = vmatprep.subr.mxu0 0.0
        %4875 = vmatpush1.msra.mxu0 %v4807
        %4876 = vmatprep.subr.mxu0 0.0
        %4877 = vmatpush1.msra.mxu0 %v4802
        %4878 = vmatprep.subr.mxu0 0.0
        %4879 = vmatpush1.msra.mxu0 %v4797
        %4880 = vmatprep.subr.mxu0 0.0
        %4881 = vmatpush2.msra.mxu0 0.0
        %4882 = vmatprep.subr.mxu0 0.0
        %4883 = vmatpush2.msra.mxu0 0.0
        %4884 = vmatprep.subr.mxu0 0.0
        %4885 = vmatpush2.msra.mxu0 0.0
        %4886 = vmatprep.subr.mxu0 0.0
        %4887 = vmatpush2.msra.mxu0 0.0
        %4888 = vmatprep.subr.mxu0 0.0
        %4889 = vmatpush2.msra.mxu0 0.0
        %4890 = vmatprep.subr.mxu0 0.0
        %4891 = vmatpush2.msra.mxu0 0.0
        %4892 = vmatprep.subr.mxu0 0.0
        %4893 = vmatpush2.msra.mxu0 0.0
        %4894 = vmatprep.subr.mxu0 0.0
        %4895 = vmatpush2.msra.mxu0 0.0
        %4896 = vmatprep.subr.mxu0 0.0
        %4897 = vmatpush2.msra.mxu0 0.0
        %4898 = vmatprep.subr.mxu0 0.0
        %4899 = vmatpush2.msra.mxu0 0.0
        %4900 = vmatprep.subr.mxu0 0.0
        %4901 = vmatpush2.msra.mxu0 0.0
        %4902 = vmatprep.subr.mxu0 0.0
        %4903 = vmatpush2.msra.mxu0 0.0
        %4904 = vmatprep.subr.mxu0 0.0
        %4905 = vmatpush2.msra.mxu0 0.0
        %4906 = vmatprep.subr.mxu0 0.0
        %4907 = vmatpush2.msra.mxu0 0.0
        %4908 = vmatprep.subr.mxu0 0.0
        %4909 = vmatpush2.msra.mxu0 0.0
        %4910 = vmatprep.subr.mxu0 0.0
        %4911 = vmatpush2.msra.mxu0 0.0
        %4912 = vmatprep.mubr.f32.mxu0 0.0
        %4913 = vmatmul.mubr.f32.gmra.mxu0 %v4825
        %v4914 = vpop.f32.mrf.mxu0
        %v4915 = vadd.f32 0.0, %v4914
        %v4916 = vpop.f32.mrf.mxu0
        %4917 = vmatprep.mubr.f32.mxu0 0.0
        %4918 = vmatmul.mubr.f32.gmra.mxu0 %v4828
        %v4919 = vpop.f32.mrf.mxu0
        %v4920 = vadd.f32 0.0, %v4919
        %v4921 = vpop.f32.mrf.mxu0
        %4922 = vmatprep.mubr.f32.mxu0 0.0
        %4923 = vmatmul.mubr.f32.gmra.mxu0 %v4831
        %v4924 = vpop.f32.mrf.mxu0
        %v4925 = vadd.f32 0.0, %v4924
        %v4926 = vpop.f32.mrf.mxu0
        %4927 = vmatprep.mubr.f32.mxu0 0.0
        %4928 = vmatmul.mubr.f32.gmra.mxu0 %v4834
        %v4929 = vpop.f32.mrf.mxu0
        %v4930 = vadd.f32 0.0, %v4929
        %v4931 = vpop.f32.mrf.mxu0
        %4932 = vmatprep.mubr.f32.mxu0 0.0
        %4933 = vmatmul.mubr.f32.gmra.mxu0 %v4837
        %v4934 = vpop.f32.mrf.mxu0
        %v4935 = vadd.f32 0.0, %v4934
        %v4936 = vpop.f32.mrf.mxu0
        %4937 = vmatprep.mubr.f32.mxu0 0.0
        %4938 = vmatmul.mubr.f32.gmra.mxu0 %v4840
        %v4939 = vpop.f32.mrf.mxu0
        %v4940 = vadd.f32 0.0, %v4939
        %v4941 = vpop.f32.mrf.mxu0
        %4942 = vmatprep.mubr.f32.mxu0 0.0
        %4943 = vmatmul.mubr.f32.gmra.mxu0 %v4843
        %v4944 = vpop.f32.mrf.mxu0
        %v4945 = vadd.f32 0.0, %v4944
        %v4946 = vpop.f32.mrf.mxu0
        %4947 = vmatprep.mubr.f32.mxu0 0.0
        %4948 = vmatmul.mubr.f32.gmra.mxu0 %v4846
        %v4949 = vpop.f32.mrf.mxu0
        %v4950 = vadd.f32 0.0, %v4949
        %v4951 = vpop.f32.mrf.mxu0
        %4952 = vdwg.mxu0
        %v4953 = vadd.f32 %v4713, %v4915
        %v4954 = vadd.f32 %v4714, %v4920
        %v4955 = vadd.f32 %v4715, %v4925
        %v4956 = vadd.f32 %v4716, %v4930
        %v4957 = vadd.f32 %v4717, %v4935
        %v4958 = vadd.f32 %v4718, %v4940
        %v4959 = vadd.f32 %v4719, %v4945
        %v4960 = vadd.f32 %v4720, %v4950
        %v4961 = vld [vmem:[#allocation13] sm:$0xff]
        %v4962 = vld [vmem:[#allocation13 + $0x8] sm:$0xff]
        %v4963 = vld [vmem:[#allocation13 + $0x10] sm:$0xff]
        %v4964 = vld [vmem:[#allocation13 + $0x18] sm:$0xff]
        %v4965 = vld [vmem:[#allocation13 + $0x20] sm:$0xff]
        %v4966 = vld [vmem:[#allocation13 + $0x28] sm:$0xff]
        %v4967 = vld [vmem:[#allocation13 + $0x30] sm:$0xff]
        %v4968 = vld [vmem:[#allocation13 + $0x38] sm:$0xff]
        %4970 = vset.pattern.permute.xlu0 0
        %4971 = vperm.xlu0 %4970, %v4961
        %v4972 = vpop.permute.xlu0 %4971
        %4975 = vset.pattern.permute.xlu0 0
        %4976 = vperm.xlu0 %4975, %v4962
        %v4977 = vpop.permute.xlu0 %4976
        %4980 = vset.pattern.permute.xlu0 0
        %4981 = vperm.xlu0 %4980, %v4963
        %v4982 = vpop.permute.xlu0 %4981
        %4985 = vset.pattern.permute.xlu0 0
        %4986 = vperm.xlu0 %4985, %v4964
        %v4987 = vpop.permute.xlu0 %4986
        %4990 = vset.pattern.permute.xlu0 0
        %4991 = vperm.xlu0 %4990, %v4965
        %v4992 = vpop.permute.xlu0 %4991
        %4995 = vset.pattern.permute.xlu0 0
        %4996 = vperm.xlu0 %4995, %v4966
        %v4997 = vpop.permute.xlu0 %4996
        %5000 = vset.pattern.permute.xlu0 0
        %5001 = vperm.xlu0 %5000, %v4967
        %v5002 = vpop.permute.xlu0 %5001
        %5005 = vset.pattern.permute.xlu0 0
        %5006 = vperm.xlu0 %5005, %v4968
        %v5007 = vpop.permute.xlu0 %5006
        %v5009 = vadd.f32 %v4953, %v4972
        %v5010 = vadd.f32 %v4954, %v4977
        %v5011 = vadd.f32 %v4955, %v4982
        %v5012 = vadd.f32 %v4956, %v4987
        %v5013 = vadd.f32 %v4957, %v4992
        %v5014 = vadd.f32 %v4958, %v4997
        %v5015 = vadd.f32 %v4959, %v5002
        %v5016 = vadd.f32 %v4960, %v5007
        %v5017 = vmul.f32 %v5009, 0.2
        %v5018 = vmul.f32 %v5010, 0.2
        %v5019 = vmul.f32 %v5011, 0.2
        %v5020 = vmul.f32 %v5012, 0.2
        %v5021 = vmul.f32 %v5013, 0.2
        %v5022 = vmul.f32 %v5014, 0.2
        %v5023 = vmul.f32 %v5015, 0.2
        %v5024 = vmul.f32 %v5016, 0.2
        %v5025 = vmax.f32 %v5009, %v5017
        %v5026 = vmax.f32 %v5010, %v5018
        %v5027 = vmax.f32 %v5011, %v5019
        %v5028 = vmax.f32 %v5012, %v5020
        %v5029 = vmax.f32 %v5013, %v5021
        %v5030 = vmax.f32 %v5014, %v5022
        %v5031 = vmax.f32 %v5015, %v5023
        %v5032 = vmax.f32 %v5016, %v5024
        %v5033 = vld [vmem:[%s9] sm:$0xff]
        %v5034 = vld [vmem:[%s9 + $0x8] sm:$0xff]
        %v5035 = vld [vmem:[%s9 + $0x10] sm:$0xff]
        %v5036 = vld [vmem:[%s9 + $0x18] sm:$0xff]
        %v5037 = vld [vmem:[%s9 + $0x20] sm:$0xff]
        %v5038 = vld [vmem:[%s9 + $0x28] sm:$0xff]
        %v5039 = vld [vmem:[%s9 + $0x30] sm:$0xff]
        %v5040 = vld [vmem:[%s9 + $0x38] sm:$0xff]
        %5042 = vset.pattern.permute.xlu0 0
        %5043 = vperm.xlu0 %5042, %v5033
        %v5044 = vpop.permute.xlu0 %5043
        %5047 = vset.pattern.permute.xlu0 0
        %5048 = vperm.xlu0 %5047, %v5034
        %v5049 = vpop.permute.xlu0 %5048
        %5052 = vset.pattern.permute.xlu0 0
        %5053 = vperm.xlu0 %5052, %v5035
        %v5054 = vpop.permute.xlu0 %5053
        %5057 = vset.pattern.permute.xlu0 0
        %5058 = vperm.xlu0 %5057, %v5036
        %v5059 = vpop.permute.xlu0 %5058
        %5062 = vset.pattern.permute.xlu0 0
        %5063 = vperm.xlu0 %5062, %v5037
        %v5064 = vpop.permute.xlu0 %5063
        %5067 = vset.pattern.permute.xlu0 0
        %5068 = vperm.xlu0 %5067, %v5038
        %v5069 = vpop.permute.xlu0 %5068
        %5072 = vset.pattern.permute.xlu0 0
        %5073 = vperm.xlu0 %5072, %v5039
        %v5074 = vpop.permute.xlu0 %5073
        %5077 = vset.pattern.permute.xlu0 0
        %5078 = vperm.xlu0 %5077, %v5040
        %v5079 = vpop.permute.xlu0 %5078
        %v5081 = vadd.f32 %v5025, %v5044
        %v5082 = vadd.f32 %v5026, %v5049
        %v5083 = vadd.f32 %v5027, %v5054
        %v5084 = vadd.f32 %v5028, %v5059
        %v5085 = vadd.f32 %v5029, %v5064
        %v5086 = vadd.f32 %v5030, %v5069
        %v5087 = vadd.f32 %v5031, %v5074
        %v5088 = vadd.f32 %v5032, %v5079
        %v5089 = vld [vmem:[#allocation17] sm:$0xff]
        %v5090 = vld [vmem:[#allocation17 + $0x8] sm:$0xff]
        %v5092 = vsel %vm1048, %v5081, 0
        %v5095 = vsel %vm1048, %v5082, 0
        %v5098 = vsel %vm1048, %v5083, 0
        %v5101 = vsel %vm1048, %v5084, 0
        %v5104 = vsel %vm1048, %v5085, 0
        %v5107 = vsel %vm1048, %v5086, 0
        %v5110 = vsel %vm1048, %v5087, 0
        %v5113 = vsel %vm1048, %v5088, 0
        %5115 = vmatprep.subr.mxu0 0.0
        %5116 = vmatpush1.msra.mxu0 0.0
        %5117 = vmatprep.subr.mxu0 0.0
        %5118 = vmatpush1.msra.mxu0 0.0
        %5119 = vmatprep.subr.mxu0 0.0
        %5120 = vmatpush1.msra.mxu0 0.0
        %5121 = vmatprep.subr.mxu0 0.0
        %5122 = vmatpush1.msra.mxu0 0.0
        %5123 = vmatprep.subr.mxu0 0.0
        %5124 = vmatpush1.msra.mxu0 0.0
        %5125 = vmatprep.subr.mxu0 0.0
        %5126 = vmatpush1.msra.mxu0 0.0
        %5127 = vmatprep.subr.mxu0 0.0
        %5128 = vmatpush1.msra.mxu0 0.0
        %5129 = vmatprep.subr.mxu0 0.0
        %5130 = vmatpush1.msra.mxu0 0.0
        %5131 = vmatprep.subr.mxu0 0.0
        %5132 = vmatpush1.msra.mxu0 0.0
        %5133 = vmatprep.subr.mxu0 0.0
        %5134 = vmatpush1.msra.mxu0 0.0
        %5135 = vmatprep.subr.mxu0 0.0
        %5136 = vmatpush1.msra.mxu0 0.0
        %5137 = vmatprep.subr.mxu0 0.0
        %5138 = vmatpush1.msra.mxu0 0.0
        %5139 = vmatprep.subr.mxu0 0.0
        %5140 = vmatpush1.msra.mxu0 0.0
        %5141 = vmatprep.subr.mxu0 0.0
        %5142 = vmatpush1.msra.mxu0 0.0
        %5143 = vmatprep.subr.mxu0 0.0
        %5144 = vmatpush1.msra.mxu0 %v5090
        %5145 = vmatprep.subr.mxu0 0.0
        %5146 = vmatpush1.msra.mxu0 %v5089
        %5147 = vmatprep.subr.mxu0 0.0
        %5148 = vmatpush2.msra.mxu0 0.0
        %5149 = vmatprep.subr.mxu0 0.0
        %5150 = vmatpush2.msra.mxu0 0.0
        %5151 = vmatprep.subr.mxu0 0.0
        %5152 = vmatpush2.msra.mxu0 0.0
        %5153 = vmatprep.subr.mxu0 0.0
        %5154 = vmatpush2.msra.mxu0 0.0
        %5155 = vmatprep.subr.mxu0 0.0
        %5156 = vmatpush2.msra.mxu0 0.0
        %5157 = vmatprep.subr.mxu0 0.0
        %5158 = vmatpush2.msra.mxu0 0.0
        %5159 = vmatprep.subr.mxu0 0.0
        %5160 = vmatpush2.msra.mxu0 0.0
        %5161 = vmatprep.subr.mxu0 0.0
        %5162 = vmatpush2.msra.mxu0 0.0
        %5163 = vmatprep.subr.mxu0 0.0
        %5164 = vmatpush2.msra.mxu0 0.0
        %5165 = vmatprep.subr.mxu0 0.0
        %5166 = vmatpush2.msra.mxu0 0.0
        %5167 = vmatprep.subr.mxu0 0.0
        %5168 = vmatpush2.msra.mxu0 0.0
        %5169 = vmatprep.subr.mxu0 0.0
        %5170 = vmatpush2.msra.mxu0 0.0
        %5171 = vmatprep.subr.mxu0 0.0
        %5172 = vmatpush2.msra.mxu0 0.0
        %5173 = vmatprep.subr.mxu0 0.0
        %5174 = vmatpush2.msra.mxu0 0.0
        %5175 = vmatprep.subr.mxu0 0.0
        %5176 = vmatpush2.msra.mxu0 0.0
        %5177 = vmatprep.subr.mxu0 0.0
        %5178 = vmatpush2.msra.mxu0 0.0
        %5179 = vmatprep.mubr.f32.mxu0 0.0
        %5180 = vmatmul.mubr.f32.gmra.mxu0 %v5092
        %v5181 = vpop.f32.mrf.mxu0
        %v5182 = vadd.f32 0.0, %v5181
        %v5183 = vpop.f32.mrf.mxu0
        %5184 = vmatprep.mubr.f32.mxu0 0.0
        %5185 = vmatmul.mubr.f32.gmra.mxu0 %v5095
        %v5186 = vpop.f32.mrf.mxu0
        %v5187 = vadd.f32 0.0, %v5186
        %v5188 = vpop.f32.mrf.mxu0
        %5189 = vmatprep.mubr.f32.mxu0 0.0
        %5190 = vmatmul.mubr.f32.gmra.mxu0 %v5098
        %v5191 = vpop.f32.mrf.mxu0
        %v5192 = vadd.f32 0.0, %v5191
        %v5193 = vpop.f32.mrf.mxu0
        %5194 = vmatprep.mubr.f32.mxu0 0.0
        %5195 = vmatmul.mubr.f32.gmra.mxu0 %v5101
        %v5196 = vpop.f32.mrf.mxu0
        %v5197 = vadd.f32 0.0, %v5196
        %v5198 = vpop.f32.mrf.mxu0
        %5199 = vmatprep.mubr.f32.mxu0 0.0
        %5200 = vmatmul.mubr.f32.gmra.mxu0 %v5104
        %v5201 = vpop.f32.mrf.mxu0
        %v5202 = vadd.f32 0.0, %v5201
        %v5203 = vpop.f32.mrf.mxu0
        %5204 = vmatprep.mubr.f32.mxu0 0.0
        %5205 = vmatmul.mubr.f32.gmra.mxu0 %v5107
        %v5206 = vpop.f32.mrf.mxu0
        %v5207 = vadd.f32 0.0, %v5206
        %v5208 = vpop.f32.mrf.mxu0
        %5209 = vmatprep.mubr.f32.mxu0 0.0
        %5210 = vmatmul.mubr.f32.gmra.mxu0 %v5110
        %v5211 = vpop.f32.mrf.mxu0
        %v5212 = vadd.f32 0.0, %v5211
        %v5213 = vpop.f32.mrf.mxu0
        %5214 = vmatprep.mubr.f32.mxu0 0.0
        %5215 = vmatmul.mubr.f32.gmra.mxu0 %v5113
        %v5216 = vpop.f32.mrf.mxu0
        %v5217 = vadd.f32 0.0, %v5216
        %v5218 = vpop.f32.mrf.mxu0
        %5219 = vdwg.mxu0
        %v5220 = vld [vmem:[%s11] sm:$0xff]
        %v5221 = vld [vmem:[%s11 + $0x8] sm:$0xff]
        %v5222 = vld [vmem:[%s11 + $0x10] sm:$0xff]
        %v5223 = vld [vmem:[%s11 + $0x18] sm:$0xff]
        %v5224 = vld [vmem:[%s11 + $0x20] sm:$0xff]
        %v5225 = vld [vmem:[%s11 + $0x28] sm:$0xff]
        %v5226 = vld [vmem:[%s11 + $0x30] sm:$0xff]
        %v5227 = vld [vmem:[%s11 + $0x38] sm:$0xff]
        %v5228 = vld [vmem:[%s11 + $0x40] sm:$0xff]
        %v5229 = vld [vmem:[%s11 + $0x48] sm:$0xff]
        %v5230 = vld [vmem:[%s11 + $0x50] sm:$0xff]
        %v5231 = vld [vmem:[%s11 + $0x58] sm:$0xff]
        %v5232 = vld [vmem:[%s11 + $0x60] sm:$0xff]
        %v5233 = vld [vmem:[%s11 + $0x68] sm:$0xff]
        %v5234 = vld [vmem:[%s11 + $0x70] sm:$0xff]
        %v5235 = vld [vmem:[%s11 + $0x78] sm:$0xff]
        %s5236 = scalar_lea.vmem [#allocation17], 16
        %v5237 = vld [vmem:[%s5236] sm:$0xff]
        %v5238 = vld [vmem:[%s5236 + $0x8] sm:$0xff]
        %5239 = vmatprep.subr.mxu0 0.0
        %5240 = vmatpush1.msra.mxu0 0.0
        %5241 = vmatprep.subr.mxu0 0.0
        %5242 = vmatpush1.msra.mxu0 0.0
        %5243 = vmatprep.subr.mxu0 0.0
        %5244 = vmatpush1.msra.mxu0 0.0
        %5245 = vmatprep.subr.mxu0 0.0
        %5246 = vmatpush1.msra.mxu0 0.0
        %5247 = vmatprep.subr.mxu0 0.0
        %5248 = vmatpush1.msra.mxu0 0.0
        %5249 = vmatprep.subr.mxu0 0.0
        %5250 = vmatpush1.msra.mxu0 0.0
        %5251 = vmatprep.subr.mxu0 0.0
        %5252 = vmatpush1.msra.mxu0 0.0
        %5253 = vmatprep.subr.mxu0 0.0
        %5254 = vmatpush1.msra.mxu0 0.0
        %5255 = vmatprep.subr.mxu0 0.0
        %5256 = vmatpush1.msra.mxu0 0.0
        %5257 = vmatprep.subr.mxu0 0.0
        %5258 = vmatpush1.msra.mxu0 0.0
        %5259 = vmatprep.subr.mxu0 0.0
        %5260 = vmatpush1.msra.mxu0 0.0
        %5261 = vmatprep.subr.mxu0 0.0
        %5262 = vmatpush1.msra.mxu0 0.0
        %5263 = vmatprep.subr.mxu0 0.0
        %5264 = vmatpush1.msra.mxu0 0.0
        %5265 = vmatprep.subr.mxu0 0.0
        %5266 = vmatpush1.msra.mxu0 0.0
        %5267 = vmatprep.subr.mxu0 0.0
        %5268 = vmatpush1.msra.mxu0 %v5238
        %5269 = vmatprep.subr.mxu0 0.0
        %5270 = vmatpush1.msra.mxu0 %v5237
        %5271 = vmatprep.subr.mxu0 0.0
        %5272 = vmatpush2.msra.mxu0 0.0
        %5273 = vmatprep.subr.mxu0 0.0
        %5274 = vmatpush2.msra.mxu0 0.0
        %5275 = vmatprep.subr.mxu0 0.0
        %5276 = vmatpush2.msra.mxu0 0.0
        %5277 = vmatprep.subr.mxu0 0.0
        %5278 = vmatpush2.msra.mxu0 0.0
        %5279 = vmatprep.subr.mxu0 0.0
        %5280 = vmatpush2.msra.mxu0 0.0
        %5281 = vmatprep.subr.mxu0 0.0
        %5282 = vmatpush2.msra.mxu0 0.0
        %5283 = vmatprep.subr.mxu0 0.0
        %5284 = vmatpush2.msra.mxu0 0.0
        %5285 = vmatprep.subr.mxu0 0.0
        %5286 = vmatpush2.msra.mxu0 0.0
        %5287 = vmatprep.subr.mxu0 0.0
        %5288 = vmatpush2.msra.mxu0 0.0
        %5289 = vmatprep.subr.mxu0 0.0
        %5290 = vmatpush2.msra.mxu0 0.0
        %5291 = vmatprep.subr.mxu0 0.0
        %5292 = vmatpush2.msra.mxu0 0.0
        %5293 = vmatprep.subr.mxu0 0.0
        %5294 = vmatpush2.msra.mxu0 0.0
        %5295 = vmatprep.subr.mxu0 0.0
        %5296 = vmatpush2.msra.mxu0 0.0
        %5297 = vmatprep.subr.mxu0 0.0
        %5298 = vmatpush2.msra.mxu0 0.0
        %5299 = vmatprep.subr.mxu0 0.0
        %5300 = vmatpush2.msra.mxu0 0.0
        %5301 = vmatprep.subr.mxu0 0.0
        %5302 = vmatpush2.msra.mxu0 0.0
        %5303 = vmatprep.mubr.f32.mxu0 0.0
        %5304 = vmatmul.mubr.f32.gmra.mxu0 %v5092
        %v5305 = vpop.f32.mrf.mxu0
        %v5306 = vadd.f32 0.0, %v5305
        %v5307 = vpop.f32.mrf.mxu0
        %5308 = vmatprep.mubr.f32.mxu0 0.0
        %5309 = vmatmul.mubr.f32.gmra.mxu0 %v5095
        %v5310 = vpop.f32.mrf.mxu0
        %v5311 = vadd.f32 0.0, %v5310
        %v5312 = vpop.f32.mrf.mxu0
        %5313 = vmatprep.mubr.f32.mxu0 0.0
        %5314 = vmatmul.mubr.f32.gmra.mxu0 %v5098
        %v5315 = vpop.f32.mrf.mxu0
        %v5316 = vadd.f32 0.0, %v5315
        %v5317 = vpop.f32.mrf.mxu0
        %5318 = vmatprep.mubr.f32.mxu0 0.0
        %5319 = vmatmul.mubr.f32.gmra.mxu0 %v5101
        %v5320 = vpop.f32.mrf.mxu0
        %v5321 = vadd.f32 0.0, %v5320
        %v5322 = vpop.f32.mrf.mxu0
        %5323 = vmatprep.mubr.f32.mxu0 0.0
        %5324 = vmatmul.mubr.f32.gmra.mxu0 %v5104
        %v5325 = vpop.f32.mrf.mxu0
        %v5326 = vadd.f32 0.0, %v5325
        %v5327 = vpop.f32.mrf.mxu0
        %5328 = vmatprep.mubr.f32.mxu0 0.0
        %5329 = vmatmul.mubr.f32.gmra.mxu0 %v5107
        %v5330 = vpop.f32.mrf.mxu0
        %v5331 = vadd.f32 0.0, %v5330
        %v5332 = vpop.f32.mrf.mxu0
        %5333 = vmatprep.mubr.f32.mxu0 0.0
        %5334 = vmatmul.mubr.f32.gmra.mxu0 %v5110
        %v5335 = vpop.f32.mrf.mxu0
        %v5336 = vadd.f32 0.0, %v5335
        %v5337 = vpop.f32.mrf.mxu0
        %5338 = vmatprep.mubr.f32.mxu0 0.0
        %5339 = vmatmul.mubr.f32.gmra.mxu0 %v5113
        %v5340 = vpop.f32.mrf.mxu0
        %v5341 = vadd.f32 0.0, %v5340
        %v5342 = vpop.f32.mrf.mxu0
        %5343 = vdwg.mxu0
        %s5344 = scalar_lea.vmem %s11, 128
        %v5345 = vld [vmem:[%s5344] sm:$0xff]
        %v5346 = vld [vmem:[%s5344 + $0x8] sm:$0xff]
        %v5347 = vld [vmem:[%s5344 + $0x10] sm:$0xff]
        %v5348 = vld [vmem:[%s5344 + $0x18] sm:$0xff]
        %v5349 = vld [vmem:[%s5344 + $0x20] sm:$0xff]
        %v5350 = vld [vmem:[%s5344 + $0x28] sm:$0xff]
        %v5351 = vld [vmem:[%s5344 + $0x30] sm:$0xff]
        %v5352 = vld [vmem:[%s5344 + $0x38] sm:$0xff]
        %v5353 = vld [vmem:[%s5344 + $0x40] sm:$0xff]
        %v5354 = vld [vmem:[%s5344 + $0x48] sm:$0xff]
        %v5355 = vld [vmem:[%s5344 + $0x50] sm:$0xff]
        %v5356 = vld [vmem:[%s5344 + $0x58] sm:$0xff]
        %v5357 = vld [vmem:[%s5344 + $0x60] sm:$0xff]
        %v5358 = vld [vmem:[%s5344 + $0x68] sm:$0xff]
        %v5359 = vld [vmem:[%s5344 + $0x70] sm:$0xff]
        %v5360 = vld [vmem:[%s5344 + $0x78] sm:$0xff]
        %v5362 = vsel %vm2813, %v5345, 0
        %v5365 = vsel %vm2813, %v5346, 0
        %v5368 = vsel %vm2813, %v5347, 0
        %v5371 = vsel %vm2813, %v5348, 0
        %v5374 = vsel %vm2813, %v5349, 0
        %v5377 = vsel %vm2813, %v5350, 0
        %v5380 = vsel %vm2813, %v5351, 0
        %v5383 = vsel %vm2813, %v5352, 0
        %v5386 = vsel %vm2813, %v5353, 0
        %v5389 = vsel %vm2813, %v5354, 0
        %v5392 = vsel %vm2813, %v5355, 0
        %v5395 = vsel %vm2813, %v5356, 0
        %v5398 = vsel %vm2813, %v5357, 0
        %v5401 = vsel %vm2813, %v5358, 0
        %v5404 = vsel %vm2813, %v5359, 0
        %v5407 = vsel %vm2813, %v5360, 0
        %5409 = vmatprep.subr.mxu0 0.0
        %5410 = vmatpush1.msra.mxu0 0.0
        %5411 = vmatprep.subr.mxu0 0.0
        %5412 = vmatpush1.msra.mxu0 0.0
        %5413 = vmatprep.subr.mxu0 0.0
        %5414 = vmatpush1.msra.mxu0 0.0
        %5415 = vmatprep.subr.mxu0 0.0
        %5416 = vmatpush1.msra.mxu0 0.0
        %5417 = vmatprep.subr.mxu0 0.0
        %5418 = vmatpush1.msra.mxu0 0.0
        %5419 = vmatprep.subr.mxu0 0.0
        %5420 = vmatpush1.msra.mxu0 0.0
        %5421 = vmatprep.subr.mxu0 0.0
        %5422 = vmatpush1.msra.mxu0 0.0
        %5423 = vmatprep.subr.mxu0 0.0
        %5424 = vmatpush1.msra.mxu0 0.0
        %5425 = vmatprep.subr.mxu0 0.0
        %5426 = vmatpush1.msra.mxu0 %v5341
        %5427 = vmatprep.subr.mxu0 0.0
        %5428 = vmatpush1.msra.mxu0 %v5336
        %5429 = vmatprep.subr.mxu0 0.0
        %5430 = vmatpush1.msra.mxu0 %v5331
        %5431 = vmatprep.subr.mxu0 0.0
        %5432 = vmatpush1.msra.mxu0 %v5326
        %5433 = vmatprep.subr.mxu0 0.0
        %5434 = vmatpush1.msra.mxu0 %v5321
        %5435 = vmatprep.subr.mxu0 0.0
        %5436 = vmatpush1.msra.mxu0 %v5316
        %5437 = vmatprep.subr.mxu0 0.0
        %5438 = vmatpush1.msra.mxu0 %v5311
        %5439 = vmatprep.subr.mxu0 0.0
        %5440 = vmatpush1.msra.mxu0 %v5306
        %5441 = vmatprep.subr.mxu0 0.0
        %5442 = vmatpush2.msra.mxu0 0.0
        %5443 = vmatprep.subr.mxu0 0.0
        %5444 = vmatpush2.msra.mxu0 0.0
        %5445 = vmatprep.subr.mxu0 0.0
        %5446 = vmatpush2.msra.mxu0 0.0
        %5447 = vmatprep.subr.mxu0 0.0
        %5448 = vmatpush2.msra.mxu0 0.0
        %5449 = vmatprep.subr.mxu0 0.0
        %5450 = vmatpush2.msra.mxu0 0.0
        %5451 = vmatprep.subr.mxu0 0.0
        %5452 = vmatpush2.msra.mxu0 0.0
        %5453 = vmatprep.subr.mxu0 0.0
        %5454 = vmatpush2.msra.mxu0 0.0
        %5455 = vmatprep.subr.mxu0 0.0
        %5456 = vmatpush2.msra.mxu0 0.0
        %5457 = vmatprep.subr.mxu0 0.0
        %5458 = vmatpush2.msra.mxu0 0.0
        %5459 = vmatprep.subr.mxu0 0.0
        %5460 = vmatpush2.msra.mxu0 0.0
        %5461 = vmatprep.subr.mxu0 0.0
        %5462 = vmatpush2.msra.mxu0 0.0
        %5463 = vmatprep.subr.mxu0 0.0
        %5464 = vmatpush2.msra.mxu0 0.0
        %5465 = vmatprep.subr.mxu0 0.0
        %5466 = vmatpush2.msra.mxu0 0.0
        %5467 = vmatprep.subr.mxu0 0.0
        %5468 = vmatpush2.msra.mxu0 0.0
        %5469 = vmatprep.subr.mxu0 0.0
        %5470 = vmatpush2.msra.mxu0 0.0
        %5471 = vmatprep.subr.mxu0 0.0
        %5472 = vmatpush2.msra.mxu0 0.0
        %5473 = vmatprep.mubr.f32.mxu0 0.0
        %5474 = vmatmul.mubr.f32.gmra.mxu0 %v5362
        %v5475 = vpop.f32.mrf.mxu0
        %v5476 = vadd.f32 0.0, %v5475
        %v5477 = vpop.f32.mrf.mxu0
        %5478 = vmatprep.mubr.f32.mxu0 0.0
        %5479 = vmatmul.mubr.f32.gmra.mxu0 %v5365
        %v5480 = vpop.f32.mrf.mxu0
        %v5481 = vadd.f32 0.0, %v5480
        %v5482 = vpop.f32.mrf.mxu0
        %5483 = vmatprep.mubr.f32.mxu0 0.0
        %5484 = vmatmul.mubr.f32.gmra.mxu0 %v5368
        %v5485 = vpop.f32.mrf.mxu0
        %v5486 = vadd.f32 0.0, %v5485
        %v5487 = vpop.f32.mrf.mxu0
        %5488 = vmatprep.mubr.f32.mxu0 0.0
        %5489 = vmatmul.mubr.f32.gmra.mxu0 %v5371
        %v5490 = vpop.f32.mrf.mxu0
        %v5491 = vadd.f32 0.0, %v5490
        %v5492 = vpop.f32.mrf.mxu0
        %5493 = vmatprep.mubr.f32.mxu0 0.0
        %5494 = vmatmul.mubr.f32.gmra.mxu0 %v5374
        %v5495 = vpop.f32.mrf.mxu0
        %v5496 = vadd.f32 0.0, %v5495
        %v5497 = vpop.f32.mrf.mxu0
        %5498 = vmatprep.mubr.f32.mxu0 0.0
        %5499 = vmatmul.mubr.f32.gmra.mxu0 %v5377
        %v5500 = vpop.f32.mrf.mxu0
        %v5501 = vadd.f32 0.0, %v5500
        %v5502 = vpop.f32.mrf.mxu0
        %5503 = vmatprep.mubr.f32.mxu0 0.0
        %5504 = vmatmul.mubr.f32.gmra.mxu0 %v5380
        %v5505 = vpop.f32.mrf.mxu0
        %v5506 = vadd.f32 0.0, %v5505
        %v5507 = vpop.f32.mrf.mxu0
        %5508 = vmatprep.mubr.f32.mxu0 0.0
        %5509 = vmatmul.mubr.f32.gmra.mxu0 %v5383
        %v5510 = vpop.f32.mrf.mxu0
        %v5511 = vadd.f32 0.0, %v5510
        %v5512 = vpop.f32.mrf.mxu0
        %5513 = vmatprep.mubr.f32.mxu0 0.0
        %5514 = vmatmul.mubr.f32.gmra.mxu0 %v5386
        %v5515 = vpop.f32.mrf.mxu0
        %v5516 = vadd.f32 0.0, %v5515
        %v5517 = vpop.f32.mrf.mxu0
        %5518 = vmatprep.mubr.f32.mxu0 0.0
        %5519 = vmatmul.mubr.f32.gmra.mxu0 %v5389
        %v5520 = vpop.f32.mrf.mxu0
        %v5521 = vadd.f32 0.0, %v5520
        %v5522 = vpop.f32.mrf.mxu0
        %5523 = vmatprep.mubr.f32.mxu0 0.0
        %5524 = vmatmul.mubr.f32.gmra.mxu0 %v5392
        %v5525 = vpop.f32.mrf.mxu0
        %v5526 = vadd.f32 0.0, %v5525
        %v5527 = vpop.f32.mrf.mxu0
        %5528 = vmatprep.mubr.f32.mxu0 0.0
        %5529 = vmatmul.mubr.f32.gmra.mxu0 %v5395
        %v5530 = vpop.f32.mrf.mxu0
        %v5531 = vadd.f32 0.0, %v5530
        %v5532 = vpop.f32.mrf.mxu0
        %5533 = vmatprep.mubr.f32.mxu0 0.0
        %5534 = vmatmul.mubr.f32.gmra.mxu0 %v5398
        %v5535 = vpop.f32.mrf.mxu0
        %v5536 = vadd.f32 0.0, %v5535
        %v5537 = vpop.f32.mrf.mxu0
        %5538 = vmatprep.mubr.f32.mxu0 0.0
        %5539 = vmatmul.mubr.f32.gmra.mxu0 %v5401
        %v5540 = vpop.f32.mrf.mxu0
        %v5541 = vadd.f32 0.0, %v5540
        %v5542 = vpop.f32.mrf.mxu0
        %5543 = vmatprep.mubr.f32.mxu0 0.0
        %5544 = vmatmul.mubr.f32.gmra.mxu0 %v5404
        %v5545 = vpop.f32.mrf.mxu0
        %v5546 = vadd.f32 0.0, %v5545
        %v5547 = vpop.f32.mrf.mxu0
        %5548 = vmatprep.mubr.f32.mxu0 0.0
        %5549 = vmatmul.mubr.f32.gmra.mxu0 %v5407
        %v5550 = vpop.f32.mrf.mxu0
        %v5551 = vadd.f32 0.0, %v5550
        %v5552 = vpop.f32.mrf.mxu0
        %5553 = vdwg.mxu0
        %v5555 = vsel %vm2813, %v5220, 0
        %v5558 = vsel %vm2813, %v5221, 0
        %v5561 = vsel %vm2813, %v5222, 0
        %v5564 = vsel %vm2813, %v5223, 0
        %v5567 = vsel %vm2813, %v5224, 0
        %v5570 = vsel %vm2813, %v5225, 0
        %v5573 = vsel %vm2813, %v5226, 0
        %v5576 = vsel %vm2813, %v5227, 0
        %v5579 = vsel %vm2813, %v5228, 0
        %v5582 = vsel %vm2813, %v5229, 0
        %v5585 = vsel %vm2813, %v5230, 0
        %v5588 = vsel %vm2813, %v5231, 0
        %v5591 = vsel %vm2813, %v5232, 0
        %v5594 = vsel %vm2813, %v5233, 0
        %v5597 = vsel %vm2813, %v5234, 0
        %v5600 = vsel %vm2813, %v5235, 0
        %5602 = vmatprep.subr.mxu0 0.0
        %5603 = vmatpush1.msra.mxu0 0.0
        %5604 = vmatprep.subr.mxu0 0.0
        %5605 = vmatpush1.msra.mxu0 0.0
        %5606 = vmatprep.subr.mxu0 0.0
        %5607 = vmatpush1.msra.mxu0 0.0
        %5608 = vmatprep.subr.mxu0 0.0
        %5609 = vmatpush1.msra.mxu0 0.0
        %5610 = vmatprep.subr.mxu0 0.0
        %5611 = vmatpush1.msra.mxu0 0.0
        %5612 = vmatprep.subr.mxu0 0.0
        %5613 = vmatpush1.msra.mxu0 0.0
        %5614 = vmatprep.subr.mxu0 0.0
        %5615 = vmatpush1.msra.mxu0 0.0
        %5616 = vmatprep.subr.mxu0 0.0
        %5617 = vmatpush1.msra.mxu0 0.0
        %5618 = vmatprep.subr.mxu0 0.0
        %5619 = vmatpush1.msra.mxu0 %v5217
        %5620 = vmatprep.subr.mxu0 0.0
        %5621 = vmatpush1.msra.mxu0 %v5212
        %5622 = vmatprep.subr.mxu0 0.0
        %5623 = vmatpush1.msra.mxu0 %v5207
        %5624 = vmatprep.subr.mxu0 0.0
        %5625 = vmatpush1.msra.mxu0 %v5202
        %5626 = vmatprep.subr.mxu0 0.0
        %5627 = vmatpush1.msra.mxu0 %v5197
        %5628 = vmatprep.subr.mxu0 0.0
        %5629 = vmatpush1.msra.mxu0 %v5192
        %5630 = vmatprep.subr.mxu0 0.0
        %5631 = vmatpush1.msra.mxu0 %v5187
        %5632 = vmatprep.subr.mxu0 0.0
        %5633 = vmatpush1.msra.mxu0 %v5182
        %5634 = vmatprep.subr.mxu0 0.0
        %5635 = vmatpush2.msra.mxu0 0.0
        %5636 = vmatprep.subr.mxu0 0.0
        %5637 = vmatpush2.msra.mxu0 0.0
        %5638 = vmatprep.subr.mxu0 0.0
        %5639 = vmatpush2.msra.mxu0 0.0
        %5640 = vmatprep.subr.mxu0 0.0
        %5641 = vmatpush2.msra.mxu0 0.0
        %5642 = vmatprep.subr.mxu0 0.0
        %5643 = vmatpush2.msra.mxu0 0.0
        %5644 = vmatprep.subr.mxu0 0.0
        %5645 = vmatpush2.msra.mxu0 0.0
        %5646 = vmatprep.subr.mxu0 0.0
        %5647 = vmatpush2.msra.mxu0 0.0
        %5648 = vmatprep.subr.mxu0 0.0
        %5649 = vmatpush2.msra.mxu0 0.0
        %5650 = vmatprep.subr.mxu0 0.0
        %5651 = vmatpush2.msra.mxu0 0.0
        %5652 = vmatprep.subr.mxu0 0.0
        %5653 = vmatpush2.msra.mxu0 0.0
        %5654 = vmatprep.subr.mxu0 0.0
        %5655 = vmatpush2.msra.mxu0 0.0
        %5656 = vmatprep.subr.mxu0 0.0
        %5657 = vmatpush2.msra.mxu0 0.0
        %5658 = vmatprep.subr.mxu0 0.0
        %5659 = vmatpush2.msra.mxu0 0.0
        %5660 = vmatprep.subr.mxu0 0.0
        %5661 = vmatpush2.msra.mxu0 0.0
        %5662 = vmatprep.subr.mxu0 0.0
        %5663 = vmatpush2.msra.mxu0 0.0
        %5664 = vmatprep.subr.mxu0 0.0
        %5665 = vmatpush2.msra.mxu0 0.0
        %5666 = vmatprep.mubr.f32.mxu0 0.0
        %5667 = vmatmul.mubr.f32.gmra.mxu0 %v5555
        %v5668 = vpop.f32.mrf.mxu0
        %v5669 = vadd.f32 %v5476, %v5668
        %v5670 = vpop.f32.mrf.mxu0
        %5671 = vmatprep.mubr.f32.mxu0 0.0
        %5672 = vmatmul.mubr.f32.gmra.mxu0 %v5558
        %v5673 = vpop.f32.mrf.mxu0
        %v5674 = vadd.f32 %v5481, %v5673
        %v5675 = vpop.f32.mrf.mxu0
        %5676 = vmatprep.mubr.f32.mxu0 0.0
        %5677 = vmatmul.mubr.f32.gmra.mxu0 %v5561
        %v5678 = vpop.f32.mrf.mxu0
        %v5679 = vadd.f32 %v5486, %v5678
        %v5680 = vpop.f32.mrf.mxu0
        %5681 = vmatprep.mubr.f32.mxu0 0.0
        %5682 = vmatmul.mubr.f32.gmra.mxu0 %v5564
        %v5683 = vpop.f32.mrf.mxu0
        %v5684 = vadd.f32 %v5491, %v5683
        %v5685 = vpop.f32.mrf.mxu0
        %5686 = vmatprep.mubr.f32.mxu0 0.0
        %5687 = vmatmul.mubr.f32.gmra.mxu0 %v5567
        %v5688 = vpop.f32.mrf.mxu0
        %v5689 = vadd.f32 %v5496, %v5688
        %v5690 = vpop.f32.mrf.mxu0
        %5691 = vmatprep.mubr.f32.mxu0 0.0
        %5692 = vmatmul.mubr.f32.gmra.mxu0 %v5570
        %v5693 = vpop.f32.mrf.mxu0
        %v5694 = vadd.f32 %v5501, %v5693
        %v5695 = vpop.f32.mrf.mxu0
        %5696 = vmatprep.mubr.f32.mxu0 0.0
        %5697 = vmatmul.mubr.f32.gmra.mxu0 %v5573
        %v5698 = vpop.f32.mrf.mxu0
        %v5699 = vadd.f32 %v5506, %v5698
        %v5700 = vpop.f32.mrf.mxu0
        %5701 = vmatprep.mubr.f32.mxu0 0.0
        %5702 = vmatmul.mubr.f32.gmra.mxu0 %v5576
        %v5703 = vpop.f32.mrf.mxu0
        %v5704 = vadd.f32 %v5511, %v5703
        %v5705 = vpop.f32.mrf.mxu0
        %5706 = vmatprep.mubr.f32.mxu0 0.0
        %5707 = vmatmul.mubr.f32.gmra.mxu0 %v5579
        %v5708 = vpop.f32.mrf.mxu0
        %v5709 = vadd.f32 %v5516, %v5708
        %v5710 = vpop.f32.mrf.mxu0
        %5711 = vmatprep.mubr.f32.mxu0 0.0
        %5712 = vmatmul.mubr.f32.gmra.mxu0 %v5582
        %v5713 = vpop.f32.mrf.mxu0
        %v5714 = vadd.f32 %v5521, %v5713
        %v5715 = vpop.f32.mrf.mxu0
        %5716 = vmatprep.mubr.f32.mxu0 0.0
        %5717 = vmatmul.mubr.f32.gmra.mxu0 %v5585
        %v5718 = vpop.f32.mrf.mxu0
        %v5719 = vadd.f32 %v5526, %v5718
        %v5720 = vpop.f32.mrf.mxu0
        %5721 = vmatprep.mubr.f32.mxu0 0.0
        %5722 = vmatmul.mubr.f32.gmra.mxu0 %v5588
        %v5723 = vpop.f32.mrf.mxu0
        %v5724 = vadd.f32 %v5531, %v5723
        %v5725 = vpop.f32.mrf.mxu0
        %5726 = vmatprep.mubr.f32.mxu0 0.0
        %5727 = vmatmul.mubr.f32.gmra.mxu0 %v5591
        %v5728 = vpop.f32.mrf.mxu0
        %v5729 = vadd.f32 %v5536, %v5728
        %v5730 = vpop.f32.mrf.mxu0
        %5731 = vmatprep.mubr.f32.mxu0 0.0
        %5732 = vmatmul.mubr.f32.gmra.mxu0 %v5594
        %v5733 = vpop.f32.mrf.mxu0
        %v5734 = vadd.f32 %v5541, %v5733
        %v5735 = vpop.f32.mrf.mxu0
        %5736 = vmatprep.mubr.f32.mxu0 0.0
        %5737 = vmatmul.mubr.f32.gmra.mxu0 %v5597
        %v5738 = vpop.f32.mrf.mxu0
        %v5739 = vadd.f32 %v5546, %v5738
        %v5740 = vpop.f32.mrf.mxu0
        %5741 = vmatprep.mubr.f32.mxu0 0.0
        %5742 = vmatmul.mubr.f32.gmra.mxu0 %v5600
        %v5743 = vpop.f32.mrf.mxu0
        %v5744 = vadd.f32 %v5551, %v5743
        %v5745 = vpop.f32.mrf.mxu0
        %5746 = vdwg.mxu0
        %s5747 = scalar_lea.vmem [#allocation17], 32
        %v5748 = vld [vmem:[%s5747] sm:$0xff]
        %v5749 = vld [vmem:[%s5747 + $0x8] sm:$0xff]
        %5750 = vmatprep.subr.mxu0 0.0
        %5751 = vmatpush1.msra.mxu0 0.0
        %5752 = vmatprep.subr.mxu0 0.0
        %5753 = vmatpush1.msra.mxu0 0.0
        %5754 = vmatprep.subr.mxu0 0.0
        %5755 = vmatpush1.msra.mxu0 0.0
        %5756 = vmatprep.subr.mxu0 0.0
        %5757 = vmatpush1.msra.mxu0 0.0
        %5758 = vmatprep.subr.mxu0 0.0
        %5759 = vmatpush1.msra.mxu0 0.0
        %5760 = vmatprep.subr.mxu0 0.0
        %5761 = vmatpush1.msra.mxu0 0.0
        %5762 = vmatprep.subr.mxu0 0.0
        %5763 = vmatpush1.msra.mxu0 0.0
        %5764 = vmatprep.subr.mxu0 0.0
        %5765 = vmatpush1.msra.mxu0 0.0
        %5766 = vmatprep.subr.mxu0 0.0
        %5767 = vmatpush1.msra.mxu0 0.0
        %5768 = vmatprep.subr.mxu0 0.0
        %5769 = vmatpush1.msra.mxu0 0.0
        %5770 = vmatprep.subr.mxu0 0.0
        %5771 = vmatpush1.msra.mxu0 0.0
        %5772 = vmatprep.subr.mxu0 0.0
        %5773 = vmatpush1.msra.mxu0 0.0
        %5774 = vmatprep.subr.mxu0 0.0
        %5775 = vmatpush1.msra.mxu0 0.0
        %5776 = vmatprep.subr.mxu0 0.0
        %5777 = vmatpush1.msra.mxu0 0.0
        %5778 = vmatprep.subr.mxu0 0.0
        %5779 = vmatpush1.msra.mxu0 %v5749
        %5780 = vmatprep.subr.mxu0 0.0
        %5781 = vmatpush1.msra.mxu0 %v5748
        %5782 = vmatprep.subr.mxu0 0.0
        %5783 = vmatpush2.msra.mxu0 0.0
        %5784 = vmatprep.subr.mxu0 0.0
        %5785 = vmatpush2.msra.mxu0 0.0
        %5786 = vmatprep.subr.mxu0 0.0
        %5787 = vmatpush2.msra.mxu0 0.0
        %5788 = vmatprep.subr.mxu0 0.0
        %5789 = vmatpush2.msra.mxu0 0.0
        %5790 = vmatprep.subr.mxu0 0.0
        %5791 = vmatpush2.msra.mxu0 0.0
        %5792 = vmatprep.subr.mxu0 0.0
        %5793 = vmatpush2.msra.mxu0 0.0
        %5794 = vmatprep.subr.mxu0 0.0
        %5795 = vmatpush2.msra.mxu0 0.0
        %5796 = vmatprep.subr.mxu0 0.0
        %5797 = vmatpush2.msra.mxu0 0.0
        %5798 = vmatprep.subr.mxu0 0.0
        %5799 = vmatpush2.msra.mxu0 0.0
        %5800 = vmatprep.subr.mxu0 0.0
        %5801 = vmatpush2.msra.mxu0 0.0
        %5802 = vmatprep.subr.mxu0 0.0
        %5803 = vmatpush2.msra.mxu0 0.0
        %5804 = vmatprep.subr.mxu0 0.0
        %5805 = vmatpush2.msra.mxu0 0.0
        %5806 = vmatprep.subr.mxu0 0.0
        %5807 = vmatpush2.msra.mxu0 0.0
        %5808 = vmatprep.subr.mxu0 0.0
        %5809 = vmatpush2.msra.mxu0 0.0
        %5810 = vmatprep.subr.mxu0 0.0
        %5811 = vmatpush2.msra.mxu0 0.0
        %5812 = vmatprep.subr.mxu0 0.0
        %5813 = vmatpush2.msra.mxu0 0.0
        %5814 = vmatprep.mubr.f32.mxu0 0.0
        %5815 = vmatmul.mubr.f32.gmra.mxu0 %v5092
        %v5816 = vpop.f32.mrf.mxu0
        %v5817 = vadd.f32 0.0, %v5816
        %v5818 = vpop.f32.mrf.mxu0
        %5819 = vmatprep.mubr.f32.mxu0 0.0
        %5820 = vmatmul.mubr.f32.gmra.mxu0 %v5095
        %v5821 = vpop.f32.mrf.mxu0
        %v5822 = vadd.f32 0.0, %v5821
        %v5823 = vpop.f32.mrf.mxu0
        %5824 = vmatprep.mubr.f32.mxu0 0.0
        %5825 = vmatmul.mubr.f32.gmra.mxu0 %v5098
        %v5826 = vpop.f32.mrf.mxu0
        %v5827 = vadd.f32 0.0, %v5826
        %v5828 = vpop.f32.mrf.mxu0
        %5829 = vmatprep.mubr.f32.mxu0 0.0
        %5830 = vmatmul.mubr.f32.gmra.mxu0 %v5101
        %v5831 = vpop.f32.mrf.mxu0
        %v5832 = vadd.f32 0.0, %v5831
        %v5833 = vpop.f32.mrf.mxu0
        %5834 = vmatprep.mubr.f32.mxu0 0.0
        %5835 = vmatmul.mubr.f32.gmra.mxu0 %v5104
        %v5836 = vpop.f32.mrf.mxu0
        %v5837 = vadd.f32 0.0, %v5836
        %v5838 = vpop.f32.mrf.mxu0
        %5839 = vmatprep.mubr.f32.mxu0 0.0
        %5840 = vmatmul.mubr.f32.gmra.mxu0 %v5107
        %v5841 = vpop.f32.mrf.mxu0
        %v5842 = vadd.f32 0.0, %v5841
        %v5843 = vpop.f32.mrf.mxu0
        %5844 = vmatprep.mubr.f32.mxu0 0.0
        %5845 = vmatmul.mubr.f32.gmra.mxu0 %v5110
        %v5846 = vpop.f32.mrf.mxu0
        %v5847 = vadd.f32 0.0, %v5846
        %v5848 = vpop.f32.mrf.mxu0
        %5849 = vmatprep.mubr.f32.mxu0 0.0
        %5850 = vmatmul.mubr.f32.gmra.mxu0 %v5113
        %v5851 = vpop.f32.mrf.mxu0
        %v5852 = vadd.f32 0.0, %v5851
        %v5853 = vpop.f32.mrf.mxu0
        %5854 = vdwg.mxu0
        %s5855 = scalar_lea.vmem %s11, 256
        %v5856 = vld [vmem:[%s5855] sm:$0xff]
        %v5857 = vld [vmem:[%s5855 + $0x8] sm:$0xff]
        %v5858 = vld [vmem:[%s5855 + $0x10] sm:$0xff]
        %v5859 = vld [vmem:[%s5855 + $0x18] sm:$0xff]
        %v5860 = vld [vmem:[%s5855 + $0x20] sm:$0xff]
        %v5861 = vld [vmem:[%s5855 + $0x28] sm:$0xff]
        %v5862 = vld [vmem:[%s5855 + $0x30] sm:$0xff]
        %v5863 = vld [vmem:[%s5855 + $0x38] sm:$0xff]
        %v5864 = vld [vmem:[%s5855 + $0x40] sm:$0xff]
        %v5865 = vld [vmem:[%s5855 + $0x48] sm:$0xff]
        %v5866 = vld [vmem:[%s5855 + $0x50] sm:$0xff]
        %v5867 = vld [vmem:[%s5855 + $0x58] sm:$0xff]
        %v5868 = vld [vmem:[%s5855 + $0x60] sm:$0xff]
        %v5869 = vld [vmem:[%s5855 + $0x68] sm:$0xff]
        %v5870 = vld [vmem:[%s5855 + $0x70] sm:$0xff]
        %v5871 = vld [vmem:[%s5855 + $0x78] sm:$0xff]
        %v5873 = vsel %vm2813, %v5856, 0
        %v5876 = vsel %vm2813, %v5857, 0
        %v5879 = vsel %vm2813, %v5858, 0
        %v5882 = vsel %vm2813, %v5859, 0
        %v5885 = vsel %vm2813, %v5860, 0
        %v5888 = vsel %vm2813, %v5861, 0
        %v5891 = vsel %vm2813, %v5862, 0
        %v5894 = vsel %vm2813, %v5863, 0
        %v5897 = vsel %vm2813, %v5864, 0
        %v5900 = vsel %vm2813, %v5865, 0
        %v5903 = vsel %vm2813, %v5866, 0
        %v5906 = vsel %vm2813, %v5867, 0
        %v5909 = vsel %vm2813, %v5868, 0
        %v5912 = vsel %vm2813, %v5869, 0
        %v5915 = vsel %vm2813, %v5870, 0
        %v5918 = vsel %vm2813, %v5871, 0
        %5920 = vmatprep.subr.mxu0 0.0
        %5921 = vmatpush1.msra.mxu0 0.0
        %5922 = vmatprep.subr.mxu0 0.0
        %5923 = vmatpush1.msra.mxu0 0.0
        %5924 = vmatprep.subr.mxu0 0.0
        %5925 = vmatpush1.msra.mxu0 0.0
        %5926 = vmatprep.subr.mxu0 0.0
        %5927 = vmatpush1.msra.mxu0 0.0
        %5928 = vmatprep.subr.mxu0 0.0
        %5929 = vmatpush1.msra.mxu0 0.0
        %5930 = vmatprep.subr.mxu0 0.0
        %5931 = vmatpush1.msra.mxu0 0.0
        %5932 = vmatprep.subr.mxu0 0.0
        %5933 = vmatpush1.msra.mxu0 0.0
        %5934 = vmatprep.subr.mxu0 0.0
        %5935 = vmatpush1.msra.mxu0 0.0
        %5936 = vmatprep.subr.mxu0 0.0
        %5937 = vmatpush1.msra.mxu0 %v5852
        %5938 = vmatprep.subr.mxu0 0.0
        %5939 = vmatpush1.msra.mxu0 %v5847
        %5940 = vmatprep.subr.mxu0 0.0
        %5941 = vmatpush1.msra.mxu0 %v5842
        %5942 = vmatprep.subr.mxu0 0.0
        %5943 = vmatpush1.msra.mxu0 %v5837
        %5944 = vmatprep.subr.mxu0 0.0
        %5945 = vmatpush1.msra.mxu0 %v5832
        %5946 = vmatprep.subr.mxu0 0.0
        %5947 = vmatpush1.msra.mxu0 %v5827
        %5948 = vmatprep.subr.mxu0 0.0
        %5949 = vmatpush1.msra.mxu0 %v5822
        %5950 = vmatprep.subr.mxu0 0.0
        %5951 = vmatpush1.msra.mxu0 %v5817
        %5952 = vmatprep.subr.mxu0 0.0
        %5953 = vmatpush2.msra.mxu0 0.0
        %5954 = vmatprep.subr.mxu0 0.0
        %5955 = vmatpush2.msra.mxu0 0.0
        %5956 = vmatprep.subr.mxu0 0.0
        %5957 = vmatpush2.msra.mxu0 0.0
        %5958 = vmatprep.subr.mxu0 0.0
        %5959 = vmatpush2.msra.mxu0 0.0
        %5960 = vmatprep.subr.mxu0 0.0
        %5961 = vmatpush2.msra.mxu0 0.0
        %5962 = vmatprep.subr.mxu0 0.0
        %5963 = vmatpush2.msra.mxu0 0.0
        %5964 = vmatprep.subr.mxu0 0.0
        %5965 = vmatpush2.msra.mxu0 0.0
        %5966 = vmatprep.subr.mxu0 0.0
        %5967 = vmatpush2.msra.mxu0 0.0
        %5968 = vmatprep.subr.mxu0 0.0
        %5969 = vmatpush2.msra.mxu0 0.0
        %5970 = vmatprep.subr.mxu0 0.0
        %5971 = vmatpush2.msra.mxu0 0.0
        %5972 = vmatprep.subr.mxu0 0.0
        %5973 = vmatpush2.msra.mxu0 0.0
        %5974 = vmatprep.subr.mxu0 0.0
        %5975 = vmatpush2.msra.mxu0 0.0
        %5976 = vmatprep.subr.mxu0 0.0
        %5977 = vmatpush2.msra.mxu0 0.0
        %5978 = vmatprep.subr.mxu0 0.0
        %5979 = vmatpush2.msra.mxu0 0.0
        %5980 = vmatprep.subr.mxu0 0.0
        %5981 = vmatpush2.msra.mxu0 0.0
        %5982 = vmatprep.subr.mxu0 0.0
        %5983 = vmatpush2.msra.mxu0 0.0
        %5984 = vmatprep.mubr.f32.mxu0 0.0
        %5985 = vmatmul.mubr.f32.gmra.mxu0 %v5873
        %v5986 = vpop.f32.mrf.mxu0
        %v5987 = vadd.f32 0.0, %v5986
        %v5988 = vpop.f32.mrf.mxu0
        %5989 = vmatprep.mubr.f32.mxu0 0.0
        %5990 = vmatmul.mubr.f32.gmra.mxu0 %v5876
        %v5991 = vpop.f32.mrf.mxu0
        %v5992 = vadd.f32 0.0, %v5991
        %v5993 = vpop.f32.mrf.mxu0
        %5994 = vmatprep.mubr.f32.mxu0 0.0
        %5995 = vmatmul.mubr.f32.gmra.mxu0 %v5879
        %v5996 = vpop.f32.mrf.mxu0
        %v5997 = vadd.f32 0.0, %v5996
        %v5998 = vpop.f32.mrf.mxu0
        %5999 = vmatprep.mubr.f32.mxu0 0.0
        %6000 = vmatmul.mubr.f32.gmra.mxu0 %v5882
        %v6001 = vpop.f32.mrf.mxu0
        %v6002 = vadd.f32 0.0, %v6001
        %v6003 = vpop.f32.mrf.mxu0
        %6004 = vmatprep.mubr.f32.mxu0 0.0
        %6005 = vmatmul.mubr.f32.gmra.mxu0 %v5885
        %v6006 = vpop.f32.mrf.mxu0
        %v6007 = vadd.f32 0.0, %v6006
        %v6008 = vpop.f32.mrf.mxu0
        %6009 = vmatprep.mubr.f32.mxu0 0.0
        %6010 = vmatmul.mubr.f32.gmra.mxu0 %v5888
        %v6011 = vpop.f32.mrf.mxu0
        %v6012 = vadd.f32 0.0, %v6011
        %v6013 = vpop.f32.mrf.mxu0
        %6014 = vmatprep.mubr.f32.mxu0 0.0
        %6015 = vmatmul.mubr.f32.gmra.mxu0 %v5891
        %v6016 = vpop.f32.mrf.mxu0
        %v6017 = vadd.f32 0.0, %v6016
        %v6018 = vpop.f32.mrf.mxu0
        %6019 = vmatprep.mubr.f32.mxu0 0.0
        %6020 = vmatmul.mubr.f32.gmra.mxu0 %v5894
        %v6021 = vpop.f32.mrf.mxu0
        %v6022 = vadd.f32 0.0, %v6021
        %v6023 = vpop.f32.mrf.mxu0
        %6024 = vmatprep.mubr.f32.mxu0 0.0
        %6025 = vmatmul.mubr.f32.gmra.mxu0 %v5897
        %v6026 = vpop.f32.mrf.mxu0
        %v6027 = vadd.f32 0.0, %v6026
        %v6028 = vpop.f32.mrf.mxu0
        %6029 = vmatprep.mubr.f32.mxu0 0.0
        %6030 = vmatmul.mubr.f32.gmra.mxu0 %v5900
        %v6031 = vpop.f32.mrf.mxu0
        %v6032 = vadd.f32 0.0, %v6031
        %v6033 = vpop.f32.mrf.mxu0
        %6034 = vmatprep.mubr.f32.mxu0 0.0
        %6035 = vmatmul.mubr.f32.gmra.mxu0 %v5903
        %v6036 = vpop.f32.mrf.mxu0
        %v6037 = vadd.f32 0.0, %v6036
        %v6038 = vpop.f32.mrf.mxu0
        %6039 = vmatprep.mubr.f32.mxu0 0.0
        %6040 = vmatmul.mubr.f32.gmra.mxu0 %v5906
        %v6041 = vpop.f32.mrf.mxu0
        %v6042 = vadd.f32 0.0, %v6041
        %v6043 = vpop.f32.mrf.mxu0
        %6044 = vmatprep.mubr.f32.mxu0 0.0
        %6045 = vmatmul.mubr.f32.gmra.mxu0 %v5909
        %v6046 = vpop.f32.mrf.mxu0
        %v6047 = vadd.f32 0.0, %v6046
        %v6048 = vpop.f32.mrf.mxu0
        %6049 = vmatprep.mubr.f32.mxu0 0.0
        %6050 = vmatmul.mubr.f32.gmra.mxu0 %v5912
        %v6051 = vpop.f32.mrf.mxu0
        %v6052 = vadd.f32 0.0, %v6051
        %v6053 = vpop.f32.mrf.mxu0
        %6054 = vmatprep.mubr.f32.mxu0 0.0
        %6055 = vmatmul.mubr.f32.gmra.mxu0 %v5915
        %v6056 = vpop.f32.mrf.mxu0
        %v6057 = vadd.f32 0.0, %v6056
        %v6058 = vpop.f32.mrf.mxu0
        %6059 = vmatprep.mubr.f32.mxu0 0.0
        %6060 = vmatmul.mubr.f32.gmra.mxu0 %v5918
        %v6061 = vpop.f32.mrf.mxu0
        %v6062 = vadd.f32 0.0, %v6061
        %v6063 = vpop.f32.mrf.mxu0
        %6064 = vdwg.mxu0
        %v6065 = vadd.f32 %v5669, %v5987
        %v6066 = vadd.f32 %v5674, %v5992
        %v6067 = vadd.f32 %v5679, %v5997
        %v6068 = vadd.f32 %v5684, %v6002
        %v6069 = vadd.f32 %v5689, %v6007
        %v6070 = vadd.f32 %v5694, %v6012
        %v6071 = vadd.f32 %v5699, %v6017
        %v6072 = vadd.f32 %v5704, %v6022
        %v6073 = vadd.f32 %v5709, %v6027
        %v6074 = vadd.f32 %v5714, %v6032
        %v6075 = vadd.f32 %v5719, %v6037
        %v6076 = vadd.f32 %v5724, %v6042
        %v6077 = vadd.f32 %v5729, %v6047
        %v6078 = vadd.f32 %v5734, %v6052
        %v6079 = vadd.f32 %v5739, %v6057
        %v6080 = vadd.f32 %v5744, %v6062
        %s6081 = scalar_lea.vmem [#allocation17], 48
        %v6082 = vld [vmem:[%s6081] sm:$0xff]
        %v6083 = vld [vmem:[%s6081 + $0x8] sm:$0xff]
        %6084 = vmatprep.subr.mxu0 0.0
        %6085 = vmatpush1.msra.mxu0 0.0
        %6086 = vmatprep.subr.mxu0 0.0
        %6087 = vmatpush1.msra.mxu0 0.0
        %6088 = vmatprep.subr.mxu0 0.0
        %6089 = vmatpush1.msra.mxu0 0.0
        %6090 = vmatprep.subr.mxu0 0.0
        %6091 = vmatpush1.msra.mxu0 0.0
        %6092 = vmatprep.subr.mxu0 0.0
        %6093 = vmatpush1.msra.mxu0 0.0
        %6094 = vmatprep.subr.mxu0 0.0
        %6095 = vmatpush1.msra.mxu0 0.0
        %6096 = vmatprep.subr.mxu0 0.0
        %6097 = vmatpush1.msra.mxu0 0.0
        %6098 = vmatprep.subr.mxu0 0.0
        %6099 = vmatpush1.msra.mxu0 0.0
        %6100 = vmatprep.subr.mxu0 0.0
        %6101 = vmatpush1.msra.mxu0 0.0
        %6102 = vmatprep.subr.mxu0 0.0
        %6103 = vmatpush1.msra.mxu0 0.0
        %6104 = vmatprep.subr.mxu0 0.0
        %6105 = vmatpush1.msra.mxu0 0.0
        %6106 = vmatprep.subr.mxu0 0.0
        %6107 = vmatpush1.msra.mxu0 0.0
        %6108 = vmatprep.subr.mxu0 0.0
        %6109 = vmatpush1.msra.mxu0 0.0
        %6110 = vmatprep.subr.mxu0 0.0
        %6111 = vmatpush1.msra.mxu0 0.0
        %6112 = vmatprep.subr.mxu0 0.0
        %6113 = vmatpush1.msra.mxu0 %v6083
        %6114 = vmatprep.subr.mxu0 0.0
        %6115 = vmatpush1.msra.mxu0 %v6082
        %6116 = vmatprep.subr.mxu0 0.0
        %6117 = vmatpush2.msra.mxu0 0.0
        %6118 = vmatprep.subr.mxu0 0.0
        %6119 = vmatpush2.msra.mxu0 0.0
        %6120 = vmatprep.subr.mxu0 0.0
        %6121 = vmatpush2.msra.mxu0 0.0
        %6122 = vmatprep.subr.mxu0 0.0
        %6123 = vmatpush2.msra.mxu0 0.0
        %6124 = vmatprep.subr.mxu0 0.0
        %6125 = vmatpush2.msra.mxu0 0.0
        %6126 = vmatprep.subr.mxu0 0.0
        %6127 = vmatpush2.msra.mxu0 0.0
        %6128 = vmatprep.subr.mxu0 0.0
        %6129 = vmatpush2.msra.mxu0 0.0
        %6130 = vmatprep.subr.mxu0 0.0
        %6131 = vmatpush2.msra.mxu0 0.0
        %6132 = vmatprep.subr.mxu0 0.0
        %6133 = vmatpush2.msra.mxu0 0.0
        %6134 = vmatprep.subr.mxu0 0.0
        %6135 = vmatpush2.msra.mxu0 0.0
        %6136 = vmatprep.subr.mxu0 0.0
        %6137 = vmatpush2.msra.mxu0 0.0
        %6138 = vmatprep.subr.mxu0 0.0
        %6139 = vmatpush2.msra.mxu0 0.0
        %6140 = vmatprep.subr.mxu0 0.0
        %6141 = vmatpush2.msra.mxu0 0.0
        %6142 = vmatprep.subr.mxu0 0.0
        %6143 = vmatpush2.msra.mxu0 0.0
        %6144 = vmatprep.subr.mxu0 0.0
        %6145 = vmatpush2.msra.mxu0 0.0
        %6146 = vmatprep.subr.mxu0 0.0
        %6147 = vmatpush2.msra.mxu0 0.0
        %6148 = vmatprep.mubr.f32.mxu0 0.0
        %6149 = vmatmul.mubr.f32.gmra.mxu0 %v5092
        %v6150 = vpop.f32.mrf.mxu0
        %v6151 = vadd.f32 0.0, %v6150
        %v6152 = vpop.f32.mrf.mxu0
        %6153 = vmatprep.mubr.f32.mxu0 0.0
        %6154 = vmatmul.mubr.f32.gmra.mxu0 %v5095
        %v6155 = vpop.f32.mrf.mxu0
        %v6156 = vadd.f32 0.0, %v6155
        %v6157 = vpop.f32.mrf.mxu0
        %6158 = vmatprep.mubr.f32.mxu0 0.0
        %6159 = vmatmul.mubr.f32.gmra.mxu0 %v5098
        %v6160 = vpop.f32.mrf.mxu0
        %v6161 = vadd.f32 0.0, %v6160
        %v6162 = vpop.f32.mrf.mxu0
        %6163 = vmatprep.mubr.f32.mxu0 0.0
        %6164 = vmatmul.mubr.f32.gmra.mxu0 %v5101
        %v6165 = vpop.f32.mrf.mxu0
        %v6166 = vadd.f32 0.0, %v6165
        %v6167 = vpop.f32.mrf.mxu0
        %6168 = vmatprep.mubr.f32.mxu0 0.0
        %6169 = vmatmul.mubr.f32.gmra.mxu0 %v5104
        %v6170 = vpop.f32.mrf.mxu0
        %v6171 = vadd.f32 0.0, %v6170
        %v6172 = vpop.f32.mrf.mxu0
        %6173 = vmatprep.mubr.f32.mxu0 0.0
        %6174 = vmatmul.mubr.f32.gmra.mxu0 %v5107
        %v6175 = vpop.f32.mrf.mxu0
        %v6176 = vadd.f32 0.0, %v6175
        %v6177 = vpop.f32.mrf.mxu0
        %6178 = vmatprep.mubr.f32.mxu0 0.0
        %6179 = vmatmul.mubr.f32.gmra.mxu0 %v5110
        %v6180 = vpop.f32.mrf.mxu0
        %v6181 = vadd.f32 0.0, %v6180
        %v6182 = vpop.f32.mrf.mxu0
        %6183 = vmatprep.mubr.f32.mxu0 0.0
        %6184 = vmatmul.mubr.f32.gmra.mxu0 %v5113
        %v6185 = vpop.f32.mrf.mxu0
        %v6186 = vadd.f32 0.0, %v6185
        %v6187 = vpop.f32.mrf.mxu0
        %6188 = vdwg.mxu0
        %s6189 = scalar_lea.vmem %s11, 384
        %v6190 = vld [vmem:[%s6189] sm:$0xff]
        %v6191 = vld [vmem:[%s6189 + $0x8] sm:$0xff]
        %v6192 = vld [vmem:[%s6189 + $0x10] sm:$0xff]
        %v6193 = vld [vmem:[%s6189 + $0x18] sm:$0xff]
        %v6194 = vld [vmem:[%s6189 + $0x20] sm:$0xff]
        %v6195 = vld [vmem:[%s6189 + $0x28] sm:$0xff]
        %v6196 = vld [vmem:[%s6189 + $0x30] sm:$0xff]
        %v6197 = vld [vmem:[%s6189 + $0x38] sm:$0xff]
        %v6198 = vld [vmem:[%s6189 + $0x40] sm:$0xff]
        %v6199 = vld [vmem:[%s6189 + $0x48] sm:$0xff]
        %v6200 = vld [vmem:[%s6189 + $0x50] sm:$0xff]
        %v6201 = vld [vmem:[%s6189 + $0x58] sm:$0xff]
        %v6202 = vld [vmem:[%s6189 + $0x60] sm:$0xff]
        %v6203 = vld [vmem:[%s6189 + $0x68] sm:$0xff]
        %v6204 = vld [vmem:[%s6189 + $0x70] sm:$0xff]
        %v6205 = vld [vmem:[%s6189 + $0x78] sm:$0xff]
        %v6207 = vsel %vm2813, %v6190, 0
        %v6210 = vsel %vm2813, %v6191, 0
        %v6213 = vsel %vm2813, %v6192, 0
        %v6216 = vsel %vm2813, %v6193, 0
        %v6219 = vsel %vm2813, %v6194, 0
        %v6222 = vsel %vm2813, %v6195, 0
        %v6225 = vsel %vm2813, %v6196, 0
        %v6228 = vsel %vm2813, %v6197, 0
        %v6231 = vsel %vm2813, %v6198, 0
        %v6234 = vsel %vm2813, %v6199, 0
        %v6237 = vsel %vm2813, %v6200, 0
        %v6240 = vsel %vm2813, %v6201, 0
        %v6243 = vsel %vm2813, %v6202, 0
        %v6246 = vsel %vm2813, %v6203, 0
        %v6249 = vsel %vm2813, %v6204, 0
        %v6252 = vsel %vm2813, %v6205, 0
        %6254 = vmatprep.subr.mxu0 0.0
        %6255 = vmatpush1.msra.mxu0 0.0
        %6256 = vmatprep.subr.mxu0 0.0
        %6257 = vmatpush1.msra.mxu0 0.0
        %6258 = vmatprep.subr.mxu0 0.0
        %6259 = vmatpush1.msra.mxu0 0.0
        %6260 = vmatprep.subr.mxu0 0.0
        %6261 = vmatpush1.msra.mxu0 0.0
        %6262 = vmatprep.subr.mxu0 0.0
        %6263 = vmatpush1.msra.mxu0 0.0
        %6264 = vmatprep.subr.mxu0 0.0
        %6265 = vmatpush1.msra.mxu0 0.0
        %6266 = vmatprep.subr.mxu0 0.0
        %6267 = vmatpush1.msra.mxu0 0.0
        %6268 = vmatprep.subr.mxu0 0.0
        %6269 = vmatpush1.msra.mxu0 0.0
        %6270 = vmatprep.subr.mxu0 0.0
        %6271 = vmatpush1.msra.mxu0 %v6186
        %6272 = vmatprep.subr.mxu0 0.0
        %6273 = vmatpush1.msra.mxu0 %v6181
        %6274 = vmatprep.subr.mxu0 0.0
        %6275 = vmatpush1.msra.mxu0 %v6176
        %6276 = vmatprep.subr.mxu0 0.0
        %6277 = vmatpush1.msra.mxu0 %v6171
        %6278 = vmatprep.subr.mxu0 0.0
        %6279 = vmatpush1.msra.mxu0 %v6166
        %6280 = vmatprep.subr.mxu0 0.0
        %6281 = vmatpush1.msra.mxu0 %v6161
        %6282 = vmatprep.subr.mxu0 0.0
        %6283 = vmatpush1.msra.mxu0 %v6156
        %6284 = vmatprep.subr.mxu0 0.0
        %6285 = vmatpush1.msra.mxu0 %v6151
        %6286 = vmatprep.subr.mxu0 0.0
        %6287 = vmatpush2.msra.mxu0 0.0
        %6288 = vmatprep.subr.mxu0 0.0
        %6289 = vmatpush2.msra.mxu0 0.0
        %6290 = vmatprep.subr.mxu0 0.0
        %6291 = vmatpush2.msra.mxu0 0.0
        %6292 = vmatprep.subr.mxu0 0.0
        %6293 = vmatpush2.msra.mxu0 0.0
        %6294 = vmatprep.subr.mxu0 0.0
        %6295 = vmatpush2.msra.mxu0 0.0
        %6296 = vmatprep.subr.mxu0 0.0
        %6297 = vmatpush2.msra.mxu0 0.0
        %6298 = vmatprep.subr.mxu0 0.0
        %6299 = vmatpush2.msra.mxu0 0.0
        %6300 = vmatprep.subr.mxu0 0.0
        %6301 = vmatpush2.msra.mxu0 0.0
        %6302 = vmatprep.subr.mxu0 0.0
        %6303 = vmatpush2.msra.mxu0 0.0
        %6304 = vmatprep.subr.mxu0 0.0
        %6305 = vmatpush2.msra.mxu0 0.0
        %6306 = vmatprep.subr.mxu0 0.0
        %6307 = vmatpush2.msra.mxu0 0.0
        %6308 = vmatprep.subr.mxu0 0.0
        %6309 = vmatpush2.msra.mxu0 0.0
        %6310 = vmatprep.subr.mxu0 0.0
        %6311 = vmatpush2.msra.mxu0 0.0
        %6312 = vmatprep.subr.mxu0 0.0
        %6313 = vmatpush2.msra.mxu0 0.0
        %6314 = vmatprep.subr.mxu0 0.0
        %6315 = vmatpush2.msra.mxu0 0.0
        %6316 = vmatprep.subr.mxu0 0.0
        %6317 = vmatpush2.msra.mxu0 0.0
        %6318 = vmatprep.mubr.f32.mxu0 0.0
        %6319 = vmatmul.mubr.f32.gmra.mxu0 %v6207
        %v6320 = vpop.f32.mrf.mxu0
        %v6321 = vadd.f32 0.0, %v6320
        %v6322 = vpop.f32.mrf.mxu0
        %6323 = vmatprep.mubr.f32.mxu0 0.0
        %6324 = vmatmul.mubr.f32.gmra.mxu0 %v6210
        %v6325 = vpop.f32.mrf.mxu0
        %v6326 = vadd.f32 0.0, %v6325
        %v6327 = vpop.f32.mrf.mxu0
        %6328 = vmatprep.mubr.f32.mxu0 0.0
        %6329 = vmatmul.mubr.f32.gmra.mxu0 %v6213
        %v6330 = vpop.f32.mrf.mxu0
        %v6331 = vadd.f32 0.0, %v6330
        %v6332 = vpop.f32.mrf.mxu0
        %6333 = vmatprep.mubr.f32.mxu0 0.0
        %6334 = vmatmul.mubr.f32.gmra.mxu0 %v6216
        %v6335 = vpop.f32.mrf.mxu0
        %v6336 = vadd.f32 0.0, %v6335
        %v6337 = vpop.f32.mrf.mxu0
        %6338 = vmatprep.mubr.f32.mxu0 0.0
        %6339 = vmatmul.mubr.f32.gmra.mxu0 %v6219
        %v6340 = vpop.f32.mrf.mxu0
        %v6341 = vadd.f32 0.0, %v6340
        %v6342 = vpop.f32.mrf.mxu0
        %6343 = vmatprep.mubr.f32.mxu0 0.0
        %6344 = vmatmul.mubr.f32.gmra.mxu0 %v6222
        %v6345 = vpop.f32.mrf.mxu0
        %v6346 = vadd.f32 0.0, %v6345
        %v6347 = vpop.f32.mrf.mxu0
        %6348 = vmatprep.mubr.f32.mxu0 0.0
        %6349 = vmatmul.mubr.f32.gmra.mxu0 %v6225
        %v6350 = vpop.f32.mrf.mxu0
        %v6351 = vadd.f32 0.0, %v6350
        %v6352 = vpop.f32.mrf.mxu0
        %6353 = vmatprep.mubr.f32.mxu0 0.0
        %6354 = vmatmul.mubr.f32.gmra.mxu0 %v6228
        %v6355 = vpop.f32.mrf.mxu0
        %v6356 = vadd.f32 0.0, %v6355
        %v6357 = vpop.f32.mrf.mxu0
        %6358 = vmatprep.mubr.f32.mxu0 0.0
        %6359 = vmatmul.mubr.f32.gmra.mxu0 %v6231
        %v6360 = vpop.f32.mrf.mxu0
        %v6361 = vadd.f32 0.0, %v6360
        %v6362 = vpop.f32.mrf.mxu0
        %6363 = vmatprep.mubr.f32.mxu0 0.0
        %6364 = vmatmul.mubr.f32.gmra.mxu0 %v6234
        %v6365 = vpop.f32.mrf.mxu0
        %v6366 = vadd.f32 0.0, %v6365
        %v6367 = vpop.f32.mrf.mxu0
        %6368 = vmatprep.mubr.f32.mxu0 0.0
        %6369 = vmatmul.mubr.f32.gmra.mxu0 %v6237
        %v6370 = vpop.f32.mrf.mxu0
        %v6371 = vadd.f32 0.0, %v6370
        %v6372 = vpop.f32.mrf.mxu0
        %6373 = vmatprep.mubr.f32.mxu0 0.0
        %6374 = vmatmul.mubr.f32.gmra.mxu0 %v6240
        %v6375 = vpop.f32.mrf.mxu0
        %v6376 = vadd.f32 0.0, %v6375
        %v6377 = vpop.f32.mrf.mxu0
        %6378 = vmatprep.mubr.f32.mxu0 0.0
        %6379 = vmatmul.mubr.f32.gmra.mxu0 %v6243
        %v6380 = vpop.f32.mrf.mxu0
        %v6381 = vadd.f32 0.0, %v6380
        %v6382 = vpop.f32.mrf.mxu0
        %6383 = vmatprep.mubr.f32.mxu0 0.0
        %6384 = vmatmul.mubr.f32.gmra.mxu0 %v6246
        %v6385 = vpop.f32.mrf.mxu0
        %v6386 = vadd.f32 0.0, %v6385
        %v6387 = vpop.f32.mrf.mxu0
        %6388 = vmatprep.mubr.f32.mxu0 0.0
        %6389 = vmatmul.mubr.f32.gmra.mxu0 %v6249
        %v6390 = vpop.f32.mrf.mxu0
        %v6391 = vadd.f32 0.0, %v6390
        %v6392 = vpop.f32.mrf.mxu0
        %6393 = vmatprep.mubr.f32.mxu0 0.0
        %6394 = vmatmul.mubr.f32.gmra.mxu0 %v6252
        %v6395 = vpop.f32.mrf.mxu0
        %v6396 = vadd.f32 0.0, %v6395
        %v6397 = vpop.f32.mrf.mxu0
        %6398 = vdwg.mxu0
        %v6399 = vadd.f32 %v6065, %v6321
        %v6400 = vadd.f32 %v6066, %v6326
        %v6401 = vadd.f32 %v6067, %v6331
        %v6402 = vadd.f32 %v6068, %v6336
        %v6403 = vadd.f32 %v6069, %v6341
        %v6404 = vadd.f32 %v6070, %v6346
        %v6405 = vadd.f32 %v6071, %v6351
        %v6406 = vadd.f32 %v6072, %v6356
        %v6407 = vadd.f32 %v6073, %v6361
        %v6408 = vadd.f32 %v6074, %v6366
        %v6409 = vadd.f32 %v6075, %v6371
        %v6410 = vadd.f32 %v6076, %v6376
        %v6411 = vadd.f32 %v6077, %v6381
        %v6412 = vadd.f32 %v6078, %v6386
        %v6413 = vadd.f32 %v6079, %v6391
        %v6414 = vadd.f32 %v6080, %v6396
        %s6415 = scalar_lea.vmem [#allocation17], 64
        %v6416 = vld [vmem:[%s6415] sm:$0xff]
        %v6417 = vld [vmem:[%s6415 + $0x8] sm:$0xff]
        %6418 = vmatprep.subr.mxu0 0.0
        %6419 = vmatpush1.msra.mxu0 0.0
        %6420 = vmatprep.subr.mxu0 0.0
        %6421 = vmatpush1.msra.mxu0 0.0
        %6422 = vmatprep.subr.mxu0 0.0
        %6423 = vmatpush1.msra.mxu0 0.0
        %6424 = vmatprep.subr.mxu0 0.0
        %6425 = vmatpush1.msra.mxu0 0.0
        %6426 = vmatprep.subr.mxu0 0.0
        %6427 = vmatpush1.msra.mxu0 0.0
        %6428 = vmatprep.subr.mxu0 0.0
        %6429 = vmatpush1.msra.mxu0 0.0
        %6430 = vmatprep.subr.mxu0 0.0
        %6431 = vmatpush1.msra.mxu0 0.0
        %6432 = vmatprep.subr.mxu0 0.0
        %6433 = vmatpush1.msra.mxu0 0.0
        %6434 = vmatprep.subr.mxu0 0.0
        %6435 = vmatpush1.msra.mxu0 0.0
        %6436 = vmatprep.subr.mxu0 0.0
        %6437 = vmatpush1.msra.mxu0 0.0
        %6438 = vmatprep.subr.mxu0 0.0
        %6439 = vmatpush1.msra.mxu0 0.0
        %6440 = vmatprep.subr.mxu0 0.0
        %6441 = vmatpush1.msra.mxu0 0.0
        %6442 = vmatprep.subr.mxu0 0.0
        %6443 = vmatpush1.msra.mxu0 0.0
        %6444 = vmatprep.subr.mxu0 0.0
        %6445 = vmatpush1.msra.mxu0 0.0
        %6446 = vmatprep.subr.mxu0 0.0
        %6447 = vmatpush1.msra.mxu0 %v6417
        %6448 = vmatprep.subr.mxu0 0.0
        %6449 = vmatpush1.msra.mxu0 %v6416
        %6450 = vmatprep.subr.mxu0 0.0
        %6451 = vmatpush2.msra.mxu0 0.0
        %6452 = vmatprep.subr.mxu0 0.0
        %6453 = vmatpush2.msra.mxu0 0.0
        %6454 = vmatprep.subr.mxu0 0.0
        %6455 = vmatpush2.msra.mxu0 0.0
        %6456 = vmatprep.subr.mxu0 0.0
        %6457 = vmatpush2.msra.mxu0 0.0
        %6458 = vmatprep.subr.mxu0 0.0
        %6459 = vmatpush2.msra.mxu0 0.0
        %6460 = vmatprep.subr.mxu0 0.0
        %6461 = vmatpush2.msra.mxu0 0.0
        %6462 = vmatprep.subr.mxu0 0.0
        %6463 = vmatpush2.msra.mxu0 0.0
        %6464 = vmatprep.subr.mxu0 0.0
        %6465 = vmatpush2.msra.mxu0 0.0
        %6466 = vmatprep.subr.mxu0 0.0
        %6467 = vmatpush2.msra.mxu0 0.0
        %6468 = vmatprep.subr.mxu0 0.0
        %6469 = vmatpush2.msra.mxu0 0.0
        %6470 = vmatprep.subr.mxu0 0.0
        %6471 = vmatpush2.msra.mxu0 0.0
        %6472 = vmatprep.subr.mxu0 0.0
        %6473 = vmatpush2.msra.mxu0 0.0
        %6474 = vmatprep.subr.mxu0 0.0
        %6475 = vmatpush2.msra.mxu0 0.0
        %6476 = vmatprep.subr.mxu0 0.0
        %6477 = vmatpush2.msra.mxu0 0.0
        %6478 = vmatprep.subr.mxu0 0.0
        %6479 = vmatpush2.msra.mxu0 0.0
        %6480 = vmatprep.subr.mxu0 0.0
        %6481 = vmatpush2.msra.mxu0 0.0
        %6482 = vmatprep.mubr.f32.mxu0 0.0
        %6483 = vmatmul.mubr.f32.gmra.mxu0 %v5092
        %v6484 = vpop.f32.mrf.mxu0
        %v6485 = vadd.f32 0.0, %v6484
        %v6486 = vpop.f32.mrf.mxu0
        %6487 = vmatprep.mubr.f32.mxu0 0.0
        %6488 = vmatmul.mubr.f32.gmra.mxu0 %v5095
        %v6489 = vpop.f32.mrf.mxu0
        %v6490 = vadd.f32 0.0, %v6489
        %v6491 = vpop.f32.mrf.mxu0
        %6492 = vmatprep.mubr.f32.mxu0 0.0
        %6493 = vmatmul.mubr.f32.gmra.mxu0 %v5098
        %v6494 = vpop.f32.mrf.mxu0
        %v6495 = vadd.f32 0.0, %v6494
        %v6496 = vpop.f32.mrf.mxu0
        %6497 = vmatprep.mubr.f32.mxu0 0.0
        %6498 = vmatmul.mubr.f32.gmra.mxu0 %v5101
        %v6499 = vpop.f32.mrf.mxu0
        %v6500 = vadd.f32 0.0, %v6499
        %v6501 = vpop.f32.mrf.mxu0
        %6502 = vmatprep.mubr.f32.mxu0 0.0
        %6503 = vmatmul.mubr.f32.gmra.mxu0 %v5104
        %v6504 = vpop.f32.mrf.mxu0
        %v6505 = vadd.f32 0.0, %v6504
        %v6506 = vpop.f32.mrf.mxu0
        %6507 = vmatprep.mubr.f32.mxu0 0.0
        %6508 = vmatmul.mubr.f32.gmra.mxu0 %v5107
        %v6509 = vpop.f32.mrf.mxu0
        %v6510 = vadd.f32 0.0, %v6509
        %v6511 = vpop.f32.mrf.mxu0
        %6512 = vmatprep.mubr.f32.mxu0 0.0
        %6513 = vmatmul.mubr.f32.gmra.mxu0 %v5110
        %v6514 = vpop.f32.mrf.mxu0
        %v6515 = vadd.f32 0.0, %v6514
        %v6516 = vpop.f32.mrf.mxu0
        %6517 = vmatprep.mubr.f32.mxu0 0.0
        %6518 = vmatmul.mubr.f32.gmra.mxu0 %v5113
        %v6519 = vpop.f32.mrf.mxu0
        %v6520 = vadd.f32 0.0, %v6519
        %v6521 = vpop.f32.mrf.mxu0
        %6522 = vdwg.mxu0
        %s6523 = scalar_lea.vmem %s11, 512
        %v6524 = vld [vmem:[%s6523] sm:$0xff]
        %v6525 = vld [vmem:[%s6523 + $0x8] sm:$0xff]
        %v6526 = vld [vmem:[%s6523 + $0x10] sm:$0xff]
        %v6527 = vld [vmem:[%s6523 + $0x18] sm:$0xff]
        %v6528 = vld [vmem:[%s6523 + $0x20] sm:$0xff]
        %v6529 = vld [vmem:[%s6523 + $0x28] sm:$0xff]
        %v6530 = vld [vmem:[%s6523 + $0x30] sm:$0xff]
        %v6531 = vld [vmem:[%s6523 + $0x38] sm:$0xff]
        %v6532 = vld [vmem:[%s6523 + $0x40] sm:$0xff]
        %v6533 = vld [vmem:[%s6523 + $0x48] sm:$0xff]
        %v6534 = vld [vmem:[%s6523 + $0x50] sm:$0xff]
        %v6535 = vld [vmem:[%s6523 + $0x58] sm:$0xff]
        %v6536 = vld [vmem:[%s6523 + $0x60] sm:$0xff]
        %v6537 = vld [vmem:[%s6523 + $0x68] sm:$0xff]
        %v6538 = vld [vmem:[%s6523 + $0x70] sm:$0xff]
        %v6539 = vld [vmem:[%s6523 + $0x78] sm:$0xff]
        %v6541 = vsel %vm2813, %v6524, 0
        %v6544 = vsel %vm2813, %v6525, 0
        %v6547 = vsel %vm2813, %v6526, 0
        %v6550 = vsel %vm2813, %v6527, 0
        %v6553 = vsel %vm2813, %v6528, 0
        %v6556 = vsel %vm2813, %v6529, 0
        %v6559 = vsel %vm2813, %v6530, 0
        %v6562 = vsel %vm2813, %v6531, 0
        %v6565 = vsel %vm2813, %v6532, 0
        %v6568 = vsel %vm2813, %v6533, 0
        %v6571 = vsel %vm2813, %v6534, 0
        %v6574 = vsel %vm2813, %v6535, 0
        %v6577 = vsel %vm2813, %v6536, 0
        %v6580 = vsel %vm2813, %v6537, 0
        %v6583 = vsel %vm2813, %v6538, 0
        %v6586 = vsel %vm2813, %v6539, 0
        %6588 = vmatprep.subr.mxu0 0.0
        %6589 = vmatpush1.msra.mxu0 0.0
        %6590 = vmatprep.subr.mxu0 0.0
        %6591 = vmatpush1.msra.mxu0 0.0
        %6592 = vmatprep.subr.mxu0 0.0
        %6593 = vmatpush1.msra.mxu0 0.0
        %6594 = vmatprep.subr.mxu0 0.0
        %6595 = vmatpush1.msra.mxu0 0.0
        %6596 = vmatprep.subr.mxu0 0.0
        %6597 = vmatpush1.msra.mxu0 0.0
        %6598 = vmatprep.subr.mxu0 0.0
        %6599 = vmatpush1.msra.mxu0 0.0
        %6600 = vmatprep.subr.mxu0 0.0
        %6601 = vmatpush1.msra.mxu0 0.0
        %6602 = vmatprep.subr.mxu0 0.0
        %6603 = vmatpush1.msra.mxu0 0.0
        %6604 = vmatprep.subr.mxu0 0.0
        %6605 = vmatpush1.msra.mxu0 %v6520
        %6606 = vmatprep.subr.mxu0 0.0
        %6607 = vmatpush1.msra.mxu0 %v6515
        %6608 = vmatprep.subr.mxu0 0.0
        %6609 = vmatpush1.msra.mxu0 %v6510
        %6610 = vmatprep.subr.mxu0 0.0
        %6611 = vmatpush1.msra.mxu0 %v6505
        %6612 = vmatprep.subr.mxu0 0.0
        %6613 = vmatpush1.msra.mxu0 %v6500
        %6614 = vmatprep.subr.mxu0 0.0
        %6615 = vmatpush1.msra.mxu0 %v6495
        %6616 = vmatprep.subr.mxu0 0.0
        %6617 = vmatpush1.msra.mxu0 %v6490
        %6618 = vmatprep.subr.mxu0 0.0
        %6619 = vmatpush1.msra.mxu0 %v6485
        %6620 = vmatprep.subr.mxu0 0.0
        %6621 = vmatpush2.msra.mxu0 0.0
        %6622 = vmatprep.subr.mxu0 0.0
        %6623 = vmatpush2.msra.mxu0 0.0
        %6624 = vmatprep.subr.mxu0 0.0
        %6625 = vmatpush2.msra.mxu0 0.0
        %6626 = vmatprep.subr.mxu0 0.0
        %6627 = vmatpush2.msra.mxu0 0.0
        %6628 = vmatprep.subr.mxu0 0.0
        %6629 = vmatpush2.msra.mxu0 0.0
        %6630 = vmatprep.subr.mxu0 0.0
        %6631 = vmatpush2.msra.mxu0 0.0
        %6632 = vmatprep.subr.mxu0 0.0
        %6633 = vmatpush2.msra.mxu0 0.0
        %6634 = vmatprep.subr.mxu0 0.0
        %6635 = vmatpush2.msra.mxu0 0.0
        %6636 = vmatprep.subr.mxu0 0.0
        %6637 = vmatpush2.msra.mxu0 0.0
        %6638 = vmatprep.subr.mxu0 0.0
        %6639 = vmatpush2.msra.mxu0 0.0
        %6640 = vmatprep.subr.mxu0 0.0
        %6641 = vmatpush2.msra.mxu0 0.0
        %6642 = vmatprep.subr.mxu0 0.0
        %6643 = vmatpush2.msra.mxu0 0.0
        %6644 = vmatprep.subr.mxu0 0.0
        %6645 = vmatpush2.msra.mxu0 0.0
        %6646 = vmatprep.subr.mxu0 0.0
        %6647 = vmatpush2.msra.mxu0 0.0
        %6648 = vmatprep.subr.mxu0 0.0
        %6649 = vmatpush2.msra.mxu0 0.0
        %6650 = vmatprep.subr.mxu0 0.0
        %6651 = vmatpush2.msra.mxu0 0.0
        %6652 = vmatprep.mubr.f32.mxu0 0.0
        %6653 = vmatmul.mubr.f32.gmra.mxu0 %v6541
        %v6654 = vpop.f32.mrf.mxu0
        %v6655 = vadd.f32 0.0, %v6654
        %v6656 = vpop.f32.mrf.mxu0
        %6657 = vmatprep.mubr.f32.mxu0 0.0
        %6658 = vmatmul.mubr.f32.gmra.mxu0 %v6544
        %v6659 = vpop.f32.mrf.mxu0
        %v6660 = vadd.f32 0.0, %v6659
        %v6661 = vpop.f32.mrf.mxu0
        %6662 = vmatprep.mubr.f32.mxu0 0.0
        %6663 = vmatmul.mubr.f32.gmra.mxu0 %v6547
        %v6664 = vpop.f32.mrf.mxu0
        %v6665 = vadd.f32 0.0, %v6664
        %v6666 = vpop.f32.mrf.mxu0
        %6667 = vmatprep.mubr.f32.mxu0 0.0
        %6668 = vmatmul.mubr.f32.gmra.mxu0 %v6550
        %v6669 = vpop.f32.mrf.mxu0
        %v6670 = vadd.f32 0.0, %v6669
        %v6671 = vpop.f32.mrf.mxu0
        %6672 = vmatprep.mubr.f32.mxu0 0.0
        %6673 = vmatmul.mubr.f32.gmra.mxu0 %v6553
        %v6674 = vpop.f32.mrf.mxu0
        %v6675 = vadd.f32 0.0, %v6674
        %v6676 = vpop.f32.mrf.mxu0
        %6677 = vmatprep.mubr.f32.mxu0 0.0
        %6678 = vmatmul.mubr.f32.gmra.mxu0 %v6556
        %v6679 = vpop.f32.mrf.mxu0
        %v6680 = vadd.f32 0.0, %v6679
        %v6681 = vpop.f32.mrf.mxu0
        %6682 = vmatprep.mubr.f32.mxu0 0.0
        %6683 = vmatmul.mubr.f32.gmra.mxu0 %v6559
        %v6684 = vpop.f32.mrf.mxu0
        %v6685 = vadd.f32 0.0, %v6684
        %v6686 = vpop.f32.mrf.mxu0
        %6687 = vmatprep.mubr.f32.mxu0 0.0
        %6688 = vmatmul.mubr.f32.gmra.mxu0 %v6562
        %v6689 = vpop.f32.mrf.mxu0
        %v6690 = vadd.f32 0.0, %v6689
        %v6691 = vpop.f32.mrf.mxu0
        %6692 = vmatprep.mubr.f32.mxu0 0.0
        %6693 = vmatmul.mubr.f32.gmra.mxu0 %v6565
        %v6694 = vpop.f32.mrf.mxu0
        %v6695 = vadd.f32 0.0, %v6694
        %v6696 = vpop.f32.mrf.mxu0
        %6697 = vmatprep.mubr.f32.mxu0 0.0
        %6698 = vmatmul.mubr.f32.gmra.mxu0 %v6568
        %v6699 = vpop.f32.mrf.mxu0
        %v6700 = vadd.f32 0.0, %v6699
        %v6701 = vpop.f32.mrf.mxu0
        %6702 = vmatprep.mubr.f32.mxu0 0.0
        %6703 = vmatmul.mubr.f32.gmra.mxu0 %v6571
        %v6704 = vpop.f32.mrf.mxu0
        %v6705 = vadd.f32 0.0, %v6704
        %v6706 = vpop.f32.mrf.mxu0
        %6707 = vmatprep.mubr.f32.mxu0 0.0
        %6708 = vmatmul.mubr.f32.gmra.mxu0 %v6574
        %v6709 = vpop.f32.mrf.mxu0
        %v6710 = vadd.f32 0.0, %v6709
        %v6711 = vpop.f32.mrf.mxu0
        %6712 = vmatprep.mubr.f32.mxu0 0.0
        %6713 = vmatmul.mubr.f32.gmra.mxu0 %v6577
        %v6714 = vpop.f32.mrf.mxu0
        %v6715 = vadd.f32 0.0, %v6714
        %v6716 = vpop.f32.mrf.mxu0
        %6717 = vmatprep.mubr.f32.mxu0 0.0
        %6718 = vmatmul.mubr.f32.gmra.mxu0 %v6580
        %v6719 = vpop.f32.mrf.mxu0
        %v6720 = vadd.f32 0.0, %v6719
        %v6721 = vpop.f32.mrf.mxu0
        %6722 = vmatprep.mubr.f32.mxu0 0.0
        %6723 = vmatmul.mubr.f32.gmra.mxu0 %v6583
        %v6724 = vpop.f32.mrf.mxu0
        %v6725 = vadd.f32 0.0, %v6724
        %v6726 = vpop.f32.mrf.mxu0
        %6727 = vmatprep.mubr.f32.mxu0 0.0
        %6728 = vmatmul.mubr.f32.gmra.mxu0 %v6586
        %v6729 = vpop.f32.mrf.mxu0
        %v6730 = vadd.f32 0.0, %v6729
        %v6731 = vpop.f32.mrf.mxu0
        %6732 = vdwg.mxu0
        %v6733 = vadd.f32 %v6399, %v6655
        %v6734 = vadd.f32 %v6400, %v6660
        %v6735 = vadd.f32 %v6401, %v6665
        %v6736 = vadd.f32 %v6402, %v6670
        %v6737 = vadd.f32 %v6403, %v6675
        %v6738 = vadd.f32 %v6404, %v6680
        %v6739 = vadd.f32 %v6405, %v6685
        %v6740 = vadd.f32 %v6406, %v6690
        %v6741 = vadd.f32 %v6407, %v6695
        %v6742 = vadd.f32 %v6408, %v6700
        %v6743 = vadd.f32 %v6409, %v6705
        %v6744 = vadd.f32 %v6410, %v6710
        %v6745 = vadd.f32 %v6411, %v6715
        %v6746 = vadd.f32 %v6412, %v6720
        %v6747 = vadd.f32 %v6413, %v6725
        %v6748 = vadd.f32 %v6414, %v6730
        %s6749 = scalar_lea.vmem [#allocation17], 80
        %v6750 = vld [vmem:[%s6749] sm:$0xff]
        %v6751 = vld [vmem:[%s6749 + $0x8] sm:$0xff]
        %6752 = vmatprep.subr.mxu0 0.0
        %6753 = vmatpush1.msra.mxu0 0.0
        %6754 = vmatprep.subr.mxu0 0.0
        %6755 = vmatpush1.msra.mxu0 0.0
        %6756 = vmatprep.subr.mxu0 0.0
        %6757 = vmatpush1.msra.mxu0 0.0
        %6758 = vmatprep.subr.mxu0 0.0
        %6759 = vmatpush1.msra.mxu0 0.0
        %6760 = vmatprep.subr.mxu0 0.0
        %6761 = vmatpush1.msra.mxu0 0.0
        %6762 = vmatprep.subr.mxu0 0.0
        %6763 = vmatpush1.msra.mxu0 0.0
        %6764 = vmatprep.subr.mxu0 0.0
        %6765 = vmatpush1.msra.mxu0 0.0
        %6766 = vmatprep.subr.mxu0 0.0
        %6767 = vmatpush1.msra.mxu0 0.0
        %6768 = vmatprep.subr.mxu0 0.0
        %6769 = vmatpush1.msra.mxu0 0.0
        %6770 = vmatprep.subr.mxu0 0.0
        %6771 = vmatpush1.msra.mxu0 0.0
        %6772 = vmatprep.subr.mxu0 0.0
        %6773 = vmatpush1.msra.mxu0 0.0
        %6774 = vmatprep.subr.mxu0 0.0
        %6775 = vmatpush1.msra.mxu0 0.0
        %6776 = vmatprep.subr.mxu0 0.0
        %6777 = vmatpush1.msra.mxu0 0.0
        %6778 = vmatprep.subr.mxu0 0.0
        %6779 = vmatpush1.msra.mxu0 0.0
        %6780 = vmatprep.subr.mxu0 0.0
        %6781 = vmatpush1.msra.mxu0 %v6751
        %6782 = vmatprep.subr.mxu0 0.0
        %6783 = vmatpush1.msra.mxu0 %v6750
        %6784 = vmatprep.subr.mxu0 0.0
        %6785 = vmatpush2.msra.mxu0 0.0
        %6786 = vmatprep.subr.mxu0 0.0
        %6787 = vmatpush2.msra.mxu0 0.0
        %6788 = vmatprep.subr.mxu0 0.0
        %6789 = vmatpush2.msra.mxu0 0.0
        %6790 = vmatprep.subr.mxu0 0.0
        %6791 = vmatpush2.msra.mxu0 0.0
        %6792 = vmatprep.subr.mxu0 0.0
        %6793 = vmatpush2.msra.mxu0 0.0
        %6794 = vmatprep.subr.mxu0 0.0
        %6795 = vmatpush2.msra.mxu0 0.0
        %6796 = vmatprep.subr.mxu0 0.0
        %6797 = vmatpush2.msra.mxu0 0.0
        %6798 = vmatprep.subr.mxu0 0.0
        %6799 = vmatpush2.msra.mxu0 0.0
        %6800 = vmatprep.subr.mxu0 0.0
        %6801 = vmatpush2.msra.mxu0 0.0
        %6802 = vmatprep.subr.mxu0 0.0
        %6803 = vmatpush2.msra.mxu0 0.0
        %6804 = vmatprep.subr.mxu0 0.0
        %6805 = vmatpush2.msra.mxu0 0.0
        %6806 = vmatprep.subr.mxu0 0.0
        %6807 = vmatpush2.msra.mxu0 0.0
        %6808 = vmatprep.subr.mxu0 0.0
        %6809 = vmatpush2.msra.mxu0 0.0
        %6810 = vmatprep.subr.mxu0 0.0
        %6811 = vmatpush2.msra.mxu0 0.0
        %6812 = vmatprep.subr.mxu0 0.0
        %6813 = vmatpush2.msra.mxu0 0.0
        %6814 = vmatprep.subr.mxu0 0.0
        %6815 = vmatpush2.msra.mxu0 0.0
        %6816 = vmatprep.mubr.f32.mxu0 0.0
        %6817 = vmatmul.mubr.f32.gmra.mxu0 %v5092
        %v6818 = vpop.f32.mrf.mxu0
        %v6819 = vadd.f32 0.0, %v6818
        %v6820 = vpop.f32.mrf.mxu0
        %6821 = vmatprep.mubr.f32.mxu0 0.0
        %6822 = vmatmul.mubr.f32.gmra.mxu0 %v5095
        %v6823 = vpop.f32.mrf.mxu0
        %v6824 = vadd.f32 0.0, %v6823
        %v6825 = vpop.f32.mrf.mxu0
        %6826 = vmatprep.mubr.f32.mxu0 0.0
        %6827 = vmatmul.mubr.f32.gmra.mxu0 %v5098
        %v6828 = vpop.f32.mrf.mxu0
        %v6829 = vadd.f32 0.0, %v6828
        %v6830 = vpop.f32.mrf.mxu0
        %6831 = vmatprep.mubr.f32.mxu0 0.0
        %6832 = vmatmul.mubr.f32.gmra.mxu0 %v5101
        %v6833 = vpop.f32.mrf.mxu0
        %v6834 = vadd.f32 0.0, %v6833
        %v6835 = vpop.f32.mrf.mxu0
        %6836 = vmatprep.mubr.f32.mxu0 0.0
        %6837 = vmatmul.mubr.f32.gmra.mxu0 %v5104
        %v6838 = vpop.f32.mrf.mxu0
        %v6839 = vadd.f32 0.0, %v6838
        %v6840 = vpop.f32.mrf.mxu0
        %6841 = vmatprep.mubr.f32.mxu0 0.0
        %6842 = vmatmul.mubr.f32.gmra.mxu0 %v5107
        %v6843 = vpop.f32.mrf.mxu0
        %v6844 = vadd.f32 0.0, %v6843
        %v6845 = vpop.f32.mrf.mxu0
        %6846 = vmatprep.mubr.f32.mxu0 0.0
        %6847 = vmatmul.mubr.f32.gmra.mxu0 %v5110
        %v6848 = vpop.f32.mrf.mxu0
        %v6849 = vadd.f32 0.0, %v6848
        %v6850 = vpop.f32.mrf.mxu0
        %6851 = vmatprep.mubr.f32.mxu0 0.0
        %6852 = vmatmul.mubr.f32.gmra.mxu0 %v5113
        %v6853 = vpop.f32.mrf.mxu0
        %v6854 = vadd.f32 0.0, %v6853
        %v6855 = vpop.f32.mrf.mxu0
        %6856 = vdwg.mxu0
        %s6857 = scalar_lea.vmem %s11, 640
        %v6858 = vld [vmem:[%s6857] sm:$0xff]
        %v6859 = vld [vmem:[%s6857 + $0x8] sm:$0xff]
        %v6860 = vld [vmem:[%s6857 + $0x10] sm:$0xff]
        %v6861 = vld [vmem:[%s6857 + $0x18] sm:$0xff]
        %v6862 = vld [vmem:[%s6857 + $0x20] sm:$0xff]
        %v6863 = vld [vmem:[%s6857 + $0x28] sm:$0xff]
        %v6864 = vld [vmem:[%s6857 + $0x30] sm:$0xff]
        %v6865 = vld [vmem:[%s6857 + $0x38] sm:$0xff]
        %v6866 = vld [vmem:[%s6857 + $0x40] sm:$0xff]
        %v6867 = vld [vmem:[%s6857 + $0x48] sm:$0xff]
        %v6868 = vld [vmem:[%s6857 + $0x50] sm:$0xff]
        %v6869 = vld [vmem:[%s6857 + $0x58] sm:$0xff]
        %v6870 = vld [vmem:[%s6857 + $0x60] sm:$0xff]
        %v6871 = vld [vmem:[%s6857 + $0x68] sm:$0xff]
        %v6872 = vld [vmem:[%s6857 + $0x70] sm:$0xff]
        %v6873 = vld [vmem:[%s6857 + $0x78] sm:$0xff]
        %v6875 = vsel %vm2813, %v6858, 0
        %v6878 = vsel %vm2813, %v6859, 0
        %v6881 = vsel %vm2813, %v6860, 0
        %v6884 = vsel %vm2813, %v6861, 0
        %v6887 = vsel %vm2813, %v6862, 0
        %v6890 = vsel %vm2813, %v6863, 0
        %v6893 = vsel %vm2813, %v6864, 0
        %v6896 = vsel %vm2813, %v6865, 0
        %v6899 = vsel %vm2813, %v6866, 0
        %v6902 = vsel %vm2813, %v6867, 0
        %v6905 = vsel %vm2813, %v6868, 0
        %v6908 = vsel %vm2813, %v6869, 0
        %v6911 = vsel %vm2813, %v6870, 0
        %v6914 = vsel %vm2813, %v6871, 0
        %v6917 = vsel %vm2813, %v6872, 0
        %v6920 = vsel %vm2813, %v6873, 0
        %6922 = vmatprep.subr.mxu0 0.0
        %6923 = vmatpush1.msra.mxu0 0.0
        %6924 = vmatprep.subr.mxu0 0.0
        %6925 = vmatpush1.msra.mxu0 0.0
        %6926 = vmatprep.subr.mxu0 0.0
        %6927 = vmatpush1.msra.mxu0 0.0
        %6928 = vmatprep.subr.mxu0 0.0
        %6929 = vmatpush1.msra.mxu0 0.0
        %6930 = vmatprep.subr.mxu0 0.0
        %6931 = vmatpush1.msra.mxu0 0.0
        %6932 = vmatprep.subr.mxu0 0.0
        %6933 = vmatpush1.msra.mxu0 0.0
        %6934 = vmatprep.subr.mxu0 0.0
        %6935 = vmatpush1.msra.mxu0 0.0
        %6936 = vmatprep.subr.mxu0 0.0
        %6937 = vmatpush1.msra.mxu0 0.0
        %6938 = vmatprep.subr.mxu0 0.0
        %6939 = vmatpush1.msra.mxu0 %v6854
        %6940 = vmatprep.subr.mxu0 0.0
        %6941 = vmatpush1.msra.mxu0 %v6849
        %6942 = vmatprep.subr.mxu0 0.0
        %6943 = vmatpush1.msra.mxu0 %v6844
        %6944 = vmatprep.subr.mxu0 0.0
        %6945 = vmatpush1.msra.mxu0 %v6839
        %6946 = vmatprep.subr.mxu0 0.0
        %6947 = vmatpush1.msra.mxu0 %v6834
        %6948 = vmatprep.subr.mxu0 0.0
        %6949 = vmatpush1.msra.mxu0 %v6829
        %6950 = vmatprep.subr.mxu0 0.0
        %6951 = vmatpush1.msra.mxu0 %v6824
        %6952 = vmatprep.subr.mxu0 0.0
        %6953 = vmatpush1.msra.mxu0 %v6819
        %6954 = vmatprep.subr.mxu0 0.0
        %6955 = vmatpush2.msra.mxu0 0.0
        %6956 = vmatprep.subr.mxu0 0.0
        %6957 = vmatpush2.msra.mxu0 0.0
        %6958 = vmatprep.subr.mxu0 0.0
        %6959 = vmatpush2.msra.mxu0 0.0
        %6960 = vmatprep.subr.mxu0 0.0
        %6961 = vmatpush2.msra.mxu0 0.0
        %6962 = vmatprep.subr.mxu0 0.0
        %6963 = vmatpush2.msra.mxu0 0.0
        %6964 = vmatprep.subr.mxu0 0.0
        %6965 = vmatpush2.msra.mxu0 0.0
        %6966 = vmatprep.subr.mxu0 0.0
        %6967 = vmatpush2.msra.mxu0 0.0
        %6968 = vmatprep.subr.mxu0 0.0
        %6969 = vmatpush2.msra.mxu0 0.0
        %6970 = vmatprep.subr.mxu0 0.0
        %6971 = vmatpush2.msra.mxu0 0.0
        %6972 = vmatprep.subr.mxu0 0.0
        %6973 = vmatpush2.msra.mxu0 0.0
        %6974 = vmatprep.subr.mxu0 0.0
        %6975 = vmatpush2.msra.mxu0 0.0
        %6976 = vmatprep.subr.mxu0 0.0
        %6977 = vmatpush2.msra.mxu0 0.0
        %6978 = vmatprep.subr.mxu0 0.0
        %6979 = vmatpush2.msra.mxu0 0.0
        %6980 = vmatprep.subr.mxu0 0.0
        %6981 = vmatpush2.msra.mxu0 0.0
        %6982 = vmatprep.subr.mxu0 0.0
        %6983 = vmatpush2.msra.mxu0 0.0
        %6984 = vmatprep.subr.mxu0 0.0
        %6985 = vmatpush2.msra.mxu0 0.0
        %6986 = vmatprep.mubr.f32.mxu0 0.0
        %6987 = vmatmul.mubr.f32.gmra.mxu0 %v6875
        %v6988 = vpop.f32.mrf.mxu0
        %v6989 = vadd.f32 0.0, %v6988
        %v6990 = vpop.f32.mrf.mxu0
        %6991 = vmatprep.mubr.f32.mxu0 0.0
        %6992 = vmatmul.mubr.f32.gmra.mxu0 %v6878
        %v6993 = vpop.f32.mrf.mxu0
        %v6994 = vadd.f32 0.0, %v6993
        %v6995 = vpop.f32.mrf.mxu0
        %6996 = vmatprep.mubr.f32.mxu0 0.0
        %6997 = vmatmul.mubr.f32.gmra.mxu0 %v6881
        %v6998 = vpop.f32.mrf.mxu0
        %v6999 = vadd.f32 0.0, %v6998
        %v7000 = vpop.f32.mrf.mxu0
        %7001 = vmatprep.mubr.f32.mxu0 0.0
        %7002 = vmatmul.mubr.f32.gmra.mxu0 %v6884
        %v7003 = vpop.f32.mrf.mxu0
        %v7004 = vadd.f32 0.0, %v7003
        %v7005 = vpop.f32.mrf.mxu0
        %7006 = vmatprep.mubr.f32.mxu0 0.0
        %7007 = vmatmul.mubr.f32.gmra.mxu0 %v6887
        %v7008 = vpop.f32.mrf.mxu0
        %v7009 = vadd.f32 0.0, %v7008
        %v7010 = vpop.f32.mrf.mxu0
        %7011 = vmatprep.mubr.f32.mxu0 0.0
        %7012 = vmatmul.mubr.f32.gmra.mxu0 %v6890
        %v7013 = vpop.f32.mrf.mxu0
        %v7014 = vadd.f32 0.0, %v7013
        %v7015 = vpop.f32.mrf.mxu0
        %7016 = vmatprep.mubr.f32.mxu0 0.0
        %7017 = vmatmul.mubr.f32.gmra.mxu0 %v6893
        %v7018 = vpop.f32.mrf.mxu0
        %v7019 = vadd.f32 0.0, %v7018
        %v7020 = vpop.f32.mrf.mxu0
        %7021 = vmatprep.mubr.f32.mxu0 0.0
        %7022 = vmatmul.mubr.f32.gmra.mxu0 %v6896
        %v7023 = vpop.f32.mrf.mxu0
        %v7024 = vadd.f32 0.0, %v7023
        %v7025 = vpop.f32.mrf.mxu0
        %7026 = vmatprep.mubr.f32.mxu0 0.0
        %7027 = vmatmul.mubr.f32.gmra.mxu0 %v6899
        %v7028 = vpop.f32.mrf.mxu0
        %v7029 = vadd.f32 0.0, %v7028
        %v7030 = vpop.f32.mrf.mxu0
        %7031 = vmatprep.mubr.f32.mxu0 0.0
        %7032 = vmatmul.mubr.f32.gmra.mxu0 %v6902
        %v7033 = vpop.f32.mrf.mxu0
        %v7034 = vadd.f32 0.0, %v7033
        %v7035 = vpop.f32.mrf.mxu0
        %7036 = vmatprep.mubr.f32.mxu0 0.0
        %7037 = vmatmul.mubr.f32.gmra.mxu0 %v6905
        %v7038 = vpop.f32.mrf.mxu0
        %v7039 = vadd.f32 0.0, %v7038
        %v7040 = vpop.f32.mrf.mxu0
        %7041 = vmatprep.mubr.f32.mxu0 0.0
        %7042 = vmatmul.mubr.f32.gmra.mxu0 %v6908
        %v7043 = vpop.f32.mrf.mxu0
        %v7044 = vadd.f32 0.0, %v7043
        %v7045 = vpop.f32.mrf.mxu0
        %7046 = vmatprep.mubr.f32.mxu0 0.0
        %7047 = vmatmul.mubr.f32.gmra.mxu0 %v6911
        %v7048 = vpop.f32.mrf.mxu0
        %v7049 = vadd.f32 0.0, %v7048
        %v7050 = vpop.f32.mrf.mxu0
        %7051 = vmatprep.mubr.f32.mxu0 0.0
        %7052 = vmatmul.mubr.f32.gmra.mxu0 %v6914
        %v7053 = vpop.f32.mrf.mxu0
        %v7054 = vadd.f32 0.0, %v7053
        %v7055 = vpop.f32.mrf.mxu0
        %7056 = vmatprep.mubr.f32.mxu0 0.0
        %7057 = vmatmul.mubr.f32.gmra.mxu0 %v6917
        %v7058 = vpop.f32.mrf.mxu0
        %v7059 = vadd.f32 0.0, %v7058
        %v7060 = vpop.f32.mrf.mxu0
        %7061 = vmatprep.mubr.f32.mxu0 0.0
        %7062 = vmatmul.mubr.f32.gmra.mxu0 %v6920
        %v7063 = vpop.f32.mrf.mxu0
        %v7064 = vadd.f32 0.0, %v7063
        %v7065 = vpop.f32.mrf.mxu0
        %7066 = vdwg.mxu0
        %v7067 = vadd.f32 %v6733, %v6989
        %v7068 = vadd.f32 %v6734, %v6994
        %v7069 = vadd.f32 %v6735, %v6999
        %v7070 = vadd.f32 %v6736, %v7004
        %v7071 = vadd.f32 %v6737, %v7009
        %v7072 = vadd.f32 %v6738, %v7014
        %v7073 = vadd.f32 %v6739, %v7019
        %v7074 = vadd.f32 %v6740, %v7024
        %v7075 = vadd.f32 %v6741, %v7029
        %v7076 = vadd.f32 %v6742, %v7034
        %v7077 = vadd.f32 %v6743, %v7039
        %v7078 = vadd.f32 %v6744, %v7044
        %v7079 = vadd.f32 %v6745, %v7049
        %v7080 = vadd.f32 %v6746, %v7054
        %v7081 = vadd.f32 %v6747, %v7059
        %v7082 = vadd.f32 %v6748, %v7064
        %s7083 = scalar_lea.vmem [#allocation17], 96
        %v7084 = vld [vmem:[%s7083] sm:$0xff]
        %v7085 = vld [vmem:[%s7083 + $0x8] sm:$0xff]
        %7086 = vmatprep.subr.mxu0 0.0
        %7087 = vmatpush1.msra.mxu0 0.0
        %7088 = vmatprep.subr.mxu0 0.0
        %7089 = vmatpush1.msra.mxu0 0.0
        %7090 = vmatprep.subr.mxu0 0.0
        %7091 = vmatpush1.msra.mxu0 0.0
        %7092 = vmatprep.subr.mxu0 0.0
        %7093 = vmatpush1.msra.mxu0 0.0
        %7094 = vmatprep.subr.mxu0 0.0
        %7095 = vmatpush1.msra.mxu0 0.0
        %7096 = vmatprep.subr.mxu0 0.0
        %7097 = vmatpush1.msra.mxu0 0.0
        %7098 = vmatprep.subr.mxu0 0.0
        %7099 = vmatpush1.msra.mxu0 0.0
        %7100 = vmatprep.subr.mxu0 0.0
        %7101 = vmatpush1.msra.mxu0 0.0
        %7102 = vmatprep.subr.mxu0 0.0
        %7103 = vmatpush1.msra.mxu0 0.0
        %7104 = vmatprep.subr.mxu0 0.0
        %7105 = vmatpush1.msra.mxu0 0.0
        %7106 = vmatprep.subr.mxu0 0.0
        %7107 = vmatpush1.msra.mxu0 0.0
        %7108 = vmatprep.subr.mxu0 0.0
        %7109 = vmatpush1.msra.mxu0 0.0
        %7110 = vmatprep.subr.mxu0 0.0
        %7111 = vmatpush1.msra.mxu0 0.0
        %7112 = vmatprep.subr.mxu0 0.0
        %7113 = vmatpush1.msra.mxu0 0.0
        %7114 = vmatprep.subr.mxu0 0.0
        %7115 = vmatpush1.msra.mxu0 %v7085
        %7116 = vmatprep.subr.mxu0 0.0
        %7117 = vmatpush1.msra.mxu0 %v7084
        %7118 = vmatprep.subr.mxu0 0.0
        %7119 = vmatpush2.msra.mxu0 0.0
        %7120 = vmatprep.subr.mxu0 0.0
        %7121 = vmatpush2.msra.mxu0 0.0
        %7122 = vmatprep.subr.mxu0 0.0
        %7123 = vmatpush2.msra.mxu0 0.0
        %7124 = vmatprep.subr.mxu0 0.0
        %7125 = vmatpush2.msra.mxu0 0.0
        %7126 = vmatprep.subr.mxu0 0.0
        %7127 = vmatpush2.msra.mxu0 0.0
        %7128 = vmatprep.subr.mxu0 0.0
        %7129 = vmatpush2.msra.mxu0 0.0
        %7130 = vmatprep.subr.mxu0 0.0
        %7131 = vmatpush2.msra.mxu0 0.0
        %7132 = vmatprep.subr.mxu0 0.0
        %7133 = vmatpush2.msra.mxu0 0.0
        %7134 = vmatprep.subr.mxu0 0.0
        %7135 = vmatpush2.msra.mxu0 0.0
        %7136 = vmatprep.subr.mxu0 0.0
        %7137 = vmatpush2.msra.mxu0 0.0
        %7138 = vmatprep.subr.mxu0 0.0
        %7139 = vmatpush2.msra.mxu0 0.0
        %7140 = vmatprep.subr.mxu0 0.0
        %7141 = vmatpush2.msra.mxu0 0.0
        %7142 = vmatprep.subr.mxu0 0.0
        %7143 = vmatpush2.msra.mxu0 0.0
        %7144 = vmatprep.subr.mxu0 0.0
        %7145 = vmatpush2.msra.mxu0 0.0
        %7146 = vmatprep.subr.mxu0 0.0
        %7147 = vmatpush2.msra.mxu0 0.0
        %7148 = vmatprep.subr.mxu0 0.0
        %7149 = vmatpush2.msra.mxu0 0.0
        %7150 = vmatprep.mubr.f32.mxu0 0.0
        %7151 = vmatmul.mubr.f32.gmra.mxu0 %v5092
        %v7152 = vpop.f32.mrf.mxu0
        %v7153 = vadd.f32 0.0, %v7152
        %v7154 = vpop.f32.mrf.mxu0
        %7155 = vmatprep.mubr.f32.mxu0 0.0
        %7156 = vmatmul.mubr.f32.gmra.mxu0 %v5095
        %v7157 = vpop.f32.mrf.mxu0
        %v7158 = vadd.f32 0.0, %v7157
        %v7159 = vpop.f32.mrf.mxu0
        %7160 = vmatprep.mubr.f32.mxu0 0.0
        %7161 = vmatmul.mubr.f32.gmra.mxu0 %v5098
        %v7162 = vpop.f32.mrf.mxu0
        %v7163 = vadd.f32 0.0, %v7162
        %v7164 = vpop.f32.mrf.mxu0
        %7165 = vmatprep.mubr.f32.mxu0 0.0
        %7166 = vmatmul.mubr.f32.gmra.mxu0 %v5101
        %v7167 = vpop.f32.mrf.mxu0
        %v7168 = vadd.f32 0.0, %v7167
        %v7169 = vpop.f32.mrf.mxu0
        %7170 = vmatprep.mubr.f32.mxu0 0.0
        %7171 = vmatmul.mubr.f32.gmra.mxu0 %v5104
        %v7172 = vpop.f32.mrf.mxu0
        %v7173 = vadd.f32 0.0, %v7172
        %v7174 = vpop.f32.mrf.mxu0
        %7175 = vmatprep.mubr.f32.mxu0 0.0
        %7176 = vmatmul.mubr.f32.gmra.mxu0 %v5107
        %v7177 = vpop.f32.mrf.mxu0
        %v7178 = vadd.f32 0.0, %v7177
        %v7179 = vpop.f32.mrf.mxu0
        %7180 = vmatprep.mubr.f32.mxu0 0.0
        %7181 = vmatmul.mubr.f32.gmra.mxu0 %v5110
        %v7182 = vpop.f32.mrf.mxu0
        %v7183 = vadd.f32 0.0, %v7182
        %v7184 = vpop.f32.mrf.mxu0
        %7185 = vmatprep.mubr.f32.mxu0 0.0
        %7186 = vmatmul.mubr.f32.gmra.mxu0 %v5113
        %v7187 = vpop.f32.mrf.mxu0
        %v7188 = vadd.f32 0.0, %v7187
        %v7189 = vpop.f32.mrf.mxu0
        %7190 = vdwg.mxu0
        %s7191 = scalar_lea.vmem %s11, 768
        %v7192 = vld [vmem:[%s7191] sm:$0xff]
        %v7193 = vld [vmem:[%s7191 + $0x8] sm:$0xff]
        %v7194 = vld [vmem:[%s7191 + $0x10] sm:$0xff]
        %v7195 = vld [vmem:[%s7191 + $0x18] sm:$0xff]
        %v7196 = vld [vmem:[%s7191 + $0x20] sm:$0xff]
        %v7197 = vld [vmem:[%s7191 + $0x28] sm:$0xff]
        %v7198 = vld [vmem:[%s7191 + $0x30] sm:$0xff]
        %v7199 = vld [vmem:[%s7191 + $0x38] sm:$0xff]
        %v7200 = vld [vmem:[%s7191 + $0x40] sm:$0xff]
        %v7201 = vld [vmem:[%s7191 + $0x48] sm:$0xff]
        %v7202 = vld [vmem:[%s7191 + $0x50] sm:$0xff]
        %v7203 = vld [vmem:[%s7191 + $0x58] sm:$0xff]
        %v7204 = vld [vmem:[%s7191 + $0x60] sm:$0xff]
        %v7205 = vld [vmem:[%s7191 + $0x68] sm:$0xff]
        %v7206 = vld [vmem:[%s7191 + $0x70] sm:$0xff]
        %v7207 = vld [vmem:[%s7191 + $0x78] sm:$0xff]
        %v7209 = vsel %vm2813, %v7192, 0
        %v7212 = vsel %vm2813, %v7193, 0
        %v7215 = vsel %vm2813, %v7194, 0
        %v7218 = vsel %vm2813, %v7195, 0
        %v7221 = vsel %vm2813, %v7196, 0
        %v7224 = vsel %vm2813, %v7197, 0
        %v7227 = vsel %vm2813, %v7198, 0
        %v7230 = vsel %vm2813, %v7199, 0
        %v7233 = vsel %vm2813, %v7200, 0
        %v7236 = vsel %vm2813, %v7201, 0
        %v7239 = vsel %vm2813, %v7202, 0
        %v7242 = vsel %vm2813, %v7203, 0
        %v7245 = vsel %vm2813, %v7204, 0
        %v7248 = vsel %vm2813, %v7205, 0
        %v7251 = vsel %vm2813, %v7206, 0
        %v7254 = vsel %vm2813, %v7207, 0
        %7256 = vmatprep.subr.mxu0 0.0
        %7257 = vmatpush1.msra.mxu0 0.0
        %7258 = vmatprep.subr.mxu0 0.0
        %7259 = vmatpush1.msra.mxu0 0.0
        %7260 = vmatprep.subr.mxu0 0.0
        %7261 = vmatpush1.msra.mxu0 0.0
        %7262 = vmatprep.subr.mxu0 0.0
        %7263 = vmatpush1.msra.mxu0 0.0
        %7264 = vmatprep.subr.mxu0 0.0
        %7265 = vmatpush1.msra.mxu0 0.0
        %7266 = vmatprep.subr.mxu0 0.0
        %7267 = vmatpush1.msra.mxu0 0.0
        %7268 = vmatprep.subr.mxu0 0.0
        %7269 = vmatpush1.msra.mxu0 0.0
        %7270 = vmatprep.subr.mxu0 0.0
        %7271 = vmatpush1.msra.mxu0 0.0
        %7272 = vmatprep.subr.mxu0 0.0
        %7273 = vmatpush1.msra.mxu0 %v7188
        %7274 = vmatprep.subr.mxu0 0.0
        %7275 = vmatpush1.msra.mxu0 %v7183
        %7276 = vmatprep.subr.mxu0 0.0
        %7277 = vmatpush1.msra.mxu0 %v7178
        %7278 = vmatprep.subr.mxu0 0.0
        %7279 = vmatpush1.msra.mxu0 %v7173
        %7280 = vmatprep.subr.mxu0 0.0
        %7281 = vmatpush1.msra.mxu0 %v7168
        %7282 = vmatprep.subr.mxu0 0.0
        %7283 = vmatpush1.msra.mxu0 %v7163
        %7284 = vmatprep.subr.mxu0 0.0
        %7285 = vmatpush1.msra.mxu0 %v7158
        %7286 = vmatprep.subr.mxu0 0.0
        %7287 = vmatpush1.msra.mxu0 %v7153
        %7288 = vmatprep.subr.mxu0 0.0
        %7289 = vmatpush2.msra.mxu0 0.0
        %7290 = vmatprep.subr.mxu0 0.0
        %7291 = vmatpush2.msra.mxu0 0.0
        %7292 = vmatprep.subr.mxu0 0.0
        %7293 = vmatpush2.msra.mxu0 0.0
        %7294 = vmatprep.subr.mxu0 0.0
        %7295 = vmatpush2.msra.mxu0 0.0
        %7296 = vmatprep.subr.mxu0 0.0
        %7297 = vmatpush2.msra.mxu0 0.0
        %7298 = vmatprep.subr.mxu0 0.0
        %7299 = vmatpush2.msra.mxu0 0.0
        %7300 = vmatprep.subr.mxu0 0.0
        %7301 = vmatpush2.msra.mxu0 0.0
        %7302 = vmatprep.subr.mxu0 0.0
        %7303 = vmatpush2.msra.mxu0 0.0
        %7304 = vmatprep.subr.mxu0 0.0
        %7305 = vmatpush2.msra.mxu0 0.0
        %7306 = vmatprep.subr.mxu0 0.0
        %7307 = vmatpush2.msra.mxu0 0.0
        %7308 = vmatprep.subr.mxu0 0.0
        %7309 = vmatpush2.msra.mxu0 0.0
        %7310 = vmatprep.subr.mxu0 0.0
        %7311 = vmatpush2.msra.mxu0 0.0
        %7312 = vmatprep.subr.mxu0 0.0
        %7313 = vmatpush2.msra.mxu0 0.0
        %7314 = vmatprep.subr.mxu0 0.0
        %7315 = vmatpush2.msra.mxu0 0.0
        %7316 = vmatprep.subr.mxu0 0.0
        %7317 = vmatpush2.msra.mxu0 0.0
        %7318 = vmatprep.subr.mxu0 0.0
        %7319 = vmatpush2.msra.mxu0 0.0
        %7320 = vmatprep.mubr.f32.mxu0 0.0
        %7321 = vmatmul.mubr.f32.gmra.mxu0 %v7209
        %v7322 = vpop.f32.mrf.mxu0
        %v7323 = vadd.f32 0.0, %v7322
        %v7324 = vpop.f32.mrf.mxu0
        %7325 = vmatprep.mubr.f32.mxu0 0.0
        %7326 = vmatmul.mubr.f32.gmra.mxu0 %v7212
        %v7327 = vpop.f32.mrf.mxu0
        %v7328 = vadd.f32 0.0, %v7327
        %v7329 = vpop.f32.mrf.mxu0
        %7330 = vmatprep.mubr.f32.mxu0 0.0
        %7331 = vmatmul.mubr.f32.gmra.mxu0 %v7215
        %v7332 = vpop.f32.mrf.mxu0
        %v7333 = vadd.f32 0.0, %v7332
        %v7334 = vpop.f32.mrf.mxu0
        %7335 = vmatprep.mubr.f32.mxu0 0.0
        %7336 = vmatmul.mubr.f32.gmra.mxu0 %v7218
        %v7337 = vpop.f32.mrf.mxu0
        %v7338 = vadd.f32 0.0, %v7337
        %v7339 = vpop.f32.mrf.mxu0
        %7340 = vmatprep.mubr.f32.mxu0 0.0
        %7341 = vmatmul.mubr.f32.gmra.mxu0 %v7221
        %v7342 = vpop.f32.mrf.mxu0
        %v7343 = vadd.f32 0.0, %v7342
        %v7344 = vpop.f32.mrf.mxu0
        %7345 = vmatprep.mubr.f32.mxu0 0.0
        %7346 = vmatmul.mubr.f32.gmra.mxu0 %v7224
        %v7347 = vpop.f32.mrf.mxu0
        %v7348 = vadd.f32 0.0, %v7347
        %v7349 = vpop.f32.mrf.mxu0
        %7350 = vmatprep.mubr.f32.mxu0 0.0
        %7351 = vmatmul.mubr.f32.gmra.mxu0 %v7227
        %v7352 = vpop.f32.mrf.mxu0
        %v7353 = vadd.f32 0.0, %v7352
        %v7354 = vpop.f32.mrf.mxu0
        %7355 = vmatprep.mubr.f32.mxu0 0.0
        %7356 = vmatmul.mubr.f32.gmra.mxu0 %v7230
        %v7357 = vpop.f32.mrf.mxu0
        %v7358 = vadd.f32 0.0, %v7357
        %v7359 = vpop.f32.mrf.mxu0
        %7360 = vmatprep.mubr.f32.mxu0 0.0
        %7361 = vmatmul.mubr.f32.gmra.mxu0 %v7233
        %v7362 = vpop.f32.mrf.mxu0
        %v7363 = vadd.f32 0.0, %v7362
        %v7364 = vpop.f32.mrf.mxu0
        %7365 = vmatprep.mubr.f32.mxu0 0.0
        %7366 = vmatmul.mubr.f32.gmra.mxu0 %v7236
        %v7367 = vpop.f32.mrf.mxu0
        %v7368 = vadd.f32 0.0, %v7367
        %v7369 = vpop.f32.mrf.mxu0
        %7370 = vmatprep.mubr.f32.mxu0 0.0
        %7371 = vmatmul.mubr.f32.gmra.mxu0 %v7239
        %v7372 = vpop.f32.mrf.mxu0
        %v7373 = vadd.f32 0.0, %v7372
        %v7374 = vpop.f32.mrf.mxu0
        %7375 = vmatprep.mubr.f32.mxu0 0.0
        %7376 = vmatmul.mubr.f32.gmra.mxu0 %v7242
        %v7377 = vpop.f32.mrf.mxu0
        %v7378 = vadd.f32 0.0, %v7377
        %v7379 = vpop.f32.mrf.mxu0
        %7380 = vmatprep.mubr.f32.mxu0 0.0
        %7381 = vmatmul.mubr.f32.gmra.mxu0 %v7245
        %v7382 = vpop.f32.mrf.mxu0
        %v7383 = vadd.f32 0.0, %v7382
        %v7384 = vpop.f32.mrf.mxu0
        %7385 = vmatprep.mubr.f32.mxu0 0.0
        %7386 = vmatmul.mubr.f32.gmra.mxu0 %v7248
        %v7387 = vpop.f32.mrf.mxu0
        %v7388 = vadd.f32 0.0, %v7387
        %v7389 = vpop.f32.mrf.mxu0
        %7390 = vmatprep.mubr.f32.mxu0 0.0
        %7391 = vmatmul.mubr.f32.gmra.mxu0 %v7251
        %v7392 = vpop.f32.mrf.mxu0
        %v7393 = vadd.f32 0.0, %v7392
        %v7394 = vpop.f32.mrf.mxu0
        %7395 = vmatprep.mubr.f32.mxu0 0.0
        %7396 = vmatmul.mubr.f32.gmra.mxu0 %v7254
        %v7397 = vpop.f32.mrf.mxu0
        %v7398 = vadd.f32 0.0, %v7397
        %v7399 = vpop.f32.mrf.mxu0
        %7400 = vdwg.mxu0
        %v7401 = vadd.f32 %v7067, %v7323
        %v7402 = vadd.f32 %v7068, %v7328
        %v7403 = vadd.f32 %v7069, %v7333
        %v7404 = vadd.f32 %v7070, %v7338
        %v7405 = vadd.f32 %v7071, %v7343
        %v7406 = vadd.f32 %v7072, %v7348
        %v7407 = vadd.f32 %v7073, %v7353
        %v7408 = vadd.f32 %v7074, %v7358
        %v7409 = vadd.f32 %v7075, %v7363
        %v7410 = vadd.f32 %v7076, %v7368
        %v7411 = vadd.f32 %v7077, %v7373
        %v7412 = vadd.f32 %v7078, %v7378
        %v7413 = vadd.f32 %v7079, %v7383
        %v7414 = vadd.f32 %v7080, %v7388
        %v7415 = vadd.f32 %v7081, %v7393
        %v7416 = vadd.f32 %v7082, %v7398
        %s7417 = scalar_lea.vmem [#allocation17], 112
        %v7418 = vld [vmem:[%s7417] sm:$0xff]
        %v7419 = vld [vmem:[%s7417 + $0x8] sm:$0xff]
        %7420 = vmatprep.subr.mxu0 0.0
        %7421 = vmatpush1.msra.mxu0 0.0
        %7422 = vmatprep.subr.mxu0 0.0
        %7423 = vmatpush1.msra.mxu0 0.0
        %7424 = vmatprep.subr.mxu0 0.0
        %7425 = vmatpush1.msra.mxu0 0.0
        %7426 = vmatprep.subr.mxu0 0.0
        %7427 = vmatpush1.msra.mxu0 0.0
        %7428 = vmatprep.subr.mxu0 0.0
        %7429 = vmatpush1.msra.mxu0 0.0
        %7430 = vmatprep.subr.mxu0 0.0
        %7431 = vmatpush1.msra.mxu0 0.0
        %7432 = vmatprep.subr.mxu0 0.0
        %7433 = vmatpush1.msra.mxu0 0.0
        %7434 = vmatprep.subr.mxu0 0.0
        %7435 = vmatpush1.msra.mxu0 0.0
        %7436 = vmatprep.subr.mxu0 0.0
        %7437 = vmatpush1.msra.mxu0 0.0
        %7438 = vmatprep.subr.mxu0 0.0
        %7439 = vmatpush1.msra.mxu0 0.0
        %7440 = vmatprep.subr.mxu0 0.0
        %7441 = vmatpush1.msra.mxu0 0.0
        %7442 = vmatprep.subr.mxu0 0.0
        %7443 = vmatpush1.msra.mxu0 0.0
        %7444 = vmatprep.subr.mxu0 0.0
        %7445 = vmatpush1.msra.mxu0 0.0
        %7446 = vmatprep.subr.mxu0 0.0
        %7447 = vmatpush1.msra.mxu0 0.0
        %7448 = vmatprep.subr.mxu0 0.0
        %7449 = vmatpush1.msra.mxu0 %v7419
        %7450 = vmatprep.subr.mxu0 0.0
        %7451 = vmatpush1.msra.mxu0 %v7418
        %7452 = vmatprep.subr.mxu0 0.0
        %7453 = vmatpush2.msra.mxu0 0.0
        %7454 = vmatprep.subr.mxu0 0.0
        %7455 = vmatpush2.msra.mxu0 0.0
        %7456 = vmatprep.subr.mxu0 0.0
        %7457 = vmatpush2.msra.mxu0 0.0
        %7458 = vmatprep.subr.mxu0 0.0
        %7459 = vmatpush2.msra.mxu0 0.0
        %7460 = vmatprep.subr.mxu0 0.0
        %7461 = vmatpush2.msra.mxu0 0.0
        %7462 = vmatprep.subr.mxu0 0.0
        %7463 = vmatpush2.msra.mxu0 0.0
        %7464 = vmatprep.subr.mxu0 0.0
        %7465 = vmatpush2.msra.mxu0 0.0
        %7466 = vmatprep.subr.mxu0 0.0
        %7467 = vmatpush2.msra.mxu0 0.0
        %7468 = vmatprep.subr.mxu0 0.0
        %7469 = vmatpush2.msra.mxu0 0.0
        %7470 = vmatprep.subr.mxu0 0.0
        %7471 = vmatpush2.msra.mxu0 0.0
        %7472 = vmatprep.subr.mxu0 0.0
        %7473 = vmatpush2.msra.mxu0 0.0
        %7474 = vmatprep.subr.mxu0 0.0
        %7475 = vmatpush2.msra.mxu0 0.0
        %7476 = vmatprep.subr.mxu0 0.0
        %7477 = vmatpush2.msra.mxu0 0.0
        %7478 = vmatprep.subr.mxu0 0.0
        %7479 = vmatpush2.msra.mxu0 0.0
        %7480 = vmatprep.subr.mxu0 0.0
        %7481 = vmatpush2.msra.mxu0 0.0
        %7482 = vmatprep.subr.mxu0 0.0
        %7483 = vmatpush2.msra.mxu0 0.0
        %7484 = vmatprep.mubr.f32.mxu0 0.0
        %7485 = vmatmul.mubr.f32.gmra.mxu0 %v5092
        %v7486 = vpop.f32.mrf.mxu0
        %v7487 = vadd.f32 0.0, %v7486
        %v7488 = vpop.f32.mrf.mxu0
        %7489 = vmatprep.mubr.f32.mxu0 0.0
        %7490 = vmatmul.mubr.f32.gmra.mxu0 %v5095
        %v7491 = vpop.f32.mrf.mxu0
        %v7492 = vadd.f32 0.0, %v7491
        %v7493 = vpop.f32.mrf.mxu0
        %7494 = vmatprep.mubr.f32.mxu0 0.0
        %7495 = vmatmul.mubr.f32.gmra.mxu0 %v5098
        %v7496 = vpop.f32.mrf.mxu0
        %v7497 = vadd.f32 0.0, %v7496
        %v7498 = vpop.f32.mrf.mxu0
        %7499 = vmatprep.mubr.f32.mxu0 0.0
        %7500 = vmatmul.mubr.f32.gmra.mxu0 %v5101
        %v7501 = vpop.f32.mrf.mxu0
        %v7502 = vadd.f32 0.0, %v7501
        %v7503 = vpop.f32.mrf.mxu0
        %7504 = vmatprep.mubr.f32.mxu0 0.0
        %7505 = vmatmul.mubr.f32.gmra.mxu0 %v5104
        %v7506 = vpop.f32.mrf.mxu0
        %v7507 = vadd.f32 0.0, %v7506
        %v7508 = vpop.f32.mrf.mxu0
        %7509 = vmatprep.mubr.f32.mxu0 0.0
        %7510 = vmatmul.mubr.f32.gmra.mxu0 %v5107
        %v7511 = vpop.f32.mrf.mxu0
        %v7512 = vadd.f32 0.0, %v7511
        %v7513 = vpop.f32.mrf.mxu0
        %7514 = vmatprep.mubr.f32.mxu0 0.0
        %7515 = vmatmul.mubr.f32.gmra.mxu0 %v5110
        %v7516 = vpop.f32.mrf.mxu0
        %v7517 = vadd.f32 0.0, %v7516
        %v7518 = vpop.f32.mrf.mxu0
        %7519 = vmatprep.mubr.f32.mxu0 0.0
        %7520 = vmatmul.mubr.f32.gmra.mxu0 %v5113
        %v7521 = vpop.f32.mrf.mxu0
        %v7522 = vadd.f32 0.0, %v7521
        %v7523 = vpop.f32.mrf.mxu0
        %7524 = vdwg.mxu0
        %s7525 = scalar_lea.vmem %s11, 896
        %v7526 = vld [vmem:[%s7525] sm:$0xff]
        %v7527 = vld [vmem:[%s7525 + $0x8] sm:$0xff]
        %v7528 = vld [vmem:[%s7525 + $0x10] sm:$0xff]
        %v7529 = vld [vmem:[%s7525 + $0x18] sm:$0xff]
        %v7530 = vld [vmem:[%s7525 + $0x20] sm:$0xff]
        %v7531 = vld [vmem:[%s7525 + $0x28] sm:$0xff]
        %v7532 = vld [vmem:[%s7525 + $0x30] sm:$0xff]
        %v7533 = vld [vmem:[%s7525 + $0x38] sm:$0xff]
        %v7534 = vld [vmem:[%s7525 + $0x40] sm:$0xff]
        %v7535 = vld [vmem:[%s7525 + $0x48] sm:$0xff]
        %v7536 = vld [vmem:[%s7525 + $0x50] sm:$0xff]
        %v7537 = vld [vmem:[%s7525 + $0x58] sm:$0xff]
        %v7538 = vld [vmem:[%s7525 + $0x60] sm:$0xff]
        %v7539 = vld [vmem:[%s7525 + $0x68] sm:$0xff]
        %v7540 = vld [vmem:[%s7525 + $0x70] sm:$0xff]
        %v7541 = vld [vmem:[%s7525 + $0x78] sm:$0xff]
        %v7543 = vsel %vm2813, %v7526, 0
        %v7546 = vsel %vm2813, %v7527, 0
        %v7549 = vsel %vm2813, %v7528, 0
        %v7552 = vsel %vm2813, %v7529, 0
        %v7555 = vsel %vm2813, %v7530, 0
        %v7558 = vsel %vm2813, %v7531, 0
        %v7561 = vsel %vm2813, %v7532, 0
        %v7564 = vsel %vm2813, %v7533, 0
        %v7567 = vsel %vm2813, %v7534, 0
        %v7570 = vsel %vm2813, %v7535, 0
        %v7573 = vsel %vm2813, %v7536, 0
        %v7576 = vsel %vm2813, %v7537, 0
        %v7579 = vsel %vm2813, %v7538, 0
        %v7582 = vsel %vm2813, %v7539, 0
        %v7585 = vsel %vm2813, %v7540, 0
        %v7588 = vsel %vm2813, %v7541, 0
        %7590 = vmatprep.subr.mxu0 0.0
        %7591 = vmatpush1.msra.mxu0 0.0
        %7592 = vmatprep.subr.mxu0 0.0
        %7593 = vmatpush1.msra.mxu0 0.0
        %7594 = vmatprep.subr.mxu0 0.0
        %7595 = vmatpush1.msra.mxu0 0.0
        %7596 = vmatprep.subr.mxu0 0.0
        %7597 = vmatpush1.msra.mxu0 0.0
        %7598 = vmatprep.subr.mxu0 0.0
        %7599 = vmatpush1.msra.mxu0 0.0
        %7600 = vmatprep.subr.mxu0 0.0
        %7601 = vmatpush1.msra.mxu0 0.0
        %7602 = vmatprep.subr.mxu0 0.0
        %7603 = vmatpush1.msra.mxu0 0.0
        %7604 = vmatprep.subr.mxu0 0.0
        %7605 = vmatpush1.msra.mxu0 0.0
        %7606 = vmatprep.subr.mxu0 0.0
        %7607 = vmatpush1.msra.mxu0 %v7522
        %7608 = vmatprep.subr.mxu0 0.0
        %7609 = vmatpush1.msra.mxu0 %v7517
        %7610 = vmatprep.subr.mxu0 0.0
        %7611 = vmatpush1.msra.mxu0 %v7512
        %7612 = vmatprep.subr.mxu0 0.0
        %7613 = vmatpush1.msra.mxu0 %v7507
        %7614 = vmatprep.subr.mxu0 0.0
        %7615 = vmatpush1.msra.mxu0 %v7502
        %7616 = vmatprep.subr.mxu0 0.0
        %7617 = vmatpush1.msra.mxu0 %v7497
        %7618 = vmatprep.subr.mxu0 0.0
        %7619 = vmatpush1.msra.mxu0 %v7492
        %7620 = vmatprep.subr.mxu0 0.0
        %7621 = vmatpush1.msra.mxu0 %v7487
        %7622 = vmatprep.subr.mxu0 0.0
        %7623 = vmatpush2.msra.mxu0 0.0
        %7624 = vmatprep.subr.mxu0 0.0
        %7625 = vmatpush2.msra.mxu0 0.0
        %7626 = vmatprep.subr.mxu0 0.0
        %7627 = vmatpush2.msra.mxu0 0.0
        %7628 = vmatprep.subr.mxu0 0.0
        %7629 = vmatpush2.msra.mxu0 0.0
        %7630 = vmatprep.subr.mxu0 0.0
        %7631 = vmatpush2.msra.mxu0 0.0
        %7632 = vmatprep.subr.mxu0 0.0
        %7633 = vmatpush2.msra.mxu0 0.0
        %7634 = vmatprep.subr.mxu0 0.0
        %7635 = vmatpush2.msra.mxu0 0.0
        %7636 = vmatprep.subr.mxu0 0.0
        %7637 = vmatpush2.msra.mxu0 0.0
        %7638 = vmatprep.subr.mxu0 0.0
        %7639 = vmatpush2.msra.mxu0 0.0
        %7640 = vmatprep.subr.mxu0 0.0
        %7641 = vmatpush2.msra.mxu0 0.0
        %7642 = vmatprep.subr.mxu0 0.0
        %7643 = vmatpush2.msra.mxu0 0.0
        %7644 = vmatprep.subr.mxu0 0.0
        %7645 = vmatpush2.msra.mxu0 0.0
        %7646 = vmatprep.subr.mxu0 0.0
        %7647 = vmatpush2.msra.mxu0 0.0
        %7648 = vmatprep.subr.mxu0 0.0
        %7649 = vmatpush2.msra.mxu0 0.0
        %7650 = vmatprep.subr.mxu0 0.0
        %7651 = vmatpush2.msra.mxu0 0.0
        %7652 = vmatprep.subr.mxu0 0.0
        %7653 = vmatpush2.msra.mxu0 0.0
        %7654 = vmatprep.mubr.f32.mxu0 0.0
        %7655 = vmatmul.mubr.f32.gmra.mxu0 %v7543
        %v7656 = vpop.f32.mrf.mxu0
        %v7657 = vadd.f32 0.0, %v7656
        %v7658 = vpop.f32.mrf.mxu0
        %7659 = vmatprep.mubr.f32.mxu0 0.0
        %7660 = vmatmul.mubr.f32.gmra.mxu0 %v7546
        %v7661 = vpop.f32.mrf.mxu0
        %v7662 = vadd.f32 0.0, %v7661
        %v7663 = vpop.f32.mrf.mxu0
        %7664 = vmatprep.mubr.f32.mxu0 0.0
        %7665 = vmatmul.mubr.f32.gmra.mxu0 %v7549
        %v7666 = vpop.f32.mrf.mxu0
        %v7667 = vadd.f32 0.0, %v7666
        %v7668 = vpop.f32.mrf.mxu0
        %7669 = vmatprep.mubr.f32.mxu0 0.0
        %7670 = vmatmul.mubr.f32.gmra.mxu0 %v7552
        %v7671 = vpop.f32.mrf.mxu0
        %v7672 = vadd.f32 0.0, %v7671
        %v7673 = vpop.f32.mrf.mxu0
        %7674 = vmatprep.mubr.f32.mxu0 0.0
        %7675 = vmatmul.mubr.f32.gmra.mxu0 %v7555
        %v7676 = vpop.f32.mrf.mxu0
        %v7677 = vadd.f32 0.0, %v7676
        %v7678 = vpop.f32.mrf.mxu0
        %7679 = vmatprep.mubr.f32.mxu0 0.0
        %7680 = vmatmul.mubr.f32.gmra.mxu0 %v7558
        %v7681 = vpop.f32.mrf.mxu0
        %v7682 = vadd.f32 0.0, %v7681
        %v7683 = vpop.f32.mrf.mxu0
        %7684 = vmatprep.mubr.f32.mxu0 0.0
        %7685 = vmatmul.mubr.f32.gmra.mxu0 %v7561
        %v7686 = vpop.f32.mrf.mxu0
        %v7687 = vadd.f32 0.0, %v7686
        %v7688 = vpop.f32.mrf.mxu0
        %7689 = vmatprep.mubr.f32.mxu0 0.0
        %7690 = vmatmul.mubr.f32.gmra.mxu0 %v7564
        %v7691 = vpop.f32.mrf.mxu0
        %v7692 = vadd.f32 0.0, %v7691
        %v7693 = vpop.f32.mrf.mxu0
        %7694 = vmatprep.mubr.f32.mxu0 0.0
        %7695 = vmatmul.mubr.f32.gmra.mxu0 %v7567
        %v7696 = vpop.f32.mrf.mxu0
        %v7697 = vadd.f32 0.0, %v7696
        %v7698 = vpop.f32.mrf.mxu0
        %7699 = vmatprep.mubr.f32.mxu0 0.0
        %7700 = vmatmul.mubr.f32.gmra.mxu0 %v7570
        %v7701 = vpop.f32.mrf.mxu0
        %v7702 = vadd.f32 0.0, %v7701
        %v7703 = vpop.f32.mrf.mxu0
        %7704 = vmatprep.mubr.f32.mxu0 0.0
        %7705 = vmatmul.mubr.f32.gmra.mxu0 %v7573
        %v7706 = vpop.f32.mrf.mxu0
        %v7707 = vadd.f32 0.0, %v7706
        %v7708 = vpop.f32.mrf.mxu0
        %7709 = vmatprep.mubr.f32.mxu0 0.0
        %7710 = vmatmul.mubr.f32.gmra.mxu0 %v7576
        %v7711 = vpop.f32.mrf.mxu0
        %v7712 = vadd.f32 0.0, %v7711
        %v7713 = vpop.f32.mrf.mxu0
        %7714 = vmatprep.mubr.f32.mxu0 0.0
        %7715 = vmatmul.mubr.f32.gmra.mxu0 %v7579
        %v7716 = vpop.f32.mrf.mxu0
        %v7717 = vadd.f32 0.0, %v7716
        %v7718 = vpop.f32.mrf.mxu0
        %7719 = vmatprep.mubr.f32.mxu0 0.0
        %7720 = vmatmul.mubr.f32.gmra.mxu0 %v7582
        %v7721 = vpop.f32.mrf.mxu0
        %v7722 = vadd.f32 0.0, %v7721
        %v7723 = vpop.f32.mrf.mxu0
        %7724 = vmatprep.mubr.f32.mxu0 0.0
        %7725 = vmatmul.mubr.f32.gmra.mxu0 %v7585
        %v7726 = vpop.f32.mrf.mxu0
        %v7727 = vadd.f32 0.0, %v7726
        %v7728 = vpop.f32.mrf.mxu0
        %7729 = vmatprep.mubr.f32.mxu0 0.0
        %7730 = vmatmul.mubr.f32.gmra.mxu0 %v7588
        %v7731 = vpop.f32.mrf.mxu0
        %v7732 = vadd.f32 0.0, %v7731
        %v7733 = vpop.f32.mrf.mxu0
        %7734 = vdwg.mxu0
        %v7735 = vadd.f32 %v7401, %v7657
        %v7736 = vadd.f32 %v7402, %v7662
        %v7737 = vadd.f32 %v7403, %v7667
        %v7738 = vadd.f32 %v7404, %v7672
        %v7739 = vadd.f32 %v7405, %v7677
        %v7740 = vadd.f32 %v7406, %v7682
        %v7741 = vadd.f32 %v7407, %v7687
        %v7742 = vadd.f32 %v7408, %v7692
        %v7743 = vadd.f32 %v7409, %v7697
        %v7744 = vadd.f32 %v7410, %v7702
        %v7745 = vadd.f32 %v7411, %v7707
        %v7746 = vadd.f32 %v7412, %v7712
        %v7747 = vadd.f32 %v7413, %v7717
        %v7748 = vadd.f32 %v7414, %v7722
        %v7749 = vadd.f32 %v7415, %v7727
        %v7750 = vadd.f32 %v7416, %v7732
        %s7751 = scalar_lea.vmem [#allocation17], 128
        %v7752 = vld [vmem:[%s7751] sm:$0xff]
        %v7753 = vld [vmem:[%s7751 + $0x8] sm:$0xff]
        %7754 = vmatprep.subr.mxu0 0.0
        %7755 = vmatpush1.msra.mxu0 0.0
        %7756 = vmatprep.subr.mxu0 0.0
        %7757 = vmatpush1.msra.mxu0 0.0
        %7758 = vmatprep.subr.mxu0 0.0
        %7759 = vmatpush1.msra.mxu0 0.0
        %7760 = vmatprep.subr.mxu0 0.0
        %7761 = vmatpush1.msra.mxu0 0.0
        %7762 = vmatprep.subr.mxu0 0.0
        %7763 = vmatpush1.msra.mxu0 0.0
        %7764 = vmatprep.subr.mxu0 0.0
        %7765 = vmatpush1.msra.mxu0 0.0
        %7766 = vmatprep.subr.mxu0 0.0
        %7767 = vmatpush1.msra.mxu0 0.0
        %7768 = vmatprep.subr.mxu0 0.0
        %7769 = vmatpush1.msra.mxu0 0.0
        %7770 = vmatprep.subr.mxu0 0.0
        %7771 = vmatpush1.msra.mxu0 0.0
        %7772 = vmatprep.subr.mxu0 0.0
        %7773 = vmatpush1.msra.mxu0 0.0
        %7774 = vmatprep.subr.mxu0 0.0
        %7775 = vmatpush1.msra.mxu0 0.0
        %7776 = vmatprep.subr.mxu0 0.0
        %7777 = vmatpush1.msra.mxu0 0.0
        %7778 = vmatprep.subr.mxu0 0.0
        %7779 = vmatpush1.msra.mxu0 0.0
        %7780 = vmatprep.subr.mxu0 0.0
        %7781 = vmatpush1.msra.mxu0 0.0
        %7782 = vmatprep.subr.mxu0 0.0
        %7783 = vmatpush1.msra.mxu0 %v7753
        %7784 = vmatprep.subr.mxu0 0.0
        %7785 = vmatpush1.msra.mxu0 %v7752
        %7786 = vmatprep.subr.mxu0 0.0
        %7787 = vmatpush2.msra.mxu0 0.0
        %7788 = vmatprep.subr.mxu0 0.0
        %7789 = vmatpush2.msra.mxu0 0.0
        %7790 = vmatprep.subr.mxu0 0.0
        %7791 = vmatpush2.msra.mxu0 0.0
        %7792 = vmatprep.subr.mxu0 0.0
        %7793 = vmatpush2.msra.mxu0 0.0
        %7794 = vmatprep.subr.mxu0 0.0
        %7795 = vmatpush2.msra.mxu0 0.0
        %7796 = vmatprep.subr.mxu0 0.0
        %7797 = vmatpush2.msra.mxu0 0.0
        %7798 = vmatprep.subr.mxu0 0.0
        %7799 = vmatpush2.msra.mxu0 0.0
        %7800 = vmatprep.subr.mxu0 0.0
        %7801 = vmatpush2.msra.mxu0 0.0
        %7802 = vmatprep.subr.mxu0 0.0
        %7803 = vmatpush2.msra.mxu0 0.0
        %7804 = vmatprep.subr.mxu0 0.0
        %7805 = vmatpush2.msra.mxu0 0.0
        %7806 = vmatprep.subr.mxu0 0.0
        %7807 = vmatpush2.msra.mxu0 0.0
        %7808 = vmatprep.subr.mxu0 0.0
        %7809 = vmatpush2.msra.mxu0 0.0
        %7810 = vmatprep.subr.mxu0 0.0
        %7811 = vmatpush2.msra.mxu0 0.0
        %7812 = vmatprep.subr.mxu0 0.0
        %7813 = vmatpush2.msra.mxu0 0.0
        %7814 = vmatprep.subr.mxu0 0.0
        %7815 = vmatpush2.msra.mxu0 0.0
        %7816 = vmatprep.subr.mxu0 0.0
        %7817 = vmatpush2.msra.mxu0 0.0
        %7818 = vmatprep.mubr.f32.mxu0 0.0
        %7819 = vmatmul.mubr.f32.gmra.mxu0 %v5092
        %v7820 = vpop.f32.mrf.mxu0
        %v7821 = vadd.f32 0.0, %v7820
        %v7822 = vpop.f32.mrf.mxu0
        %7823 = vmatprep.mubr.f32.mxu0 0.0
        %7824 = vmatmul.mubr.f32.gmra.mxu0 %v5095
        %v7825 = vpop.f32.mrf.mxu0
        %v7826 = vadd.f32 0.0, %v7825
        %v7827 = vpop.f32.mrf.mxu0
        %7828 = vmatprep.mubr.f32.mxu0 0.0
        %7829 = vmatmul.mubr.f32.gmra.mxu0 %v5098
        %v7830 = vpop.f32.mrf.mxu0
        %v7831 = vadd.f32 0.0, %v7830
        %v7832 = vpop.f32.mrf.mxu0
        %7833 = vmatprep.mubr.f32.mxu0 0.0
        %7834 = vmatmul.mubr.f32.gmra.mxu0 %v5101
        %v7835 = vpop.f32.mrf.mxu0
        %v7836 = vadd.f32 0.0, %v7835
        %v7837 = vpop.f32.mrf.mxu0
        %7838 = vmatprep.mubr.f32.mxu0 0.0
        %7839 = vmatmul.mubr.f32.gmra.mxu0 %v5104
        %v7840 = vpop.f32.mrf.mxu0
        %v7841 = vadd.f32 0.0, %v7840
        %v7842 = vpop.f32.mrf.mxu0
        %7843 = vmatprep.mubr.f32.mxu0 0.0
        %7844 = vmatmul.mubr.f32.gmra.mxu0 %v5107
        %v7845 = vpop.f32.mrf.mxu0
        %v7846 = vadd.f32 0.0, %v7845
        %v7847 = vpop.f32.mrf.mxu0
        %7848 = vmatprep.mubr.f32.mxu0 0.0
        %7849 = vmatmul.mubr.f32.gmra.mxu0 %v5110
        %v7850 = vpop.f32.mrf.mxu0
        %v7851 = vadd.f32 0.0, %v7850
        %v7852 = vpop.f32.mrf.mxu0
        %7853 = vmatprep.mubr.f32.mxu0 0.0
        %7854 = vmatmul.mubr.f32.gmra.mxu0 %v5113
        %v7855 = vpop.f32.mrf.mxu0
        %v7856 = vadd.f32 0.0, %v7855
        %v7857 = vpop.f32.mrf.mxu0
        %7858 = vdwg.mxu0
        %s7859 = scalar_lea.vmem %s11, 1024
        %v7860 = vld [vmem:[%s7859] sm:$0xff]
        %v7861 = vld [vmem:[%s7859 + $0x8] sm:$0xff]
        %v7862 = vld [vmem:[%s7859 + $0x10] sm:$0xff]
        %v7863 = vld [vmem:[%s7859 + $0x18] sm:$0xff]
        %v7864 = vld [vmem:[%s7859 + $0x20] sm:$0xff]
        %v7865 = vld [vmem:[%s7859 + $0x28] sm:$0xff]
        %v7866 = vld [vmem:[%s7859 + $0x30] sm:$0xff]
        %v7867 = vld [vmem:[%s7859 + $0x38] sm:$0xff]
        %v7868 = vld [vmem:[%s7859 + $0x40] sm:$0xff]
        %v7869 = vld [vmem:[%s7859 + $0x48] sm:$0xff]
        %v7870 = vld [vmem:[%s7859 + $0x50] sm:$0xff]
        %v7871 = vld [vmem:[%s7859 + $0x58] sm:$0xff]
        %v7872 = vld [vmem:[%s7859 + $0x60] sm:$0xff]
        %v7873 = vld [vmem:[%s7859 + $0x68] sm:$0xff]
        %v7874 = vld [vmem:[%s7859 + $0x70] sm:$0xff]
        %v7875 = vld [vmem:[%s7859 + $0x78] sm:$0xff]
        %v7877 = vsel %vm2813, %v7860, 0
        %v7880 = vsel %vm2813, %v7861, 0
        %v7883 = vsel %vm2813, %v7862, 0
        %v7886 = vsel %vm2813, %v7863, 0
        %v7889 = vsel %vm2813, %v7864, 0
        %v7892 = vsel %vm2813, %v7865, 0
        %v7895 = vsel %vm2813, %v7866, 0
        %v7898 = vsel %vm2813, %v7867, 0
        %v7901 = vsel %vm2813, %v7868, 0
        %v7904 = vsel %vm2813, %v7869, 0
        %v7907 = vsel %vm2813, %v7870, 0
        %v7910 = vsel %vm2813, %v7871, 0
        %v7913 = vsel %vm2813, %v7872, 0
        %v7916 = vsel %vm2813, %v7873, 0
        %v7919 = vsel %vm2813, %v7874, 0
        %v7922 = vsel %vm2813, %v7875, 0
        %7924 = vmatprep.subr.mxu0 0.0
        %7925 = vmatpush1.msra.mxu0 0.0
        %7926 = vmatprep.subr.mxu0 0.0
        %7927 = vmatpush1.msra.mxu0 0.0
        %7928 = vmatprep.subr.mxu0 0.0
        %7929 = vmatpush1.msra.mxu0 0.0
        %7930 = vmatprep.subr.mxu0 0.0
        %7931 = vmatpush1.msra.mxu0 0.0
        %7932 = vmatprep.subr.mxu0 0.0
        %7933 = vmatpush1.msra.mxu0 0.0
        %7934 = vmatprep.subr.mxu0 0.0
        %7935 = vmatpush1.msra.mxu0 0.0
        %7936 = vmatprep.subr.mxu0 0.0
        %7937 = vmatpush1.msra.mxu0 0.0
        %7938 = vmatprep.subr.mxu0 0.0
        %7939 = vmatpush1.msra.mxu0 0.0
        %7940 = vmatprep.subr.mxu0 0.0
        %7941 = vmatpush1.msra.mxu0 %v7856
        %7942 = vmatprep.subr.mxu0 0.0
        %7943 = vmatpush1.msra.mxu0 %v7851
        %7944 = vmatprep.subr.mxu0 0.0
        %7945 = vmatpush1.msra.mxu0 %v7846
        %7946 = vmatprep.subr.mxu0 0.0
        %7947 = vmatpush1.msra.mxu0 %v7841
        %7948 = vmatprep.subr.mxu0 0.0
        %7949 = vmatpush1.msra.mxu0 %v7836
        %7950 = vmatprep.subr.mxu0 0.0
        %7951 = vmatpush1.msra.mxu0 %v7831
        %7952 = vmatprep.subr.mxu0 0.0
        %7953 = vmatpush1.msra.mxu0 %v7826
        %7954 = vmatprep.subr.mxu0 0.0
        %7955 = vmatpush1.msra.mxu0 %v7821
        %7956 = vmatprep.subr.mxu0 0.0
        %7957 = vmatpush2.msra.mxu0 0.0
        %7958 = vmatprep.subr.mxu0 0.0
        %7959 = vmatpush2.msra.mxu0 0.0
        %7960 = vmatprep.subr.mxu0 0.0
        %7961 = vmatpush2.msra.mxu0 0.0
        %7962 = vmatprep.subr.mxu0 0.0
        %7963 = vmatpush2.msra.mxu0 0.0
        %7964 = vmatprep.subr.mxu0 0.0
        %7965 = vmatpush2.msra.mxu0 0.0
        %7966 = vmatprep.subr.mxu0 0.0
        %7967 = vmatpush2.msra.mxu0 0.0
        %7968 = vmatprep.subr.mxu0 0.0
        %7969 = vmatpush2.msra.mxu0 0.0
        %7970 = vmatprep.subr.mxu0 0.0
        %7971 = vmatpush2.msra.mxu0 0.0
        %7972 = vmatprep.subr.mxu0 0.0
        %7973 = vmatpush2.msra.mxu0 0.0
        %7974 = vmatprep.subr.mxu0 0.0
        %7975 = vmatpush2.msra.mxu0 0.0
        %7976 = vmatprep.subr.mxu0 0.0
        %7977 = vmatpush2.msra.mxu0 0.0
        %7978 = vmatprep.subr.mxu0 0.0
        %7979 = vmatpush2.msra.mxu0 0.0
        %7980 = vmatprep.subr.mxu0 0.0
        %7981 = vmatpush2.msra.mxu0 0.0
        %7982 = vmatprep.subr.mxu0 0.0
        %7983 = vmatpush2.msra.mxu0 0.0
        %7984 = vmatprep.subr.mxu0 0.0
        %7985 = vmatpush2.msra.mxu0 0.0
        %7986 = vmatprep.subr.mxu0 0.0
        %7987 = vmatpush2.msra.mxu0 0.0
        %7988 = vmatprep.mubr.f32.mxu0 0.0
        %7989 = vmatmul.mubr.f32.gmra.mxu0 %v7877
        %v7990 = vpop.f32.mrf.mxu0
        %v7991 = vadd.f32 0.0, %v7990
        %v7992 = vpop.f32.mrf.mxu0
        %7993 = vmatprep.mubr.f32.mxu0 0.0
        %7994 = vmatmul.mubr.f32.gmra.mxu0 %v7880
        %v7995 = vpop.f32.mrf.mxu0
        %v7996 = vadd.f32 0.0, %v7995
        %v7997 = vpop.f32.mrf.mxu0
        %7998 = vmatprep.mubr.f32.mxu0 0.0
        %7999 = vmatmul.mubr.f32.gmra.mxu0 %v7883
        %v8000 = vpop.f32.mrf.mxu0
        %v8001 = vadd.f32 0.0, %v8000
        %v8002 = vpop.f32.mrf.mxu0
        %8003 = vmatprep.mubr.f32.mxu0 0.0
        %8004 = vmatmul.mubr.f32.gmra.mxu0 %v7886
        %v8005 = vpop.f32.mrf.mxu0
        %v8006 = vadd.f32 0.0, %v8005
        %v8007 = vpop.f32.mrf.mxu0
        %8008 = vmatprep.mubr.f32.mxu0 0.0
        %8009 = vmatmul.mubr.f32.gmra.mxu0 %v7889
        %v8010 = vpop.f32.mrf.mxu0
        %v8011 = vadd.f32 0.0, %v8010
        %v8012 = vpop.f32.mrf.mxu0
        %8013 = vmatprep.mubr.f32.mxu0 0.0
        %8014 = vmatmul.mubr.f32.gmra.mxu0 %v7892
        %v8015 = vpop.f32.mrf.mxu0
        %v8016 = vadd.f32 0.0, %v8015
        %v8017 = vpop.f32.mrf.mxu0
        %8018 = vmatprep.mubr.f32.mxu0 0.0
        %8019 = vmatmul.mubr.f32.gmra.mxu0 %v7895
        %v8020 = vpop.f32.mrf.mxu0
        %v8021 = vadd.f32 0.0, %v8020
        %v8022 = vpop.f32.mrf.mxu0
        %8023 = vmatprep.mubr.f32.mxu0 0.0
        %8024 = vmatmul.mubr.f32.gmra.mxu0 %v7898
        %v8025 = vpop.f32.mrf.mxu0
        %v8026 = vadd.f32 0.0, %v8025
        %v8027 = vpop.f32.mrf.mxu0
        %8028 = vmatprep.mubr.f32.mxu0 0.0
        %8029 = vmatmul.mubr.f32.gmra.mxu0 %v7901
        %v8030 = vpop.f32.mrf.mxu0
        %v8031 = vadd.f32 0.0, %v8030
        %v8032 = vpop.f32.mrf.mxu0
        %8033 = vmatprep.mubr.f32.mxu0 0.0
        %8034 = vmatmul.mubr.f32.gmra.mxu0 %v7904
        %v8035 = vpop.f32.mrf.mxu0
        %v8036 = vadd.f32 0.0, %v8035
        %v8037 = vpop.f32.mrf.mxu0
        %8038 = vmatprep.mubr.f32.mxu0 0.0
        %8039 = vmatmul.mubr.f32.gmra.mxu0 %v7907
        %v8040 = vpop.f32.mrf.mxu0
        %v8041 = vadd.f32 0.0, %v8040
        %v8042 = vpop.f32.mrf.mxu0
        %8043 = vmatprep.mubr.f32.mxu0 0.0
        %8044 = vmatmul.mubr.f32.gmra.mxu0 %v7910
        %v8045 = vpop.f32.mrf.mxu0
        %v8046 = vadd.f32 0.0, %v8045
        %v8047 = vpop.f32.mrf.mxu0
        %8048 = vmatprep.mubr.f32.mxu0 0.0
        %8049 = vmatmul.mubr.f32.gmra.mxu0 %v7913
        %v8050 = vpop.f32.mrf.mxu0
        %v8051 = vadd.f32 0.0, %v8050
        %v8052 = vpop.f32.mrf.mxu0
        %8053 = vmatprep.mubr.f32.mxu0 0.0
        %8054 = vmatmul.mubr.f32.gmra.mxu0 %v7916
        %v8055 = vpop.f32.mrf.mxu0
        %v8056 = vadd.f32 0.0, %v8055
        %v8057 = vpop.f32.mrf.mxu0
        %8058 = vmatprep.mubr.f32.mxu0 0.0
        %8059 = vmatmul.mubr.f32.gmra.mxu0 %v7919
        %v8060 = vpop.f32.mrf.mxu0
        %v8061 = vadd.f32 0.0, %v8060
        %v8062 = vpop.f32.mrf.mxu0
        %8063 = vmatprep.mubr.f32.mxu0 0.0
        %8064 = vmatmul.mubr.f32.gmra.mxu0 %v7922
        %v8065 = vpop.f32.mrf.mxu0
        %v8066 = vadd.f32 0.0, %v8065
        %v8067 = vpop.f32.mrf.mxu0
        %8068 = vdwg.mxu0
        %v8069 = vadd.f32 %v7735, %v7991
        %v8070 = vadd.f32 %v7736, %v7996
        %v8071 = vadd.f32 %v7737, %v8001
        %v8072 = vadd.f32 %v7738, %v8006
        %v8073 = vadd.f32 %v7739, %v8011
        %v8074 = vadd.f32 %v7740, %v8016
        %v8075 = vadd.f32 %v7741, %v8021
        %v8076 = vadd.f32 %v7742, %v8026
        %v8077 = vadd.f32 %v7743, %v8031
        %v8078 = vadd.f32 %v7744, %v8036
        %v8079 = vadd.f32 %v7745, %v8041
        %v8080 = vadd.f32 %v7746, %v8046
        %v8081 = vadd.f32 %v7747, %v8051
        %v8082 = vadd.f32 %v7748, %v8056
        %v8083 = vadd.f32 %v7749, %v8061
        %v8084 = vadd.f32 %v7750, %v8066
        %v8085 = vld [vmem:[#allocation16] sm:$0xff]
        %v8086 = vld [vmem:[#allocation16 + $0x8] sm:$0xff]
        %v8087 = vld [vmem:[#allocation16 + $0x10] sm:$0xff]
        %v8088 = vld [vmem:[#allocation16 + $0x18] sm:$0xff]
        %v8089 = vld [vmem:[#allocation16 + $0x20] sm:$0xff]
        %v8090 = vld [vmem:[#allocation16 + $0x28] sm:$0xff]
        %v8091 = vld [vmem:[#allocation16 + $0x30] sm:$0xff]
        %v8092 = vld [vmem:[#allocation16 + $0x38] sm:$0xff]
        %v8093 = vld [vmem:[#allocation16 + $0x40] sm:$0xff]
        %v8094 = vld [vmem:[#allocation16 + $0x48] sm:$0xff]
        %v8095 = vld [vmem:[#allocation16 + $0x50] sm:$0xff]
        %v8096 = vld [vmem:[#allocation16 + $0x58] sm:$0xff]
        %v8097 = vld [vmem:[#allocation16 + $0x60] sm:$0xff]
        %v8098 = vld [vmem:[#allocation16 + $0x68] sm:$0xff]
        %v8099 = vld [vmem:[#allocation16 + $0x70] sm:$0xff]
        %v8100 = vld [vmem:[#allocation16 + $0x78] sm:$0xff]
        %8102 = vset.pattern.permute.xlu0 0
        %8103 = vperm.xlu0 %8102, %v8085
        %v8104 = vpop.permute.xlu0 %8103
        %8107 = vset.pattern.permute.xlu0 0
        %8108 = vperm.xlu0 %8107, %v8086
        %v8109 = vpop.permute.xlu0 %8108
        %8112 = vset.pattern.permute.xlu0 0
        %8113 = vperm.xlu0 %8112, %v8087
        %v8114 = vpop.permute.xlu0 %8113
        %8117 = vset.pattern.permute.xlu0 0
        %8118 = vperm.xlu0 %8117, %v8088
        %v8119 = vpop.permute.xlu0 %8118
        %8122 = vset.pattern.permute.xlu0 0
        %8123 = vperm.xlu0 %8122, %v8089
        %v8124 = vpop.permute.xlu0 %8123
        %8127 = vset.pattern.permute.xlu0 0
        %8128 = vperm.xlu0 %8127, %v8090
        %v8129 = vpop.permute.xlu0 %8128
        %8132 = vset.pattern.permute.xlu0 0
        %8133 = vperm.xlu0 %8132, %v8091
        %v8134 = vpop.permute.xlu0 %8133
        %8137 = vset.pattern.permute.xlu0 0
        %8138 = vperm.xlu0 %8137, %v8092
        %v8139 = vpop.permute.xlu0 %8138
        %8142 = vset.pattern.permute.xlu0 0
        %8143 = vperm.xlu0 %8142, %v8093
        %v8144 = vpop.permute.xlu0 %8143
        %8147 = vset.pattern.permute.xlu0 0
        %8148 = vperm.xlu0 %8147, %v8094
        %v8149 = vpop.permute.xlu0 %8148
        %8152 = vset.pattern.permute.xlu0 0
        %8153 = vperm.xlu0 %8152, %v8095
        %v8154 = vpop.permute.xlu0 %8153
        %8157 = vset.pattern.permute.xlu0 0
        %8158 = vperm.xlu0 %8157, %v8096
        %v8159 = vpop.permute.xlu0 %8158
        %8162 = vset.pattern.permute.xlu0 0
        %8163 = vperm.xlu0 %8162, %v8097
        %v8164 = vpop.permute.xlu0 %8163
        %8167 = vset.pattern.permute.xlu0 0
        %8168 = vperm.xlu0 %8167, %v8098
        %v8169 = vpop.permute.xlu0 %8168
        %8172 = vset.pattern.permute.xlu0 0
        %8173 = vperm.xlu0 %8172, %v8099
        %v8174 = vpop.permute.xlu0 %8173
        %8177 = vset.pattern.permute.xlu0 0
        %8178 = vperm.xlu0 %8177, %v8100
        %v8179 = vpop.permute.xlu0 %8178
        %v8181 = vadd.f32 %v8069, %v8104
        %v8182 = vadd.f32 %v8070, %v8109
        %v8183 = vadd.f32 %v8071, %v8114
        %v8184 = vadd.f32 %v8072, %v8119
        %v8185 = vadd.f32 %v8073, %v8124
        %v8186 = vadd.f32 %v8074, %v8129
        %v8187 = vadd.f32 %v8075, %v8134
        %v8188 = vadd.f32 %v8076, %v8139
        %v8189 = vadd.f32 %v8077, %v8144
        %v8190 = vadd.f32 %v8078, %v8149
        %v8191 = vadd.f32 %v8079, %v8154
        %v8192 = vadd.f32 %v8080, %v8159
        %v8193 = vadd.f32 %v8081, %v8164
        %v8194 = vadd.f32 %v8082, %v8169
        %v8195 = vadd.f32 %v8083, %v8174
        %v8196 = vadd.f32 %v8084, %v8179
        %v8197 = vmul.f32 %v8181, 0.2
        %v8198 = vmul.f32 %v8182, 0.2
        %v8199 = vmul.f32 %v8183, 0.2
        %v8200 = vmul.f32 %v8184, 0.2
        %v8201 = vmul.f32 %v8185, 0.2
        %v8202 = vmul.f32 %v8186, 0.2
        %v8203 = vmul.f32 %v8187, 0.2
        %v8204 = vmul.f32 %v8188, 0.2
        %v8205 = vmul.f32 %v8189, 0.2
        %v8206 = vmul.f32 %v8190, 0.2
        %v8207 = vmul.f32 %v8191, 0.2
        %v8208 = vmul.f32 %v8192, 0.2
        %v8209 = vmul.f32 %v8193, 0.2
        %v8210 = vmul.f32 %v8194, 0.2
        %v8211 = vmul.f32 %v8195, 0.2
        %v8212 = vmul.f32 %v8196, 0.2
        %v8213 = vmax.f32 %v8181, %v8197
        %v8214 = vmax.f32 %v8182, %v8198
        %v8215 = vmax.f32 %v8183, %v8199
        %v8216 = vmax.f32 %v8184, %v8200
        %v8217 = vmax.f32 %v8185, %v8201
        %v8218 = vmax.f32 %v8186, %v8202
        %v8219 = vmax.f32 %v8187, %v8203
        %v8220 = vmax.f32 %v8188, %v8204
        %v8221 = vmax.f32 %v8189, %v8205
        %v8222 = vmax.f32 %v8190, %v8206
        %v8223 = vmax.f32 %v8191, %v8207
        %v8224 = vmax.f32 %v8192, %v8208
        %v8225 = vmax.f32 %v8193, %v8209
        %v8226 = vmax.f32 %v8194, %v8210
        %v8227 = vmax.f32 %v8195, %v8211
        %v8228 = vmax.f32 %v8196, %v8212
        %v8229 = vld [vmem:[%s13] sm:$0xff]
        %v8230 = vld [vmem:[%s13 + $0x8] sm:$0xff]
        %v8231 = vld [vmem:[%s13 + $0x10] sm:$0xff]
        %v8232 = vld [vmem:[%s13 + $0x18] sm:$0xff]
        %v8233 = vld [vmem:[%s13 + $0x20] sm:$0xff]
        %v8234 = vld [vmem:[%s13 + $0x28] sm:$0xff]
        %v8235 = vld [vmem:[%s13 + $0x30] sm:$0xff]
        %v8236 = vld [vmem:[%s13 + $0x38] sm:$0xff]
        %v8237 = vld [vmem:[%s13 + $0x40] sm:$0xff]
        %v8238 = vld [vmem:[%s13 + $0x48] sm:$0xff]
        %v8239 = vld [vmem:[%s13 + $0x50] sm:$0xff]
        %v8240 = vld [vmem:[%s13 + $0x58] sm:$0xff]
        %v8241 = vld [vmem:[%s13 + $0x60] sm:$0xff]
        %v8242 = vld [vmem:[%s13 + $0x68] sm:$0xff]
        %v8243 = vld [vmem:[%s13 + $0x70] sm:$0xff]
        %v8244 = vld [vmem:[%s13 + $0x78] sm:$0xff]
        %8246 = vset.pattern.permute.xlu0 0
        %8247 = vperm.xlu0 %8246, %v8229
        %v8248 = vpop.permute.xlu0 %8247
        %8251 = vset.pattern.permute.xlu0 0
        %8252 = vperm.xlu0 %8251, %v8230
        %v8253 = vpop.permute.xlu0 %8252
        %8256 = vset.pattern.permute.xlu0 0
        %8257 = vperm.xlu0 %8256, %v8231
        %v8258 = vpop.permute.xlu0 %8257
        %8261 = vset.pattern.permute.xlu0 0
        %8262 = vperm.xlu0 %8261, %v8232
        %v8263 = vpop.permute.xlu0 %8262
        %8266 = vset.pattern.permute.xlu0 0
        %8267 = vperm.xlu0 %8266, %v8233
        %v8268 = vpop.permute.xlu0 %8267
        %8271 = vset.pattern.permute.xlu0 0
        %8272 = vperm.xlu0 %8271, %v8234
        %v8273 = vpop.permute.xlu0 %8272
        %8276 = vset.pattern.permute.xlu0 0
        %8277 = vperm.xlu0 %8276, %v8235
        %v8278 = vpop.permute.xlu0 %8277
        %8281 = vset.pattern.permute.xlu0 0
        %8282 = vperm.xlu0 %8281, %v8236
        %v8283 = vpop.permute.xlu0 %8282
        %8286 = vset.pattern.permute.xlu0 0
        %8287 = vperm.xlu0 %8286, %v8237
        %v8288 = vpop.permute.xlu0 %8287
        %8291 = vset.pattern.permute.xlu0 0
        %8292 = vperm.xlu0 %8291, %v8238
        %v8293 = vpop.permute.xlu0 %8292
        %8296 = vset.pattern.permute.xlu0 0
        %8297 = vperm.xlu0 %8296, %v8239
        %v8298 = vpop.permute.xlu0 %8297
        %8301 = vset.pattern.permute.xlu0 0
        %8302 = vperm.xlu0 %8301, %v8240
        %v8303 = vpop.permute.xlu0 %8302
        %8306 = vset.pattern.permute.xlu0 0
        %8307 = vperm.xlu0 %8306, %v8241
        %v8308 = vpop.permute.xlu0 %8307
        %8311 = vset.pattern.permute.xlu0 0
        %8312 = vperm.xlu0 %8311, %v8242
        %v8313 = vpop.permute.xlu0 %8312
        %8316 = vset.pattern.permute.xlu0 0
        %8317 = vperm.xlu0 %8316, %v8243
        %v8318 = vpop.permute.xlu0 %8317
        %8321 = vset.pattern.permute.xlu0 0
        %8322 = vperm.xlu0 %8321, %v8244
        %v8323 = vpop.permute.xlu0 %8322
        %v8325 = vadd.f32 %v8213, %v8248
        %v8326 = vadd.f32 %v8214, %v8253
        %v8327 = vadd.f32 %v8215, %v8258
        %v8328 = vadd.f32 %v8216, %v8263
        %v8329 = vadd.f32 %v8217, %v8268
        %v8330 = vadd.f32 %v8218, %v8273
        %v8331 = vadd.f32 %v8219, %v8278
        %v8332 = vadd.f32 %v8220, %v8283
        %v8333 = vadd.f32 %v8221, %v8288
        %v8334 = vadd.f32 %v8222, %v8293
        %v8335 = vadd.f32 %v8223, %v8298
        %v8336 = vadd.f32 %v8224, %v8303
        %v8337 = vadd.f32 %v8225, %v8308
        %v8338 = vadd.f32 %v8226, %v8313
        %v8339 = vadd.f32 %v8227, %v8318
        %v8340 = vadd.f32 %v8228, %v8323
        %v8341 = vld [vmem:[#allocation19] sm:$0xff]
        %v8342 = vld [vmem:[#allocation19 + $0x8] sm:$0xff]
        %v8343 = vld [vmem:[#allocation19 + $0x10] sm:$0xff]
        %v8344 = vld [vmem:[#allocation19 + $0x18] sm:$0xff]
        %v8345 = vld [vmem:[#allocation19 + $0x20] sm:$0xff]
        %v8346 = vld [vmem:[#allocation19 + $0x28] sm:$0xff]
        %v8347 = vld [vmem:[#allocation19 + $0x30] sm:$0xff]
        %v8348 = vld [vmem:[#allocation19 + $0x38] sm:$0xff]
        %v8349 = vld [vmem:[#allocation19 + $0x40] sm:$0xff]
        %v8350 = vld [vmem:[#allocation19 + $0x48] sm:$0xff]
        %v8351 = vld [vmem:[#allocation19 + $0x50] sm:$0xff]
        %v8352 = vld [vmem:[#allocation19 + $0x58] sm:$0xff]
        %v8353 = vld [vmem:[#allocation19 + $0x60] sm:$0xff]
        %v8354 = vld [vmem:[#allocation19 + $0x68] sm:$0xff]
        %v8355 = vld [vmem:[#allocation19 + $0x70] sm:$0xff]
        %v8356 = vld [vmem:[#allocation19 + $0x78] sm:$0xff]
        %v8357 = vmul.f32 %v8325, %v8341
        %v8358 = vmul.f32 %v8326, %v8342
        %v8359 = vmul.f32 %v8327, %v8343
        %v8360 = vmul.f32 %v8328, %v8344
        %v8361 = vmul.f32 %v8329, %v8345
        %v8362 = vmul.f32 %v8330, %v8346
        %v8363 = vmul.f32 %v8331, %v8347
        %v8364 = vmul.f32 %v8332, %v8348
        %v8365 = vmul.f32 %v8333, %v8349
        %v8366 = vmul.f32 %v8334, %v8350
        %v8367 = vmul.f32 %v8335, %v8351
        %v8368 = vmul.f32 %v8336, %v8352
        %v8369 = vmul.f32 %v8337, %v8353
        %v8370 = vmul.f32 %v8338, %v8354
        %v8371 = vmul.f32 %v8339, %v8355
        %v8372 = vmul.f32 %v8340, %v8356
        %vm8373 = vcmask 31744
        %v8374 = vsel %vm8373, %v8357, 0.0
        %8375 = vadd.xlane.f32.xlu0 %v8374
        %v8376 = vpop.xlane.xlu0 %8375
        %v8377 = vsel %vm8373, %v8358, 0.0
        %8378 = vadd.xlane.f32.xlu0 %v8377
        %v8379 = vpop.xlane.xlu0 %8378
        %v8380 = vsel %vm8373, %v8359, 0.0
        %8381 = vadd.xlane.f32.xlu0 %v8380
        %v8382 = vpop.xlane.xlu0 %8381
        %v8383 = vsel %vm8373, %v8360, 0.0
        %8384 = vadd.xlane.f32.xlu0 %v8383
        %v8385 = vpop.xlane.xlu0 %8384
        %v8386 = vsel %vm8373, %v8361, 0.0
        %8387 = vadd.xlane.f32.xlu0 %v8386
        %v8388 = vpop.xlane.xlu0 %8387
        %v8389 = vsel %vm8373, %v8362, 0.0
        %8390 = vadd.xlane.f32.xlu0 %v8389
        %v8391 = vpop.xlane.xlu0 %8390
        %v8392 = vsel %vm8373, %v8363, 0.0
        %8393 = vadd.xlane.f32.xlu0 %v8392
        %v8394 = vpop.xlane.xlu0 %8393
        %v8395 = vsel %vm8373, %v8364, 0.0
        %8396 = vadd.xlane.f32.xlu0 %v8395
        %v8397 = vpop.xlane.xlu0 %8396
        %v8398 = vsel %vm8373, %v8365, 0.0
        %8399 = vadd.xlane.f32.xlu0 %v8398
        %v8400 = vpop.xlane.xlu0 %8399
        %v8401 = vsel %vm8373, %v8366, 0.0
        %8402 = vadd.xlane.f32.xlu0 %v8401
        %v8403 = vpop.xlane.xlu0 %8402
        %v8404 = vsel %vm8373, %v8367, 0.0
        %8405 = vadd.xlane.f32.xlu0 %v8404
        %v8406 = vpop.xlane.xlu0 %8405
        %v8407 = vsel %vm8373, %v8368, 0.0
        %8408 = vadd.xlane.f32.xlu0 %v8407
        %v8409 = vpop.xlane.xlu0 %8408
        %v8410 = vsel %vm8373, %v8369, 0.0
        %8411 = vadd.xlane.f32.xlu0 %v8410
        %v8412 = vpop.xlane.xlu0 %8411
        %v8413 = vsel %vm8373, %v8370, 0.0
        %8414 = vadd.xlane.f32.xlu0 %v8413
        %v8415 = vpop.xlane.xlu0 %8414
        %v8416 = vsel %vm8373, %v8371, 0.0
        %8417 = vadd.xlane.f32.xlu0 %v8416
        %v8418 = vpop.xlane.xlu0 %8417
        %v8419 = vsel %vm8373, %v8372, 0.0
        %8420 = vadd.xlane.f32.xlu0 %v8419
        %v8421 = vpop.xlane.xlu0 %8420
        %v8422 = vadd.f32 %v8376, %v8379
        %v8423 = vadd.f32 %v8422, %v8382
        %v8424 = vadd.f32 %v8423, %v8385
        %v8425 = vadd.f32 %v8424, %v8388
        %v8426 = vadd.f32 %v8425, %v8391
        %v8427 = vadd.f32 %v8426, %v8394
        %v8428 = vadd.f32 %v8427, %v8397
        %v8429 = vadd.f32 %v8428, %v8400
        %v8430 = vadd.f32 %v8429, %v8403
        %v8431 = vadd.f32 %v8430, %v8406
        %v8432 = vadd.f32 %v8431, %v8409
        %v8433 = vadd.f32 %v8432, %v8412
        %v8434 = vadd.f32 %v8433, %v8415
        %v8435 = vadd.f32 %v8434, %v8418
        %v8436 = vadd.f32 %v8435, %v8421
        %v8437 = vrot.slane %v8436, 4
        %v8438 = vadd.f32 %v8436, %v8437
        %v8439 = vrot.slane %v8438, 2
        %v8440 = vadd.f32 %v8438, %v8439
        %v8441 = vrot.slane %v8440, 1
        %v8442 = vadd.f32 %v8440, %v8441
        %v8443 = vld [vmem:[#allocation2] sm:$0x1]
        %v8444 = vadd.f32 %v8442, %v8443
        %v8445 = vsub.f32 0.0, %v8444
        %v8446 = vmul.f32 %v8445, 1.442695
        %v8447 = vpow.pop %v8446
        %v8448 = vadd.f32 %v8447, 1.0
        %v8449 = vrcp.pop %v8448
        %v8450 = vmul.f32 1.0, %v8449
        %vm8451 = vcmask 0
        %8452 = vst.msk [vmem:[%s706] sm:$0x1] %vm8451, %v8450
        %p8453 = scmp.lt.s32.totalorder %s36, 1
        %s8454 = scalar_select %p8453, %s36, 1
        %s8455 = scalar_lea.vmem %s17, %s8454
        // Predicated region
        $region133: #{_lambda_.1} parent=87 // pred_check
          %p8456 = pneg %p416
        $region134: #{_lambda_.1} parent=87 // pred_check_branch
          %8458 = sbr.rel (%p8456) target = $region136
        $region135: #{_lambda_.1} parent=87 // pred_region
          _
        $region136: #{_lambda_.1} parent=87 // pred_fallthru
          _
      $region88: #{_lambda_.1} parent=5 // pred_fallthru
        _
      %p8459 = scmp.le.s32.totalorder 2, %s31
      // Predicated region
      $region137: #{_lambda_.1} parent=5 // pred_check
        %p8460 = pneg %p8459
      $region138: #{_lambda_.1} parent=5 // pred_check_branch
        %8462 = sbr.rel (%p8460) target = $region140
      $region139: #{_lambda_.1} parent=5 // pred_region
        %s8463 = ssub.s32 %s31, 2
        // Predicated region
        $region141: #{_lambda_.1} parent=139 // pred_check
          %p8464 = pneg %p422
        $region142: #{_lambda_.1} parent=139 // pred_check_branch
          %8466 = sbr.rel (%p8464) target = $region144
        $region143: #{_lambda_.1} parent=139 // pred_region
          %p8467 = scmp.lt.s32.totalorder %s37, 1
          %s8468 = scalar_select %p8467, %s37, 1
          %s8469 = scalar_lea.vmem %s17, %s8468
        $region144: #{_lambda_.1} parent=139 // pred_fallthru
          _
      $region140: #{_lambda_.1} parent=5 // pred_fallthru
        _
    $region6: #{_lambda_.1} parent=1 // loop_footer
      %s35 = sadd.s32 1, %s31
    $region7: #{_lambda_.1} parent=1 // loop_footer_branch
      %30 = sbr.rel target = $region3
    $region8: #{_lambda_.1} parent=1 // loop_exit
      _
    %8470 = vsyncpa [#allocation4], 1
    %s8471 = scalar_lea.sflag [#allocation4], 1
    %8472 = vsyncpa %s8471, 1
    %8473 = vsyncpa [#allocation6], 1
    %8474 = vsyncpa [#allocation9], 1
    %8475 = vsyncpa [#allocation12], 1
    %8476 = vsyncpa [#allocation15], 1
    %8477 = vsyncpa [#allocation18], 1

</llo_original>
